<compile_context>
chip_gen: v7x
topology: tpu7x:2x2x1
jax: 0.10.0
libtpu: 0.0.40
codegen_flags: <defaults>
</compile_context>

<pallas_src>
import jax
import jax.numpy as jnp
from jax.experimental import pallas as pl
from jax.experimental.pallas import tpu as pltpu

C_PAD = 128          # padded input-channel dim (64 feat + 2 coords = 66 -> 128)
S_PAD = 128          # padded hidden / head lane dim (64 -> 128, head 2 -> 128)
RING_K = 2           # ring adjacency: self +/-1 +/-2 neighbours (degree 5)
BLOCK_CONTOURS = 4   # contours per grid step (fixed -> VMEM bounded, v7x safe)


# -----------------------------------------------------------------------------
# Pallas kernel: fused 3-layer residual GCN + prediction head for one block of
# NB contours, flattened to 2-D (bf16 operands, f32 accumulation, lane-dense
# output).
#   x_ref   : (M, C_PAD)        bf16  flattened [sampled feature | ro*coords]
#   adj_ref : (M, M)            bf16  0/1 block-diagonal ring adjacency (+self)
#   w*s/w*n : (C_PAD|S_PAD, S_PAD) bf16  self / (neigh/deg) weights, (in, out)
#   wp_ref  : (S_PAD, S_PAD)    bf16  head; only cols [:2] non-zero
#   b_ref   : (4, S_PAD)        f32   rows 0..2 layer biases, row 3 head bias
#   out_ref : (M, S_PAD)        f32   lane-dense; only cols [:2] meaningful
# -----------------------------------------------------------------------------
def _gcn_kernel(x_ref, adj_ref, w1s_ref, w1n_ref, w2s_ref, w2n_ref,
                w3s_ref, w3n_ref, wp_ref, b_ref, out_ref):
    x = x_ref[...]                                      # (M, C_PAD) bf16
    adj = adj_ref[...]                                  # (M, M) bf16 0/1
    b = b_ref[...]                                      # (4, S_PAD) f32

    def gconv(h_bf, ws_ref_, wn_ref_, b_row):
        # Neighbour mean on the MXU: (A01 @ h) @ (W_neigh / deg).
        agg = jnp.dot(adj, h_bf,
                      preferred_element_type=jnp.float32).astype(jnp.bfloat16)
        return (jnp.dot(h_bf, ws_ref_[...], preferred_element_type=jnp.float32)
                + jnp.dot(agg, wn_ref_[...], preferred_element_type=jnp.float32)
                + b_row)

    h = jnp.maximum(gconv(x, w1s_ref, w1n_ref, b[0:1]), 0.0)            # (M,S)
    h = jnp.maximum(h + gconv(h.astype(jnp.bfloat16), w2s_ref, w2n_ref,
                              b[1:2]), 0.0)
    h = jnp.maximum(h + gconv(h.astype(jnp.bfloat16), w3s_ref, w3n_ref,
                              b[2:3]), 0.0)
    out_ref[...] = (jnp.dot(h.astype(jnp.bfloat16), wp_ref[...],
                            preferred_element_type=jnp.float32) + b[3:4])


# -----------------------------------------------------------------------------
# Parameter packing (padded bf16 weight slabs, 1/deg folded into neigh weights)
# -----------------------------------------------------------------------------
def pack_gcn_params(params, c_pad=C_PAD, s_pad=S_PAD):
    S = params["w1_self"].shape[0]
    inv_deg = 1.0 / (2 * RING_K + 1)

    def pad_to(mat, rows, cols):
        out = jnp.zeros((rows, cols), jnp.float32)
        return out.at[:mat.shape[0], :mat.shape[1]].set(mat)

    packed = {
        "w1_self":  pad_to(params["w1_self"].T, c_pad, s_pad).astype(jnp.bfloat16),
        "w1_neigh": pad_to(params["w1_neigh"].T * inv_deg, c_pad, s_pad).astype(jnp.bfloat16),
        "w2_self":  pad_to(params["w2_self"].T, s_pad, s_pad).astype(jnp.bfloat16),
        "w2_neigh": pad_to(params["w2_neigh"].T * inv_deg, s_pad, s_pad).astype(jnp.bfloat16),
        "w3_self":  pad_to(params["w3_self"].T, s_pad, s_pad).astype(jnp.bfloat16),
        "w3_neigh": pad_to(params["w3_neigh"].T * inv_deg, s_pad, s_pad).astype(jnp.bfloat16),
        "wp":       pad_to(params["wp"].T, s_pad, s_pad).astype(jnp.bfloat16),
    }
    b = jnp.zeros((4, s_pad), jnp.float32)
    b = b.at[0, :S].set(params["b1"][:, 0])
    b = b.at[1, :S].set(params["b2"][:, 0])
    b = b.at[2, :S].set(params["b3"][:, 0])
    b = b.at[3, :2].set(params["bp"][:, 0])
    packed["b"] = b
    return packed


# -----------------------------------------------------------------------------
# Graph helpers
# -----------------------------------------------------------------------------
def ring_adjacency(num_points, k=RING_K):
    """0/1 ring adjacency (self + +-k neighbours), f32."""
    idx = jnp.arange(num_points)
    a = jnp.eye(num_points, dtype=jnp.float32)
    for d in range(1, k + 1):
        a = a.at[idx, (idx + d) % num_points].set(1.0)
        a = a.at[idx, (idx - d) % num_points].set(1.0)
    return a


def construct_graph(num_points, k=RING_K):
    """Row-normalized ring adjacency (matches the PyTorch construct_graph)."""
    a = ring_adjacency(num_points, k)
    return a / a.sum(axis=1, keepdims=True)


def _block_ring_adjacency(nb, num_points, k=RING_K):
    """Block-diagonal 0/1 ring adjacency over NB contours, bf16 (exact)."""
    a = ring_adjacency(num_points, k)
    return jnp.kron(jnp.eye(nb, dtype=jnp.float32), a).astype(jnp.bfloat16)


# -----------------------------------------------------------------------------
# Pallas wrapper
# -----------------------------------------------------------------------------
def gcn_apply_pallas(packed, x, block_contours=BLOCK_CONTOURS):
    """Apply the fused GCN to x: (N, P, C_in) channels-last. Returns (N, P, 2)."""
    N, P, C_in = x.shape
    assert C_in <= C_PAD
    NB = max(1, min(block_contours, N))
    grid = pl.cdiv(N, NB)
    N_pad = grid * NB
    M_blk = NB * P
    assert M_blk % 8 == 0, "contour block rows must be a multiple of 8"

    x_p = jnp.pad(x, ((0, N_pad - N), (0, 0), (0, C_PAD - C_in)))
    x_flat = x_p.reshape(N_pad * P, C_PAD).astype(jnp.bfloat16)
    adj = _block_ring_adjacency(NB, P)                      # (M_blk, M_blk) bf16

    def const_spec(arr):
        return pl.BlockSpec(arr.shape, lambda g: (0, 0))

    out = pl.pallas_call(
        _gcn_kernel,
        out_shape=jax.ShapeDtypeStruct((N_pad * P, S_PAD), jnp.float32),
        grid=(grid,),
        in_specs=[
            pl.BlockSpec((M_blk, C_PAD), lambda g: (g, 0)),
            const_spec(adj),
            const_spec(packed["w1_self"]), const_spec(packed["w1_neigh"]),
            const_spec(packed["w2_self"]), const_spec(packed["w2_neigh"]),
            const_spec(packed["w3_self"]), const_spec(packed["w3_neigh"]),
            const_spec(packed["wp"]), const_spec(packed["b"]),
        ],
        out_specs=pl.BlockSpec((M_blk, S_PAD), lambda g: (g, 0)),
        compiler_params=pltpu.CompilerParams(
            dimension_semantics=("parallel",)),
    )(x_flat, adj, packed["w1_self"], packed["w1_neigh"],
      packed["w2_self"], packed["w2_neigh"], packed["w3_self"],
      packed["w3_neigh"], packed["wp"], packed["b"])

    return out.reshape(N_pad, P, S_PAD)[:N, :, :2]


def gcn_apply_reference(params, x, adj):
    """Pure-JAX f32 reference (dense normalized adjacency) of the fused kernel.

    x: (N, P, C_in), adj: (P, P) row-normalised ring adjacency -> (N, P, 2).
    """
    def gconv(h, ws, wn, b):
        agg = jnp.einsum("pq,nqc->npc", adj, h)
        return (jnp.einsum("npc,oc->npo", h, ws)
                + jnp.einsum("npc,oc->npo", agg, wn)
                + b[:, 0][None, None, :])

    h = jnp.maximum(gconv(x, params["w1_self"], params["w1_neigh"], params["b1"]), 0.0)
    h = jnp.maximum(h + gconv(h, params["w2_self"], params["w2_neigh"], params["b2"]), 0.0)
    h = jnp.maximum(h + gconv(h, params["w3_self"], params["w3_neigh"], params["b3"]), 0.0)
    return jnp.einsum("npc,oc->npo", h, params["wp"]) + params["bp"][:, 0][None, None, :]


# -----------------------------------------------------------------------------
# Plain-JAX glue (matches the PyTorch helper semantics)
# -----------------------------------------------------------------------------
def img_poly_to_can_poly(img_poly):
    """Subtract per-polygon min x / min y (canonical polygon)."""
    mins = jnp.min(img_poly, axis=1, keepdims=True)
    return img_poly - mins


def get_gcn_feature(cnn_feature, img_poly, ind, h, w):
    """Bilinear-sample cnn_feature (B,C,H,W) at poly points -> (N, C, P).

    Mirrors F.grid_sample(align_corners=False, padding_mode='zeros') after the
    [-1, 1] normalization done in gcn_utils.get_gcn_feature.
    """
    gx = img_poly[..., 0] / (w / 2.0) - 1.0    # (N, P) in [-1, 1]
    gy = img_poly[..., 1] / (h / 2.0) - 1.0
    ix = ((gx + 1.0) * w - 1.0) / 2.0
    iy = ((gy + 1.0) * h - 1.0) / 2.0

    x0 = jnp.floor(ix)
    y0 = jnp.floor(iy)
    x1 = x0 + 1.0
    y1 = y0 + 1.0

    wa = (x1 - ix) * (y1 - iy)
    wb = (x1 - ix) * (iy - y0)
    wc = (ix - x0) * (y1 - iy)
    wd = (ix - x0) * (iy - y0)

    feats = cnn_feature[ind]   # (N, C, H, W)

    def gather(xi, yi):
        valid = ((xi >= 0) & (xi <= w - 1) & (yi >= 0) & (yi <= h - 1))
        xc = jnp.clip(xi, 0, w - 1).astype(jnp.int32)
        yc = jnp.clip(yi, 0, h - 1).astype(jnp.int32)
        vals = jax.vmap(lambda f, yy, xx: f[:, yy, xx])(feats, yc, xc)  # (N,C,P)
        return vals * valid.astype(cnn_feature.dtype)[:, None, :]

    out = (wa[:, None, :] * gather(x0, y0)
           + wb[:, None, :] * gather(x0, y1)
           + wc[:, None, :] * gather(x1, y0)
           + wd[:, None, :] * gather(x1, y1))
    return out


# -----------------------------------------------------------------------------
# ResGCN module (forward, training branch)
# -----------------------------------------------------------------------------
def init_gcn_params(key, feature_dim, state_dim, std=0.01):
    ks = jax.random.split(key, 8)
    p = {
        "w1_self":  std * jax.random.normal(ks[0], (state_dim, feature_dim)),
        "w1_neigh": std * jax.random.normal(ks[1], (state_dim, feature_dim)),
        "b1": jnp.zeros((state_dim, 1)),
        "w2_self":  std * jax.random.normal(ks[2], (state_dim, state_dim)),
        "w2_neigh": std * jax.random.normal(ks[3], (state_dim, state_dim)),
        "b2": jnp.zeros((state_dim, 1)),
        "w3_self":  std * jax.random.normal(ks[4], (state_dim, state_dim)),
        "w3_neigh": std * jax.random.normal(ks[5], (state_dim, state_dim)),
        "b3": jnp.zeros((state_dim, 1)),
        "wp": std * jax.random.normal(ks[6], (2, state_dim)),
        "bp": jnp.zeros((2, 1)),
    }
    return {k: v.astype(jnp.float32) for k, v in p.items()}


class ResGCNPallas:
    def __init__(self, key, hidlayers=64, feature_channels=64, n_iter=3, ro=4,
                 block_contours=BLOCK_CONTOURS):
        assert hidlayers <= S_PAD and feature_channels + 2 <= C_PAD
        self.hidlayers = hidlayers
        self.iter = n_iter
        self.ro = ro
        self.block_contours = block_contours
        keys = jax.random.split(key, n_iter + 2)
        feature_dim = feature_channels + 2
        self.feature_dim = feature_dim
        # self.fuse and self.init_gcn exist in the PyTorch module but are
        # unused in forward(); they are omitted here.
        self.resgcn = init_gcn_params(keys[0], feature_dim, hidlayers)
        self.resgcn_i = [init_gcn_params(keys[1 + i], feature_dim, hidlayers)
                         for i in range(n_iter)]
        self.resgcn_packed = pack_gcn_params(self.resgcn)
        self.resgcn_i_packed = [pack_gcn_params(p) for p in self.resgcn_i]

    def evolve_contour(self, packed, cnn_feature, i_it_contour, c_it_contour, ind):
        if i_it_contour.shape[0] == 0:
            return jnp.zeros_like(i_it_contour)
        h, w = cnn_feature.shape[2], cnn_feature.shape[3]
        init_feature = get_gcn_feature(cnn_feature, i_it_contour, ind, h, w)  # (N,C,P)
        c_it = c_it_contour.astype(jnp.float32) * self.ro                     # (N,P,2)
        # channels-last GCN input: [sampled feature | canonical coords]
        init_input = jnp.concatenate(
            [jnp.transpose(init_feature, (0, 2, 1)), c_it], axis=-1)          # (N,P,C+2)
        # the ring graph (construct_graph, k=2) is baked into the kernel's
        # block-diagonal adjacency input (1/deg folded into W_neigh).
        offsets = gcn_apply_pallas(packed, init_input,
                                   block_contours=self.block_contours)        # (N,P,2)
        return i_it_contour * self.ro + offsets

    def forward(self, output, cnn_feature, batch=None):
        ret = output[0]
        if batch is not None and "test" not in batch["meta"]:
            init = ret  # synthetic init already carries i_it/c_it/i_gt ctrs + ind
            pred = self.evolve_contour(self.resgcn_packed, cnn_feature,
                                       init["i_it_ctrs"], init["c_it_ctrs"], init["ind"])
            preds = [pred]
            for i in range(self.iter):
                pred = pred / self.ro
                c_pred = img_poly_to_can_poly(pred)
                pred = self.evolve_contour(self.resgcn_i_packed[i], cnn_feature,
                                           pred, c_pred, init["ind"])
                preds.append(pred)
            ret.update({"preds": preds, "i_gt_ctrs": ret["i_gt_ctrs"] * self.ro})
        # TODO(synk): inference branch (batch is None) depends on
        # gcn_utils.test_cirpoint over detections; not reproduced here.
        return output


# -----------------------------------------------------------------------------
# Demo / self-test
# -----------------------------------------------------------------------------
if __name__ == "__main__":
    key = jax.random.PRNGKey(0)
    k_model, k_feat, k_ctr, k_rad = jax.random.split(key, 4)

    B, C, H, W = 2, 64, 16, 16          # feature map (NCHW)
    N, P = 8, 128                       # contours, points per contour
    HIDLAYERS = 64                      # opt.gcn_hidlayers

    cnn_feature = 0.1 * jax.random.normal(k_feat, (B, C, H, W), jnp.float32)

    # synthetic circular init contours in feature-map coordinates
    centers = jax.random.uniform(k_ctr, (N, 1, 2), minval=5.0, maxval=11.0)
    radii = jax.random.uniform(k_rad, (N, 1, 1), minval=2.0, maxval=4.0)
    theta = jnp.linspace(0.0, 2.0 * jnp.pi, P, endpoint=False)
    ring = jnp.stack([jnp.cos(theta), jnp.sin(theta)], axis=-1)   # (P, 2)
    i_it_ctrs = (centers + radii * ring[None]).astype(jnp.float32)
    c_it_ctrs = img_poly_to_can_poly(i_it_ctrs)
    i_gt_ctrs = (centers + 1.1 * radii * ring[None]).astype(jnp.float32)
    ind = jnp.array([0, 0, 0, 0, 1, 1, 1, 1], dtype=jnp.int32)

    output = [{"i_it_ctrs": i_it_ctrs, "c_it_ctrs": c_it_ctrs,
               "i_gt_ctrs": i_gt_ctrs, "ind": ind}]
    batch = {"meta": {}}   # training-style batch ('test' not in meta)

    model = ResGCNPallas(k_model, hidlayers=HIDLAYERS, feature_channels=C,
                         n_iter=3, ro=4, block_contours=BLOCK_CONTOURS)

    adj_norm = construct_graph(P, k=RING_K)

    # --- single-apply correctness check: bf16 Pallas kernel (MXU block-diag
    # aggregation, lane-dense output) vs f32 dense-adjacency reference.
    feat0 = get_gcn_feature(cnn_feature, i_it_ctrs, ind, H, W)
    x0 = jnp.concatenate(
        [jnp.transpose(feat0, (0, 2, 1)), c_it_ctrs * model.ro], axis=-1)  # (N,P,66)
    got = gcn_apply_pallas(model.resgcn_packed, x0,
                           block_contours=model.block_contours)
    want = gcn_apply_reference(model.resgcn, x0, adj_norm)
    max_err = float(jnp.max(jnp.abs(got - want)))
    assert got.shape == (N, P, 2)
    assert jnp.allclose(got, want, atol=2.5e-2, rtol=2.5e-2), \
        f"pallas/reference mismatch (max abs err {max_err})"

    # --- full forward pass (training branch)
    out = model.forward(output, cnn_feature, batch=batch)
    preds = out[0]["preds"]
    jax.block_until_ready(preds)

    assert len(preds) == 4
    for p in preds:
        assert p.shape == (N, P, 2) and p.dtype == jnp.float32
        assert bool(jnp.all(jnp.isfinite(p)))
    assert out[0]["i_gt_ctrs"].shape == (N, P, 2)

    # --- end-to-end consistency check against the f32 reference chain
    # (loose tolerances: bf16 rounding accumulates over 4 evolutions).
    def evolve_ref(params, i_it, c_it):
        feat = get_gcn_feature(cnn_feature, i_it, ind, H, W)
        xin = jnp.concatenate(
            [jnp.transpose(feat, (0, 2, 1)), c_it.astype(jnp.float32) * model.ro],
            axis=-1)
        return i_it * model.ro + gcn_apply_reference(params, xin, adj_norm)

    pred_r = evolve_ref(model.resgcn, i_it_ctrs, c_it_ctrs)
    preds_ref = [pred_r]
    for i in range(model.iter):
        pred_r = pred_r / model.ro
        pred_r = evolve_ref(model.resgcn_i[i], pred_r, img_poly_to_can_poly(pred_r))
        preds_ref.append(pred_r)
    for p, pr in zip(preds, preds_ref):
        e2e_err = float(jnp.max(jnp.abs(p - pr)))
        assert jnp.allclose(p, pr, atol=0.5, rtol=0.05), \
            f"end-to-end mismatch (max abs err {e2e_err})"

    print("KERNEL_OK")
</pallas_src>

<mosaic_0001>
module attributes {stable_mosaic.version = 11 : i64} {
  func.func @_gcn_kernel(%arg0: i32, %arg1: memref<512x128xbf16, #tpu.memory_space<vmem>>, %arg2: memref<512x512xbf16, #tpu.memory_space<vmem>>, %arg3: memref<128x128xbf16, #tpu.memory_space<vmem>>, %arg4: memref<128x128xbf16, #tpu.memory_space<vmem>>, %arg5: memref<128x128xbf16, #tpu.memory_space<vmem>>, %arg6: memref<128x128xbf16, #tpu.memory_space<vmem>>, %arg7: memref<128x128xbf16, #tpu.memory_space<vmem>>, %arg8: memref<128x128xbf16, #tpu.memory_space<vmem>>, %arg9: memref<128x128xbf16, #tpu.memory_space<vmem>>, %arg10: memref<4x128xf32, #tpu.memory_space<vmem>>, %arg11: memref<512x128xf32, #tpu.memory_space<vmem>>) attributes {dimension_semantics = [#tpu.dimension_semantics<parallel>], iteration_bounds = array<i64: 2>, scalar_prefetch = 0 : i64, scratch_operands = 0 : i64, tpu.core_type = #tpu.core_type<tc>, window_params = [{transform_indices = @transform_0, window_bounds = array<i64: 512, 128>}, {pipeline_mode = #tpu.pipeline_mode<synchronous>, transform_indices = @transform_1, window_bounds = array<i64: 512, 512>}, {pipeline_mode = #tpu.pipeline_mode<synchronous>, transform_indices = @transform_2, window_bounds = array<i64: 128, 128>}, {pipeline_mode = #tpu.pipeline_mode<synchronous>, transform_indices = @transform_3, window_bounds = array<i64: 128, 128>}, {pipeline_mode = #tpu.pipeline_mode<synchronous>, transform_indices = @transform_4, window_bounds = array<i64: 128, 128>}, {pipeline_mode = #tpu.pipeline_mode<synchronous>, transform_indices = @transform_5, window_bounds = array<i64: 128, 128>}, {pipeline_mode = #tpu.pipeline_mode<synchronous>, transform_indices = @transform_6, window_bounds = array<i64: 128, 128>}, {pipeline_mode = #tpu.pipeline_mode<synchronous>, transform_indices = @transform_7, window_bounds = array<i64: 128, 128>}, {pipeline_mode = #tpu.pipeline_mode<synchronous>, transform_indices = @transform_8, window_bounds = array<i64: 128, 128>}, {pipeline_mode = #tpu.pipeline_mode<synchronous>, transform_indices = @transform_9, window_bounds = array<i64: 4, 128>}, {transform_indices = @transform_10, window_bounds = array<i64: 512, 128>}]} {
    %c0 = arith.constant 0 : index
    %c0_0 = arith.constant 0 : index
    %0 = vector.load %arg1[%c0, %c0_0] : memref<512x128xbf16, #tpu.memory_space<vmem>>, vector<512x128xbf16>
    %c0_1 = arith.constant 0 : index
    %c0_2 = arith.constant 0 : index
    %1 = vector.load %arg2[%c0_1, %c0_2] : memref<512x512xbf16, #tpu.memory_space<vmem>>, vector<512x512xbf16>
    %c0_3 = arith.constant 0 : index
    %c0_4 = arith.constant 0 : index
    %2 = vector.load %arg10[%c0_3, %c0_4] : memref<4x128xf32, #tpu.memory_space<vmem>>, vector<4x128xf32>
    %3 = vector.extract_strided_slice %2 {offsets = [0, 0], sizes = [1, 128], strides = [1, 1]} : vector<4x128xf32> to vector<1x128xf32>
    %cst = arith.constant dense<0.000000e+00> : vector<512x128xf32>
    %4 = tpu.matmul %1, %0, %cst {dimension_numbers = #tpu.dot_dimension_numbers<[1], [0], [0], [1], [0, 0, 1, 1], [], []>} : vector<512x512xbf16>, vector<512x128xbf16>, vector<512x128xf32> -> vector<512x128xf32>
    %5 = arith.truncf %4 : vector<512x128xf32> to vector<512x128xbf16>
    %c0_5 = arith.constant 0 : index
    %c0_6 = arith.constant 0 : index
    %6 = vector.load %arg3[%c0_5, %c0_6] : memref<128x128xbf16, #tpu.memory_space<vmem>>, vector<128x128xbf16>
    %cst_7 = arith.constant dense<0.000000e+00> : vector<512x128xf32>
    %7 = tpu.matmul %0, %6, %cst_7 {dimension_numbers = #tpu.dot_dimension_numbers<[1], [0], [0], [1], [0, 0, 1, 1], [], []>} : vector<512x128xbf16>, vector<128x128xbf16>, vector<512x128xf32> -> vector<512x128xf32>
    %c0_8 = arith.constant 0 : index
    %c0_9 = arith.constant 0 : index
    %8 = vector.load %arg4[%c0_8, %c0_9] : memref<128x128xbf16, #tpu.memory_space<vmem>>, vector<128x128xbf16>
    %cst_10 = arith.constant dense<0.000000e+00> : vector<512x128xf32>
    %9 = tpu.matmul %5, %8, %cst_10 {dimension_numbers = #tpu.dot_dimension_numbers<[1], [0], [0], [1], [0, 0, 1, 1], [], []>} : vector<512x128xbf16>, vector<128x128xbf16>, vector<512x128xf32> -> vector<512x128xf32>
    %10 = arith.addf %7, %9 : vector<512x128xf32>
    %11 = vector.broadcast %3 : vector<1x128xf32> to vector<512x128xf32>
    %12 = arith.addf %10, %11 : vector<512x128xf32>
    %cst_11 = arith.constant 0.000000e+00 : f32
    %13 = vector.broadcast %cst_11 : f32 to vector<512x128xf32>
    %14 = arith.maximumf %12, %13 : vector<512x128xf32>
    %15 = arith.truncf %14 : vector<512x128xf32> to vector<512x128xbf16>
    %16 = vector.extract_strided_slice %2 {offsets = [1, 0], sizes = [1, 128], strides = [1, 1]} : vector<4x128xf32> to vector<1x128xf32>
    %cst_12 = arith.constant dense<0.000000e+00> : vector<512x128xf32>
    %17 = tpu.matmul %1, %15, %cst_12 {dimension_numbers = #tpu.dot_dimension_numbers<[1], [0], [0], [1], [0, 0, 1, 1], [], []>} : vector<512x512xbf16>, vector<512x128xbf16>, vector<512x128xf32> -> vector<512x128xf32>
    %18 = arith.truncf %17 : vector<512x128xf32> to vector<512x128xbf16>
    %c0_13 = arith.constant 0 : index
    %c0_14 = arith.constant 0 : index
    %19 = vector.load %arg5[%c0_13, %c0_14] : memref<128x128xbf16, #tpu.memory_space<vmem>>, vector<128x128xbf16>
    %cst_15 = arith.constant dense<0.000000e+00> : vector<512x128xf32>
    %20 = tpu.matmul %15, %19, %cst_15 {dimension_numbers = #tpu.dot_dimension_numbers<[1], [0], [0], [1], [0, 0, 1, 1], [], []>} : vector<512x128xbf16>, vector<128x128xbf16>, vector<512x128xf32> -> vector<512x128xf32>
    %c0_16 = arith.constant 0 : index
    %c0_17 = arith.constant 0 : index
    %21 = vector.load %arg6[%c0_16, %c0_17] : memref<128x128xbf16, #tpu.memory_space<vmem>>, vector<128x128xbf16>
    %cst_18 = arith.constant dense<0.000000e+00> : vector<512x128xf32>
    %22 = tpu.matmul %18, %21, %cst_18 {dimension_numbers = #tpu.dot_dimension_numbers<[1], [0], [0], [1], [0, 0, 1, 1], [], []>} : vector<512x128xbf16>, vector<128x128xbf16>, vector<512x128xf32> -> vector<512x128xf32>
    %23 = arith.addf %20, %22 : vector<512x128xf32>
    %24 = vector.broadcast %16 : vector<1x128xf32> to vector<512x128xf32>
    %25 = arith.addf %23, %24 : vector<512x128xf32>
    %26 = arith.addf %14, %25 : vector<512x128xf32>
    %cst_19 = arith.constant 0.000000e+00 : f32
    %27 = vector.broadcast %cst_19 : f32 to vector<512x128xf32>
    %28 = arith.maximumf %26, %27 : vector<512x128xf32>
    %29 = arith.truncf %28 : vector<512x128xf32> to vector<512x128xbf16>
    %30 = vector.extract_strided_slice %2 {offsets = [2, 0], sizes = [1, 128], strides = [1, 1]} : vector<4x128xf32> to vector<1x128xf32>
    %cst_20 = arith.constant dense<0.000000e+00> : vector<512x128xf32>
    %31 = tpu.matmul %1, %29, %cst_20 {dimension_numbers = #tpu.dot_dimension_numbers<[1], [0], [0], [1], [0, 0, 1, 1], [], []>} : vector<512x512xbf16>, vector<512x128xbf16>, vector<512x128xf32> -> vector<512x128xf32>
    %32 = arith.truncf %31 : vector<512x128xf32> to vector<512x128xbf16>
    %c0_21 = arith.constant 0 : index
    %c0_22 = arith.constant 0 : index
    %33 = vector.load %arg7[%c0_21, %c0_22] : memref<128x128xbf16, #tpu.memory_space<vmem>>, vector<128x128xbf16>
    %cst_23 = arith.constant dense<0.000000e+00> : vector<512x128xf32>
    %34 = tpu.matmul %29, %33, %cst_23 {dimension_numbers = #tpu.dot_dimension_numbers<[1], [0], [0], [1], [0, 0, 1, 1], [], []>} : vector<512x128xbf16>, vector<128x128xbf16>, vector<512x128xf32> -> vector<512x128xf32>
    %c0_24 = arith.constant 0 : index
    %c0_25 = arith.constant 0 : index
    %35 = vector.load %arg8[%c0_24, %c0_25] : memref<128x128xbf16, #tpu.memory_space<vmem>>, vector<128x128xbf16>
    %cst_26 = arith.constant dense<0.000000e+00> : vector<512x128xf32>
    %36 = tpu.matmul %32, %35, %cst_26 {dimension_numbers = #tpu.dot_dimension_numbers<[1], [0], [0], [1], [0, 0, 1, 1], [], []>} : vector<512x128xbf16>, vector<128x128xbf16>, vector<512x128xf32> -> vector<512x128xf32>
    %37 = arith.addf %34, %36 : vector<512x128xf32>
    %38 = vector.broadcast %30 : vector<1x128xf32> to vector<512x128xf32>
    %39 = arith.addf %37, %38 : vector<512x128xf32>
    %40 = arith.addf %28, %39 : vector<512x128xf32>
    %cst_27 = arith.constant 0.000000e+00 : f32
    %41 = vector.broadcast %cst_27 : f32 to vector<512x128xf32>
    %42 = arith.maximumf %40, %41 : vector<512x128xf32>
    %43 = arith.truncf %42 : vector<512x128xf32> to vector<512x128xbf16>
    %c0_28 = arith.constant 0 : index
    %c0_29 = arith.constant 0 : index
    %44 = vector.load %arg9[%c0_28, %c0_29] : memref<128x128xbf16, #tpu.memory_space<vmem>>, vector<128x128xbf16>
    %cst_30 = arith.constant dense<0.000000e+00> : vector<512x128xf32>
    %45 = tpu.matmul %43, %44, %cst_30 {dimension_numbers = #tpu.dot_dimension_numbers<[1], [0], [0], [1], [0, 0, 1, 1], [], []>} : vector<512x128xbf16>, vector<128x128xbf16>, vector<512x128xf32> -> vector<512x128xf32>
    %46 = vector.extract_strided_slice %2 {offsets = [3, 0], sizes = [1, 128], strides = [1, 1]} : vector<4x128xf32> to vector<1x128xf32>
    %47 = vector.broadcast %46 : vector<1x128xf32> to vector<512x128xf32>
    %48 = arith.addf %45, %47 : vector<512x128xf32>
    %c0_31 = arith.constant 0 : index
    %c0_32 = arith.constant 0 : index
    %49 = vector.load %arg11[%c0_31, %c0_32] : memref<512x128xf32, #tpu.memory_space<vmem>>, vector<512x128xf32>
    tpu.vector_store %arg11[%c0_31, %c0_32], %48 {strides = array<i32>} : memref<512x128xf32, #tpu.memory_space<vmem>>, vector<512x128xf32>,
    return
  }
  func.func @transform_0(%arg0: i32) -> (i32, i32) {
    %c0_i32 = arith.constant 0 : i32
    %c0_i32_0 = arith.constant 0 : i32
    return %arg0, %c0_i32 : i32, i32
  }
  func.func @transform_1(%arg0: i32) -> (i32, i32) {
    %c0_i32 = arith.constant 0 : i32
    %c0_i32_0 = arith.constant 0 : i32
    %c0_i32_1 = arith.constant 0 : i32
    return %c0_i32, %c0_i32_0 : i32, i32
  }
  func.func @transform_2(%arg0: i32) -> (i32, i32) {
    %c0_i32 = arith.constant 0 : i32
    %c0_i32_0 = arith.constant 0 : i32
    %c0_i32_1 = arith.constant 0 : i32
    return %c0_i32, %c0_i32_0 : i32, i32
  }
  func.func @transform_3(%arg0: i32) -> (i32, i32) {
    %c0_i32 = arith.constant 0 : i32
    %c0_i32_0 = arith.constant 0 : i32
    %c0_i32_1 = arith.constant 0 : i32
    return %c0_i32, %c0_i32_0 : i32, i32
  }
  func.func @transform_4(%arg0: i32) -> (i32, i32) {
    %c0_i32 = arith.constant 0 : i32
    %c0_i32_0 = arith.constant 0 : i32
    %c0_i32_1 = arith.constant 0 : i32
    return %c0_i32, %c0_i32_0 : i32, i32
  }
  func.func @transform_5(%arg0: i32) -> (i32, i32) {
    %c0_i32 = arith.constant 0 : i32
    %c0_i32_0 = arith.constant 0 : i32
    %c0_i32_1 = arith.constant 0 : i32
    return %c0_i32, %c0_i32_0 : i32, i32
  }
  func.func @transform_6(%arg0: i32) -> (i32, i32) {
    %c0_i32 = arith.constant 0 : i32
    %c0_i32_0 = arith.constant 0 : i32
    %c0_i32_1 = arith.constant 0 : i32
    return %c0_i32, %c0_i32_0 : i32, i32
  }
  func.func @transform_7(%arg0: i32) -> (i32, i32) {
    %c0_i32 = arith.constant 0 : i32
    %c0_i32_0 = arith.constant 0 : i32
    %c0_i32_1 = arith.constant 0 : i32
    return %c0_i32, %c0_i32_0 : i32, i32
  }
  func.func @transform_8(%arg0: i32) -> (i32, i32) {
    %c0_i32 = arith.constant 0 : i32
    %c0_i32_0 = arith.constant 0 : i32
    %c0_i32_1 = arith.constant 0 : i32
    return %c0_i32, %c0_i32_0 : i32, i32
  }
  func.func @transform_9(%arg0: i32) -> (i32, i32) {
    %c0_i32 = arith.constant 0 : i32
    %c0_i32_0 = arith.constant 0 : i32
    %c0_i32_1 = arith.constant 0 : i32
    return %c0_i32, %c0_i32_0 : i32, i32
  }
  func.func @transform_10(%arg0: i32) -> (i32, i32) {
    %c0_i32 = arith.constant 0 : i32
    %c0_i32_0 = arith.constant 0 : i32
    return %arg0, %c0_i32 : i32, i32
  }
}

</mosaic_0001>

<llo_original>
// kernel: tpu_custom_call.1
$region0: #{tpu_custom_call.1}
  #allocation0 [shape = 'u32[]', space=smem, size = 0x4, offset = 0x4, fixed_abs, tag = 'smem constant byte address 0x4 - core index']
  #allocation1 [shape = 'u32[144,128]{1,0:T(1,128)}', space=vmem, size = 0x12000, scoped, tag = 'internal scratch']
  %s0 = inlined_call_operand.hbm [shape: bf16[1024,128], index: 0, kind: input, shape index: {}]
  %s1 = inlined_call_operand.hbm [shape: bf16[512,512], index: 1, kind: input, shape index: {}]
  %s2 = inlined_call_operand.hbm [shape: bf16[128,128], index: 2, kind: input, shape index: {}]
  %s3 = inlined_call_operand.hbm [shape: bf16[128,128], index: 3, kind: input, shape index: {}]
  %s4 = inlined_call_operand.hbm [shape: bf16[128,128], index: 4, kind: input, shape index: {}]
  %s5 = inlined_call_operand.hbm [shape: bf16[128,128], index: 5, kind: input, shape index: {}]
  %s6 = inlined_call_operand.hbm [shape: bf16[128,128], index: 6, kind: input, shape index: {}]
  %s7 = inlined_call_operand.hbm [shape: bf16[128,128], index: 7, kind: input, shape index: {}]
  %s8 = inlined_call_operand.hbm [shape: bf16[128,128], index: 8, kind: input, shape index: {}]
  %s9 = inlined_call_operand.vmem [shape: f32[4,128], index: 9, kind: input, shape index: {}]
  %s10 = inlined_call_operand.hbm [shape: f32[1024,128], index: 10, kind: output, shape index: {}]
  %s11 = sld [smem:[#allocation0]]
  $region109: #{tpu_custom_call.1} parent=0
    _
  %s13 = ssub.s32 1, %s11
  %s14 = scalar_select 0, %s13, %s11
  $region1: #{tpu_custom_call.1} parent=0
    #allocation2 [shape = 'u8[262144]{0}', space=vmem, size = 0x40000, scoped, tag = 'input window, operand 0']
    #allocation3 [shape = 's32[2]{0}', space=sflag, size = 0x8, scoped, tag = 'scoped memory for tpu_custom_call.1']
    #allocation4 [shape = 's32[2]{0}', space=sflag, size = 0x8, scoped, tag = 'scoped memory for tpu_custom_call.1']
    #allocation5 [shape = 'u8[524288]{0}', space=vmem, size = 0x80000, scoped, tag = 'input window, operand 1, single buffered']
    #allocation6 [shape = 's32[1]{0}', space=sflag, size = 0x4, scoped, tag = 'scoped memory for tpu_custom_call.1']
    #allocation7 [shape = 'u8[32768]{0}', space=vmem, size = 0x8000, scoped, tag = 'input window, operand 2, single buffered']
    #allocation8 [shape = 'u8[32768]{0}', space=vmem, size = 0x8000, scoped, tag = 'input window, operand 3, single buffered']
    #allocation9 [shape = 's32[1]{0}', space=sflag, size = 0x4, scoped, tag = 'scoped memory for tpu_custom_call.1']
    #allocation10 [shape = 'u8[32768]{0}', space=vmem, size = 0x8000, scoped, tag = 'input window, operand 4, single buffered']
    #allocation11 [shape = 'u8[32768]{0}', space=vmem, size = 0x8000, scoped, tag = 'input window, operand 5, single buffered']
    #allocation12 [shape = 's32[1]{0}', space=sflag, size = 0x4, scoped, tag = 'scoped memory for tpu_custom_call.1']
    #allocation13 [shape = 'u8[32768]{0}', space=vmem, size = 0x8000, scoped, tag = 'input window, operand 6, single buffered']
    #allocation14 [shape = 'u8[32768]{0}', space=vmem, size = 0x8000, scoped, tag = 'input window, operand 7, single buffered']
    #allocation15 [shape = 's32[1]{0}', space=sflag, size = 0x4, scoped, tag = 'scoped memory for tpu_custom_call.1']
    #allocation16 [shape = 'u8[32768]{0}', space=vmem, size = 0x8000, scoped, tag = 'input window, operand 8, single buffered']
    #allocation17 [shape = 'u8[524288]{0}', space=vmem, size = 0x80000, scoped, tag = 'output window, operand 0']
    %15 = vsyncpa [#allocation3], 0
    %s16 = scalar_lea.sflag [#allocation3], 1
    %17 = vsyncpa %s16, 0
    %18 = vsyncpa [#allocation6], 0
    %19 = vsyncpa [#allocation9], 0
    %20 = vsyncpa [#allocation12], 0
    %21 = vsyncpa [#allocation15], 0
    %22 = vsyncpa [#allocation4], 0
    %s23 = scalar_lea.sflag [#allocation4], 1
    %24 = vsyncpa %s23, 0
    loop: start=0, step=1, limit=4
    $region2: #{tpu_custom_call.1} parent=1 // loop_pre_header
      _
    $region3: #{tpu_custom_call.1} parent=1 // loop_header
      %s26 = sphi 0, %s30
      %p27 = scmp.ge.s32.totalorder %s26, 4
      %s36 = sphi 0, %s38
      %s39 = sphi 0, %s36
      %s40 = sphi 0, %s39
      %s56 = sphi 0, %s40
      %s60 = sphi 0, %s60
      %s62 = sphi 0, %s60
      %s63 = sphi 0, %s62
      %s77 = sphi 0, %s63
      %s81 = sphi 0, %s81
      %s83 = sphi 0, %s81
      %s84 = sphi 0, %s83
      %s98 = sphi 0, %s84
      %s102 = sphi 0, %s102
      %s104 = sphi 0, %s102
      %s105 = sphi 0, %s104
      %s119 = sphi 0, %s105
      %s123 = sphi 0, %s123
      %s125 = sphi 0, %s123
      %s126 = sphi 0, %s125
      %s140 = sphi 0, %s126
      %s144 = sphi 0, %s144
      %s146 = sphi 0, %s144
      %s147 = sphi 0, %s146
      %s161 = sphi 0, %s147
      %s165 = sphi 0, %s165
      %s167 = sphi 0, %s165
      %s168 = sphi 0, %s167
      %s182 = sphi 0, %s168
      %s186 = sphi 0, %s186
      %s188 = sphi 0, %s186
      %s189 = sphi 0, %s188
      %s203 = sphi 0, %s189
      %s207 = sphi 0, %s207
      %s209 = sphi 0, %s207
      %s210 = sphi 0, %s209
      %s224 = sphi 0, %s210
      %s228 = sphi 0, %s228
      %s230 = sphi 0, %s228
      %s231 = sphi 0, %s230
      %s245 = sphi 0, %s231
      %s251 = sphi 0, %s253
      %s254 = sphi 0, %s251
      %s255 = sphi 0, %s254
      %s271 = sphi 0, %s255
    $region4: #{tpu_custom_call.1} parent=1 // loop_header_branch
      %29 = sbr.rel (%p27) target = $region8
    $region5: #{tpu_custom_call.1} parent=1 // loop_body
      %s31 = ssub.s32 %s26, 1
      %s32 = ssub.s32 %s26, 2
      %s33 = sadd.s32 %s26, 1
      %s34 = ssub.s32 %s26, %s33
      %p35 = scmp.eq.s32.totalorder %s34, 0
      %s37 = sadd.s32 %s36, 1
      %s38 = scalar_select %p35, %s36, %s37
      %p41 = pneg %p35
      %p42 = scmp.eq.s32.totalorder %s26, 1
      %p43 = por %p41, %p42
      %p44 = scmp.ne.s32.totalorder %s36, %s39
      %p45 = scmp.eq.s32.totalorder %s26, 0
      %p46 = por %p44, %p45
      %p47 = scmp.ne.s32.totalorder %s36, %s39
      %p48 = scmp.eq.s32.totalorder %s31, 1
      %p49 = por %p47, %p48
      %p50 = scmp.ne.s32.totalorder %s39, %s40
      %p51 = scmp.eq.s32.totalorder %s31, 0
      %p52 = por %p50, %p51
      %p53 = scmp.ne.s32.totalorder %s39, %s40
      %p54 = scmp.eq.s32.totalorder %s32, 1
      %p55 = por %p53, %p54
      %p57 = scmp.ne.s32.totalorder %s40, %s56
      %p58 = scmp.eq.s32.totalorder %s32, 0
      %p59 = por %p57, %p58
      %s61 = sadd.s32 %s60, 1
      %p64 = scmp.eq.s32.totalorder %s26, 1
      %p65 = scmp.ne.s32.totalorder %s60, %s62
      %p66 = scmp.eq.s32.totalorder %s26, 0
      %p67 = por %p65, %p66
      %p68 = scmp.ne.s32.totalorder %s60, %s62
      %p69 = scmp.eq.s32.totalorder %s31, 1
      %p70 = por %p68, %p69
      %p71 = scmp.ne.s32.totalorder %s62, %s63
      %p72 = scmp.eq.s32.totalorder %s31, 0
      %p73 = por %p71, %p72
      %p74 = scmp.ne.s32.totalorder %s62, %s63
      %p75 = scmp.eq.s32.totalorder %s32, 1
      %p76 = por %p74, %p75
      %p78 = scmp.ne.s32.totalorder %s63, %s77
      %p79 = scmp.eq.s32.totalorder %s32, 0
      %p80 = por %p78, %p79
      %s82 = sadd.s32 %s81, 1
      %p85 = scmp.eq.s32.totalorder %s26, 1
      %p86 = scmp.ne.s32.totalorder %s81, %s83
      %p87 = scmp.eq.s32.totalorder %s26, 0
      %p88 = por %p86, %p87
      %p89 = scmp.ne.s32.totalorder %s81, %s83
      %p90 = scmp.eq.s32.totalorder %s31, 1
      %p91 = por %p89, %p90
      %p92 = scmp.ne.s32.totalorder %s83, %s84
      %p93 = scmp.eq.s32.totalorder %s31, 0
      %p94 = por %p92, %p93
      %p95 = scmp.ne.s32.totalorder %s83, %s84
      %p96 = scmp.eq.s32.totalorder %s32, 1
      %p97 = por %p95, %p96
      %p99 = scmp.ne.s32.totalorder %s84, %s98
      %p100 = scmp.eq.s32.totalorder %s32, 0
      %p101 = por %p99, %p100
      %s103 = sadd.s32 %s102, 1
      %p106 = scmp.eq.s32.totalorder %s26, 1
      %p107 = scmp.ne.s32.totalorder %s102, %s104
      %p108 = scmp.eq.s32.totalorder %s26, 0
      %p109 = por %p107, %p108
      %p110 = scmp.ne.s32.totalorder %s102, %s104
      %p111 = scmp.eq.s32.totalorder %s31, 1
      %p112 = por %p110, %p111
      %p113 = scmp.ne.s32.totalorder %s104, %s105
      %p114 = scmp.eq.s32.totalorder %s31, 0
      %p115 = por %p113, %p114
      %p116 = scmp.ne.s32.totalorder %s104, %s105
      %p117 = scmp.eq.s32.totalorder %s32, 1
      %p118 = por %p116, %p117
      %p120 = scmp.ne.s32.totalorder %s105, %s119
      %p121 = scmp.eq.s32.totalorder %s32, 0
      %p122 = por %p120, %p121
      %s124 = sadd.s32 %s123, 1
      %p127 = scmp.eq.s32.totalorder %s26, 1
      %p128 = scmp.ne.s32.totalorder %s123, %s125
      %p129 = scmp.eq.s32.totalorder %s26, 0
      %p130 = por %p128, %p129
      %p131 = scmp.ne.s32.totalorder %s123, %s125
      %p132 = scmp.eq.s32.totalorder %s31, 1
      %p133 = por %p131, %p132
      %p134 = scmp.ne.s32.totalorder %s125, %s126
      %p135 = scmp.eq.s32.totalorder %s31, 0
      %p136 = por %p134, %p135
      %p137 = scmp.ne.s32.totalorder %s125, %s126
      %p138 = scmp.eq.s32.totalorder %s32, 1
      %p139 = por %p137, %p138
      %p141 = scmp.ne.s32.totalorder %s126, %s140
      %p142 = scmp.eq.s32.totalorder %s32, 0
      %p143 = por %p141, %p142
      %s145 = sadd.s32 %s144, 1
      %p148 = scmp.eq.s32.totalorder %s26, 1
      %p149 = scmp.ne.s32.totalorder %s144, %s146
      %p150 = scmp.eq.s32.totalorder %s26, 0
      %p151 = por %p149, %p150
      %p152 = scmp.ne.s32.totalorder %s144, %s146
      %p153 = scmp.eq.s32.totalorder %s31, 1
      %p154 = por %p152, %p153
      %p155 = scmp.ne.s32.totalorder %s146, %s147
      %p156 = scmp.eq.s32.totalorder %s31, 0
      %p157 = por %p155, %p156
      %p158 = scmp.ne.s32.totalorder %s146, %s147
      %p159 = scmp.eq.s32.totalorder %s32, 1
      %p160 = por %p158, %p159
      %p162 = scmp.ne.s32.totalorder %s147, %s161
      %p163 = scmp.eq.s32.totalorder %s32, 0
      %p164 = por %p162, %p163
      %s166 = sadd.s32 %s165, 1
      %p169 = scmp.eq.s32.totalorder %s26, 1
      %p170 = scmp.ne.s32.totalorder %s165, %s167
      %p171 = scmp.eq.s32.totalorder %s26, 0
      %p172 = por %p170, %p171
      %p173 = scmp.ne.s32.totalorder %s165, %s167
      %p174 = scmp.eq.s32.totalorder %s31, 1
      %p175 = por %p173, %p174
      %p176 = scmp.ne.s32.totalorder %s167, %s168
      %p177 = scmp.eq.s32.totalorder %s31, 0
      %p178 = por %p176, %p177
      %p179 = scmp.ne.s32.totalorder %s167, %s168
      %p180 = scmp.eq.s32.totalorder %s32, 1
      %p181 = por %p179, %p180
      %p183 = scmp.ne.s32.totalorder %s168, %s182
      %p184 = scmp.eq.s32.totalorder %s32, 0
      %p185 = por %p183, %p184
      %s187 = sadd.s32 %s186, 1
      %p190 = scmp.eq.s32.totalorder %s26, 1
      %p191 = scmp.ne.s32.totalorder %s186, %s188
      %p192 = scmp.eq.s32.totalorder %s26, 0
      %p193 = por %p191, %p192
      %p194 = scmp.ne.s32.totalorder %s186, %s188
      %p195 = scmp.eq.s32.totalorder %s31, 1
      %p196 = por %p194, %p195
      %p197 = scmp.ne.s32.totalorder %s188, %s189
      %p198 = scmp.eq.s32.totalorder %s31, 0
      %p199 = por %p197, %p198
      %p200 = scmp.ne.s32.totalorder %s188, %s189
      %p201 = scmp.eq.s32.totalorder %s32, 1
      %p202 = por %p200, %p201
      %p204 = scmp.ne.s32.totalorder %s189, %s203
      %p205 = scmp.eq.s32.totalorder %s32, 0
      %p206 = por %p204, %p205
      %s208 = sadd.s32 %s207, 1
      %p211 = scmp.eq.s32.totalorder %s26, 1
      %p212 = scmp.ne.s32.totalorder %s207, %s209
      %p213 = scmp.eq.s32.totalorder %s26, 0
      %p214 = por %p212, %p213
      %p215 = scmp.ne.s32.totalorder %s207, %s209
      %p216 = scmp.eq.s32.totalorder %s31, 1
      %p217 = por %p215, %p216
      %p218 = scmp.ne.s32.totalorder %s209, %s210
      %p219 = scmp.eq.s32.totalorder %s31, 0
      %p220 = por %p218, %p219
      %p221 = scmp.ne.s32.totalorder %s209, %s210
      %p222 = scmp.eq.s32.totalorder %s32, 1
      %p223 = por %p221, %p222
      %p225 = scmp.ne.s32.totalorder %s210, %s224
      %p226 = scmp.eq.s32.totalorder %s32, 0
      %p227 = por %p225, %p226
      %s229 = sadd.s32 %s228, 1
      %p232 = scmp.eq.s32.totalorder %s26, 1
      %p233 = scmp.ne.s32.totalorder %s228, %s230
      %p234 = scmp.eq.s32.totalorder %s26, 0
      %p235 = por %p233, %p234
      %p236 = scmp.ne.s32.totalorder %s228, %s230
      %p237 = scmp.eq.s32.totalorder %s31, 1
      %p238 = por %p236, %p237
      %p239 = scmp.ne.s32.totalorder %s230, %s231
      %p240 = scmp.eq.s32.totalorder %s31, 0
      %p241 = por %p239, %p240
      %p242 = scmp.ne.s32.totalorder %s230, %s231
      %p243 = scmp.eq.s32.totalorder %s32, 1
      %p244 = por %p242, %p243
      %p246 = scmp.ne.s32.totalorder %s231, %s245
      %p247 = scmp.eq.s32.totalorder %s32, 0
      %p248 = por %p246, %p247
      %s249 = ssub.s32 %s26, %s33
      %p250 = scmp.eq.s32.totalorder %s249, 0
      %s252 = sadd.s32 %s251, 1
      %s253 = scalar_select %p250, %s251, %s252
      %p256 = pneg %p250
      %p257 = scmp.eq.s32.totalorder %s26, 1
      %p258 = por %p256, %p257
      %p259 = scmp.ne.s32.totalorder %s251, %s254
      %p260 = scmp.eq.s32.totalorder %s26, 0
      %p261 = por %p259, %p260
      %p262 = scmp.ne.s32.totalorder %s251, %s254
      %p263 = scmp.eq.s32.totalorder %s31, 1
      %p264 = por %p262, %p263
      %p265 = scmp.ne.s32.totalorder %s254, %s255
      %p266 = scmp.eq.s32.totalorder %s31, 0
      %p267 = por %p265, %p266
      %p268 = scmp.ne.s32.totalorder %s254, %s255
      %p269 = scmp.eq.s32.totalorder %s32, 1
      %p270 = por %p268, %p269
      %p272 = scmp.ne.s32.totalorder %s255, %s271
      %p273 = scmp.eq.s32.totalorder %s32, 0
      %p274 = por %p272, %p273
      %p275 = scmp.le.s32.totalorder 1, %s26
      %p276 = scmp.lt.s32.totalorder %s26, 3
      %p277 = pnand %p275, %p276
      %p278 = pneg %p277
      // Predicated region
      $region9: #{tpu_custom_call.1} parent=5 // pred_check
        _
      $region10: #{tpu_custom_call.1} parent=5 // pred_check_branch
        %280 = sbr.rel (%p277) target = $region12
      $region11: #{tpu_custom_call.1} parent=5 // pred_region
        %s281 = ssub.s32 %s26, 1
        // Predicated region
        $region13: #{tpu_custom_call.1} parent=11 // pred_check
          %p282 = pneg %p73
        $region14: #{tpu_custom_call.1} parent=11 // pred_check_branch
          %284 = sbr.rel (%p282) target = $region16
        $region15: #{tpu_custom_call.1} parent=11 // pred_region
          %s286 = ssub.s32 16384, 16384
          %287 = vsyncadd [#allocation6], %s286
          %s288 = sshll.u32 [#allocation5], 4
          %s289 = int_to_ptr.vmem [resolvable:$true] %s288
          %294 = dma.hbm_to_vmem [thread:$0]  %s1, 16384, %s289, [#allocation6], 256, 256, 16
        $region16: #{tpu_custom_call.1} parent=11 // pred_fallthru
          _
        // Predicated region
        $region17: #{tpu_custom_call.1} parent=11 // pred_check
          %p295 = pneg %p94
        $region18: #{tpu_custom_call.1} parent=11 // pred_check_branch
          %297 = sbr.rel (%p295) target = $region20
        $region19: #{tpu_custom_call.1} parent=11 // pred_region
          %s299 = ssub.s32 1024, 1024
          %300 = vsyncadd [#allocation6], %s299
          %s301 = sshll.u32 [#allocation7], 4
          %s302 = int_to_ptr.vmem [resolvable:$true] %s301
          %307 = dma.hbm_to_vmem [thread:$0]  %s2, 1024, %s302, [#allocation6], 64, 64, 4
        $region20: #{tpu_custom_call.1} parent=11 // pred_fallthru
          _
        // Predicated region
        $region21: #{tpu_custom_call.1} parent=11 // pred_check
          %p308 = pneg %p115
        $region22: #{tpu_custom_call.1} parent=11 // pred_check_branch
          %310 = sbr.rel (%p308) target = $region24
        $region23: #{tpu_custom_call.1} parent=11 // pred_region
          %s312 = ssub.s32 1024, 1024
          %313 = vsyncadd [#allocation9], %s312
          %s314 = sshll.u32 [#allocation8], 4
          %s315 = int_to_ptr.vmem [resolvable:$true] %s314
          %320 = dma.hbm_to_vmem [thread:$0]  %s3, 1024, %s315, [#allocation9], 64, 64, 4
        $region24: #{tpu_custom_call.1} parent=11 // pred_fallthru
          _
        // Predicated region
        $region25: #{tpu_custom_call.1} parent=11 // pred_check
          %p321 = pneg %p136
        $region26: #{tpu_custom_call.1} parent=11 // pred_check_branch
          %323 = sbr.rel (%p321) target = $region28
        $region27: #{tpu_custom_call.1} parent=11 // pred_region
          %s325 = ssub.s32 1024, 1024
          %326 = vsyncadd [#allocation9], %s325
          %s327 = sshll.u32 [#allocation10], 4
          %s328 = int_to_ptr.vmem [resolvable:$true] %s327
          %333 = dma.hbm_to_vmem [thread:$0]  %s4, 1024, %s328, [#allocation9], 64, 64, 4
        $region28: #{tpu_custom_call.1} parent=11 // pred_fallthru
          _
        // Predicated region
        $region29: #{tpu_custom_call.1} parent=11 // pred_check
          %p334 = pneg %p157
        $region30: #{tpu_custom_call.1} parent=11 // pred_check_branch
          %336 = sbr.rel (%p334) target = $region32
        $region31: #{tpu_custom_call.1} parent=11 // pred_region
          %s338 = ssub.s32 1024, 1024
          %339 = vsyncadd [#allocation12], %s338
          %s340 = sshll.u32 [#allocation11], 4
          %s341 = int_to_ptr.vmem [resolvable:$true] %s340
          %346 = dma.hbm_to_vmem [thread:$0]  %s5, 1024, %s341, [#allocation12], 64, 64, 4
        $region32: #{tpu_custom_call.1} parent=11 // pred_fallthru
          _
        // Predicated region
        $region33: #{tpu_custom_call.1} parent=11 // pred_check
          %p347 = pneg %p178
        $region34: #{tpu_custom_call.1} parent=11 // pred_check_branch
          %349 = sbr.rel (%p347) target = $region36
        $region35: #{tpu_custom_call.1} parent=11 // pred_region
          %s351 = ssub.s32 1024, 1024
          %352 = vsyncadd [#allocation12], %s351
          %s353 = sshll.u32 [#allocation13], 4
          %s354 = int_to_ptr.vmem [resolvable:$true] %s353
          %359 = dma.hbm_to_vmem [thread:$0]  %s6, 1024, %s354, [#allocation12], 64, 64, 4
        $region36: #{tpu_custom_call.1} parent=11 // pred_fallthru
          _
        // Predicated region
        $region37: #{tpu_custom_call.1} parent=11 // pred_check
          %p360 = pneg %p199
        $region38: #{tpu_custom_call.1} parent=11 // pred_check_branch
          %362 = sbr.rel (%p360) target = $region40
        $region39: #{tpu_custom_call.1} parent=11 // pred_region
          %s364 = ssub.s32 1024, 1024
          %365 = vsyncadd [#allocation15], %s364
          %s366 = sshll.u32 [#allocation14], 4
          %s367 = int_to_ptr.vmem [resolvable:$true] %s366
          %372 = dma.hbm_to_vmem [thread:$0]  %s7, 1024, %s367, [#allocation15], 64, 64, 4
        $region40: #{tpu_custom_call.1} parent=11 // pred_fallthru
          _
        // Predicated region
        $region41: #{tpu_custom_call.1} parent=11 // pred_check
          %p373 = pneg %p220
        $region42: #{tpu_custom_call.1} parent=11 // pred_check_branch
          %375 = sbr.rel (%p373) target = $region44
        $region43: #{tpu_custom_call.1} parent=11 // pred_region
          %s377 = ssub.s32 1024, 1024
          %378 = vsyncadd [#allocation15], %s377
          %s379 = sshll.u32 [#allocation16], 4
          %s380 = int_to_ptr.vmem [resolvable:$true] %s379
          %385 = dma.hbm_to_vmem [thread:$0]  %s8, 1024, %s380, [#allocation15], 64, 64, 4
        $region44: #{tpu_custom_call.1} parent=11 // pred_fallthru
          _
        // Predicated region
        $region45: #{tpu_custom_call.1} parent=11 // pred_check
          %p386 = pneg %p241
        $region46: #{tpu_custom_call.1} parent=11 // pred_check_branch
          %388 = sbr.rel (%p386) target = $region48
        $region47: #{tpu_custom_call.1} parent=11 // pred_region
          _
        $region48: #{tpu_custom_call.1} parent=11 // pred_fallthru
          _
      $region12: #{tpu_custom_call.1} parent=5 // pred_fallthru
        _
      %p389 = scmp.lt.s32.totalorder %s26, 2
      // Predicated region
      $region49: #{tpu_custom_call.1} parent=5 // pred_check
        %p390 = pneg %p389
      $region50: #{tpu_custom_call.1} parent=5 // pred_check_branch
        %392 = sbr.rel (%p390) target = $region52
      $region51: #{tpu_custom_call.1} parent=5 // pred_region
        // Predicated region
        $region53: #{tpu_custom_call.1} parent=51 // pred_check
          %p393 = pneg %p46
        $region54: #{tpu_custom_call.1} parent=51 // pred_check_branch
          %395 = sbr.rel (%p393) target = $region56
        $region55: #{tpu_custom_call.1} parent=51 // pred_region
          %s396 = sand.u32 %s36, 1
          %s397 = scalar_lea.sflag [#allocation3], %s396
          %s398 = sand.u32 %s36, 1
          %s399 = smul.addr %s398, 256
          %s400 = scalar_lea.vmem [#allocation2], %s399
          %s401 = smul.u32 64, %s26
          %s403 = ssub.s32 4096, 4096
          %404 = vsyncadd %s397, %s403
          %s405 = smul.addr %s401, 64
          %s406 = scalar_lea.hbm %s0, %s405
          %s407 = sshll.u32 %s400, 4
          %s408 = int_to_ptr.vmem [resolvable:$true] %s407
          %413 = dma.hbm_to_vmem [thread:$0]  %s406, 4096, %s408, %s397, 64, 64, 4
        $region56: #{tpu_custom_call.1} parent=51 // pred_fallthru
          _
      $region52: #{tpu_custom_call.1} parent=5 // pred_fallthru
        _
      %p414 = scmp.le.s32.totalorder 1, %s26
      %p415 = scmp.lt.s32.totalorder %s26, 3
      %p416 = pnand %p414, %p415
      %p417 = pneg %p416
      // Predicated region
      $region57: #{tpu_custom_call.1} parent=5 // pred_check
        _
      $region58: #{tpu_custom_call.1} parent=5 // pred_check_branch
        %419 = sbr.rel (%p416) target = $region60
      $region59: #{tpu_custom_call.1} parent=5 // pred_region
        %s420 = ssub.s32 %s26, 1
        %s421 = sand.u32 %s39, 1
        %s422 = scalar_lea.sflag [#allocation3], %s421
        %s423 = sand.u32 %s39, 1
        %s424 = smul.addr %s423, 256
        %s425 = scalar_lea.vmem [#allocation2], %s424
        // Predicated region
        $region61: #{tpu_custom_call.1} parent=59 // pred_check
          %p426 = pneg %p52
        $region62: #{tpu_custom_call.1} parent=59 // pred_check_branch
          %428 = sbr.rel (%p426) target = $region64
        $region63: #{tpu_custom_call.1} parent=59 // pred_region
          %429 = dma.done %s422, 4096
        $region64: #{tpu_custom_call.1} parent=59 // pred_fallthru
          _
        // Predicated region
        $region65: #{tpu_custom_call.1} parent=59 // pred_check
          %p430 = pneg %p73
        $region66: #{tpu_custom_call.1} parent=59 // pred_check_branch
          %432 = sbr.rel (%p430) target = $region68
        $region67: #{tpu_custom_call.1} parent=59 // pred_region
          %433 = dma.done [#allocation6], 16384
        $region68: #{tpu_custom_call.1} parent=59 // pred_fallthru
          _
        // Predicated region
        $region69: #{tpu_custom_call.1} parent=59 // pred_check
          %p434 = pneg %p94
        $region70: #{tpu_custom_call.1} parent=59 // pred_check_branch
          %436 = sbr.rel (%p434) target = $region72
        $region71: #{tpu_custom_call.1} parent=59 // pred_region
          %437 = dma.done [#allocation6], 1024
        $region72: #{tpu_custom_call.1} parent=59 // pred_fallthru
          _
        // Predicated region
        $region73: #{tpu_custom_call.1} parent=59 // pred_check
          %p438 = pneg %p115
        $region74: #{tpu_custom_call.1} parent=59 // pred_check_branch
          %440 = sbr.rel (%p438) target = $region76
        $region75: #{tpu_custom_call.1} parent=59 // pred_region
          %441 = dma.done [#allocation9], 1024
        $region76: #{tpu_custom_call.1} parent=59 // pred_fallthru
          _
        // Predicated region
        $region77: #{tpu_custom_call.1} parent=59 // pred_check
          %p442 = pneg %p136
        $region78: #{tpu_custom_call.1} parent=59 // pred_check_branch
          %444 = sbr.rel (%p442) target = $region80
        $region79: #{tpu_custom_call.1} parent=59 // pred_region
          %445 = dma.done [#allocation9], 1024
        $region80: #{tpu_custom_call.1} parent=59 // pred_fallthru
          _
        // Predicated region
        $region81: #{tpu_custom_call.1} parent=59 // pred_check
          %p446 = pneg %p157
        $region82: #{tpu_custom_call.1} parent=59 // pred_check_branch
          %448 = sbr.rel (%p446) target = $region84
        $region83: #{tpu_custom_call.1} parent=59 // pred_region
          %449 = dma.done [#allocation12], 1024
        $region84: #{tpu_custom_call.1} parent=59 // pred_fallthru
          _
        // Predicated region
        $region85: #{tpu_custom_call.1} parent=59 // pred_check
          %p450 = pneg %p178
        $region86: #{tpu_custom_call.1} parent=59 // pred_check_branch
          %452 = sbr.rel (%p450) target = $region88
        $region87: #{tpu_custom_call.1} parent=59 // pred_region
          %453 = dma.done [#allocation12], 1024
        $region88: #{tpu_custom_call.1} parent=59 // pred_fallthru
          _
        // Predicated region
        $region89: #{tpu_custom_call.1} parent=59 // pred_check
          %p454 = pneg %p199
        $region90: #{tpu_custom_call.1} parent=59 // pred_check_branch
          %456 = sbr.rel (%p454) target = $region92
        $region91: #{tpu_custom_call.1} parent=59 // pred_region
          %457 = dma.done [#allocation15], 1024
        $region92: #{tpu_custom_call.1} parent=59 // pred_fallthru
          _
        // Predicated region
        $region93: #{tpu_custom_call.1} parent=59 // pred_check
          %p458 = pneg %p220
        $region94: #{tpu_custom_call.1} parent=59 // pred_check_branch
          %460 = sbr.rel (%p458) target = $region96
        $region95: #{tpu_custom_call.1} parent=59 // pred_region
          %461 = dma.done [#allocation15], 1024
        $region96: #{tpu_custom_call.1} parent=59 // pred_fallthru
          _
        %s462 = sand.u32 %s39, 1
        %s463 = scalar_lea.sflag [#allocation3], %s462
        %s464 = sand.u32 %s39, 1
        %s465 = smul.addr %s464, 256
        %s466 = scalar_lea.vmem [#allocation2], %s465
        %p467 = pneg %p52
        %p468 = pneg %p49
        %p469 = pneg %p73
        %p470 = pneg %p70
        %p471 = pneg %p94
        %p472 = pneg %p91
        %p473 = pneg %p115
        %p474 = pneg %p112
        %p475 = pneg %p136
        %p476 = pneg %p133
        %p477 = pneg %p157
        %p478 = pneg %p154
        %p479 = pneg %p178
        %p480 = pneg %p175
        %p481 = pneg %p199
        %p482 = pneg %p196
        %p483 = pneg %p220
        %p484 = pneg %p217
        %p485 = pneg %p241
        %p486 = pneg %p238
        %p487 = pneg %p267
        %p488 = pneg %p264
        %s489 = sand.u32 %s254, 1
        %s490 = scalar_lea.sflag [#allocation4], %s489
        %s491 = sand.u32 %s254, 1
        %s492 = smul.addr %s491, 512
        %s493 = scalar_lea.vmem [#allocation17], %s492
        %s494 = smul.u32 64, %s31
        %s495 = smul.u32 64, %s31
        %v497 = vld [vmem:[%s425] sm:$0xf]
        %v498 = vld [vmem:[%s425 + $0x4] sm:$0xf]
        %v499 = vld [vmem:[%s425 + $0x8] sm:$0xf]
        %v500 = vld [vmem:[%s425 + $0xc] sm:$0xf]
        %v501 = vld [vmem:[%s425 + $0x10] sm:$0xf]
        %v502 = vld [vmem:[%s425 + $0x14] sm:$0xf]
        %v503 = vld [vmem:[%s425 + $0x18] sm:$0xf]
        %v504 = vld [vmem:[%s425 + $0x1c] sm:$0xf]
        %v505 = vld [vmem:[%s425 + $0x20] sm:$0xf]
        %v506 = vld [vmem:[%s425 + $0x24] sm:$0xf]
        %v507 = vld [vmem:[%s425 + $0x28] sm:$0xf]
        %v508 = vld [vmem:[%s425 + $0x2c] sm:$0xf]
        %v509 = vld [vmem:[%s425 + $0x30] sm:$0xf]
        %v510 = vld [vmem:[%s425 + $0x34] sm:$0xf]
        %v511 = vld [vmem:[%s425 + $0x38] sm:$0xf]
        %v512 = vld [vmem:[%s425 + $0x3c] sm:$0xf]
        %v513 = vld [vmem:[%s425 + $0x40] sm:$0xf]
        %v514 = vld [vmem:[%s425 + $0x44] sm:$0xf]
        %v515 = vld [vmem:[%s425 + $0x48] sm:$0xf]
        %v516 = vld [vmem:[%s425 + $0x4c] sm:$0xf]
        %v517 = vld [vmem:[%s425 + $0x50] sm:$0xf]
        %v518 = vld [vmem:[%s425 + $0x54] sm:$0xf]
        %v519 = vld [vmem:[%s425 + $0x58] sm:$0xf]
        %v520 = vld [vmem:[%s425 + $0x5c] sm:$0xf]
        %v521 = vld [vmem:[%s425 + $0x60] sm:$0xf]
        %v522 = vld [vmem:[%s425 + $0x64] sm:$0xf]
        %v523 = vld [vmem:[%s425 + $0x68] sm:$0xf]
        %v524 = vld [vmem:[%s425 + $0x6c] sm:$0xf]
        %v525 = vld [vmem:[%s425 + $0x70] sm:$0xf]
        %v526 = vld [vmem:[%s425 + $0x74] sm:$0xf]
        %v527 = vld [vmem:[%s425 + $0x78] sm:$0xf]
        %v528 = vld [vmem:[%s425 + $0x7c] sm:$0xf]
        %v529 = vld [vmem:[%s425 + $0x80] sm:$0xf]
        %v530 = vld [vmem:[%s425 + $0x84] sm:$0xf]
        %v531 = vld [vmem:[%s425 + $0x88] sm:$0xf]
        %v532 = vld [vmem:[%s425 + $0x8c] sm:$0xf]
        %v533 = vld [vmem:[%s425 + $0x90] sm:$0xf]
        %v534 = vld [vmem:[%s425 + $0x94] sm:$0xf]
        %v535 = vld [vmem:[%s425 + $0x98] sm:$0xf]
        %v536 = vld [vmem:[%s425 + $0x9c] sm:$0xf]
        %v537 = vld [vmem:[%s425 + $0xa0] sm:$0xf]
        %v538 = vld [vmem:[%s425 + $0xa4] sm:$0xf]
        %v539 = vld [vmem:[%s425 + $0xa8] sm:$0xf]
        %v540 = vld [vmem:[%s425 + $0xac] sm:$0xf]
        %v541 = vld [vmem:[%s425 + $0xb0] sm:$0xf]
        %v542 = vld [vmem:[%s425 + $0xb4] sm:$0xf]
        %v543 = vld [vmem:[%s425 + $0xb8] sm:$0xf]
        %v544 = vld [vmem:[%s425 + $0xbc] sm:$0xf]
        %v545 = vld [vmem:[%s425 + $0xc0] sm:$0xf]
        %v546 = vld [vmem:[%s425 + $0xc4] sm:$0xf]
        %v547 = vld [vmem:[%s425 + $0xc8] sm:$0xf]
        %v548 = vld [vmem:[%s425 + $0xcc] sm:$0xf]
        %v549 = vld [vmem:[%s425 + $0xd0] sm:$0xf]
        %v550 = vld [vmem:[%s425 + $0xd4] sm:$0xf]
        %v551 = vld [vmem:[%s425 + $0xd8] sm:$0xf]
        %v552 = vld [vmem:[%s425 + $0xdc] sm:$0xf]
        %v553 = vld [vmem:[%s425 + $0xe0] sm:$0xf]
        %v554 = vld [vmem:[%s425 + $0xe4] sm:$0xf]
        %v555 = vld [vmem:[%s425 + $0xe8] sm:$0xf]
        %v556 = vld [vmem:[%s425 + $0xec] sm:$0xf]
        %v557 = vld [vmem:[%s425 + $0xf0] sm:$0xf]
        %v558 = vld [vmem:[%s425 + $0xf4] sm:$0xf]
        %v559 = vld [vmem:[%s425 + $0xf8] sm:$0xf]
        %v560 = vld [vmem:[%s425 + $0xfc] sm:$0xf]
        %v561 = vld [vmem:[#allocation5] sm:$0xff]
        %v562 = vld [vmem:[#allocation5 + $0x8] sm:$0xff]
        %v563 = vld [vmem:[#allocation5 + $0x10] sm:$0xff]
        %v564 = vld [vmem:[#allocation5 + $0x18] sm:$0xff]
        %v565 = vld [vmem:[#allocation5 + $0x20] sm:$0xff]
        %v566 = vld [vmem:[#allocation5 + $0x28] sm:$0xff]
        %v567 = vld [vmem:[#allocation5 + $0x30] sm:$0xff]
        %v568 = vld [vmem:[#allocation5 + $0x38] sm:$0xff]
        %v569 = vld [vmem:[#allocation5 + $0x40] sm:$0xff]
        %v570 = vld [vmem:[#allocation5 + $0x48] sm:$0xff]
        %v571 = vld [vmem:[#allocation5 + $0x50] sm:$0xff]
        %v572 = vld [vmem:[#allocation5 + $0x58] sm:$0xff]
        %v573 = vld [vmem:[#allocation5 + $0x60] sm:$0xff]
        %v574 = vld [vmem:[#allocation5 + $0x68] sm:$0xff]
        %v575 = vld [vmem:[#allocation5 + $0x70] sm:$0xff]
        %v576 = vld [vmem:[#allocation5 + $0x78] sm:$0xff]
        %v577 = vld [vmem:[#allocation5 + $0x80] sm:$0xff]
        %v578 = vld [vmem:[#allocation5 + $0x88] sm:$0xff]
        %v579 = vld [vmem:[#allocation5 + $0x90] sm:$0xff]
        %v580 = vld [vmem:[#allocation5 + $0x98] sm:$0xff]
        %v581 = vld [vmem:[#allocation5 + $0xa0] sm:$0xff]
        %v582 = vld [vmem:[#allocation5 + $0xa8] sm:$0xff]
        %v583 = vld [vmem:[#allocation5 + $0xb0] sm:$0xff]
        %v584 = vld [vmem:[#allocation5 + $0xb8] sm:$0xff]
        %v585 = vld [vmem:[#allocation5 + $0xc0] sm:$0xff]
        %v586 = vld [vmem:[#allocation5 + $0xc8] sm:$0xff]
        %v587 = vld [vmem:[#allocation5 + $0xd0] sm:$0xff]
        %v588 = vld [vmem:[#allocation5 + $0xd8] sm:$0xff]
        %v589 = vld [vmem:[#allocation5 + $0xe0] sm:$0xff]
        %v590 = vld [vmem:[#allocation5 + $0xe8] sm:$0xff]
        %v591 = vld [vmem:[#allocation5 + $0xf0] sm:$0xff]
        %v592 = vld [vmem:[#allocation5 + $0xf8] sm:$0xff]
        %v593 = vld [vmem:[#allocation5 + $0x100] sm:$0xff]
        %v594 = vld [vmem:[#allocation5 + $0x108] sm:$0xff]
        %v595 = vld [vmem:[#allocation5 + $0x110] sm:$0xff]
        %v596 = vld [vmem:[#allocation5 + $0x118] sm:$0xff]
        %v597 = vld [vmem:[#allocation5 + $0x120] sm:$0xff]
        %v598 = vld [vmem:[#allocation5 + $0x128] sm:$0xff]
        %v599 = vld [vmem:[#allocation5 + $0x130] sm:$0xff]
        %v600 = vld [vmem:[#allocation5 + $0x138] sm:$0xff]
        %v601 = vld [vmem:[#allocation5 + $0x140] sm:$0xff]
        %v602 = vld [vmem:[#allocation5 + $0x148] sm:$0xff]
        %v603 = vld [vmem:[#allocation5 + $0x150] sm:$0xff]
        %v604 = vld [vmem:[#allocation5 + $0x158] sm:$0xff]
        %v605 = vld [vmem:[#allocation5 + $0x160] sm:$0xff]
        %v606 = vld [vmem:[#allocation5 + $0x168] sm:$0xff]
        %v607 = vld [vmem:[#allocation5 + $0x170] sm:$0xff]
        %v608 = vld [vmem:[#allocation5 + $0x178] sm:$0xff]
        %v609 = vld [vmem:[#allocation5 + $0x180] sm:$0xff]
        %v610 = vld [vmem:[#allocation5 + $0x188] sm:$0xff]
        %v611 = vld [vmem:[#allocation5 + $0x190] sm:$0xff]
        %v612 = vld [vmem:[#allocation5 + $0x198] sm:$0xff]
        %v613 = vld [vmem:[#allocation5 + $0x1a0] sm:$0xff]
        %v614 = vld [vmem:[#allocation5 + $0x1a8] sm:$0xff]
        %v615 = vld [vmem:[#allocation5 + $0x1b0] sm:$0xff]
        %v616 = vld [vmem:[#allocation5 + $0x1b8] sm:$0xff]
        %v617 = vld [vmem:[#allocation5 + $0x1c0] sm:$0xff]
        %v618 = vld [vmem:[#allocation5 + $0x1c8] sm:$0xff]
        %v619 = vld [vmem:[#allocation5 + $0x1d0] sm:$0xff]
        %v620 = vld [vmem:[#allocation5 + $0x1d8] sm:$0xff]
        %v621 = vld [vmem:[#allocation5 + $0x1e0] sm:$0xff]
        %v622 = vld [vmem:[#allocation5 + $0x1e8] sm:$0xff]
        %v623 = vld [vmem:[#allocation5 + $0x1f0] sm:$0xff]
        %v624 = vld [vmem:[#allocation5 + $0x1f8] sm:$0xff]
        %v625 = vld [vmem:[#allocation5 + $0x200] sm:$0xff]
        %v626 = vld [vmem:[#allocation5 + $0x208] sm:$0xff]
        %v627 = vld [vmem:[#allocation5 + $0x210] sm:$0xff]
        %v628 = vld [vmem:[#allocation5 + $0x218] sm:$0xff]
        %v629 = vld [vmem:[#allocation5 + $0x220] sm:$0xff]
        %v630 = vld [vmem:[#allocation5 + $0x228] sm:$0xff]
        %v631 = vld [vmem:[#allocation5 + $0x230] sm:$0xff]
        %v632 = vld [vmem:[#allocation5 + $0x238] sm:$0xff]
        %v633 = vld [vmem:[#allocation5 + $0x240] sm:$0xff]
        %v634 = vld [vmem:[#allocation5 + $0x248] sm:$0xff]
        %v635 = vld [vmem:[#allocation5 + $0x250] sm:$0xff]
        %v636 = vld [vmem:[#allocation5 + $0x258] sm:$0xff]
        %v637 = vld [vmem:[#allocation5 + $0x260] sm:$0xff]
        %v638 = vld [vmem:[#allocation5 + $0x268] sm:$0xff]
        %v639 = vld [vmem:[#allocation5 + $0x270] sm:$0xff]
        %v640 = vld [vmem:[#allocation5 + $0x278] sm:$0xff]
        %v641 = vld [vmem:[#allocation5 + $0x280] sm:$0xff]
        %v642 = vld [vmem:[#allocation5 + $0x288] sm:$0xff]
        %v643 = vld [vmem:[#allocation5 + $0x290] sm:$0xff]
        %v644 = vld [vmem:[#allocation5 + $0x298] sm:$0xff]
        %v645 = vld [vmem:[#allocation5 + $0x2a0] sm:$0xff]
        %v646 = vld [vmem:[#allocation5 + $0x2a8] sm:$0xff]
        %v647 = vld [vmem:[#allocation5 + $0x2b0] sm:$0xff]
        %v648 = vld [vmem:[#allocation5 + $0x2b8] sm:$0xff]
        %v649 = vld [vmem:[#allocation5 + $0x2c0] sm:$0xff]
        %v650 = vld [vmem:[#allocation5 + $0x2c8] sm:$0xff]
        %v651 = vld [vmem:[#allocation5 + $0x2d0] sm:$0xff]
        %v652 = vld [vmem:[#allocation5 + $0x2d8] sm:$0xff]
        %v653 = vld [vmem:[#allocation5 + $0x2e0] sm:$0xff]
        %v654 = vld [vmem:[#allocation5 + $0x2e8] sm:$0xff]
        %v655 = vld [vmem:[#allocation5 + $0x2f0] sm:$0xff]
        %v656 = vld [vmem:[#allocation5 + $0x2f8] sm:$0xff]
        %v657 = vld [vmem:[#allocation5 + $0x300] sm:$0xff]
        %v658 = vld [vmem:[#allocation5 + $0x308] sm:$0xff]
        %v659 = vld [vmem:[#allocation5 + $0x310] sm:$0xff]
        %v660 = vld [vmem:[#allocation5 + $0x318] sm:$0xff]
        %v661 = vld [vmem:[#allocation5 + $0x320] sm:$0xff]
        %v662 = vld [vmem:[#allocation5 + $0x328] sm:$0xff]
        %v663 = vld [vmem:[#allocation5 + $0x330] sm:$0xff]
        %v664 = vld [vmem:[#allocation5 + $0x338] sm:$0xff]
        %v665 = vld [vmem:[#allocation5 + $0x340] sm:$0xff]
        %v666 = vld [vmem:[#allocation5 + $0x348] sm:$0xff]
        %v667 = vld [vmem:[#allocation5 + $0x350] sm:$0xff]
        %v668 = vld [vmem:[#allocation5 + $0x358] sm:$0xff]
        %v669 = vld [vmem:[#allocation5 + $0x360] sm:$0xff]
        %v670 = vld [vmem:[#allocation5 + $0x368] sm:$0xff]
        %v671 = vld [vmem:[#allocation5 + $0x370] sm:$0xff]
        %v672 = vld [vmem:[#allocation5 + $0x378] sm:$0xff]
        %v673 = vld [vmem:[#allocation5 + $0x380] sm:$0xff]
        %v674 = vld [vmem:[#allocation5 + $0x388] sm:$0xff]
        %v675 = vld [vmem:[#allocation5 + $0x390] sm:$0xff]
        %v676 = vld [vmem:[#allocation5 + $0x398] sm:$0xff]
        %v677 = vld [vmem:[#allocation5 + $0x3a0] sm:$0xff]
        %v678 = vld [vmem:[#allocation5 + $0x3a8] sm:$0xff]
        %v679 = vld [vmem:[#allocation5 + $0x3b0] sm:$0xff]
        %v680 = vld [vmem:[#allocation5 + $0x3b8] sm:$0xff]
        %v681 = vld [vmem:[#allocation5 + $0x3c0] sm:$0xff]
        %v682 = vld [vmem:[#allocation5 + $0x3c8] sm:$0xff]
        %v683 = vld [vmem:[#allocation5 + $0x3d0] sm:$0xff]
        %v684 = vld [vmem:[#allocation5 + $0x3d8] sm:$0xff]
        %v685 = vld [vmem:[#allocation5 + $0x3e0] sm:$0xff]
        %v686 = vld [vmem:[#allocation5 + $0x3e8] sm:$0xff]
        %v687 = vld [vmem:[#allocation5 + $0x3f0] sm:$0xff]
        %v688 = vld [vmem:[#allocation5 + $0x3f8] sm:$0xff]
        %v689 = vld [vmem:[%s9] sm:$0xf]
        %v818 = vunpack.c.l.b16 %v561
        %v819 = vunpack.c.h.b16 %v561
        %v820 = vunpack.c.l.b16 %v562
        %v821 = vunpack.c.h.b16 %v562
        %v822 = vunpack.c.l.b16 %v563
        %v823 = vunpack.c.h.b16 %v563
        %v824 = vunpack.c.l.b16 %v564
        %v825 = vunpack.c.h.b16 %v564
        %v826 = vunpack.c.l.b16 %v565
        %v827 = vunpack.c.h.b16 %v565
        %v828 = vunpack.c.l.b16 %v566
        %v829 = vunpack.c.h.b16 %v566
        %v830 = vunpack.c.l.b16 %v567
        %v831 = vunpack.c.h.b16 %v567
        %v832 = vunpack.c.l.b16 %v568
        %v833 = vunpack.c.h.b16 %v568
        %v834 = vunpack.c.l.b16 %v569
        %v835 = vunpack.c.h.b16 %v569
        %v836 = vunpack.c.l.b16 %v570
        %v837 = vunpack.c.h.b16 %v570
        %v838 = vunpack.c.l.b16 %v571
        %v839 = vunpack.c.h.b16 %v571
        %v840 = vunpack.c.l.b16 %v572
        %v841 = vunpack.c.h.b16 %v572
        %v842 = vunpack.c.l.b16 %v573
        %v843 = vunpack.c.h.b16 %v573
        %v844 = vunpack.c.l.b16 %v574
        %v845 = vunpack.c.h.b16 %v574
        %v846 = vunpack.c.l.b16 %v575
        %v847 = vunpack.c.h.b16 %v575
        %v848 = vunpack.c.l.b16 %v576
        %v849 = vunpack.c.h.b16 %v576
        %v850 = vunpack.c.l.b16 %v577
        %v851 = vunpack.c.h.b16 %v577
        %v852 = vunpack.c.l.b16 %v578
        %v853 = vunpack.c.h.b16 %v578
        %v854 = vunpack.c.l.b16 %v579
        %v855 = vunpack.c.h.b16 %v579
        %v856 = vunpack.c.l.b16 %v580
        %v857 = vunpack.c.h.b16 %v580
        %v858 = vunpack.c.l.b16 %v581
        %v859 = vunpack.c.h.b16 %v581
        %v860 = vunpack.c.l.b16 %v582
        %v861 = vunpack.c.h.b16 %v582
        %v862 = vunpack.c.l.b16 %v583
        %v863 = vunpack.c.h.b16 %v583
        %v864 = vunpack.c.l.b16 %v584
        %v865 = vunpack.c.h.b16 %v584
        %v866 = vunpack.c.l.b16 %v585
        %v867 = vunpack.c.h.b16 %v585
        %v868 = vunpack.c.l.b16 %v586
        %v869 = vunpack.c.h.b16 %v586
        %v870 = vunpack.c.l.b16 %v587
        %v871 = vunpack.c.h.b16 %v587
        %v872 = vunpack.c.l.b16 %v588
        %v873 = vunpack.c.h.b16 %v588
        %v874 = vunpack.c.l.b16 %v589
        %v875 = vunpack.c.h.b16 %v589
        %v876 = vunpack.c.l.b16 %v590
        %v877 = vunpack.c.h.b16 %v590
        %v878 = vunpack.c.l.b16 %v591
        %v879 = vunpack.c.h.b16 %v591
        %v880 = vunpack.c.l.b16 %v592
        %v881 = vunpack.c.h.b16 %v592
        %v882 = vunpack.c.l.b16 %v593
        %v883 = vunpack.c.h.b16 %v593
        %v884 = vunpack.c.l.b16 %v594
        %v885 = vunpack.c.h.b16 %v594
        %v886 = vunpack.c.l.b16 %v595
        %v887 = vunpack.c.h.b16 %v595
        %v888 = vunpack.c.l.b16 %v596
        %v889 = vunpack.c.h.b16 %v596
        %v890 = vunpack.c.l.b16 %v597
        %v891 = vunpack.c.h.b16 %v597
        %v892 = vunpack.c.l.b16 %v598
        %v893 = vunpack.c.h.b16 %v598
        %v894 = vunpack.c.l.b16 %v599
        %v895 = vunpack.c.h.b16 %v599
        %v896 = vunpack.c.l.b16 %v600
        %v897 = vunpack.c.h.b16 %v600
        %v898 = vunpack.c.l.b16 %v601
        %v899 = vunpack.c.h.b16 %v601
        %v900 = vunpack.c.l.b16 %v602
        %v901 = vunpack.c.h.b16 %v602
        %v902 = vunpack.c.l.b16 %v603
        %v903 = vunpack.c.h.b16 %v603
        %v904 = vunpack.c.l.b16 %v604
        %v905 = vunpack.c.h.b16 %v604
        %v906 = vunpack.c.l.b16 %v605
        %v907 = vunpack.c.h.b16 %v605
        %v908 = vunpack.c.l.b16 %v606
        %v909 = vunpack.c.h.b16 %v606
        %v910 = vunpack.c.l.b16 %v607
        %v911 = vunpack.c.h.b16 %v607
        %v912 = vunpack.c.l.b16 %v608
        %v913 = vunpack.c.h.b16 %v608
        %v914 = vunpack.c.l.b16 %v609
        %v915 = vunpack.c.h.b16 %v609
        %v916 = vunpack.c.l.b16 %v610
        %v917 = vunpack.c.h.b16 %v610
        %v918 = vunpack.c.l.b16 %v611
        %v919 = vunpack.c.h.b16 %v611
        %v920 = vunpack.c.l.b16 %v612
        %v921 = vunpack.c.h.b16 %v612
        %v922 = vunpack.c.l.b16 %v613
        %v923 = vunpack.c.h.b16 %v613
        %v924 = vunpack.c.l.b16 %v614
        %v925 = vunpack.c.h.b16 %v614
        %v926 = vunpack.c.l.b16 %v615
        %v927 = vunpack.c.h.b16 %v615
        %v928 = vunpack.c.l.b16 %v616
        %v929 = vunpack.c.h.b16 %v616
        %v930 = vunpack.c.l.b16 %v617
        %v931 = vunpack.c.h.b16 %v617
        %v932 = vunpack.c.l.b16 %v618
        %v933 = vunpack.c.h.b16 %v618
        %v934 = vunpack.c.l.b16 %v619
        %v935 = vunpack.c.h.b16 %v619
        %v936 = vunpack.c.l.b16 %v620
        %v937 = vunpack.c.h.b16 %v620
        %v938 = vunpack.c.l.b16 %v621
        %v939 = vunpack.c.h.b16 %v621
        %v940 = vunpack.c.l.b16 %v622
        %v941 = vunpack.c.h.b16 %v622
        %v942 = vunpack.c.l.b16 %v623
        %v943 = vunpack.c.h.b16 %v623
        %v944 = vunpack.c.l.b16 %v624
        %v945 = vunpack.c.h.b16 %v624
        %v946 = vunpack.c.l.b16 %v625
        %v947 = vunpack.c.h.b16 %v625
        %v948 = vunpack.c.l.b16 %v626
        %v949 = vunpack.c.h.b16 %v626
        %v950 = vunpack.c.l.b16 %v627
        %v951 = vunpack.c.h.b16 %v627
        %v952 = vunpack.c.l.b16 %v628
        %v953 = vunpack.c.h.b16 %v628
        %v954 = vunpack.c.l.b16 %v629
        %v955 = vunpack.c.h.b16 %v629
        %v956 = vunpack.c.l.b16 %v630
        %v957 = vunpack.c.h.b16 %v630
        %v958 = vunpack.c.l.b16 %v631
        %v959 = vunpack.c.h.b16 %v631
        %v960 = vunpack.c.l.b16 %v632
        %v961 = vunpack.c.h.b16 %v632
        %v962 = vunpack.c.l.b16 %v633
        %v963 = vunpack.c.h.b16 %v633
        %v964 = vunpack.c.l.b16 %v634
        %v965 = vunpack.c.h.b16 %v634
        %v966 = vunpack.c.l.b16 %v635
        %v967 = vunpack.c.h.b16 %v635
        %v968 = vunpack.c.l.b16 %v636
        %v969 = vunpack.c.h.b16 %v636
        %v970 = vunpack.c.l.b16 %v637
        %v971 = vunpack.c.h.b16 %v637
        %v972 = vunpack.c.l.b16 %v638
        %v973 = vunpack.c.h.b16 %v638
        %v974 = vunpack.c.l.b16 %v639
        %v975 = vunpack.c.h.b16 %v639
        %v976 = vunpack.c.l.b16 %v640
        %v977 = vunpack.c.h.b16 %v640
        %v978 = vunpack.c.l.b16 %v641
        %v979 = vunpack.c.h.b16 %v641
        %v980 = vunpack.c.l.b16 %v642
        %v981 = vunpack.c.h.b16 %v642
        %v982 = vunpack.c.l.b16 %v643
        %v983 = vunpack.c.h.b16 %v643
        %v984 = vunpack.c.l.b16 %v644
        %v985 = vunpack.c.h.b16 %v644
        %v986 = vunpack.c.l.b16 %v645
        %v987 = vunpack.c.h.b16 %v645
        %v988 = vunpack.c.l.b16 %v646
        %v989 = vunpack.c.h.b16 %v646
        %v990 = vunpack.c.l.b16 %v647
        %v991 = vunpack.c.h.b16 %v647
        %v992 = vunpack.c.l.b16 %v648
        %v993 = vunpack.c.h.b16 %v648
        %v994 = vunpack.c.l.b16 %v649
        %v995 = vunpack.c.h.b16 %v649
        %v996 = vunpack.c.l.b16 %v650
        %v997 = vunpack.c.h.b16 %v650
        %v998 = vunpack.c.l.b16 %v651
        %v999 = vunpack.c.h.b16 %v651
        %v1000 = vunpack.c.l.b16 %v652
        %v1001 = vunpack.c.h.b16 %v652
        %v1002 = vunpack.c.l.b16 %v653
        %v1003 = vunpack.c.h.b16 %v653
        %v1004 = vunpack.c.l.b16 %v654
        %v1005 = vunpack.c.h.b16 %v654
        %v1006 = vunpack.c.l.b16 %v655
        %v1007 = vunpack.c.h.b16 %v655
        %v1008 = vunpack.c.l.b16 %v656
        %v1009 = vunpack.c.h.b16 %v656
        %v1010 = vunpack.c.l.b16 %v657
        %v1011 = vunpack.c.h.b16 %v657
        %v1012 = vunpack.c.l.b16 %v658
        %v1013 = vunpack.c.h.b16 %v658
        %v1014 = vunpack.c.l.b16 %v659
        %v1015 = vunpack.c.h.b16 %v659
        %v1016 = vunpack.c.l.b16 %v660
        %v1017 = vunpack.c.h.b16 %v660
        %v1018 = vunpack.c.l.b16 %v661
        %v1019 = vunpack.c.h.b16 %v661
        %v1020 = vunpack.c.l.b16 %v662
        %v1021 = vunpack.c.h.b16 %v662
        %v1022 = vunpack.c.l.b16 %v663
        %v1023 = vunpack.c.h.b16 %v663
        %v1024 = vunpack.c.l.b16 %v664
        %v1025 = vunpack.c.h.b16 %v664
        %v1026 = vunpack.c.l.b16 %v665
        %v1027 = vunpack.c.h.b16 %v665
        %v1028 = vunpack.c.l.b16 %v666
        %v1029 = vunpack.c.h.b16 %v666
        %v1030 = vunpack.c.l.b16 %v667
        %v1031 = vunpack.c.h.b16 %v667
        %v1032 = vunpack.c.l.b16 %v668
        %v1033 = vunpack.c.h.b16 %v668
        %v1034 = vunpack.c.l.b16 %v669
        %v1035 = vunpack.c.h.b16 %v669
        %v1036 = vunpack.c.l.b16 %v670
        %v1037 = vunpack.c.h.b16 %v670
        %v1038 = vunpack.c.l.b16 %v671
        %v1039 = vunpack.c.h.b16 %v671
        %v1040 = vunpack.c.l.b16 %v672
        %v1041 = vunpack.c.h.b16 %v672
        %v1042 = vunpack.c.l.b16 %v673
        %v1043 = vunpack.c.h.b16 %v673
        %v1044 = vunpack.c.l.b16 %v674
        %v1045 = vunpack.c.h.b16 %v674
        %v1046 = vunpack.c.l.b16 %v675
        %v1047 = vunpack.c.h.b16 %v675
        %v1048 = vunpack.c.l.b16 %v676
        %v1049 = vunpack.c.h.b16 %v676
        %v1050 = vunpack.c.l.b16 %v677
        %v1051 = vunpack.c.h.b16 %v677
        %v1052 = vunpack.c.l.b16 %v678
        %v1053 = vunpack.c.h.b16 %v678
        %v1054 = vunpack.c.l.b16 %v679
        %v1055 = vunpack.c.h.b16 %v679
        %v1056 = vunpack.c.l.b16 %v680
        %v1057 = vunpack.c.h.b16 %v680
        %v1058 = vunpack.c.l.b16 %v681
        %v1059 = vunpack.c.h.b16 %v681
        %v1060 = vunpack.c.l.b16 %v682
        %v1061 = vunpack.c.h.b16 %v682
        %v1062 = vunpack.c.l.b16 %v683
        %v1063 = vunpack.c.h.b16 %v683
        %v1064 = vunpack.c.l.b16 %v684
        %v1065 = vunpack.c.h.b16 %v684
        %v1066 = vunpack.c.l.b16 %v685
        %v1067 = vunpack.c.h.b16 %v685
        %v1068 = vunpack.c.l.b16 %v686
        %v1069 = vunpack.c.h.b16 %v686
        %v1070 = vunpack.c.l.b16 %v687
        %v1071 = vunpack.c.h.b16 %v687
        %v1072 = vunpack.c.l.b16 %v688
        %v1073 = vunpack.c.h.b16 %v688
        %v1074 = vpack.c.b16 %v822, %v818
        %v1075 = vpack.c.b16 %v823, %v819
        %v1076 = vpack.c.b16 %v824, %v820
        %v1077 = vpack.c.b16 %v825, %v821
        %v1078 = vpack.c.b16 %v830, %v826
        %v1079 = vpack.c.b16 %v831, %v827
        %v1080 = vpack.c.b16 %v832, %v828
        %v1081 = vpack.c.b16 %v833, %v829
        %v1082 = vpack.c.b16 %v838, %v834
        %v1083 = vpack.c.b16 %v839, %v835
        %v1084 = vpack.c.b16 %v840, %v836
        %v1085 = vpack.c.b16 %v841, %v837
        %v1086 = vpack.c.b16 %v846, %v842
        %v1087 = vpack.c.b16 %v847, %v843
        %v1088 = vpack.c.b16 %v848, %v844
        %v1089 = vpack.c.b16 %v849, %v845
        %v1090 = vpack.c.b16 %v854, %v850
        %v1091 = vpack.c.b16 %v855, %v851
        %v1092 = vpack.c.b16 %v856, %v852
        %v1093 = vpack.c.b16 %v857, %v853
        %v1094 = vpack.c.b16 %v862, %v858
        %v1095 = vpack.c.b16 %v863, %v859
        %v1096 = vpack.c.b16 %v864, %v860
        %v1097 = vpack.c.b16 %v865, %v861
        %v1098 = vpack.c.b16 %v870, %v866
        %v1099 = vpack.c.b16 %v871, %v867
        %v1100 = vpack.c.b16 %v872, %v868
        %v1101 = vpack.c.b16 %v873, %v869
        %v1102 = vpack.c.b16 %v878, %v874
        %v1103 = vpack.c.b16 %v879, %v875
        %v1104 = vpack.c.b16 %v880, %v876
        %v1105 = vpack.c.b16 %v881, %v877
        %v1106 = vpack.c.b16 %v886, %v882
        %v1107 = vpack.c.b16 %v887, %v883
        %v1108 = vpack.c.b16 %v888, %v884
        %v1109 = vpack.c.b16 %v889, %v885
        %v1110 = vpack.c.b16 %v894, %v890
        %v1111 = vpack.c.b16 %v895, %v891
        %v1112 = vpack.c.b16 %v896, %v892
        %v1113 = vpack.c.b16 %v897, %v893
        %v1114 = vpack.c.b16 %v902, %v898
        %v1115 = vpack.c.b16 %v903, %v899
        %v1116 = vpack.c.b16 %v904, %v900
        %v1117 = vpack.c.b16 %v905, %v901
        %v1118 = vpack.c.b16 %v910, %v906
        %v1119 = vpack.c.b16 %v911, %v907
        %v1120 = vpack.c.b16 %v912, %v908
        %v1121 = vpack.c.b16 %v913, %v909
        %v1122 = vpack.c.b16 %v918, %v914
        %v1123 = vpack.c.b16 %v919, %v915
        %v1124 = vpack.c.b16 %v920, %v916
        %v1125 = vpack.c.b16 %v921, %v917
        %v1126 = vpack.c.b16 %v926, %v922
        %v1127 = vpack.c.b16 %v927, %v923
        %v1128 = vpack.c.b16 %v928, %v924
        %v1129 = vpack.c.b16 %v929, %v925
        %v1130 = vpack.c.b16 %v934, %v930
        %v1131 = vpack.c.b16 %v935, %v931
        %v1132 = vpack.c.b16 %v936, %v932
        %v1133 = vpack.c.b16 %v937, %v933
        %v1134 = vpack.c.b16 %v942, %v938
        %v1135 = vpack.c.b16 %v943, %v939
        %v1136 = vpack.c.b16 %v944, %v940
        %v1137 = vpack.c.b16 %v945, %v941
        %v1138 = vpack.c.b16 %v950, %v946
        %v1139 = vpack.c.b16 %v951, %v947
        %v1140 = vpack.c.b16 %v952, %v948
        %v1141 = vpack.c.b16 %v953, %v949
        %v1142 = vpack.c.b16 %v958, %v954
        %v1143 = vpack.c.b16 %v959, %v955
        %v1144 = vpack.c.b16 %v960, %v956
        %v1145 = vpack.c.b16 %v961, %v957
        %v1146 = vpack.c.b16 %v966, %v962
        %v1147 = vpack.c.b16 %v967, %v963
        %v1148 = vpack.c.b16 %v968, %v964
        %v1149 = vpack.c.b16 %v969, %v965
        %v1150 = vpack.c.b16 %v974, %v970
        %v1151 = vpack.c.b16 %v975, %v971
        %v1152 = vpack.c.b16 %v976, %v972
        %v1153 = vpack.c.b16 %v977, %v973
        %v1154 = vpack.c.b16 %v982, %v978
        %v1155 = vpack.c.b16 %v983, %v979
        %v1156 = vpack.c.b16 %v984, %v980
        %v1157 = vpack.c.b16 %v985, %v981
        %v1158 = vpack.c.b16 %v990, %v986
        %v1159 = vpack.c.b16 %v991, %v987
        %v1160 = vpack.c.b16 %v992, %v988
        %v1161 = vpack.c.b16 %v993, %v989
        %v1162 = vpack.c.b16 %v998, %v994
        %v1163 = vpack.c.b16 %v999, %v995
        %v1164 = vpack.c.b16 %v1000, %v996
        %v1165 = vpack.c.b16 %v1001, %v997
        %v1166 = vpack.c.b16 %v1006, %v1002
        %v1167 = vpack.c.b16 %v1007, %v1003
        %v1168 = vpack.c.b16 %v1008, %v1004
        %v1169 = vpack.c.b16 %v1009, %v1005
        %v1170 = vpack.c.b16 %v1014, %v1010
        %v1171 = vpack.c.b16 %v1015, %v1011
        %v1172 = vpack.c.b16 %v1016, %v1012
        %v1173 = vpack.c.b16 %v1017, %v1013
        %v1174 = vpack.c.b16 %v1022, %v1018
        %v1175 = vpack.c.b16 %v1023, %v1019
        %v1176 = vpack.c.b16 %v1024, %v1020
        %v1177 = vpack.c.b16 %v1025, %v1021
        %v1178 = vpack.c.b16 %v1030, %v1026
        %v1179 = vpack.c.b16 %v1031, %v1027
        %v1180 = vpack.c.b16 %v1032, %v1028
        %v1181 = vpack.c.b16 %v1033, %v1029
        %v1182 = vpack.c.b16 %v1038, %v1034
        %v1183 = vpack.c.b16 %v1039, %v1035
        %v1184 = vpack.c.b16 %v1040, %v1036
        %v1185 = vpack.c.b16 %v1041, %v1037
        %v1186 = vpack.c.b16 %v1046, %v1042
        %v1187 = vpack.c.b16 %v1047, %v1043
        %v1188 = vpack.c.b16 %v1048, %v1044
        %v1189 = vpack.c.b16 %v1049, %v1045
        %v1190 = vpack.c.b16 %v1054, %v1050
        %v1191 = vpack.c.b16 %v1055, %v1051
        %v1192 = vpack.c.b16 %v1056, %v1052
        %v1193 = vpack.c.b16 %v1057, %v1053
        %v1194 = vpack.c.b16 %v1062, %v1058
        %v1195 = vpack.c.b16 %v1063, %v1059
        %v1196 = vpack.c.b16 %v1064, %v1060
        %v1197 = vpack.c.b16 %v1065, %v1061
        %v1198 = vpack.c.b16 %v1070, %v1066
        %v1199 = vpack.c.b16 %v1071, %v1067
        %v1200 = vpack.c.b16 %v1072, %v1068
        %v1201 = vpack.c.b16 %v1073, %v1069
        %v1394 = vunpack.c.l.b16 %v497
        %v1395 = vunpack.c.l.b16 %v498
        %v1396 = vunpack.c.l.b16 %v499
        %v1397 = vunpack.c.l.b16 %v500
        %v1398 = vunpack.c.l.b16 %v501
        %v1399 = vunpack.c.l.b16 %v502
        %v1400 = vunpack.c.l.b16 %v503
        %v1401 = vunpack.c.l.b16 %v504
        %v1402 = vunpack.c.l.b16 %v505
        %v1403 = vunpack.c.l.b16 %v506
        %v1404 = vunpack.c.l.b16 %v507
        %v1405 = vunpack.c.l.b16 %v508
        %v1406 = vunpack.c.l.b16 %v509
        %v1407 = vunpack.c.l.b16 %v510
        %v1408 = vunpack.c.l.b16 %v511
        %v1409 = vunpack.c.l.b16 %v512
        %v1410 = vunpack.c.l.b16 %v513
        %v1411 = vunpack.c.l.b16 %v514
        %v1412 = vunpack.c.l.b16 %v515
        %v1413 = vunpack.c.l.b16 %v516
        %v1414 = vunpack.c.l.b16 %v517
        %v1415 = vunpack.c.l.b16 %v518
        %v1416 = vunpack.c.l.b16 %v519
        %v1417 = vunpack.c.l.b16 %v520
        %v1418 = vunpack.c.l.b16 %v521
        %v1419 = vunpack.c.l.b16 %v522
        %v1420 = vunpack.c.l.b16 %v523
        %v1421 = vunpack.c.l.b16 %v524
        %v1422 = vunpack.c.l.b16 %v525
        %v1423 = vunpack.c.l.b16 %v526
        %v1424 = vunpack.c.l.b16 %v527
        %v1425 = vunpack.c.l.b16 %v528
        %v1426 = vunpack.c.l.b16 %v529
        %v1427 = vunpack.c.l.b16 %v530
        %v1428 = vunpack.c.l.b16 %v531
        %v1429 = vunpack.c.l.b16 %v532
        %v1430 = vunpack.c.l.b16 %v533
        %v1431 = vunpack.c.l.b16 %v534
        %v1432 = vunpack.c.l.b16 %v535
        %v1433 = vunpack.c.l.b16 %v536
        %v1434 = vunpack.c.l.b16 %v537
        %v1435 = vunpack.c.l.b16 %v538
        %v1436 = vunpack.c.l.b16 %v539
        %v1437 = vunpack.c.l.b16 %v540
        %v1438 = vunpack.c.l.b16 %v541
        %v1439 = vunpack.c.l.b16 %v542
        %v1440 = vunpack.c.l.b16 %v543
        %v1441 = vunpack.c.l.b16 %v544
        %v1442 = vunpack.c.l.b16 %v545
        %v1443 = vunpack.c.l.b16 %v546
        %v1444 = vunpack.c.l.b16 %v547
        %v1445 = vunpack.c.l.b16 %v548
        %v1446 = vunpack.c.l.b16 %v549
        %v1447 = vunpack.c.l.b16 %v550
        %v1448 = vunpack.c.l.b16 %v551
        %v1449 = vunpack.c.l.b16 %v552
        %v1450 = vunpack.c.l.b16 %v553
        %v1451 = vunpack.c.l.b16 %v554
        %v1452 = vunpack.c.l.b16 %v555
        %v1453 = vunpack.c.l.b16 %v556
        %v1454 = vunpack.c.l.b16 %v557
        %v1455 = vunpack.c.l.b16 %v558
        %v1456 = vunpack.c.l.b16 %v559
        %v1457 = vunpack.c.l.b16 %v560
        %v1458 = vpack.c.b16 %v1395, %v1394
        %v1459 = vpack.c.b16 %v1397, %v1396
        %v1460 = vpack.c.b16 %v1399, %v1398
        %v1461 = vpack.c.b16 %v1401, %v1400
        %v1462 = vpack.c.b16 %v1403, %v1402
        %v1463 = vpack.c.b16 %v1405, %v1404
        %v1464 = vpack.c.b16 %v1407, %v1406
        %v1465 = vpack.c.b16 %v1409, %v1408
        %v1466 = vpack.c.b16 %v1411, %v1410
        %v1467 = vpack.c.b16 %v1413, %v1412
        %v1468 = vpack.c.b16 %v1415, %v1414
        %v1469 = vpack.c.b16 %v1417, %v1416
        %v1470 = vpack.c.b16 %v1419, %v1418
        %v1471 = vpack.c.b16 %v1421, %v1420
        %v1472 = vpack.c.b16 %v1423, %v1422
        %v1473 = vpack.c.b16 %v1425, %v1424
        %v1474 = vpack.c.b16 %v1427, %v1426
        %v1475 = vpack.c.b16 %v1429, %v1428
        %v1476 = vpack.c.b16 %v1431, %v1430
        %v1477 = vpack.c.b16 %v1433, %v1432
        %v1478 = vpack.c.b16 %v1435, %v1434
        %v1479 = vpack.c.b16 %v1437, %v1436
        %v1480 = vpack.c.b16 %v1439, %v1438
        %v1481 = vpack.c.b16 %v1441, %v1440
        %v1482 = vpack.c.b16 %v1443, %v1442
        %v1483 = vpack.c.b16 %v1445, %v1444
        %v1484 = vpack.c.b16 %v1447, %v1446
        %v1485 = vpack.c.b16 %v1449, %v1448
        %v1486 = vpack.c.b16 %v1451, %v1450
        %v1487 = vpack.c.b16 %v1453, %v1452
        %v1488 = vpack.c.b16 %v1455, %v1454
        %v1489 = vpack.c.b16 %v1457, %v1456
        %1522 = vmatprep.subr.bf16.mxu0 0
        %1523 = vmatpush1.bf16.msra.mxu0 %v1458
        %1524 = vmatprep.subr.bf16.mxu0 0
        %1525 = vmatpush1.bf16.msra.mxu0 %v1459
        %1526 = vmatprep.subr.bf16.mxu0 0
        %1527 = vmatpush1.bf16.msra.mxu0 %v1460
        %1528 = vmatprep.subr.bf16.mxu0 0
        %1529 = vmatpush1.bf16.msra.mxu0 %v1461
        %1530 = vmatprep.subr.bf16.mxu0 0
        %1531 = vmatpush1.bf16.msra.mxu0 %v1462
        %1532 = vmatprep.subr.bf16.mxu0 0
        %1533 = vmatpush1.bf16.msra.mxu0 %v1463
        %1534 = vmatprep.subr.bf16.mxu0 0
        %1535 = vmatpush1.bf16.msra.mxu0 %v1464
        %1536 = vmatprep.subr.bf16.mxu0 0
        %1537 = vmatpush1.bf16.msra.mxu0 %v1465
        %1538 = vmatprep.subr.bf16.mxu0 0
        %1539 = vmatpush1.bf16.msra.mxu0 %v1466
        %1540 = vmatprep.subr.bf16.mxu0 0
        %1541 = vmatpush1.bf16.msra.mxu0 %v1467
        %1542 = vmatprep.subr.bf16.mxu0 0
        %1543 = vmatpush1.bf16.msra.mxu0 %v1468
        %1544 = vmatprep.subr.bf16.mxu0 0
        %1545 = vmatpush1.bf16.msra.mxu0 %v1469
        %1546 = vmatprep.subr.bf16.mxu0 0
        %1547 = vmatpush1.bf16.msra.mxu0 %v1470
        %1548 = vmatprep.subr.bf16.mxu0 0
        %1549 = vmatpush1.bf16.msra.mxu0 %v1471
        %1550 = vmatprep.subr.bf16.mxu0 0
        %1551 = vmatpush1.bf16.msra.mxu0 %v1472
        %1552 = vmatprep.subr.bf16.mxu0 0
        %1553 = vmatpush1.bf16.msra.mxu0 %v1473
        %1554 = vmatprep.mubr.bf16.mxu0 %v1075
        %1555 = vmatmul.mubr.bf16.gmra.mrb[0].mxu0 %v1074
        %v1556 = vpop.f32.mrb[0].mxu0
        %v1557 = vadd.f32 0.0, %v1556
        %v1558 = vpop.f32.mrb[0].mxu0
        %v1559 = vpop.f32.mrb[0].mxu0
        %v1560 = vadd.f32 0.0, %v1559
        %v1561 = vpop.f32.mrb[0].mxu0
        %1562 = vmatprep.mubr.bf16.mxu0 %v1079
        %1563 = vmatmul.mubr.bf16.gmra.mrb[0].mxu0 %v1078
        %v1564 = vpop.f32.mrb[0].mxu0
        %v1565 = vadd.f32 0.0, %v1564
        %v1566 = vpop.f32.mrb[0].mxu0
        %v1567 = vpop.f32.mrb[0].mxu0
        %v1568 = vadd.f32 0.0, %v1567
        %v1569 = vpop.f32.mrb[0].mxu0
        %1570 = vmatprep.mubr.bf16.mxu0 %v1083
        %1571 = vmatmul.mubr.bf16.gmra.mrb[0].mxu0 %v1082
        %v1572 = vpop.f32.mrb[0].mxu0
        %v1573 = vadd.f32 0.0, %v1572
        %v1574 = vpop.f32.mrb[0].mxu0
        %v1575 = vpop.f32.mrb[0].mxu0
        %v1576 = vadd.f32 0.0, %v1575
        %v1577 = vpop.f32.mrb[0].mxu0
        %1578 = vmatprep.mubr.bf16.mxu0 %v1087
        %1579 = vmatmul.mubr.bf16.gmra.mrb[0].mxu0 %v1086
        %v1580 = vpop.f32.mrb[0].mxu0
        %v1581 = vadd.f32 0.0, %v1580
        %v1582 = vpop.f32.mrb[0].mxu0
        %v1583 = vpop.f32.mrb[0].mxu0
        %v1584 = vadd.f32 0.0, %v1583
        %v1585 = vpop.f32.mrb[0].mxu0
        %1586 = vmatprep.mubr.bf16.mxu0 %v1091
        %1587 = vmatmul.mubr.bf16.gmra.mrb[0].mxu0 %v1090
        %v1588 = vpop.f32.mrb[0].mxu0
        %v1589 = vadd.f32 0.0, %v1588
        %v1590 = vpop.f32.mrb[0].mxu0
        %v1591 = vpop.f32.mrb[0].mxu0
        %v1592 = vadd.f32 0.0, %v1591
        %v1593 = vpop.f32.mrb[0].mxu0
        %1594 = vmatprep.mubr.bf16.mxu0 %v1095
        %1595 = vmatmul.mubr.bf16.gmra.mrb[0].mxu0 %v1094
        %v1596 = vpop.f32.mrb[0].mxu0
        %v1597 = vadd.f32 0.0, %v1596
        %v1598 = vpop.f32.mrb[0].mxu0
        %v1599 = vpop.f32.mrb[0].mxu0
        %v1600 = vadd.f32 0.0, %v1599
        %v1601 = vpop.f32.mrb[0].mxu0
        %1602 = vmatprep.mubr.bf16.mxu0 %v1099
        %1603 = vmatmul.mubr.bf16.gmra.mrb[0].mxu0 %v1098
        %v1604 = vpop.f32.mrb[0].mxu0
        %v1605 = vadd.f32 0.0, %v1604
        %v1606 = vpop.f32.mrb[0].mxu0
        %v1607 = vpop.f32.mrb[0].mxu0
        %v1608 = vadd.f32 0.0, %v1607
        %v1609 = vpop.f32.mrb[0].mxu0
        %1610 = vmatprep.mubr.bf16.mxu0 %v1103
        %1611 = vmatmul.mubr.bf16.gmra.mrb[0].mxu0 %v1102
        %v1612 = vpop.f32.mrb[0].mxu0
        %v1613 = vadd.f32 0.0, %v1612
        %v1614 = vpop.f32.mrb[0].mxu0
        %v1615 = vpop.f32.mrb[0].mxu0
        %v1616 = vadd.f32 0.0, %v1615
        %v1617 = vpop.f32.mrb[0].mxu0
        %1618 = vmatprep.mubr.bf16.mxu0 %v1107
        %1619 = vmatmul.mubr.bf16.gmra.mrb[0].mxu0 %v1106
        %v1620 = vpop.f32.mrb[0].mxu0
        %v1621 = vadd.f32 0.0, %v1620
        %v1622 = vpop.f32.mrb[0].mxu0
        %v1623 = vpop.f32.mrb[0].mxu0
        %v1624 = vadd.f32 0.0, %v1623
        %v1625 = vpop.f32.mrb[0].mxu0
        %1626 = vmatprep.mubr.bf16.mxu0 %v1111
        %1627 = vmatmul.mubr.bf16.gmra.mrb[0].mxu0 %v1110
        %v1628 = vpop.f32.mrb[0].mxu0
        %v1629 = vadd.f32 0.0, %v1628
        %v1630 = vpop.f32.mrb[0].mxu0
        %v1631 = vpop.f32.mrb[0].mxu0
        %v1632 = vadd.f32 0.0, %v1631
        %v1633 = vpop.f32.mrb[0].mxu0
        %1634 = vmatprep.mubr.bf16.mxu0 %v1115
        %1635 = vmatmul.mubr.bf16.gmra.mrb[0].mxu0 %v1114
        %v1636 = vpop.f32.mrb[0].mxu0
        %v1637 = vadd.f32 0.0, %v1636
        %v1638 = vpop.f32.mrb[0].mxu0
        %v1639 = vpop.f32.mrb[0].mxu0
        %v1640 = vadd.f32 0.0, %v1639
        %v1641 = vpop.f32.mrb[0].mxu0
        %1642 = vmatprep.mubr.bf16.mxu0 %v1119
        %1643 = vmatmul.mubr.bf16.gmra.mrb[0].mxu0 %v1118
        %v1644 = vpop.f32.mrb[0].mxu0
        %v1645 = vadd.f32 0.0, %v1644
        %v1646 = vpop.f32.mrb[0].mxu0
        %v1647 = vpop.f32.mrb[0].mxu0
        %v1648 = vadd.f32 0.0, %v1647
        %v1649 = vpop.f32.mrb[0].mxu0
        %1650 = vmatprep.mubr.bf16.mxu0 %v1123
        %1651 = vmatmul.mubr.bf16.gmra.mrb[0].mxu0 %v1122
        %v1652 = vpop.f32.mrb[0].mxu0
        %v1653 = vadd.f32 0.0, %v1652
        %v1654 = vpop.f32.mrb[0].mxu0
        %v1655 = vpop.f32.mrb[0].mxu0
        %v1656 = vadd.f32 0.0, %v1655
        %v1657 = vpop.f32.mrb[0].mxu0
        %1658 = vmatprep.mubr.bf16.mxu0 %v1127
        %1659 = vmatmul.mubr.bf16.gmra.mrb[0].mxu0 %v1126
        %v1660 = vpop.f32.mrb[0].mxu0
        %v1661 = vadd.f32 0.0, %v1660
        %v1662 = vpop.f32.mrb[0].mxu0
        %v1663 = vpop.f32.mrb[0].mxu0
        %v1664 = vadd.f32 0.0, %v1663
        %v1665 = vpop.f32.mrb[0].mxu0
        %1666 = vmatprep.mubr.bf16.mxu0 %v1131
        %1667 = vmatmul.mubr.bf16.gmra.mrb[0].mxu0 %v1130
        %v1668 = vpop.f32.mrb[0].mxu0
        %v1669 = vadd.f32 0.0, %v1668
        %v1670 = vpop.f32.mrb[0].mxu0
        %v1671 = vpop.f32.mrb[0].mxu0
        %v1672 = vadd.f32 0.0, %v1671
        %v1673 = vpop.f32.mrb[0].mxu0
        %1674 = vmatprep.mubr.bf16.mxu0 %v1135
        %1675 = vmatmul.mubr.bf16.gmra.mrb[0].mxu0 %v1134
        %v1676 = vpop.f32.mrb[0].mxu0
        %v1677 = vadd.f32 0.0, %v1676
        %v1678 = vpop.f32.mrb[0].mxu0
        %v1679 = vpop.f32.mrb[0].mxu0
        %v1680 = vadd.f32 0.0, %v1679
        %v1681 = vpop.f32.mrb[0].mxu0
        %1682 = vmatprep.mubr.bf16.mxu0 %v1139
        %1683 = vmatmul.mubr.bf16.gmra.mrb[0].mxu0 %v1138
        %v1684 = vpop.f32.mrb[0].mxu0
        %v1685 = vadd.f32 0.0, %v1684
        %v1686 = vpop.f32.mrb[0].mxu0
        %v1687 = vpop.f32.mrb[0].mxu0
        %v1688 = vadd.f32 0.0, %v1687
        %v1689 = vpop.f32.mrb[0].mxu0
        %1690 = vmatprep.mubr.bf16.mxu0 %v1143
        %1691 = vmatmul.mubr.bf16.gmra.mrb[0].mxu0 %v1142
        %v1692 = vpop.f32.mrb[0].mxu0
        %v1693 = vadd.f32 0.0, %v1692
        %v1694 = vpop.f32.mrb[0].mxu0
        %v1695 = vpop.f32.mrb[0].mxu0
        %v1696 = vadd.f32 0.0, %v1695
        %v1697 = vpop.f32.mrb[0].mxu0
        %1698 = vmatprep.mubr.bf16.mxu0 %v1147
        %1699 = vmatmul.mubr.bf16.gmra.mrb[0].mxu0 %v1146
        %v1700 = vpop.f32.mrb[0].mxu0
        %v1701 = vadd.f32 0.0, %v1700
        %v1702 = vpop.f32.mrb[0].mxu0
        %v1703 = vpop.f32.mrb[0].mxu0
        %v1704 = vadd.f32 0.0, %v1703
        %v1705 = vpop.f32.mrb[0].mxu0
        %1706 = vmatprep.mubr.bf16.mxu0 %v1151
        %1707 = vmatmul.mubr.bf16.gmra.mrb[0].mxu0 %v1150
        %v1708 = vpop.f32.mrb[0].mxu0
        %v1709 = vadd.f32 0.0, %v1708
        %v1710 = vpop.f32.mrb[0].mxu0
        %v1711 = vpop.f32.mrb[0].mxu0
        %v1712 = vadd.f32 0.0, %v1711
        %v1713 = vpop.f32.mrb[0].mxu0
        %1714 = vmatprep.mubr.bf16.mxu0 %v1155
        %1715 = vmatmul.mubr.bf16.gmra.mrb[0].mxu0 %v1154
        %v1716 = vpop.f32.mrb[0].mxu0
        %v1717 = vadd.f32 0.0, %v1716
        %v1718 = vpop.f32.mrb[0].mxu0
        %v1719 = vpop.f32.mrb[0].mxu0
        %v1720 = vadd.f32 0.0, %v1719
        %v1721 = vpop.f32.mrb[0].mxu0
        %1722 = vmatprep.mubr.bf16.mxu0 %v1159
        %1723 = vmatmul.mubr.bf16.gmra.mrb[0].mxu0 %v1158
        %v1724 = vpop.f32.mrb[0].mxu0
        %v1725 = vadd.f32 0.0, %v1724
        %v1726 = vpop.f32.mrb[0].mxu0
        %v1727 = vpop.f32.mrb[0].mxu0
        %v1728 = vadd.f32 0.0, %v1727
        %v1729 = vpop.f32.mrb[0].mxu0
        %1730 = vmatprep.mubr.bf16.mxu0 %v1163
        %1731 = vmatmul.mubr.bf16.gmra.mrb[0].mxu0 %v1162
        %v1732 = vpop.f32.mrb[0].mxu0
        %v1733 = vadd.f32 0.0, %v1732
        %v1734 = vpop.f32.mrb[0].mxu0
        %v1735 = vpop.f32.mrb[0].mxu0
        %v1736 = vadd.f32 0.0, %v1735
        %v1737 = vpop.f32.mrb[0].mxu0
        %1738 = vmatprep.mubr.bf16.mxu0 %v1167
        %1739 = vmatmul.mubr.bf16.gmra.mrb[0].mxu0 %v1166
        %v1740 = vpop.f32.mrb[0].mxu0
        %v1741 = vadd.f32 0.0, %v1740
        %v1742 = vpop.f32.mrb[0].mxu0
        %v1743 = vpop.f32.mrb[0].mxu0
        %v1744 = vadd.f32 0.0, %v1743
        %v1745 = vpop.f32.mrb[0].mxu0
        %1746 = vmatprep.mubr.bf16.mxu0 %v1171
        %1747 = vmatmul.mubr.bf16.gmra.mrb[0].mxu0 %v1170
        %v1748 = vpop.f32.mrb[0].mxu0
        %v1749 = vadd.f32 0.0, %v1748
        %v1750 = vpop.f32.mrb[0].mxu0
        %v1751 = vpop.f32.mrb[0].mxu0
        %v1752 = vadd.f32 0.0, %v1751
        %v1753 = vpop.f32.mrb[0].mxu0
        %1754 = vmatprep.mubr.bf16.mxu0 %v1175
        %1755 = vmatmul.mubr.bf16.gmra.mrb[0].mxu0 %v1174
        %v1756 = vpop.f32.mrb[0].mxu0
        %v1757 = vadd.f32 0.0, %v1756
        %v1758 = vpop.f32.mrb[0].mxu0
        %v1759 = vpop.f32.mrb[0].mxu0
        %v1760 = vadd.f32 0.0, %v1759
        %v1761 = vpop.f32.mrb[0].mxu0
        %1762 = vmatprep.mubr.bf16.mxu0 %v1179
        %1763 = vmatmul.mubr.bf16.gmra.mrb[0].mxu0 %v1178
        %v1764 = vpop.f32.mrb[0].mxu0
        %v1765 = vadd.f32 0.0, %v1764
        %v1766 = vpop.f32.mrb[0].mxu0
        %v1767 = vpop.f32.mrb[0].mxu0
        %v1768 = vadd.f32 0.0, %v1767
        %v1769 = vpop.f32.mrb[0].mxu0
        %1770 = vmatprep.mubr.bf16.mxu0 %v1183
        %1771 = vmatmul.mubr.bf16.gmra.mrb[0].mxu0 %v1182
        %v1772 = vpop.f32.mrb[0].mxu0
        %v1773 = vadd.f32 0.0, %v1772
        %v1774 = vpop.f32.mrb[0].mxu0
        %v1775 = vpop.f32.mrb[0].mxu0
        %v1776 = vadd.f32 0.0, %v1775
        %v1777 = vpop.f32.mrb[0].mxu0
        %1778 = vmatprep.mubr.bf16.mxu0 %v1187
        %1779 = vmatmul.mubr.bf16.gmra.mrb[0].mxu0 %v1186
        %v1780 = vpop.f32.mrb[0].mxu0
        %v1781 = vadd.f32 0.0, %v1780
        %v1782 = vpop.f32.mrb[0].mxu0
        %v1783 = vpop.f32.mrb[0].mxu0
        %v1784 = vadd.f32 0.0, %v1783
        %v1785 = vpop.f32.mrb[0].mxu0
        %1786 = vmatprep.mubr.bf16.mxu0 %v1191
        %1787 = vmatmul.mubr.bf16.gmra.mrb[0].mxu0 %v1190
        %v1788 = vpop.f32.mrb[0].mxu0
        %v1789 = vadd.f32 0.0, %v1788
        %v1790 = vpop.f32.mrb[0].mxu0
        %v1791 = vpop.f32.mrb[0].mxu0
        %v1792 = vadd.f32 0.0, %v1791
        %v1793 = vpop.f32.mrb[0].mxu0
        %1794 = vmatprep.mubr.bf16.mxu0 %v1195
        %1795 = vmatmul.mubr.bf16.gmra.mrb[0].mxu0 %v1194
        %v1796 = vpop.f32.mrb[0].mxu0
        %v1797 = vadd.f32 0.0, %v1796
        %v1798 = vpop.f32.mrb[0].mxu0
        %v1799 = vpop.f32.mrb[0].mxu0
        %v1800 = vadd.f32 0.0, %v1799
        %v1801 = vpop.f32.mrb[0].mxu0
        %1802 = vmatprep.mubr.bf16.mxu0 %v1199
        %1803 = vmatmul.mubr.bf16.gmra.mrb[0].mxu0 %v1198
        %v1804 = vpop.f32.mrb[0].mxu0
        %v1805 = vadd.f32 0.0, %v1804
        %v1806 = vpop.f32.mrb[0].mxu0
        %v1807 = vpop.f32.mrb[0].mxu0
        %v1808 = vadd.f32 0.0, %v1807
        %v1809 = vpop.f32.mrb[0].mxu0
        %1810 = vdwg.mxu0
        %1811 = vmatprep.subr.bf16.mxu0 0
        %1812 = vmatpush1.bf16.msra.mxu0 %v1474
        %1813 = vmatprep.subr.bf16.mxu0 0
        %1814 = vmatpush1.bf16.msra.mxu0 %v1475
        %1815 = vmatprep.subr.bf16.mxu0 0
        %1816 = vmatpush1.bf16.msra.mxu0 %v1476
        %1817 = vmatprep.subr.bf16.mxu0 0
        %1818 = vmatpush1.bf16.msra.mxu0 %v1477
        %1819 = vmatprep.subr.bf16.mxu0 0
        %1820 = vmatpush1.bf16.msra.mxu0 %v1478
        %1821 = vmatprep.subr.bf16.mxu0 0
        %1822 = vmatpush1.bf16.msra.mxu0 %v1479
        %1823 = vmatprep.subr.bf16.mxu0 0
        %1824 = vmatpush1.bf16.msra.mxu0 %v1480
        %1825 = vmatprep.subr.bf16.mxu0 0
        %1826 = vmatpush1.bf16.msra.mxu0 %v1481
        %1827 = vmatprep.subr.bf16.mxu0 0
        %1828 = vmatpush1.bf16.msra.mxu0 %v1482
        %1829 = vmatprep.subr.bf16.mxu0 0
        %1830 = vmatpush1.bf16.msra.mxu0 %v1483
        %1831 = vmatprep.subr.bf16.mxu0 0
        %1832 = vmatpush1.bf16.msra.mxu0 %v1484
        %1833 = vmatprep.subr.bf16.mxu0 0
        %1834 = vmatpush1.bf16.msra.mxu0 %v1485
        %1835 = vmatprep.subr.bf16.mxu0 0
        %1836 = vmatpush1.bf16.msra.mxu0 %v1486
        %1837 = vmatprep.subr.bf16.mxu0 0
        %1838 = vmatpush1.bf16.msra.mxu0 %v1487
        %1839 = vmatprep.subr.bf16.mxu0 0
        %1840 = vmatpush1.bf16.msra.mxu0 %v1488
        %1841 = vmatprep.subr.bf16.mxu0 0
        %1842 = vmatpush1.bf16.msra.mxu0 %v1489
        %1843 = vmatprep.mubr.bf16.mxu0 %v1077
        %1844 = vmatmul.mubr.bf16.gmra.mrb[0].mxu0 %v1076
        %v1845 = vpop.f32.mrb[0].mxu0
        %v1846 = vadd.f32 %v1557, %v1845
        %v1847 = vpop.f32.mrb[0].mxu0
        %v1848 = vpop.f32.mrb[0].mxu0
        %v1849 = vadd.f32 %v1560, %v1848
        %v1850 = vpop.f32.mrb[0].mxu0
        %1851 = vmatprep.mubr.bf16.mxu0 %v1081
        %1852 = vmatmul.mubr.bf16.gmra.mrb[0].mxu0 %v1080
        %v1853 = vpop.f32.mrb[0].mxu0
        %v1854 = vadd.f32 %v1565, %v1853
        %v1855 = vpop.f32.mrb[0].mxu0
        %v1856 = vpop.f32.mrb[0].mxu0
        %v1857 = vadd.f32 %v1568, %v1856
        %v1858 = vpop.f32.mrb[0].mxu0
        %1859 = vmatprep.mubr.bf16.mxu0 %v1085
        %1860 = vmatmul.mubr.bf16.gmra.mrb[0].mxu0 %v1084
        %v1861 = vpop.f32.mrb[0].mxu0
        %v1862 = vadd.f32 %v1573, %v1861
        %v1863 = vpop.f32.mrb[0].mxu0
        %v1864 = vpop.f32.mrb[0].mxu0
        %v1865 = vadd.f32 %v1576, %v1864
        %v1866 = vpop.f32.mrb[0].mxu0
        %1867 = vmatprep.mubr.bf16.mxu0 %v1089
        %1868 = vmatmul.mubr.bf16.gmra.mrb[0].mxu0 %v1088
        %v1869 = vpop.f32.mrb[0].mxu0
        %v1870 = vadd.f32 %v1581, %v1869
        %v1871 = vpop.f32.mrb[0].mxu0
        %v1872 = vpop.f32.mrb[0].mxu0
        %v1873 = vadd.f32 %v1584, %v1872
        %v1874 = vpop.f32.mrb[0].mxu0
        %1875 = vmatprep.mubr.bf16.mxu0 %v1093
        %1876 = vmatmul.mubr.bf16.gmra.mrb[0].mxu0 %v1092
        %v1877 = vpop.f32.mrb[0].mxu0
        %v1878 = vadd.f32 %v1589, %v1877
        %v1879 = vpop.f32.mrb[0].mxu0
        %v1880 = vpop.f32.mrb[0].mxu0
        %v1881 = vadd.f32 %v1592, %v1880
        %v1882 = vpop.f32.mrb[0].mxu0
        %1883 = vmatprep.mubr.bf16.mxu0 %v1097
        %1884 = vmatmul.mubr.bf16.gmra.mrb[0].mxu0 %v1096
        %v1885 = vpop.f32.mrb[0].mxu0
        %v1886 = vadd.f32 %v1597, %v1885
        %v1887 = vpop.f32.mrb[0].mxu0
        %v1888 = vpop.f32.mrb[0].mxu0
        %v1889 = vadd.f32 %v1600, %v1888
        %v1890 = vpop.f32.mrb[0].mxu0
        %1891 = vmatprep.mubr.bf16.mxu0 %v1101
        %1892 = vmatmul.mubr.bf16.gmra.mrb[0].mxu0 %v1100
        %v1893 = vpop.f32.mrb[0].mxu0
        %v1894 = vadd.f32 %v1605, %v1893
        %v1895 = vpop.f32.mrb[0].mxu0
        %v1896 = vpop.f32.mrb[0].mxu0
        %v1897 = vadd.f32 %v1608, %v1896
        %v1898 = vpop.f32.mrb[0].mxu0
        %1899 = vmatprep.mubr.bf16.mxu0 %v1105
        %1900 = vmatmul.mubr.bf16.gmra.mrb[0].mxu0 %v1104
        %v1901 = vpop.f32.mrb[0].mxu0
        %v1902 = vadd.f32 %v1613, %v1901
        %v1903 = vpop.f32.mrb[0].mxu0
        %v1904 = vpop.f32.mrb[0].mxu0
        %v1905 = vadd.f32 %v1616, %v1904
        %v1906 = vpop.f32.mrb[0].mxu0
        %1907 = vmatprep.mubr.bf16.mxu0 %v1109
        %1908 = vmatmul.mubr.bf16.gmra.mrb[0].mxu0 %v1108
        %v1909 = vpop.f32.mrb[0].mxu0
        %v1910 = vadd.f32 %v1621, %v1909
        %v1911 = vpop.f32.mrb[0].mxu0
        %v1912 = vpop.f32.mrb[0].mxu0
        %v1913 = vadd.f32 %v1624, %v1912
        %v1914 = vpop.f32.mrb[0].mxu0
        %1915 = vmatprep.mubr.bf16.mxu0 %v1113
        %1916 = vmatmul.mubr.bf16.gmra.mrb[0].mxu0 %v1112
        %v1917 = vpop.f32.mrb[0].mxu0
        %v1918 = vadd.f32 %v1629, %v1917
        %v1919 = vpop.f32.mrb[0].mxu0
        %v1920 = vpop.f32.mrb[0].mxu0
        %v1921 = vadd.f32 %v1632, %v1920
        %v1922 = vpop.f32.mrb[0].mxu0
        %1923 = vmatprep.mubr.bf16.mxu0 %v1117
        %1924 = vmatmul.mubr.bf16.gmra.mrb[0].mxu0 %v1116
        %v1925 = vpop.f32.mrb[0].mxu0
        %v1926 = vadd.f32 %v1637, %v1925
        %v1927 = vpop.f32.mrb[0].mxu0
        %v1928 = vpop.f32.mrb[0].mxu0
        %v1929 = vadd.f32 %v1640, %v1928
        %v1930 = vpop.f32.mrb[0].mxu0
        %1931 = vmatprep.mubr.bf16.mxu0 %v1121
        %1932 = vmatmul.mubr.bf16.gmra.mrb[0].mxu0 %v1120
        %v1933 = vpop.f32.mrb[0].mxu0
        %v1934 = vadd.f32 %v1645, %v1933
        %v1935 = vpop.f32.mrb[0].mxu0
        %v1936 = vpop.f32.mrb[0].mxu0
        %v1937 = vadd.f32 %v1648, %v1936
        %v1938 = vpop.f32.mrb[0].mxu0
        %1939 = vmatprep.mubr.bf16.mxu0 %v1125
        %1940 = vmatmul.mubr.bf16.gmra.mrb[0].mxu0 %v1124
        %v1941 = vpop.f32.mrb[0].mxu0
        %v1942 = vadd.f32 %v1653, %v1941
        %v1943 = vpop.f32.mrb[0].mxu0
        %v1944 = vpop.f32.mrb[0].mxu0
        %v1945 = vadd.f32 %v1656, %v1944
        %v1946 = vpop.f32.mrb[0].mxu0
        %1947 = vmatprep.mubr.bf16.mxu0 %v1129
        %1948 = vmatmul.mubr.bf16.gmra.mrb[0].mxu0 %v1128
        %v1949 = vpop.f32.mrb[0].mxu0
        %v1950 = vadd.f32 %v1661, %v1949
        %v1951 = vpop.f32.mrb[0].mxu0
        %v1952 = vpop.f32.mrb[0].mxu0
        %v1953 = vadd.f32 %v1664, %v1952
        %v1954 = vpop.f32.mrb[0].mxu0
        %1955 = vmatprep.mubr.bf16.mxu0 %v1133
        %1956 = vmatmul.mubr.bf16.gmra.mrb[0].mxu0 %v1132
        %v1957 = vpop.f32.mrb[0].mxu0
        %v1958 = vadd.f32 %v1669, %v1957
        %v1959 = vpop.f32.mrb[0].mxu0
        %v1960 = vpop.f32.mrb[0].mxu0
        %v1961 = vadd.f32 %v1672, %v1960
        %v1962 = vpop.f32.mrb[0].mxu0
        %1963 = vmatprep.mubr.bf16.mxu0 %v1137
        %1964 = vmatmul.mubr.bf16.gmra.mrb[0].mxu0 %v1136
        %v1965 = vpop.f32.mrb[0].mxu0
        %v1966 = vadd.f32 %v1677, %v1965
        %v1967 = vpop.f32.mrb[0].mxu0
        %v1968 = vpop.f32.mrb[0].mxu0
        %v1969 = vadd.f32 %v1680, %v1968
        %v1970 = vpop.f32.mrb[0].mxu0
        %1971 = vmatprep.mubr.bf16.mxu0 %v1141
        %1972 = vmatmul.mubr.bf16.gmra.mrb[0].mxu0 %v1140
        %v1973 = vpop.f32.mrb[0].mxu0
        %v1974 = vadd.f32 %v1685, %v1973
        %v1975 = vpop.f32.mrb[0].mxu0
        %v1976 = vpop.f32.mrb[0].mxu0
        %v1977 = vadd.f32 %v1688, %v1976
        %v1978 = vpop.f32.mrb[0].mxu0
        %1979 = vmatprep.mubr.bf16.mxu0 %v1145
        %1980 = vmatmul.mubr.bf16.gmra.mrb[0].mxu0 %v1144
        %v1981 = vpop.f32.mrb[0].mxu0
        %v1982 = vadd.f32 %v1693, %v1981
        %v1983 = vpop.f32.mrb[0].mxu0
        %v1984 = vpop.f32.mrb[0].mxu0
        %v1985 = vadd.f32 %v1696, %v1984
        %v1986 = vpop.f32.mrb[0].mxu0
        %1987 = vmatprep.mubr.bf16.mxu0 %v1149
        %1988 = vmatmul.mubr.bf16.gmra.mrb[0].mxu0 %v1148
        %v1989 = vpop.f32.mrb[0].mxu0
        %v1990 = vadd.f32 %v1701, %v1989
        %v1991 = vpop.f32.mrb[0].mxu0
        %v1992 = vpop.f32.mrb[0].mxu0
        %v1993 = vadd.f32 %v1704, %v1992
        %v1994 = vpop.f32.mrb[0].mxu0
        %1995 = vmatprep.mubr.bf16.mxu0 %v1153
        %1996 = vmatmul.mubr.bf16.gmra.mrb[0].mxu0 %v1152
        %v1997 = vpop.f32.mrb[0].mxu0
        %v1998 = vadd.f32 %v1709, %v1997
        %v1999 = vpop.f32.mrb[0].mxu0
        %v2000 = vpop.f32.mrb[0].mxu0
        %v2001 = vadd.f32 %v1712, %v2000
        %v2002 = vpop.f32.mrb[0].mxu0
        %2003 = vmatprep.mubr.bf16.mxu0 %v1157
        %2004 = vmatmul.mubr.bf16.gmra.mrb[0].mxu0 %v1156
        %v2005 = vpop.f32.mrb[0].mxu0
        %v2006 = vadd.f32 %v1717, %v2005
        %v2007 = vpop.f32.mrb[0].mxu0
        %v2008 = vpop.f32.mrb[0].mxu0
        %v2009 = vadd.f32 %v1720, %v2008
        %v2010 = vpop.f32.mrb[0].mxu0
        %2011 = vmatprep.mubr.bf16.mxu0 %v1161
        %2012 = vmatmul.mubr.bf16.gmra.mrb[0].mxu0 %v1160
        %v2013 = vpop.f32.mrb[0].mxu0
        %v2014 = vadd.f32 %v1725, %v2013
        %v2015 = vpop.f32.mrb[0].mxu0
        %v2016 = vpop.f32.mrb[0].mxu0
        %v2017 = vadd.f32 %v1728, %v2016
        %v2018 = vpop.f32.mrb[0].mxu0
        %2019 = vmatprep.mubr.bf16.mxu0 %v1165
        %2020 = vmatmul.mubr.bf16.gmra.mrb[0].mxu0 %v1164
        %v2021 = vpop.f32.mrb[0].mxu0
        %v2022 = vadd.f32 %v1733, %v2021
        %v2023 = vpop.f32.mrb[0].mxu0
        %v2024 = vpop.f32.mrb[0].mxu0
        %v2025 = vadd.f32 %v1736, %v2024
        %v2026 = vpop.f32.mrb[0].mxu0
        %2027 = vmatprep.mubr.bf16.mxu0 %v1169
        %2028 = vmatmul.mubr.bf16.gmra.mrb[0].mxu0 %v1168
        %v2029 = vpop.f32.mrb[0].mxu0
        %v2030 = vadd.f32 %v1741, %v2029
        %v2031 = vpop.f32.mrb[0].mxu0
        %v2032 = vpop.f32.mrb[0].mxu0
        %v2033 = vadd.f32 %v1744, %v2032
        %v2034 = vpop.f32.mrb[0].mxu0
        %2035 = vmatprep.mubr.bf16.mxu0 %v1173
        %2036 = vmatmul.mubr.bf16.gmra.mrb[0].mxu0 %v1172
        %v2037 = vpop.f32.mrb[0].mxu0
        %v2038 = vadd.f32 %v1749, %v2037
        %v2039 = vpop.f32.mrb[0].mxu0
        %v2040 = vpop.f32.mrb[0].mxu0
        %v2041 = vadd.f32 %v1752, %v2040
        %v2042 = vpop.f32.mrb[0].mxu0
        %2043 = vmatprep.mubr.bf16.mxu0 %v1177
        %2044 = vmatmul.mubr.bf16.gmra.mrb[0].mxu0 %v1176
        %v2045 = vpop.f32.mrb[0].mxu0
        %v2046 = vadd.f32 %v1757, %v2045
        %v2047 = vpop.f32.mrb[0].mxu0
        %v2048 = vpop.f32.mrb[0].mxu0
        %v2049 = vadd.f32 %v1760, %v2048
        %v2050 = vpop.f32.mrb[0].mxu0
        %2051 = vmatprep.mubr.bf16.mxu0 %v1181
        %2052 = vmatmul.mubr.bf16.gmra.mrb[0].mxu0 %v1180
        %v2053 = vpop.f32.mrb[0].mxu0
        %v2054 = vadd.f32 %v1765, %v2053
        %v2055 = vpop.f32.mrb[0].mxu0
        %v2056 = vpop.f32.mrb[0].mxu0
        %v2057 = vadd.f32 %v1768, %v2056
        %v2058 = vpop.f32.mrb[0].mxu0
        %2059 = vmatprep.mubr.bf16.mxu0 %v1185
        %2060 = vmatmul.mubr.bf16.gmra.mrb[0].mxu0 %v1184
        %v2061 = vpop.f32.mrb[0].mxu0
        %v2062 = vadd.f32 %v1773, %v2061
        %v2063 = vpop.f32.mrb[0].mxu0
        %v2064 = vpop.f32.mrb[0].mxu0
        %v2065 = vadd.f32 %v1776, %v2064
        %v2066 = vpop.f32.mrb[0].mxu0
        %2067 = vmatprep.mubr.bf16.mxu0 %v1189
        %2068 = vmatmul.mubr.bf16.gmra.mrb[0].mxu0 %v1188
        %v2069 = vpop.f32.mrb[0].mxu0
        %v2070 = vadd.f32 %v1781, %v2069
        %v2071 = vpop.f32.mrb[0].mxu0
        %v2072 = vpop.f32.mrb[0].mxu0
        %v2073 = vadd.f32 %v1784, %v2072
        %v2074 = vpop.f32.mrb[0].mxu0
        %2075 = vmatprep.mubr.bf16.mxu0 %v1193
        %2076 = vmatmul.mubr.bf16.gmra.mrb[0].mxu0 %v1192
        %v2077 = vpop.f32.mrb[0].mxu0
        %v2078 = vadd.f32 %v1789, %v2077
        %v2079 = vpop.f32.mrb[0].mxu0
        %v2080 = vpop.f32.mrb[0].mxu0
        %v2081 = vadd.f32 %v1792, %v2080
        %v2082 = vpop.f32.mrb[0].mxu0
        %2083 = vmatprep.mubr.bf16.mxu0 %v1197
        %2084 = vmatmul.mubr.bf16.gmra.mrb[0].mxu0 %v1196
        %v2085 = vpop.f32.mrb[0].mxu0
        %v2086 = vadd.f32 %v1797, %v2085
        %v2087 = vpop.f32.mrb[0].mxu0
        %v2088 = vpop.f32.mrb[0].mxu0
        %v2089 = vadd.f32 %v1800, %v2088
        %v2090 = vpop.f32.mrb[0].mxu0
        %2091 = vmatprep.mubr.bf16.mxu0 %v1201
        %2092 = vmatmul.mubr.bf16.gmra.mrb[0].mxu0 %v1200
        %v2093 = vpop.f32.mrb[0].mxu0
        %v2094 = vadd.f32 %v1805, %v2093
        %v2095 = vpop.f32.mrb[0].mxu0
        %v2096 = vpop.f32.mrb[0].mxu0
        %v2097 = vadd.f32 %v1808, %v2096
        %v2098 = vpop.f32.mrb[0].mxu0
        %2099 = vdwg.mxu0
        %v2100 = vpack.c.bf16 %v1849, %v1846
        %v2101 = vpack.c.bf16 %v1857, %v1854
        %v2102 = vpack.c.bf16 %v1865, %v1862
        %v2103 = vpack.c.bf16 %v1873, %v1870
        %v2104 = vpack.c.bf16 %v1881, %v1878
        %v2105 = vpack.c.bf16 %v1889, %v1886
        %v2106 = vpack.c.bf16 %v1897, %v1894
        %v2107 = vpack.c.bf16 %v1905, %v1902
        %v2108 = vpack.c.bf16 %v1913, %v1910
        %v2109 = vpack.c.bf16 %v1921, %v1918
        %v2110 = vpack.c.bf16 %v1929, %v1926
        %v2111 = vpack.c.bf16 %v1937, %v1934
        %v2112 = vpack.c.bf16 %v1945, %v1942
        %v2113 = vpack.c.bf16 %v1953, %v1950
        %v2114 = vpack.c.bf16 %v1961, %v1958
        %v2115 = vpack.c.bf16 %v1969, %v1966
        %v2116 = vpack.c.bf16 %v1977, %v1974
        %v2117 = vpack.c.bf16 %v1985, %v1982
        %v2118 = vpack.c.bf16 %v1993, %v1990
        %v2119 = vpack.c.bf16 %v2001, %v1998
        %v2120 = vpack.c.bf16 %v2009, %v2006
        %v2121 = vpack.c.bf16 %v2017, %v2014
        %v2122 = vpack.c.bf16 %v2025, %v2022
        %v2123 = vpack.c.bf16 %v2033, %v2030
        %v2124 = vpack.c.bf16 %v2041, %v2038
        %v2125 = vpack.c.bf16 %v2049, %v2046
        %v2126 = vpack.c.bf16 %v2057, %v2054
        %v2127 = vpack.c.bf16 %v2065, %v2062
        %v2128 = vpack.c.bf16 %v2073, %v2070
        %v2129 = vpack.c.bf16 %v2081, %v2078
        %v2130 = vpack.c.bf16 %v2089, %v2086
        %v2131 = vpack.c.bf16 %v2097, %v2094
        %v2132 = vld [vmem:[#allocation7] sm:$0xf]
        %v2133 = vld [vmem:[#allocation7 + $0x4] sm:$0xf]
        %v2134 = vld [vmem:[#allocation7 + $0x8] sm:$0xf]
        %v2135 = vld [vmem:[#allocation7 + $0xc] sm:$0xf]
        %v2136 = vld [vmem:[#allocation7 + $0x10] sm:$0xf]
        %v2137 = vld [vmem:[#allocation7 + $0x14] sm:$0xf]
        %v2138 = vld [vmem:[#allocation7 + $0x18] sm:$0xf]
        %v2139 = vld [vmem:[#allocation7 + $0x1c] sm:$0xf]
        %v2140 = vld [vmem:[#allocation7 + $0x20] sm:$0xf]
        %v2141 = vld [vmem:[#allocation7 + $0x24] sm:$0xf]
        %v2142 = vld [vmem:[#allocation7 + $0x28] sm:$0xf]
        %v2143 = vld [vmem:[#allocation7 + $0x2c] sm:$0xf]
        %v2144 = vld [vmem:[#allocation7 + $0x30] sm:$0xf]
        %v2145 = vld [vmem:[#allocation7 + $0x34] sm:$0xf]
        %v2146 = vld [vmem:[#allocation7 + $0x38] sm:$0xf]
        %v2147 = vld [vmem:[#allocation7 + $0x3c] sm:$0xf]
        %v2148 = vld [vmem:[#allocation8] sm:$0xf]
        %v2149 = vld [vmem:[#allocation8 + $0x4] sm:$0xf]
        %v2150 = vld [vmem:[#allocation8 + $0x8] sm:$0xf]
        %v2151 = vld [vmem:[#allocation8 + $0xc] sm:$0xf]
        %v2152 = vld [vmem:[#allocation8 + $0x10] sm:$0xf]
        %v2153 = vld [vmem:[#allocation8 + $0x14] sm:$0xf]
        %v2154 = vld [vmem:[#allocation8 + $0x18] sm:$0xf]
        %v2155 = vld [vmem:[#allocation8 + $0x1c] sm:$0xf]
        %v2156 = vld [vmem:[#allocation8 + $0x20] sm:$0xf]
        %v2157 = vld [vmem:[#allocation8 + $0x24] sm:$0xf]
        %v2158 = vld [vmem:[#allocation8 + $0x28] sm:$0xf]
        %v2159 = vld [vmem:[#allocation8 + $0x2c] sm:$0xf]
        %v2160 = vld [vmem:[#allocation8 + $0x30] sm:$0xf]
        %v2161 = vld [vmem:[#allocation8 + $0x34] sm:$0xf]
        %v2162 = vld [vmem:[#allocation8 + $0x38] sm:$0xf]
        %v2163 = vld [vmem:[#allocation8 + $0x3c] sm:$0xf]
        %v2180 = vunpack.c.l.b16 %v2148
        %v2181 = vunpack.c.l.b16 %v2149
        %v2182 = vunpack.c.l.b16 %v2150
        %v2183 = vunpack.c.l.b16 %v2151
        %v2184 = vunpack.c.l.b16 %v2152
        %v2185 = vunpack.c.l.b16 %v2153
        %v2186 = vunpack.c.l.b16 %v2154
        %v2187 = vunpack.c.l.b16 %v2155
        %v2188 = vunpack.c.l.b16 %v2156
        %v2189 = vunpack.c.l.b16 %v2157
        %v2190 = vunpack.c.l.b16 %v2158
        %v2191 = vunpack.c.l.b16 %v2159
        %v2192 = vunpack.c.l.b16 %v2160
        %v2193 = vunpack.c.l.b16 %v2161
        %v2194 = vunpack.c.l.b16 %v2162
        %v2195 = vunpack.c.l.b16 %v2163
        %v2196 = vpack.c.b16 %v2181, %v2180
        %v2197 = vpack.c.b16 %v2183, %v2182
        %v2198 = vpack.c.b16 %v2185, %v2184
        %v2199 = vpack.c.b16 %v2187, %v2186
        %v2200 = vpack.c.b16 %v2189, %v2188
        %v2201 = vpack.c.b16 %v2191, %v2190
        %v2202 = vpack.c.b16 %v2193, %v2192
        %v2203 = vpack.c.b16 %v2195, %v2194
        %2212 = vmatprep.subr.bf16.mxu0 0
        %2213 = vmatpush1.bf16.msra.mxu0 %v2196
        %2214 = vmatprep.subr.bf16.mxu0 0
        %2215 = vmatpush1.bf16.msra.mxu0 %v2197
        %2216 = vmatprep.subr.bf16.mxu0 0
        %2217 = vmatpush1.bf16.msra.mxu0 %v2198
        %2218 = vmatprep.subr.bf16.mxu0 0
        %2219 = vmatpush1.bf16.msra.mxu0 %v2199
        %2220 = vmatprep.subr.bf16.mxu0 0
        %2221 = vmatpush1.bf16.msra.mxu0 %v2200
        %2222 = vmatprep.subr.bf16.mxu0 0
        %2223 = vmatpush1.bf16.msra.mxu0 %v2201
        %2224 = vmatprep.subr.bf16.mxu0 0
        %2225 = vmatpush1.bf16.msra.mxu0 %v2202
        %2226 = vmatprep.subr.bf16.mxu0 0
        %2227 = vmatpush1.bf16.msra.mxu0 %v2203
        %2228 = vmatprep.subr.bf16.mxu0 0
        %2229 = vmatpush1.bf16.msra.mxu0 0
        %2230 = vmatprep.subr.bf16.mxu0 0
        %2231 = vmatpush1.bf16.msra.mxu0 0
        %2232 = vmatprep.subr.bf16.mxu0 0
        %2233 = vmatpush1.bf16.msra.mxu0 0
        %2234 = vmatprep.subr.bf16.mxu0 0
        %2235 = vmatpush1.bf16.msra.mxu0 0
        %2236 = vmatprep.subr.bf16.mxu0 0
        %2237 = vmatpush1.bf16.msra.mxu0 0
        %2238 = vmatprep.subr.bf16.mxu0 0
        %2239 = vmatpush1.bf16.msra.mxu0 0
        %2240 = vmatprep.subr.bf16.mxu0 0
        %2241 = vmatpush1.bf16.msra.mxu0 0
        %2242 = vmatprep.subr.bf16.mxu0 0
        %2243 = vmatpush1.bf16.msra.mxu0 0
        %2244 = vmatprep.mubr.bf16.mxu0 0
        %2245 = vmatmul.mubr.bf16.gmra.mrb[0].mxu0 %v2100
        %v2246 = vpop.f32.mrb[0].mxu0
        %v2247 = vadd.f32 0.0, %v2246
        %v2248 = vpop.f32.mrb[0].mxu0
        %v2249 = vpop.f32.mrb[0].mxu0
        %v2250 = vadd.f32 0.0, %v2249
        %v2251 = vpop.f32.mrb[0].mxu0
        %2252 = vmatprep.mubr.bf16.mxu0 0
        %2253 = vmatmul.mubr.bf16.gmra.mrb[0].mxu0 %v2101
        %v2254 = vpop.f32.mrb[0].mxu0
        %v2255 = vadd.f32 0.0, %v2254
        %v2256 = vpop.f32.mrb[0].mxu0
        %v2257 = vpop.f32.mrb[0].mxu0
        %v2258 = vadd.f32 0.0, %v2257
        %v2259 = vpop.f32.mrb[0].mxu0
        %2260 = vmatprep.mubr.bf16.mxu0 0
        %2261 = vmatmul.mubr.bf16.gmra.mrb[0].mxu0 %v2102
        %v2262 = vpop.f32.mrb[0].mxu0
        %v2263 = vadd.f32 0.0, %v2262
        %v2264 = vpop.f32.mrb[0].mxu0
        %v2265 = vpop.f32.mrb[0].mxu0
        %v2266 = vadd.f32 0.0, %v2265
        %v2267 = vpop.f32.mrb[0].mxu0
        %2268 = vmatprep.mubr.bf16.mxu0 0
        %2269 = vmatmul.mubr.bf16.gmra.mrb[0].mxu0 %v2103
        %v2270 = vpop.f32.mrb[0].mxu0
        %v2271 = vadd.f32 0.0, %v2270
        %v2272 = vpop.f32.mrb[0].mxu0
        %v2273 = vpop.f32.mrb[0].mxu0
        %v2274 = vadd.f32 0.0, %v2273
        %v2275 = vpop.f32.mrb[0].mxu0
        %2276 = vmatprep.mubr.bf16.mxu0 0
        %2277 = vmatmul.mubr.bf16.gmra.mrb[0].mxu0 %v2104
        %v2278 = vpop.f32.mrb[0].mxu0
        %v2279 = vadd.f32 0.0, %v2278
        %v2280 = vpop.f32.mrb[0].mxu0
        %v2281 = vpop.f32.mrb[0].mxu0
        %v2282 = vadd.f32 0.0, %v2281
        %v2283 = vpop.f32.mrb[0].mxu0
        %2284 = vmatprep.mubr.bf16.mxu0 0
        %2285 = vmatmul.mubr.bf16.gmra.mrb[0].mxu0 %v2105
        %v2286 = vpop.f32.mrb[0].mxu0
        %v2287 = vadd.f32 0.0, %v2286
        %v2288 = vpop.f32.mrb[0].mxu0
        %v2289 = vpop.f32.mrb[0].mxu0
        %v2290 = vadd.f32 0.0, %v2289
        %v2291 = vpop.f32.mrb[0].mxu0
        %2292 = vmatprep.mubr.bf16.mxu0 0
        %2293 = vmatmul.mubr.bf16.gmra.mrb[0].mxu0 %v2106
        %v2294 = vpop.f32.mrb[0].mxu0
        %v2295 = vadd.f32 0.0, %v2294
        %v2296 = vpop.f32.mrb[0].mxu0
        %v2297 = vpop.f32.mrb[0].mxu0
        %v2298 = vadd.f32 0.0, %v2297
        %v2299 = vpop.f32.mrb[0].mxu0
        %2300 = vmatprep.mubr.bf16.mxu0 0
        %2301 = vmatmul.mubr.bf16.gmra.mrb[0].mxu0 %v2107
        %v2302 = vpop.f32.mrb[0].mxu0
        %v2303 = vadd.f32 0.0, %v2302
        %v2304 = vpop.f32.mrb[0].mxu0
        %v2305 = vpop.f32.mrb[0].mxu0
        %v2306 = vadd.f32 0.0, %v2305
        %v2307 = vpop.f32.mrb[0].mxu0
        %2308 = vmatprep.mubr.bf16.mxu0 0
        %2309 = vmatmul.mubr.bf16.gmra.mrb[0].mxu0 %v2108
        %v2310 = vpop.f32.mrb[0].mxu0
        %v2311 = vadd.f32 0.0, %v2310
        %v2312 = vpop.f32.mrb[0].mxu0
        %v2313 = vpop.f32.mrb[0].mxu0
        %v2314 = vadd.f32 0.0, %v2313
        %v2315 = vpop.f32.mrb[0].mxu0
        %2316 = vmatprep.mubr.bf16.mxu0 0
        %2317 = vmatmul.mubr.bf16.gmra.mrb[0].mxu0 %v2109
        %v2318 = vpop.f32.mrb[0].mxu0
        %v2319 = vadd.f32 0.0, %v2318
        %v2320 = vpop.f32.mrb[0].mxu0
        %v2321 = vpop.f32.mrb[0].mxu0
        %v2322 = vadd.f32 0.0, %v2321
        %v2323 = vpop.f32.mrb[0].mxu0
        %2324 = vmatprep.mubr.bf16.mxu0 0
        %2325 = vmatmul.mubr.bf16.gmra.mrb[0].mxu0 %v2110
        %v2326 = vpop.f32.mrb[0].mxu0
        %v2327 = vadd.f32 0.0, %v2326
        %v2328 = vpop.f32.mrb[0].mxu0
        %v2329 = vpop.f32.mrb[0].mxu0
        %v2330 = vadd.f32 0.0, %v2329
        %v2331 = vpop.f32.mrb[0].mxu0
        %2332 = vmatprep.mubr.bf16.mxu0 0
        %2333 = vmatmul.mubr.bf16.gmra.mrb[0].mxu0 %v2111
        %v2334 = vpop.f32.mrb[0].mxu0
        %v2335 = vadd.f32 0.0, %v2334
        %v2336 = vpop.f32.mrb[0].mxu0
        %v2337 = vpop.f32.mrb[0].mxu0
        %v2338 = vadd.f32 0.0, %v2337
        %v2339 = vpop.f32.mrb[0].mxu0
        %2340 = vmatprep.mubr.bf16.mxu0 0
        %2341 = vmatmul.mubr.bf16.gmra.mrb[0].mxu0 %v2112
        %v2342 = vpop.f32.mrb[0].mxu0
        %v2343 = vadd.f32 0.0, %v2342
        %v2344 = vpop.f32.mrb[0].mxu0
        %v2345 = vpop.f32.mrb[0].mxu0
        %v2346 = vadd.f32 0.0, %v2345
        %v2347 = vpop.f32.mrb[0].mxu0
        %2348 = vmatprep.mubr.bf16.mxu0 0
        %2349 = vmatmul.mubr.bf16.gmra.mrb[0].mxu0 %v2113
        %v2350 = vpop.f32.mrb[0].mxu0
        %v2351 = vadd.f32 0.0, %v2350
        %v2352 = vpop.f32.mrb[0].mxu0
        %v2353 = vpop.f32.mrb[0].mxu0
        %v2354 = vadd.f32 0.0, %v2353
        %v2355 = vpop.f32.mrb[0].mxu0
        %2356 = vmatprep.mubr.bf16.mxu0 0
        %2357 = vmatmul.mubr.bf16.gmra.mrb[0].mxu0 %v2114
        %v2358 = vpop.f32.mrb[0].mxu0
        %v2359 = vadd.f32 0.0, %v2358
        %v2360 = vpop.f32.mrb[0].mxu0
        %v2361 = vpop.f32.mrb[0].mxu0
        %v2362 = vadd.f32 0.0, %v2361
        %v2363 = vpop.f32.mrb[0].mxu0
        %2364 = vmatprep.mubr.bf16.mxu0 0
        %2365 = vmatmul.mubr.bf16.gmra.mrb[0].mxu0 %v2115
        %v2366 = vpop.f32.mrb[0].mxu0
        %v2367 = vadd.f32 0.0, %v2366
        %v2368 = vpop.f32.mrb[0].mxu0
        %v2369 = vpop.f32.mrb[0].mxu0
        %v2370 = vadd.f32 0.0, %v2369
        %v2371 = vpop.f32.mrb[0].mxu0
        %2372 = vmatprep.mubr.bf16.mxu0 0
        %2373 = vmatmul.mubr.bf16.gmra.mrb[0].mxu0 %v2116
        %v2374 = vpop.f32.mrb[0].mxu0
        %v2375 = vadd.f32 0.0, %v2374
        %v2376 = vpop.f32.mrb[0].mxu0
        %v2377 = vpop.f32.mrb[0].mxu0
        %v2378 = vadd.f32 0.0, %v2377
        %v2379 = vpop.f32.mrb[0].mxu0
        %2380 = vmatprep.mubr.bf16.mxu0 0
        %2381 = vmatmul.mubr.bf16.gmra.mrb[0].mxu0 %v2117
        %v2382 = vpop.f32.mrb[0].mxu0
        %v2383 = vadd.f32 0.0, %v2382
        %v2384 = vpop.f32.mrb[0].mxu0
        %v2385 = vpop.f32.mrb[0].mxu0
        %v2386 = vadd.f32 0.0, %v2385
        %v2387 = vpop.f32.mrb[0].mxu0
        %2388 = vmatprep.mubr.bf16.mxu0 0
        %2389 = vmatmul.mubr.bf16.gmra.mrb[0].mxu0 %v2118
        %v2390 = vpop.f32.mrb[0].mxu0
        %v2391 = vadd.f32 0.0, %v2390
        %v2392 = vpop.f32.mrb[0].mxu0
        %v2393 = vpop.f32.mrb[0].mxu0
        %v2394 = vadd.f32 0.0, %v2393
        %v2395 = vpop.f32.mrb[0].mxu0
        %2396 = vmatprep.mubr.bf16.mxu0 0
        %2397 = vmatmul.mubr.bf16.gmra.mrb[0].mxu0 %v2119
        %v2398 = vpop.f32.mrb[0].mxu0
        %v2399 = vadd.f32 0.0, %v2398
        %v2400 = vpop.f32.mrb[0].mxu0
        %v2401 = vpop.f32.mrb[0].mxu0
        %v2402 = vadd.f32 0.0, %v2401
        %v2403 = vpop.f32.mrb[0].mxu0
        %2404 = vmatprep.mubr.bf16.mxu0 0
        %2405 = vmatmul.mubr.bf16.gmra.mrb[0].mxu0 %v2120
        %v2406 = vpop.f32.mrb[0].mxu0
        %v2407 = vadd.f32 0.0, %v2406
        %v2408 = vpop.f32.mrb[0].mxu0
        %v2409 = vpop.f32.mrb[0].mxu0
        %v2410 = vadd.f32 0.0, %v2409
        %v2411 = vpop.f32.mrb[0].mxu0
        %2412 = vmatprep.mubr.bf16.mxu0 0
        %2413 = vmatmul.mubr.bf16.gmra.mrb[0].mxu0 %v2121
        %v2414 = vpop.f32.mrb[0].mxu0
        %v2415 = vadd.f32 0.0, %v2414
        %v2416 = vpop.f32.mrb[0].mxu0
        %v2417 = vpop.f32.mrb[0].mxu0
        %v2418 = vadd.f32 0.0, %v2417
        %v2419 = vpop.f32.mrb[0].mxu0
        %2420 = vmatprep.mubr.bf16.mxu0 0
        %2421 = vmatmul.mubr.bf16.gmra.mrb[0].mxu0 %v2122
        %v2422 = vpop.f32.mrb[0].mxu0
        %v2423 = vadd.f32 0.0, %v2422
        %v2424 = vpop.f32.mrb[0].mxu0
        %v2425 = vpop.f32.mrb[0].mxu0
        %v2426 = vadd.f32 0.0, %v2425
        %v2427 = vpop.f32.mrb[0].mxu0
        %2428 = vmatprep.mubr.bf16.mxu0 0
        %2429 = vmatmul.mubr.bf16.gmra.mrb[0].mxu0 %v2123
        %v2430 = vpop.f32.mrb[0].mxu0
        %v2431 = vadd.f32 0.0, %v2430
        %v2432 = vpop.f32.mrb[0].mxu0
        %v2433 = vpop.f32.mrb[0].mxu0
        %v2434 = vadd.f32 0.0, %v2433
        %v2435 = vpop.f32.mrb[0].mxu0
        %2436 = vmatprep.mubr.bf16.mxu0 0
        %2437 = vmatmul.mubr.bf16.gmra.mrb[0].mxu0 %v2124
        %v2438 = vpop.f32.mrb[0].mxu0
        %v2439 = vadd.f32 0.0, %v2438
        %v2440 = vpop.f32.mrb[0].mxu0
        %v2441 = vpop.f32.mrb[0].mxu0
        %v2442 = vadd.f32 0.0, %v2441
        %v2443 = vpop.f32.mrb[0].mxu0
        %2444 = vmatprep.mubr.bf16.mxu0 0
        %2445 = vmatmul.mubr.bf16.gmra.mrb[0].mxu0 %v2125
        %v2446 = vpop.f32.mrb[0].mxu0
        %v2447 = vadd.f32 0.0, %v2446
        %v2448 = vpop.f32.mrb[0].mxu0
        %v2449 = vpop.f32.mrb[0].mxu0
        %v2450 = vadd.f32 0.0, %v2449
        %v2451 = vpop.f32.mrb[0].mxu0
        %2452 = vmatprep.mubr.bf16.mxu0 0
        %2453 = vmatmul.mubr.bf16.gmra.mrb[0].mxu0 %v2126
        %v2454 = vpop.f32.mrb[0].mxu0
        %v2455 = vadd.f32 0.0, %v2454
        %v2456 = vpop.f32.mrb[0].mxu0
        %v2457 = vpop.f32.mrb[0].mxu0
        %v2458 = vadd.f32 0.0, %v2457
        %v2459 = vpop.f32.mrb[0].mxu0
        %2460 = vmatprep.mubr.bf16.mxu0 0
        %2461 = vmatmul.mubr.bf16.gmra.mrb[0].mxu0 %v2127
        %v2462 = vpop.f32.mrb[0].mxu0
        %v2463 = vadd.f32 0.0, %v2462
        %v2464 = vpop.f32.mrb[0].mxu0
        %v2465 = vpop.f32.mrb[0].mxu0
        %v2466 = vadd.f32 0.0, %v2465
        %v2467 = vpop.f32.mrb[0].mxu0
        %2468 = vmatprep.mubr.bf16.mxu0 0
        %2469 = vmatmul.mubr.bf16.gmra.mrb[0].mxu0 %v2128
        %v2470 = vpop.f32.mrb[0].mxu0
        %v2471 = vadd.f32 0.0, %v2470
        %v2472 = vpop.f32.mrb[0].mxu0
        %v2473 = vpop.f32.mrb[0].mxu0
        %v2474 = vadd.f32 0.0, %v2473
        %v2475 = vpop.f32.mrb[0].mxu0
        %2476 = vmatprep.mubr.bf16.mxu0 0
        %2477 = vmatmul.mubr.bf16.gmra.mrb[0].mxu0 %v2129
        %v2478 = vpop.f32.mrb[0].mxu0
        %v2479 = vadd.f32 0.0, %v2478
        %v2480 = vpop.f32.mrb[0].mxu0
        %v2481 = vpop.f32.mrb[0].mxu0
        %v2482 = vadd.f32 0.0, %v2481
        %v2483 = vpop.f32.mrb[0].mxu0
        %2484 = vmatprep.mubr.bf16.mxu0 0
        %2485 = vmatmul.mubr.bf16.gmra.mrb[0].mxu0 %v2130
        %v2486 = vpop.f32.mrb[0].mxu0
        %v2487 = vadd.f32 0.0, %v2486
        %v2488 = vpop.f32.mrb[0].mxu0
        %v2489 = vpop.f32.mrb[0].mxu0
        %v2490 = vadd.f32 0.0, %v2489
        %v2491 = vpop.f32.mrb[0].mxu0
        %2492 = vmatprep.mubr.bf16.mxu0 0
        %2493 = vmatmul.mubr.bf16.gmra.mrb[0].mxu0 %v2131
        %v2494 = vpop.f32.mrb[0].mxu0
        %v2495 = vadd.f32 0.0, %v2494
        %v2496 = vpop.f32.mrb[0].mxu0
        %v2497 = vpop.f32.mrb[0].mxu0
        %v2498 = vadd.f32 0.0, %v2497
        %v2499 = vpop.f32.mrb[0].mxu0
        %2500 = vdwg.mxu0
        %v2517 = vunpack.c.l.b16 %v2132
        %v2518 = vunpack.c.l.b16 %v2133
        %v2519 = vunpack.c.l.b16 %v2134
        %v2520 = vunpack.c.l.b16 %v2135
        %v2521 = vunpack.c.l.b16 %v2136
        %v2522 = vunpack.c.l.b16 %v2137
        %v2523 = vunpack.c.l.b16 %v2138
        %v2524 = vunpack.c.l.b16 %v2139
        %v2525 = vunpack.c.l.b16 %v2140
        %v2526 = vunpack.c.l.b16 %v2141
        %v2527 = vunpack.c.l.b16 %v2142
        %v2528 = vunpack.c.l.b16 %v2143
        %v2529 = vunpack.c.l.b16 %v2144
        %v2530 = vunpack.c.l.b16 %v2145
        %v2531 = vunpack.c.l.b16 %v2146
        %v2532 = vunpack.c.l.b16 %v2147
        %v2533 = vpack.c.b16 %v2518, %v2517
        %v2534 = vpack.c.b16 %v2520, %v2519
        %v2535 = vpack.c.b16 %v2522, %v2521
        %v2536 = vpack.c.b16 %v2524, %v2523
        %v2537 = vpack.c.b16 %v2526, %v2525
        %v2538 = vpack.c.b16 %v2528, %v2527
        %v2539 = vpack.c.b16 %v2530, %v2529
        %v2540 = vpack.c.b16 %v2532, %v2531
        %2549 = vmatprep.subr.bf16.mxu0 0
        %2550 = vmatpush1.bf16.msra.mxu0 %v2533
        %2551 = vmatprep.subr.bf16.mxu0 0
        %2552 = vmatpush1.bf16.msra.mxu0 %v2534
        %2553 = vmatprep.subr.bf16.mxu0 0
        %2554 = vmatpush1.bf16.msra.mxu0 %v2535
        %2555 = vmatprep.subr.bf16.mxu0 0
        %2556 = vmatpush1.bf16.msra.mxu0 %v2536
        %2557 = vmatprep.subr.bf16.mxu0 0
        %2558 = vmatpush1.bf16.msra.mxu0 %v2537
        %2559 = vmatprep.subr.bf16.mxu0 0
        %2560 = vmatpush1.bf16.msra.mxu0 %v2538
        %2561 = vmatprep.subr.bf16.mxu0 0
        %2562 = vmatpush1.bf16.msra.mxu0 %v2539
        %2563 = vmatprep.subr.bf16.mxu0 0
        %2564 = vmatpush1.bf16.msra.mxu0 %v2540
        %2565 = vmatprep.subr.bf16.mxu0 0
        %2566 = vmatpush1.bf16.msra.mxu0 0
        %2567 = vmatprep.subr.bf16.mxu0 0
        %2568 = vmatpush1.bf16.msra.mxu0 0
        %2569 = vmatprep.subr.bf16.mxu0 0
        %2570 = vmatpush1.bf16.msra.mxu0 0
        %2571 = vmatprep.subr.bf16.mxu0 0
        %2572 = vmatpush1.bf16.msra.mxu0 0
        %2573 = vmatprep.subr.bf16.mxu0 0
        %2574 = vmatpush1.bf16.msra.mxu0 0
        %2575 = vmatprep.subr.bf16.mxu0 0
        %2576 = vmatpush1.bf16.msra.mxu0 0
        %2577 = vmatprep.subr.bf16.mxu0 0
        %2578 = vmatpush1.bf16.msra.mxu0 0
        %2579 = vmatprep.subr.bf16.mxu0 0
        %2580 = vmatpush1.bf16.msra.mxu0 0
        %2581 = vmatprep.mubr.bf16.mxu0 0
        %2582 = vmatmul.mubr.bf16.gmra.mrb[0].mxu0 %v1458
        %v2583 = vpop.f32.mrb[0].mxu0
        %v2584 = vadd.f32 %v2247, %v2583
        %v2585 = vpop.f32.mrb[0].mxu0
        %v2586 = vpop.f32.mrb[0].mxu0
        %v2587 = vadd.f32 %v2250, %v2586
        %v2588 = vpop.f32.mrb[0].mxu0
        %2589 = vmatprep.mubr.bf16.mxu0 0
        %2590 = vmatmul.mubr.bf16.gmra.mrb[0].mxu0 %v1459
        %v2591 = vpop.f32.mrb[0].mxu0
        %v2592 = vadd.f32 %v2255, %v2591
        %v2593 = vpop.f32.mrb[0].mxu0
        %v2594 = vpop.f32.mrb[0].mxu0
        %v2595 = vadd.f32 %v2258, %v2594
        %v2596 = vpop.f32.mrb[0].mxu0
        %2597 = vmatprep.mubr.bf16.mxu0 0
        %2598 = vmatmul.mubr.bf16.gmra.mrb[0].mxu0 %v1460
        %v2599 = vpop.f32.mrb[0].mxu0
        %v2600 = vadd.f32 %v2263, %v2599
        %v2601 = vpop.f32.mrb[0].mxu0
        %v2602 = vpop.f32.mrb[0].mxu0
        %v2603 = vadd.f32 %v2266, %v2602
        %v2604 = vpop.f32.mrb[0].mxu0
        %2605 = vmatprep.mubr.bf16.mxu0 0
        %2606 = vmatmul.mubr.bf16.gmra.mrb[0].mxu0 %v1461
        %v2607 = vpop.f32.mrb[0].mxu0
        %v2608 = vadd.f32 %v2271, %v2607
        %v2609 = vpop.f32.mrb[0].mxu0
        %v2610 = vpop.f32.mrb[0].mxu0
        %v2611 = vadd.f32 %v2274, %v2610
        %v2612 = vpop.f32.mrb[0].mxu0
        %2613 = vmatprep.mubr.bf16.mxu0 0
        %2614 = vmatmul.mubr.bf16.gmra.mrb[0].mxu0 %v1462
        %v2615 = vpop.f32.mrb[0].mxu0
        %v2616 = vadd.f32 %v2279, %v2615
        %v2617 = vpop.f32.mrb[0].mxu0
        %v2618 = vpop.f32.mrb[0].mxu0
        %v2619 = vadd.f32 %v2282, %v2618
        %v2620 = vpop.f32.mrb[0].mxu0
        %2621 = vmatprep.mubr.bf16.mxu0 0
        %2622 = vmatmul.mubr.bf16.gmra.mrb[0].mxu0 %v1463
        %v2623 = vpop.f32.mrb[0].mxu0
        %v2624 = vadd.f32 %v2287, %v2623
        %v2625 = vpop.f32.mrb[0].mxu0
        %v2626 = vpop.f32.mrb[0].mxu0
        %v2627 = vadd.f32 %v2290, %v2626
        %v2628 = vpop.f32.mrb[0].mxu0
        %2629 = vmatprep.mubr.bf16.mxu0 0
        %2630 = vmatmul.mubr.bf16.gmra.mrb[0].mxu0 %v1464
        %v2631 = vpop.f32.mrb[0].mxu0
        %v2632 = vadd.f32 %v2295, %v2631
        %v2633 = vpop.f32.mrb[0].mxu0
        %v2634 = vpop.f32.mrb[0].mxu0
        %v2635 = vadd.f32 %v2298, %v2634
        %v2636 = vpop.f32.mrb[0].mxu0
        %2637 = vmatprep.mubr.bf16.mxu0 0
        %2638 = vmatmul.mubr.bf16.gmra.mrb[0].mxu0 %v1465
        %v2639 = vpop.f32.mrb[0].mxu0
        %v2640 = vadd.f32 %v2303, %v2639
        %v2641 = vpop.f32.mrb[0].mxu0
        %v2642 = vpop.f32.mrb[0].mxu0
        %v2643 = vadd.f32 %v2306, %v2642
        %v2644 = vpop.f32.mrb[0].mxu0
        %2645 = vmatprep.mubr.bf16.mxu0 0
        %2646 = vmatmul.mubr.bf16.gmra.mrb[0].mxu0 %v1466
        %v2647 = vpop.f32.mrb[0].mxu0
        %v2648 = vadd.f32 %v2311, %v2647
        %v2649 = vpop.f32.mrb[0].mxu0
        %v2650 = vpop.f32.mrb[0].mxu0
        %v2651 = vadd.f32 %v2314, %v2650
        %v2652 = vpop.f32.mrb[0].mxu0
        %2653 = vmatprep.mubr.bf16.mxu0 0
        %2654 = vmatmul.mubr.bf16.gmra.mrb[0].mxu0 %v1467
        %v2655 = vpop.f32.mrb[0].mxu0
        %v2656 = vadd.f32 %v2319, %v2655
        %v2657 = vpop.f32.mrb[0].mxu0
        %v2658 = vpop.f32.mrb[0].mxu0
        %v2659 = vadd.f32 %v2322, %v2658
        %v2660 = vpop.f32.mrb[0].mxu0
        %2661 = vmatprep.mubr.bf16.mxu0 0
        %2662 = vmatmul.mubr.bf16.gmra.mrb[0].mxu0 %v1468
        %v2663 = vpop.f32.mrb[0].mxu0
        %v2664 = vadd.f32 %v2327, %v2663
        %v2665 = vpop.f32.mrb[0].mxu0
        %v2666 = vpop.f32.mrb[0].mxu0
        %v2667 = vadd.f32 %v2330, %v2666
        %v2668 = vpop.f32.mrb[0].mxu0
        %2669 = vmatprep.mubr.bf16.mxu0 0
        %2670 = vmatmul.mubr.bf16.gmra.mrb[0].mxu0 %v1469
        %v2671 = vpop.f32.mrb[0].mxu0
        %v2672 = vadd.f32 %v2335, %v2671
        %v2673 = vpop.f32.mrb[0].mxu0
        %v2674 = vpop.f32.mrb[0].mxu0
        %v2675 = vadd.f32 %v2338, %v2674
        %v2676 = vpop.f32.mrb[0].mxu0
        %2677 = vmatprep.mubr.bf16.mxu0 0
        %2678 = vmatmul.mubr.bf16.gmra.mrb[0].mxu0 %v1470
        %v2679 = vpop.f32.mrb[0].mxu0
        %v2680 = vadd.f32 %v2343, %v2679
        %v2681 = vpop.f32.mrb[0].mxu0
        %v2682 = vpop.f32.mrb[0].mxu0
        %v2683 = vadd.f32 %v2346, %v2682
        %v2684 = vpop.f32.mrb[0].mxu0
        %2685 = vmatprep.mubr.bf16.mxu0 0
        %2686 = vmatmul.mubr.bf16.gmra.mrb[0].mxu0 %v1471
        %v2687 = vpop.f32.mrb[0].mxu0
        %v2688 = vadd.f32 %v2351, %v2687
        %v2689 = vpop.f32.mrb[0].mxu0
        %v2690 = vpop.f32.mrb[0].mxu0
        %v2691 = vadd.f32 %v2354, %v2690
        %v2692 = vpop.f32.mrb[0].mxu0
        %2693 = vmatprep.mubr.bf16.mxu0 0
        %2694 = vmatmul.mubr.bf16.gmra.mrb[0].mxu0 %v1472
        %v2695 = vpop.f32.mrb[0].mxu0
        %v2696 = vadd.f32 %v2359, %v2695
        %v2697 = vpop.f32.mrb[0].mxu0
        %v2698 = vpop.f32.mrb[0].mxu0
        %v2699 = vadd.f32 %v2362, %v2698
        %v2700 = vpop.f32.mrb[0].mxu0
        %2701 = vmatprep.mubr.bf16.mxu0 0
        %2702 = vmatmul.mubr.bf16.gmra.mrb[0].mxu0 %v1473
        %v2703 = vpop.f32.mrb[0].mxu0
        %v2704 = vadd.f32 %v2367, %v2703
        %v2705 = vpop.f32.mrb[0].mxu0
        %v2706 = vpop.f32.mrb[0].mxu0
        %v2707 = vadd.f32 %v2370, %v2706
        %v2708 = vpop.f32.mrb[0].mxu0
        %2709 = vmatprep.mubr.bf16.mxu0 0
        %2710 = vmatmul.mubr.bf16.gmra.mrb[0].mxu0 %v1474
        %v2711 = vpop.f32.mrb[0].mxu0
        %v2712 = vadd.f32 %v2375, %v2711
        %v2713 = vpop.f32.mrb[0].mxu0
        %v2714 = vpop.f32.mrb[0].mxu0
        %v2715 = vadd.f32 %v2378, %v2714
        %v2716 = vpop.f32.mrb[0].mxu0
        %2717 = vmatprep.mubr.bf16.mxu0 0
        %2718 = vmatmul.mubr.bf16.gmra.mrb[0].mxu0 %v1475
        %v2719 = vpop.f32.mrb[0].mxu0
        %v2720 = vadd.f32 %v2383, %v2719
        %v2721 = vpop.f32.mrb[0].mxu0
        %v2722 = vpop.f32.mrb[0].mxu0
        %v2723 = vadd.f32 %v2386, %v2722
        %v2724 = vpop.f32.mrb[0].mxu0
        %2725 = vmatprep.mubr.bf16.mxu0 0
        %2726 = vmatmul.mubr.bf16.gmra.mrb[0].mxu0 %v1476
        %v2727 = vpop.f32.mrb[0].mxu0
        %v2728 = vadd.f32 %v2391, %v2727
        %v2729 = vpop.f32.mrb[0].mxu0
        %v2730 = vpop.f32.mrb[0].mxu0
        %v2731 = vadd.f32 %v2394, %v2730
        %v2732 = vpop.f32.mrb[0].mxu0
        %2733 = vmatprep.mubr.bf16.mxu0 0
        %2734 = vmatmul.mubr.bf16.gmra.mrb[0].mxu0 %v1477
        %v2735 = vpop.f32.mrb[0].mxu0
        %v2736 = vadd.f32 %v2399, %v2735
        %v2737 = vpop.f32.mrb[0].mxu0
        %v2738 = vpop.f32.mrb[0].mxu0
        %v2739 = vadd.f32 %v2402, %v2738
        %v2740 = vpop.f32.mrb[0].mxu0
        %2741 = vmatprep.mubr.bf16.mxu0 0
        %2742 = vmatmul.mubr.bf16.gmra.mrb[0].mxu0 %v1478
        %v2743 = vpop.f32.mrb[0].mxu0
        %v2744 = vadd.f32 %v2407, %v2743
        %v2745 = vpop.f32.mrb[0].mxu0
        %v2746 = vpop.f32.mrb[0].mxu0
        %v2747 = vadd.f32 %v2410, %v2746
        %v2748 = vpop.f32.mrb[0].mxu0
        %2749 = vmatprep.mubr.bf16.mxu0 0
        %2750 = vmatmul.mubr.bf16.gmra.mrb[0].mxu0 %v1479
        %v2751 = vpop.f32.mrb[0].mxu0
        %v2752 = vadd.f32 %v2415, %v2751
        %v2753 = vpop.f32.mrb[0].mxu0
        %v2754 = vpop.f32.mrb[0].mxu0
        %v2755 = vadd.f32 %v2418, %v2754
        %v2756 = vpop.f32.mrb[0].mxu0
        %2757 = vmatprep.mubr.bf16.mxu0 0
        %2758 = vmatmul.mubr.bf16.gmra.mrb[0].mxu0 %v1480
        %v2759 = vpop.f32.mrb[0].mxu0
        %v2760 = vadd.f32 %v2423, %v2759
        %v2761 = vpop.f32.mrb[0].mxu0
        %v2762 = vpop.f32.mrb[0].mxu0
        %v2763 = vadd.f32 %v2426, %v2762
        %v2764 = vpop.f32.mrb[0].mxu0
        %2765 = vmatprep.mubr.bf16.mxu0 0
        %2766 = vmatmul.mubr.bf16.gmra.mrb[0].mxu0 %v1481
        %v2767 = vpop.f32.mrb[0].mxu0
        %v2768 = vadd.f32 %v2431, %v2767
        %v2769 = vpop.f32.mrb[0].mxu0
        %v2770 = vpop.f32.mrb[0].mxu0
        %v2771 = vadd.f32 %v2434, %v2770
        %v2772 = vpop.f32.mrb[0].mxu0
        %2773 = vmatprep.mubr.bf16.mxu0 0
        %2774 = vmatmul.mubr.bf16.gmra.mrb[0].mxu0 %v1482
        %v2775 = vpop.f32.mrb[0].mxu0
        %v2776 = vadd.f32 %v2439, %v2775
        %v2777 = vpop.f32.mrb[0].mxu0
        %v2778 = vpop.f32.mrb[0].mxu0
        %v2779 = vadd.f32 %v2442, %v2778
        %v2780 = vpop.f32.mrb[0].mxu0
        %2781 = vmatprep.mubr.bf16.mxu0 0
        %2782 = vmatmul.mubr.bf16.gmra.mrb[0].mxu0 %v1483
        %v2783 = vpop.f32.mrb[0].mxu0
        %v2784 = vadd.f32 %v2447, %v2783
        %v2785 = vpop.f32.mrb[0].mxu0
        %v2786 = vpop.f32.mrb[0].mxu0
        %v2787 = vadd.f32 %v2450, %v2786
        %v2788 = vpop.f32.mrb[0].mxu0
        %2789 = vmatprep.mubr.bf16.mxu0 0
        %2790 = vmatmul.mubr.bf16.gmra.mrb[0].mxu0 %v1484
        %v2791 = vpop.f32.mrb[0].mxu0
        %v2792 = vadd.f32 %v2455, %v2791
        %v2793 = vpop.f32.mrb[0].mxu0
        %v2794 = vpop.f32.mrb[0].mxu0
        %v2795 = vadd.f32 %v2458, %v2794
        %v2796 = vpop.f32.mrb[0].mxu0
        %2797 = vmatprep.mubr.bf16.mxu0 0
        %2798 = vmatmul.mubr.bf16.gmra.mrb[0].mxu0 %v1485
        %v2799 = vpop.f32.mrb[0].mxu0
        %v2800 = vadd.f32 %v2463, %v2799
        %v2801 = vpop.f32.mrb[0].mxu0
        %v2802 = vpop.f32.mrb[0].mxu0
        %v2803 = vadd.f32 %v2466, %v2802
        %v2804 = vpop.f32.mrb[0].mxu0
        %2805 = vmatprep.mubr.bf16.mxu0 0
        %2806 = vmatmul.mubr.bf16.gmra.mrb[0].mxu0 %v1486
        %v2807 = vpop.f32.mrb[0].mxu0
        %v2808 = vadd.f32 %v2471, %v2807
        %v2809 = vpop.f32.mrb[0].mxu0
        %v2810 = vpop.f32.mrb[0].mxu0
        %v2811 = vadd.f32 %v2474, %v2810
        %v2812 = vpop.f32.mrb[0].mxu0
        %2813 = vmatprep.mubr.bf16.mxu0 0
        %2814 = vmatmul.mubr.bf16.gmra.mrb[0].mxu0 %v1487
        %v2815 = vpop.f32.mrb[0].mxu0
        %v2816 = vadd.f32 %v2479, %v2815
        %v2817 = vpop.f32.mrb[0].mxu0
        %v2818 = vpop.f32.mrb[0].mxu0
        %v2819 = vadd.f32 %v2482, %v2818
        %v2820 = vpop.f32.mrb[0].mxu0
        %2821 = vmatprep.mubr.bf16.mxu0 0
        %2822 = vmatmul.mubr.bf16.gmra.mrb[0].mxu0 %v1488
        %v2823 = vpop.f32.mrb[0].mxu0
        %v2824 = vadd.f32 %v2487, %v2823
        %v2825 = vpop.f32.mrb[0].mxu0
        %v2826 = vpop.f32.mrb[0].mxu0
        %v2827 = vadd.f32 %v2490, %v2826
        %v2828 = vpop.f32.mrb[0].mxu0
        %2829 = vmatprep.mubr.bf16.mxu0 0
        %2830 = vmatmul.mubr.bf16.gmra.mrb[0].mxu0 %v1489
        %v2831 = vpop.f32.mrb[0].mxu0
        %v2832 = vadd.f32 %v2495, %v2831
        %v2833 = vpop.f32.mrb[0].mxu0
        %v2834 = vpop.f32.mrb[0].mxu0
        %v2835 = vadd.f32 %v2498, %v2834
        %v2836 = vpop.f32.mrb[0].mxu0
        %2837 = vdwg.mxu0
        %v2838 = vlaneseq
        %v2839 = vshrl.u32 %v2838, 7
        %v2840 = vsub.s32 0, %v2839
        %v2841 = vrot.slane %v689, %v2840
        %v2842 = vadd.f32 %v2584, %v2841
        %v2843 = vadd.f32 %v2587, %v2841
        %v2844 = vadd.f32 %v2592, %v2841
        %v2845 = vadd.f32 %v2595, %v2841
        %v2846 = vadd.f32 %v2600, %v2841
        %v2847 = vadd.f32 %v2603, %v2841
        %v2848 = vadd.f32 %v2608, %v2841
        %v2849 = vadd.f32 %v2611, %v2841
        %v2850 = vadd.f32 %v2616, %v2841
        %v2851 = vadd.f32 %v2619, %v2841
        %v2852 = vadd.f32 %v2624, %v2841
        %v2853 = vadd.f32 %v2627, %v2841
        %v2854 = vadd.f32 %v2632, %v2841
        %v2855 = vadd.f32 %v2635, %v2841
        %v2856 = vadd.f32 %v2640, %v2841
        %v2857 = vadd.f32 %v2643, %v2841
        %v2858 = vadd.f32 %v2648, %v2841
        %v2859 = vadd.f32 %v2651, %v2841
        %v2860 = vadd.f32 %v2656, %v2841
        %v2861 = vadd.f32 %v2659, %v2841
        %v2862 = vadd.f32 %v2664, %v2841
        %v2863 = vadd.f32 %v2667, %v2841
        %v2864 = vadd.f32 %v2672, %v2841
        %v2865 = vadd.f32 %v2675, %v2841
        %v2866 = vadd.f32 %v2680, %v2841
        %v2867 = vadd.f32 %v2683, %v2841
        %v2868 = vadd.f32 %v2688, %v2841
        %v2869 = vadd.f32 %v2691, %v2841
        %v2870 = vadd.f32 %v2696, %v2841
        %v2871 = vadd.f32 %v2699, %v2841
        %v2872 = vadd.f32 %v2704, %v2841
        %v2873 = vadd.f32 %v2707, %v2841
        %v2874 = vadd.f32 %v2712, %v2841
        %v2875 = vadd.f32 %v2715, %v2841
        %v2876 = vadd.f32 %v2720, %v2841
        %v2877 = vadd.f32 %v2723, %v2841
        %v2878 = vadd.f32 %v2728, %v2841
        %v2879 = vadd.f32 %v2731, %v2841
        %v2880 = vadd.f32 %v2736, %v2841
        %v2881 = vadd.f32 %v2739, %v2841
        %v2882 = vadd.f32 %v2744, %v2841
        %v2883 = vadd.f32 %v2747, %v2841
        %v2884 = vadd.f32 %v2752, %v2841
        %v2885 = vadd.f32 %v2755, %v2841
        %v2886 = vadd.f32 %v2760, %v2841
        %v2887 = vadd.f32 %v2763, %v2841
        %v2888 = vadd.f32 %v2768, %v2841
        %v2889 = vadd.f32 %v2771, %v2841
        %v2890 = vadd.f32 %v2776, %v2841
        %v2891 = vadd.f32 %v2779, %v2841
        %v2892 = vadd.f32 %v2784, %v2841
        %v2893 = vadd.f32 %v2787, %v2841
        %v2894 = vadd.f32 %v2792, %v2841
        %v2895 = vadd.f32 %v2795, %v2841
        %v2896 = vadd.f32 %v2800, %v2841
        %v2897 = vadd.f32 %v2803, %v2841
        %v2898 = vadd.f32 %v2808, %v2841
        %v2899 = vadd.f32 %v2811, %v2841
        %v2900 = vadd.f32 %v2816, %v2841
        %v2901 = vadd.f32 %v2819, %v2841
        %v2902 = vadd.f32 %v2824, %v2841
        %v2903 = vadd.f32 %v2827, %v2841
        %v2904 = vadd.f32 %v2832, %v2841
        %v2905 = vadd.f32 %v2835, %v2841
        %v2906 = vmax.f32 %v2842, 0.0
        %v2907 = vmax.f32 %v2843, 0.0
        %v2908 = vmax.f32 %v2844, 0.0
        %v2909 = vmax.f32 %v2845, 0.0
        %v2910 = vmax.f32 %v2846, 0.0
        %v2911 = vmax.f32 %v2847, 0.0
        %v2912 = vmax.f32 %v2848, 0.0
        %v2913 = vmax.f32 %v2849, 0.0
        %v2914 = vmax.f32 %v2850, 0.0
        %v2915 = vmax.f32 %v2851, 0.0
        %v2916 = vmax.f32 %v2852, 0.0
        %v2917 = vmax.f32 %v2853, 0.0
        %v2918 = vmax.f32 %v2854, 0.0
        %v2919 = vmax.f32 %v2855, 0.0
        %v2920 = vmax.f32 %v2856, 0.0
        %v2921 = vmax.f32 %v2857, 0.0
        %v2922 = vmax.f32 %v2858, 0.0
        %v2923 = vmax.f32 %v2859, 0.0
        %v2924 = vmax.f32 %v2860, 0.0
        %v2925 = vmax.f32 %v2861, 0.0
        %v2926 = vmax.f32 %v2862, 0.0
        %v2927 = vmax.f32 %v2863, 0.0
        %v2928 = vmax.f32 %v2864, 0.0
        %v2929 = vmax.f32 %v2865, 0.0
        %v2930 = vmax.f32 %v2866, 0.0
        %v2931 = vmax.f32 %v2867, 0.0
        %v2932 = vmax.f32 %v2868, 0.0
        %v2933 = vmax.f32 %v2869, 0.0
        %v2934 = vmax.f32 %v2870, 0.0
        %v2935 = vmax.f32 %v2871, 0.0
        %v2936 = vmax.f32 %v2872, 0.0
        %v2937 = vmax.f32 %v2873, 0.0
        %v2938 = vmax.f32 %v2874, 0.0
        %v2939 = vmax.f32 %v2875, 0.0
        %v2940 = vmax.f32 %v2876, 0.0
        %v2941 = vmax.f32 %v2877, 0.0
        %v2942 = vmax.f32 %v2878, 0.0
        %v2943 = vmax.f32 %v2879, 0.0
        %v2944 = vmax.f32 %v2880, 0.0
        %v2945 = vmax.f32 %v2881, 0.0
        %v2946 = vmax.f32 %v2882, 0.0
        %v2947 = vmax.f32 %v2883, 0.0
        %v2948 = vmax.f32 %v2884, 0.0
        %v2949 = vmax.f32 %v2885, 0.0
        %v2950 = vmax.f32 %v2886, 0.0
        %v2951 = vmax.f32 %v2887, 0.0
        %v2952 = vmax.f32 %v2888, 0.0
        %v2953 = vmax.f32 %v2889, 0.0
        %v2954 = vmax.f32 %v2890, 0.0
        %v2955 = vmax.f32 %v2891, 0.0
        %v2956 = vmax.f32 %v2892, 0.0
        %v2957 = vmax.f32 %v2893, 0.0
        %v2958 = vmax.f32 %v2894, 0.0
        %v2959 = vmax.f32 %v2895, 0.0
        %v2960 = vmax.f32 %v2896, 0.0
        %v2961 = vmax.f32 %v2897, 0.0
        %v2962 = vmax.f32 %v2898, 0.0
        %v2963 = vmax.f32 %v2899, 0.0
        %v2964 = vmax.f32 %v2900, 0.0
        %v2965 = vmax.f32 %v2901, 0.0
        %v2966 = vmax.f32 %v2902, 0.0
        %v2967 = vmax.f32 %v2903, 0.0
        %v2968 = vmax.f32 %v2904, 0.0
        %v2969 = vmax.f32 %v2905, 0.0
        %v2970 = vpack.c.bf16 %v2907, %v2906
        %v2971 = vpack.c.bf16 %v2909, %v2908
        %v2972 = vpack.c.bf16 %v2911, %v2910
        %v2973 = vpack.c.bf16 %v2913, %v2912
        %v2974 = vpack.c.bf16 %v2915, %v2914
        %v2975 = vpack.c.bf16 %v2917, %v2916
        %v2976 = vpack.c.bf16 %v2919, %v2918
        %v2977 = vpack.c.bf16 %v2921, %v2920
        %v2978 = vpack.c.bf16 %v2923, %v2922
        %v2979 = vpack.c.bf16 %v2925, %v2924
        %v2980 = vpack.c.bf16 %v2927, %v2926
        %v2981 = vpack.c.bf16 %v2929, %v2928
        %v2982 = vpack.c.bf16 %v2931, %v2930
        %v2983 = vpack.c.bf16 %v2933, %v2932
        %v2984 = vpack.c.bf16 %v2935, %v2934
        %v2985 = vpack.c.bf16 %v2937, %v2936
        %v2986 = vpack.c.bf16 %v2939, %v2938
        %v2987 = vpack.c.bf16 %v2941, %v2940
        %v2988 = vpack.c.bf16 %v2943, %v2942
        %v2989 = vpack.c.bf16 %v2945, %v2944
        %v2990 = vpack.c.bf16 %v2947, %v2946
        %v2991 = vpack.c.bf16 %v2949, %v2948
        %v2992 = vpack.c.bf16 %v2951, %v2950
        %v2993 = vpack.c.bf16 %v2953, %v2952
        %v2994 = vpack.c.bf16 %v2955, %v2954
        %v2995 = vpack.c.bf16 %v2957, %v2956
        %v2996 = vpack.c.bf16 %v2959, %v2958
        %v2997 = vpack.c.bf16 %v2961, %v2960
        %v2998 = vpack.c.bf16 %v2963, %v2962
        %v2999 = vpack.c.bf16 %v2965, %v2964
        %v3000 = vpack.c.bf16 %v2967, %v2966
        %v3001 = vpack.c.bf16 %v2969, %v2968
        %3002 = vmatprep.subr.bf16.mxu0 0
        %3003 = vmatpush1.bf16.msra.mxu0 %v2970
        %3004 = vmatprep.subr.bf16.mxu0 0
        %3005 = vmatpush1.bf16.msra.mxu0 %v2971
        %3006 = vmatprep.subr.bf16.mxu0 0
        %3007 = vmatpush1.bf16.msra.mxu0 %v2972
        %3008 = vmatprep.subr.bf16.mxu0 0
        %3009 = vmatpush1.bf16.msra.mxu0 %v2973
        %3010 = vmatprep.subr.bf16.mxu0 0
        %3011 = vmatpush1.bf16.msra.mxu0 %v2974
        %3012 = vmatprep.subr.bf16.mxu0 0
        %3013 = vmatpush1.bf16.msra.mxu0 %v2975
        %3014 = vmatprep.subr.bf16.mxu0 0
        %3015 = vmatpush1.bf16.msra.mxu0 %v2976
        %3016 = vmatprep.subr.bf16.mxu0 0
        %3017 = vmatpush1.bf16.msra.mxu0 %v2977
        %3018 = vmatprep.subr.bf16.mxu0 0
        %3019 = vmatpush1.bf16.msra.mxu0 %v2978
        %3020 = vmatprep.subr.bf16.mxu0 0
        %3021 = vmatpush1.bf16.msra.mxu0 %v2979
        %3022 = vmatprep.subr.bf16.mxu0 0
        %3023 = vmatpush1.bf16.msra.mxu0 %v2980
        %3024 = vmatprep.subr.bf16.mxu0 0
        %3025 = vmatpush1.bf16.msra.mxu0 %v2981
        %3026 = vmatprep.subr.bf16.mxu0 0
        %3027 = vmatpush1.bf16.msra.mxu0 %v2982
        %3028 = vmatprep.subr.bf16.mxu0 0
        %3029 = vmatpush1.bf16.msra.mxu0 %v2983
        %3030 = vmatprep.subr.bf16.mxu0 0
        %3031 = vmatpush1.bf16.msra.mxu0 %v2984
        %3032 = vmatprep.subr.bf16.mxu0 0
        %3033 = vmatpush1.bf16.msra.mxu0 %v2985
        %3034 = vmatprep.mubr.bf16.mxu0 %v1075
        %3035 = vmatmul.mubr.bf16.gmra.mrb[0].mxu0 %v1074
        %v3036 = vpop.f32.mrb[0].mxu0
        %v3037 = vadd.f32 0.0, %v3036
        %v3038 = vpop.f32.mrb[0].mxu0
        %v3039 = vpop.f32.mrb[0].mxu0
        %v3040 = vadd.f32 0.0, %v3039
        %v3041 = vpop.f32.mrb[0].mxu0
        %3042 = vmatprep.mubr.bf16.mxu0 %v1079
        %3043 = vmatmul.mubr.bf16.gmra.mrb[0].mxu0 %v1078
        %v3044 = vpop.f32.mrb[0].mxu0
        %v3045 = vadd.f32 0.0, %v3044
        %v3046 = vpop.f32.mrb[0].mxu0
        %v3047 = vpop.f32.mrb[0].mxu0
        %v3048 = vadd.f32 0.0, %v3047
        %v3049 = vpop.f32.mrb[0].mxu0
        %3050 = vmatprep.mubr.bf16.mxu0 %v1083
        %3051 = vmatmul.mubr.bf16.gmra.mrb[0].mxu0 %v1082
        %v3052 = vpop.f32.mrb[0].mxu0
        %v3053 = vadd.f32 0.0, %v3052
        %v3054 = vpop.f32.mrb[0].mxu0
        %v3055 = vpop.f32.mrb[0].mxu0
        %v3056 = vadd.f32 0.0, %v3055
        %v3057 = vpop.f32.mrb[0].mxu0
        %3058 = vmatprep.mubr.bf16.mxu0 %v1087
        %3059 = vmatmul.mubr.bf16.gmra.mrb[0].mxu0 %v1086
        %v3060 = vpop.f32.mrb[0].mxu0
        %v3061 = vadd.f32 0.0, %v3060
        %v3062 = vpop.f32.mrb[0].mxu0
        %v3063 = vpop.f32.mrb[0].mxu0
        %v3064 = vadd.f32 0.0, %v3063
        %v3065 = vpop.f32.mrb[0].mxu0
        %3066 = vmatprep.mubr.bf16.mxu0 %v1091
        %3067 = vmatmul.mubr.bf16.gmra.mrb[0].mxu0 %v1090
        %v3068 = vpop.f32.mrb[0].mxu0
        %v3069 = vadd.f32 0.0, %v3068
        %v3070 = vpop.f32.mrb[0].mxu0
        %v3071 = vpop.f32.mrb[0].mxu0
        %v3072 = vadd.f32 0.0, %v3071
        %v3073 = vpop.f32.mrb[0].mxu0
        %3074 = vmatprep.mubr.bf16.mxu0 %v1095
        %3075 = vmatmul.mubr.bf16.gmra.mrb[0].mxu0 %v1094
        %v3076 = vpop.f32.mrb[0].mxu0
        %v3077 = vadd.f32 0.0, %v3076
        %v3078 = vpop.f32.mrb[0].mxu0
        %v3079 = vpop.f32.mrb[0].mxu0
        %v3080 = vadd.f32 0.0, %v3079
        %v3081 = vpop.f32.mrb[0].mxu0
        %3082 = vmatprep.mubr.bf16.mxu0 %v1099
        %3083 = vmatmul.mubr.bf16.gmra.mrb[0].mxu0 %v1098
        %v3084 = vpop.f32.mrb[0].mxu0
        %v3085 = vadd.f32 0.0, %v3084
        %v3086 = vpop.f32.mrb[0].mxu0
        %v3087 = vpop.f32.mrb[0].mxu0
        %v3088 = vadd.f32 0.0, %v3087
        %v3089 = vpop.f32.mrb[0].mxu0
        %3090 = vmatprep.mubr.bf16.mxu0 %v1103
        %3091 = vmatmul.mubr.bf16.gmra.mrb[0].mxu0 %v1102
        %v3092 = vpop.f32.mrb[0].mxu0
        %v3093 = vadd.f32 0.0, %v3092
        %v3094 = vpop.f32.mrb[0].mxu0
        %v3095 = vpop.f32.mrb[0].mxu0
        %v3096 = vadd.f32 0.0, %v3095
        %v3097 = vpop.f32.mrb[0].mxu0
        %3098 = vmatprep.mubr.bf16.mxu0 %v1107
        %3099 = vmatmul.mubr.bf16.gmra.mrb[0].mxu0 %v1106
        %v3100 = vpop.f32.mrb[0].mxu0
        %v3101 = vadd.f32 0.0, %v3100
        %v3102 = vpop.f32.mrb[0].mxu0
        %v3103 = vpop.f32.mrb[0].mxu0
        %v3104 = vadd.f32 0.0, %v3103
        %v3105 = vpop.f32.mrb[0].mxu0
        %3106 = vmatprep.mubr.bf16.mxu0 %v1111
        %3107 = vmatmul.mubr.bf16.gmra.mrb[0].mxu0 %v1110
        %v3108 = vpop.f32.mrb[0].mxu0
        %v3109 = vadd.f32 0.0, %v3108
        %v3110 = vpop.f32.mrb[0].mxu0
        %v3111 = vpop.f32.mrb[0].mxu0
        %v3112 = vadd.f32 0.0, %v3111
        %v3113 = vpop.f32.mrb[0].mxu0
        %3114 = vmatprep.mubr.bf16.mxu0 %v1115
        %3115 = vmatmul.mubr.bf16.gmra.mrb[0].mxu0 %v1114
        %v3116 = vpop.f32.mrb[0].mxu0
        %v3117 = vadd.f32 0.0, %v3116
        %v3118 = vpop.f32.mrb[0].mxu0
        %v3119 = vpop.f32.mrb[0].mxu0
        %v3120 = vadd.f32 0.0, %v3119
        %v3121 = vpop.f32.mrb[0].mxu0
        %3122 = vmatprep.mubr.bf16.mxu0 %v1119
        %3123 = vmatmul.mubr.bf16.gmra.mrb[0].mxu0 %v1118
        %v3124 = vpop.f32.mrb[0].mxu0
        %v3125 = vadd.f32 0.0, %v3124
        %v3126 = vpop.f32.mrb[0].mxu0
        %v3127 = vpop.f32.mrb[0].mxu0
        %v3128 = vadd.f32 0.0, %v3127
        %v3129 = vpop.f32.mrb[0].mxu0
        %3130 = vmatprep.mubr.bf16.mxu0 %v1123
        %3131 = vmatmul.mubr.bf16.gmra.mrb[0].mxu0 %v1122
        %v3132 = vpop.f32.mrb[0].mxu0
        %v3133 = vadd.f32 0.0, %v3132
        %v3134 = vpop.f32.mrb[0].mxu0
        %v3135 = vpop.f32.mrb[0].mxu0
        %v3136 = vadd.f32 0.0, %v3135
        %v3137 = vpop.f32.mrb[0].mxu0
        %3138 = vmatprep.mubr.bf16.mxu0 %v1127
        %3139 = vmatmul.mubr.bf16.gmra.mrb[0].mxu0 %v1126
        %v3140 = vpop.f32.mrb[0].mxu0
        %v3141 = vadd.f32 0.0, %v3140
        %v3142 = vpop.f32.mrb[0].mxu0
        %v3143 = vpop.f32.mrb[0].mxu0
        %v3144 = vadd.f32 0.0, %v3143
        %v3145 = vpop.f32.mrb[0].mxu0
        %3146 = vmatprep.mubr.bf16.mxu0 %v1131
        %3147 = vmatmul.mubr.bf16.gmra.mrb[0].mxu0 %v1130
        %v3148 = vpop.f32.mrb[0].mxu0
        %v3149 = vadd.f32 0.0, %v3148
        %v3150 = vpop.f32.mrb[0].mxu0
        %v3151 = vpop.f32.mrb[0].mxu0
        %v3152 = vadd.f32 0.0, %v3151
        %v3153 = vpop.f32.mrb[0].mxu0
        %3154 = vmatprep.mubr.bf16.mxu0 %v1135
        %3155 = vmatmul.mubr.bf16.gmra.mrb[0].mxu0 %v1134
        %v3156 = vpop.f32.mrb[0].mxu0
        %v3157 = vadd.f32 0.0, %v3156
        %v3158 = vpop.f32.mrb[0].mxu0
        %v3159 = vpop.f32.mrb[0].mxu0
        %v3160 = vadd.f32 0.0, %v3159
        %v3161 = vpop.f32.mrb[0].mxu0
        %3162 = vmatprep.mubr.bf16.mxu0 %v1139
        %3163 = vmatmul.mubr.bf16.gmra.mrb[0].mxu0 %v1138
        %v3164 = vpop.f32.mrb[0].mxu0
        %v3165 = vadd.f32 0.0, %v3164
        %v3166 = vpop.f32.mrb[0].mxu0
        %v3167 = vpop.f32.mrb[0].mxu0
        %v3168 = vadd.f32 0.0, %v3167
        %v3169 = vpop.f32.mrb[0].mxu0
        %3170 = vmatprep.mubr.bf16.mxu0 %v1143
        %3171 = vmatmul.mubr.bf16.gmra.mrb[0].mxu0 %v1142
        %v3172 = vpop.f32.mrb[0].mxu0
        %v3173 = vadd.f32 0.0, %v3172
        %v3174 = vpop.f32.mrb[0].mxu0
        %v3175 = vpop.f32.mrb[0].mxu0
        %v3176 = vadd.f32 0.0, %v3175
        %v3177 = vpop.f32.mrb[0].mxu0
        %3178 = vmatprep.mubr.bf16.mxu0 %v1147
        %3179 = vmatmul.mubr.bf16.gmra.mrb[0].mxu0 %v1146
        %v3180 = vpop.f32.mrb[0].mxu0
        %v3181 = vadd.f32 0.0, %v3180
        %v3182 = vpop.f32.mrb[0].mxu0
        %v3183 = vpop.f32.mrb[0].mxu0
        %v3184 = vadd.f32 0.0, %v3183
        %v3185 = vpop.f32.mrb[0].mxu0
        %3186 = vmatprep.mubr.bf16.mxu0 %v1151
        %3187 = vmatmul.mubr.bf16.gmra.mrb[0].mxu0 %v1150
        %v3188 = vpop.f32.mrb[0].mxu0
        %v3189 = vadd.f32 0.0, %v3188
        %v3190 = vpop.f32.mrb[0].mxu0
        %v3191 = vpop.f32.mrb[0].mxu0
        %v3192 = vadd.f32 0.0, %v3191
        %v3193 = vpop.f32.mrb[0].mxu0
        %3194 = vmatprep.mubr.bf16.mxu0 %v1155
        %3195 = vmatmul.mubr.bf16.gmra.mrb[0].mxu0 %v1154
        %v3196 = vpop.f32.mrb[0].mxu0
        %v3197 = vadd.f32 0.0, %v3196
        %v3198 = vpop.f32.mrb[0].mxu0
        %v3199 = vpop.f32.mrb[0].mxu0
        %v3200 = vadd.f32 0.0, %v3199
        %v3201 = vpop.f32.mrb[0].mxu0
        %3202 = vmatprep.mubr.bf16.mxu0 %v1159
        %3203 = vmatmul.mubr.bf16.gmra.mrb[0].mxu0 %v1158
        %v3204 = vpop.f32.mrb[0].mxu0
        %v3205 = vadd.f32 0.0, %v3204
        %v3206 = vpop.f32.mrb[0].mxu0
        %v3207 = vpop.f32.mrb[0].mxu0
        %v3208 = vadd.f32 0.0, %v3207
        %v3209 = vpop.f32.mrb[0].mxu0
        %3210 = vmatprep.mubr.bf16.mxu0 %v1163
        %3211 = vmatmul.mubr.bf16.gmra.mrb[0].mxu0 %v1162
        %v3212 = vpop.f32.mrb[0].mxu0
        %v3213 = vadd.f32 0.0, %v3212
        %v3214 = vpop.f32.mrb[0].mxu0
        %v3215 = vpop.f32.mrb[0].mxu0
        %v3216 = vadd.f32 0.0, %v3215
        %v3217 = vpop.f32.mrb[0].mxu0
        %3218 = vmatprep.mubr.bf16.mxu0 %v1167
        %3219 = vmatmul.mubr.bf16.gmra.mrb[0].mxu0 %v1166
        %v3220 = vpop.f32.mrb[0].mxu0
        %v3221 = vadd.f32 0.0, %v3220
        %v3222 = vpop.f32.mrb[0].mxu0
        %v3223 = vpop.f32.mrb[0].mxu0
        %v3224 = vadd.f32 0.0, %v3223
        %v3225 = vpop.f32.mrb[0].mxu0
        %3226 = vmatprep.mubr.bf16.mxu0 %v1171
        %3227 = vmatmul.mubr.bf16.gmra.mrb[0].mxu0 %v1170
        %v3228 = vpop.f32.mrb[0].mxu0
        %v3229 = vadd.f32 0.0, %v3228
        %v3230 = vpop.f32.mrb[0].mxu0
        %v3231 = vpop.f32.mrb[0].mxu0
        %v3232 = vadd.f32 0.0, %v3231
        %v3233 = vpop.f32.mrb[0].mxu0
        %3234 = vmatprep.mubr.bf16.mxu0 %v1175
        %3235 = vmatmul.mubr.bf16.gmra.mrb[0].mxu0 %v1174
        %v3236 = vpop.f32.mrb[0].mxu0
        %v3237 = vadd.f32 0.0, %v3236
        %v3238 = vpop.f32.mrb[0].mxu0
        %v3239 = vpop.f32.mrb[0].mxu0
        %v3240 = vadd.f32 0.0, %v3239
        %v3241 = vpop.f32.mrb[0].mxu0
        %3242 = vmatprep.mubr.bf16.mxu0 %v1179
        %3243 = vmatmul.mubr.bf16.gmra.mrb[0].mxu0 %v1178
        %v3244 = vpop.f32.mrb[0].mxu0
        %v3245 = vadd.f32 0.0, %v3244
        %v3246 = vpop.f32.mrb[0].mxu0
        %v3247 = vpop.f32.mrb[0].mxu0
        %v3248 = vadd.f32 0.0, %v3247
        %v3249 = vpop.f32.mrb[0].mxu0
        %3250 = vmatprep.mubr.bf16.mxu0 %v1183
        %3251 = vmatmul.mubr.bf16.gmra.mrb[0].mxu0 %v1182
        %v3252 = vpop.f32.mrb[0].mxu0
        %v3253 = vadd.f32 0.0, %v3252
        %v3254 = vpop.f32.mrb[0].mxu0
        %v3255 = vpop.f32.mrb[0].mxu0
        %v3256 = vadd.f32 0.0, %v3255
        %v3257 = vpop.f32.mrb[0].mxu0
        %3258 = vmatprep.mubr.bf16.mxu0 %v1187
        %3259 = vmatmul.mubr.bf16.gmra.mrb[0].mxu0 %v1186
        %v3260 = vpop.f32.mrb[0].mxu0
        %v3261 = vadd.f32 0.0, %v3260
        %v3262 = vpop.f32.mrb[0].mxu0
        %v3263 = vpop.f32.mrb[0].mxu0
        %v3264 = vadd.f32 0.0, %v3263
        %v3265 = vpop.f32.mrb[0].mxu0
        %3266 = vmatprep.mubr.bf16.mxu0 %v1191
        %3267 = vmatmul.mubr.bf16.gmra.mrb[0].mxu0 %v1190
        %v3268 = vpop.f32.mrb[0].mxu0
        %v3269 = vadd.f32 0.0, %v3268
        %v3270 = vpop.f32.mrb[0].mxu0
        %v3271 = vpop.f32.mrb[0].mxu0
        %v3272 = vadd.f32 0.0, %v3271
        %v3273 = vpop.f32.mrb[0].mxu0
        %3274 = vmatprep.mubr.bf16.mxu0 %v1195
        %3275 = vmatmul.mubr.bf16.gmra.mrb[0].mxu0 %v1194
        %v3276 = vpop.f32.mrb[0].mxu0
        %v3277 = vadd.f32 0.0, %v3276
        %v3278 = vpop.f32.mrb[0].mxu0
        %v3279 = vpop.f32.mrb[0].mxu0
        %v3280 = vadd.f32 0.0, %v3279
        %v3281 = vpop.f32.mrb[0].mxu0
        %3282 = vmatprep.mubr.bf16.mxu0 %v1199
        %3283 = vmatmul.mubr.bf16.gmra.mrb[0].mxu0 %v1198
        %v3284 = vpop.f32.mrb[0].mxu0
        %v3285 = vadd.f32 0.0, %v3284
        %v3286 = vpop.f32.mrb[0].mxu0
        %v3287 = vpop.f32.mrb[0].mxu0
        %v3288 = vadd.f32 0.0, %v3287
        %v3289 = vpop.f32.mrb[0].mxu0
        %3290 = vdwg.mxu0
        %3291 = vmatprep.subr.bf16.mxu0 0
        %3292 = vmatpush1.bf16.msra.mxu0 %v2986
        %3293 = vmatprep.subr.bf16.mxu0 0
        %3294 = vmatpush1.bf16.msra.mxu0 %v2987
        %3295 = vmatprep.subr.bf16.mxu0 0
        %3296 = vmatpush1.bf16.msra.mxu0 %v2988
        %3297 = vmatprep.subr.bf16.mxu0 0
        %3298 = vmatpush1.bf16.msra.mxu0 %v2989
        %3299 = vmatprep.subr.bf16.mxu0 0
        %3300 = vmatpush1.bf16.msra.mxu0 %v2990
        %3301 = vmatprep.subr.bf16.mxu0 0
        %3302 = vmatpush1.bf16.msra.mxu0 %v2991
        %3303 = vmatprep.subr.bf16.mxu0 0
        %3304 = vmatpush1.bf16.msra.mxu0 %v2992
        %3305 = vmatprep.subr.bf16.mxu0 0
        %3306 = vmatpush1.bf16.msra.mxu0 %v2993
        %3307 = vmatprep.subr.bf16.mxu0 0
        %3308 = vmatpush1.bf16.msra.mxu0 %v2994
        %3309 = vmatprep.subr.bf16.mxu0 0
        %3310 = vmatpush1.bf16.msra.mxu0 %v2995
        %3311 = vmatprep.subr.bf16.mxu0 0
        %3312 = vmatpush1.bf16.msra.mxu0 %v2996
        %3313 = vmatprep.subr.bf16.mxu0 0
        %3314 = vmatpush1.bf16.msra.mxu0 %v2997
        %3315 = vmatprep.subr.bf16.mxu0 0
        %3316 = vmatpush1.bf16.msra.mxu0 %v2998
        %3317 = vmatprep.subr.bf16.mxu0 0
        %3318 = vmatpush1.bf16.msra.mxu0 %v2999
        %3319 = vmatprep.subr.bf16.mxu0 0
        %3320 = vmatpush1.bf16.msra.mxu0 %v3000
        %3321 = vmatprep.subr.bf16.mxu0 0
        %3322 = vmatpush1.bf16.msra.mxu0 %v3001
        %3323 = vmatprep.mubr.bf16.mxu0 %v1077
        %3324 = vmatmul.mubr.bf16.gmra.mrb[0].mxu0 %v1076
        %v3325 = vpop.f32.mrb[0].mxu0
        %v3326 = vadd.f32 %v3037, %v3325
        %v3327 = vpop.f32.mrb[0].mxu0
        %v3328 = vpop.f32.mrb[0].mxu0
        %v3329 = vadd.f32 %v3040, %v3328
        %v3330 = vpop.f32.mrb[0].mxu0
        %3331 = vmatprep.mubr.bf16.mxu0 %v1081
        %3332 = vmatmul.mubr.bf16.gmra.mrb[0].mxu0 %v1080
        %v3333 = vpop.f32.mrb[0].mxu0
        %v3334 = vadd.f32 %v3045, %v3333
        %v3335 = vpop.f32.mrb[0].mxu0
        %v3336 = vpop.f32.mrb[0].mxu0
        %v3337 = vadd.f32 %v3048, %v3336
        %v3338 = vpop.f32.mrb[0].mxu0
        %3339 = vmatprep.mubr.bf16.mxu0 %v1085
        %3340 = vmatmul.mubr.bf16.gmra.mrb[0].mxu0 %v1084
        %v3341 = vpop.f32.mrb[0].mxu0
        %v3342 = vadd.f32 %v3053, %v3341
        %v3343 = vpop.f32.mrb[0].mxu0
        %v3344 = vpop.f32.mrb[0].mxu0
        %v3345 = vadd.f32 %v3056, %v3344
        %v3346 = vpop.f32.mrb[0].mxu0
        %3347 = vmatprep.mubr.bf16.mxu0 %v1089
        %3348 = vmatmul.mubr.bf16.gmra.mrb[0].mxu0 %v1088
        %v3349 = vpop.f32.mrb[0].mxu0
        %v3350 = vadd.f32 %v3061, %v3349
        %v3351 = vpop.f32.mrb[0].mxu0
        %v3352 = vpop.f32.mrb[0].mxu0
        %v3353 = vadd.f32 %v3064, %v3352
        %v3354 = vpop.f32.mrb[0].mxu0
        %3355 = vmatprep.mubr.bf16.mxu0 %v1093
        %3356 = vmatmul.mubr.bf16.gmra.mrb[0].mxu0 %v1092
        %v3357 = vpop.f32.mrb[0].mxu0
        %v3358 = vadd.f32 %v3069, %v3357
        %v3359 = vpop.f32.mrb[0].mxu0
        %v3360 = vpop.f32.mrb[0].mxu0
        %v3361 = vadd.f32 %v3072, %v3360
        %v3362 = vpop.f32.mrb[0].mxu0
        %3363 = vmatprep.mubr.bf16.mxu0 %v1097
        %3364 = vmatmul.mubr.bf16.gmra.mrb[0].mxu0 %v1096
        %v3365 = vpop.f32.mrb[0].mxu0
        %v3366 = vadd.f32 %v3077, %v3365
        %v3367 = vpop.f32.mrb[0].mxu0
        %v3368 = vpop.f32.mrb[0].mxu0
        %v3369 = vadd.f32 %v3080, %v3368
        %v3370 = vpop.f32.mrb[0].mxu0
        %3371 = vmatprep.mubr.bf16.mxu0 %v1101
        %3372 = vmatmul.mubr.bf16.gmra.mrb[0].mxu0 %v1100
        %v3373 = vpop.f32.mrb[0].mxu0
        %v3374 = vadd.f32 %v3085, %v3373
        %v3375 = vpop.f32.mrb[0].mxu0
        %v3376 = vpop.f32.mrb[0].mxu0
        %v3377 = vadd.f32 %v3088, %v3376
        %v3378 = vpop.f32.mrb[0].mxu0
        %3379 = vmatprep.mubr.bf16.mxu0 %v1105
        %3380 = vmatmul.mubr.bf16.gmra.mrb[0].mxu0 %v1104
        %v3381 = vpop.f32.mrb[0].mxu0
        %v3382 = vadd.f32 %v3093, %v3381
        %v3383 = vpop.f32.mrb[0].mxu0
        %v3384 = vpop.f32.mrb[0].mxu0
        %v3385 = vadd.f32 %v3096, %v3384
        %v3386 = vpop.f32.mrb[0].mxu0
        %3387 = vmatprep.mubr.bf16.mxu0 %v1109
        %3388 = vmatmul.mubr.bf16.gmra.mrb[0].mxu0 %v1108
        %v3389 = vpop.f32.mrb[0].mxu0
        %v3390 = vadd.f32 %v3101, %v3389
        %v3391 = vpop.f32.mrb[0].mxu0
        %v3392 = vpop.f32.mrb[0].mxu0
        %v3393 = vadd.f32 %v3104, %v3392
        %v3394 = vpop.f32.mrb[0].mxu0
        %3395 = vmatprep.mubr.bf16.mxu0 %v1113
        %3396 = vmatmul.mubr.bf16.gmra.mrb[0].mxu0 %v1112
        %v3397 = vpop.f32.mrb[0].mxu0
        %v3398 = vadd.f32 %v3109, %v3397
        %v3399 = vpop.f32.mrb[0].mxu0
        %v3400 = vpop.f32.mrb[0].mxu0
        %v3401 = vadd.f32 %v3112, %v3400
        %v3402 = vpop.f32.mrb[0].mxu0
        %3403 = vmatprep.mubr.bf16.mxu0 %v1117
        %3404 = vmatmul.mubr.bf16.gmra.mrb[0].mxu0 %v1116
        %v3405 = vpop.f32.mrb[0].mxu0
        %v3406 = vadd.f32 %v3117, %v3405
        %v3407 = vpop.f32.mrb[0].mxu0
        %v3408 = vpop.f32.mrb[0].mxu0
        %v3409 = vadd.f32 %v3120, %v3408
        %v3410 = vpop.f32.mrb[0].mxu0
        %3411 = vmatprep.mubr.bf16.mxu0 %v1121
        %3412 = vmatmul.mubr.bf16.gmra.mrb[0].mxu0 %v1120
        %v3413 = vpop.f32.mrb[0].mxu0
        %v3414 = vadd.f32 %v3125, %v3413
        %v3415 = vpop.f32.mrb[0].mxu0
        %v3416 = vpop.f32.mrb[0].mxu0
        %v3417 = vadd.f32 %v3128, %v3416
        %v3418 = vpop.f32.mrb[0].mxu0
        %3419 = vmatprep.mubr.bf16.mxu0 %v1125
        %3420 = vmatmul.mubr.bf16.gmra.mrb[0].mxu0 %v1124
        %v3421 = vpop.f32.mrb[0].mxu0
        %v3422 = vadd.f32 %v3133, %v3421
        %v3423 = vpop.f32.mrb[0].mxu0
        %v3424 = vpop.f32.mrb[0].mxu0
        %v3425 = vadd.f32 %v3136, %v3424
        %v3426 = vpop.f32.mrb[0].mxu0
        %3427 = vmatprep.mubr.bf16.mxu0 %v1129
        %3428 = vmatmul.mubr.bf16.gmra.mrb[0].mxu0 %v1128
        %v3429 = vpop.f32.mrb[0].mxu0
        %v3430 = vadd.f32 %v3141, %v3429
        %v3431 = vpop.f32.mrb[0].mxu0
        %v3432 = vpop.f32.mrb[0].mxu0
        %v3433 = vadd.f32 %v3144, %v3432
        %v3434 = vpop.f32.mrb[0].mxu0
        %3435 = vmatprep.mubr.bf16.mxu0 %v1133
        %3436 = vmatmul.mubr.bf16.gmra.mrb[0].mxu0 %v1132
        %v3437 = vpop.f32.mrb[0].mxu0
        %v3438 = vadd.f32 %v3149, %v3437
        %v3439 = vpop.f32.mrb[0].mxu0
        %v3440 = vpop.f32.mrb[0].mxu0
        %v3441 = vadd.f32 %v3152, %v3440
        %v3442 = vpop.f32.mrb[0].mxu0
        %3443 = vmatprep.mubr.bf16.mxu0 %v1137
        %3444 = vmatmul.mubr.bf16.gmra.mrb[0].mxu0 %v1136
        %v3445 = vpop.f32.mrb[0].mxu0
        %v3446 = vadd.f32 %v3157, %v3445
        %v3447 = vpop.f32.mrb[0].mxu0
        %v3448 = vpop.f32.mrb[0].mxu0
        %v3449 = vadd.f32 %v3160, %v3448
        %v3450 = vpop.f32.mrb[0].mxu0
        %3451 = vmatprep.mubr.bf16.mxu0 %v1141
        %3452 = vmatmul.mubr.bf16.gmra.mrb[0].mxu0 %v1140
        %v3453 = vpop.f32.mrb[0].mxu0
        %v3454 = vadd.f32 %v3165, %v3453
        %v3455 = vpop.f32.mrb[0].mxu0
        %v3456 = vpop.f32.mrb[0].mxu0
        %v3457 = vadd.f32 %v3168, %v3456
        %v3458 = vpop.f32.mrb[0].mxu0
        %3459 = vmatprep.mubr.bf16.mxu0 %v1145
        %3460 = vmatmul.mubr.bf16.gmra.mrb[0].mxu0 %v1144
        %v3461 = vpop.f32.mrb[0].mxu0
        %v3462 = vadd.f32 %v3173, %v3461
        %v3463 = vpop.f32.mrb[0].mxu0
        %v3464 = vpop.f32.mrb[0].mxu0
        %v3465 = vadd.f32 %v3176, %v3464
        %v3466 = vpop.f32.mrb[0].mxu0
        %3467 = vmatprep.mubr.bf16.mxu0 %v1149
        %3468 = vmatmul.mubr.bf16.gmra.mrb[0].mxu0 %v1148
        %v3469 = vpop.f32.mrb[0].mxu0
        %v3470 = vadd.f32 %v3181, %v3469
        %v3471 = vpop.f32.mrb[0].mxu0
        %v3472 = vpop.f32.mrb[0].mxu0
        %v3473 = vadd.f32 %v3184, %v3472
        %v3474 = vpop.f32.mrb[0].mxu0
        %3475 = vmatprep.mubr.bf16.mxu0 %v1153
        %3476 = vmatmul.mubr.bf16.gmra.mrb[0].mxu0 %v1152
        %v3477 = vpop.f32.mrb[0].mxu0
        %v3478 = vadd.f32 %v3189, %v3477
        %v3479 = vpop.f32.mrb[0].mxu0
        %v3480 = vpop.f32.mrb[0].mxu0
        %v3481 = vadd.f32 %v3192, %v3480
        %v3482 = vpop.f32.mrb[0].mxu0
        %3483 = vmatprep.mubr.bf16.mxu0 %v1157
        %3484 = vmatmul.mubr.bf16.gmra.mrb[0].mxu0 %v1156
        %v3485 = vpop.f32.mrb[0].mxu0
        %v3486 = vadd.f32 %v3197, %v3485
        %v3487 = vpop.f32.mrb[0].mxu0
        %v3488 = vpop.f32.mrb[0].mxu0
        %v3489 = vadd.f32 %v3200, %v3488
        %v3490 = vpop.f32.mrb[0].mxu0
        %3491 = vmatprep.mubr.bf16.mxu0 %v1161
        %3492 = vmatmul.mubr.bf16.gmra.mrb[0].mxu0 %v1160
        %v3493 = vpop.f32.mrb[0].mxu0
        %v3494 = vadd.f32 %v3205, %v3493
        %v3495 = vpop.f32.mrb[0].mxu0
        %v3496 = vpop.f32.mrb[0].mxu0
        %v3497 = vadd.f32 %v3208, %v3496
        %v3498 = vpop.f32.mrb[0].mxu0
        %3499 = vmatprep.mubr.bf16.mxu0 %v1165
        %3500 = vmatmul.mubr.bf16.gmra.mrb[0].mxu0 %v1164
        %v3501 = vpop.f32.mrb[0].mxu0
        %v3502 = vadd.f32 %v3213, %v3501
        %v3503 = vpop.f32.mrb[0].mxu0
        %v3504 = vpop.f32.mrb[0].mxu0
        %v3505 = vadd.f32 %v3216, %v3504
        %v3506 = vpop.f32.mrb[0].mxu0
        %3507 = vmatprep.mubr.bf16.mxu0 %v1169
        %3508 = vmatmul.mubr.bf16.gmra.mrb[0].mxu0 %v1168
        %v3509 = vpop.f32.mrb[0].mxu0
        %v3510 = vadd.f32 %v3221, %v3509
        %v3511 = vpop.f32.mrb[0].mxu0
        %v3512 = vpop.f32.mrb[0].mxu0
        %v3513 = vadd.f32 %v3224, %v3512
        %v3514 = vpop.f32.mrb[0].mxu0
        %3515 = vmatprep.mubr.bf16.mxu0 %v1173
        %3516 = vmatmul.mubr.bf16.gmra.mrb[0].mxu0 %v1172
        %v3517 = vpop.f32.mrb[0].mxu0
        %v3518 = vadd.f32 %v3229, %v3517
        %v3519 = vpop.f32.mrb[0].mxu0
        %v3520 = vpop.f32.mrb[0].mxu0
        %v3521 = vadd.f32 %v3232, %v3520
        %v3522 = vpop.f32.mrb[0].mxu0
        %3523 = vmatprep.mubr.bf16.mxu0 %v1177
        %3524 = vmatmul.mubr.bf16.gmra.mrb[0].mxu0 %v1176
        %v3525 = vpop.f32.mrb[0].mxu0
        %v3526 = vadd.f32 %v3237, %v3525
        %v3527 = vpop.f32.mrb[0].mxu0
        %v3528 = vpop.f32.mrb[0].mxu0
        %v3529 = vadd.f32 %v3240, %v3528
        %v3530 = vpop.f32.mrb[0].mxu0
        %3531 = vmatprep.mubr.bf16.mxu0 %v1181
        %3532 = vmatmul.mubr.bf16.gmra.mrb[0].mxu0 %v1180
        %v3533 = vpop.f32.mrb[0].mxu0
        %v3534 = vadd.f32 %v3245, %v3533
        %v3535 = vpop.f32.mrb[0].mxu0
        %v3536 = vpop.f32.mrb[0].mxu0
        %v3537 = vadd.f32 %v3248, %v3536
        %v3538 = vpop.f32.mrb[0].mxu0
        %3539 = vmatprep.mubr.bf16.mxu0 %v1185
        %3540 = vmatmul.mubr.bf16.gmra.mrb[0].mxu0 %v1184
        %v3541 = vpop.f32.mrb[0].mxu0
        %v3542 = vadd.f32 %v3253, %v3541
        %v3543 = vpop.f32.mrb[0].mxu0
        %v3544 = vpop.f32.mrb[0].mxu0
        %v3545 = vadd.f32 %v3256, %v3544
        %v3546 = vpop.f32.mrb[0].mxu0
        %3547 = vmatprep.mubr.bf16.mxu0 %v1189
        %3548 = vmatmul.mubr.bf16.gmra.mrb[0].mxu0 %v1188
        %v3549 = vpop.f32.mrb[0].mxu0
        %v3550 = vadd.f32 %v3261, %v3549
        %v3551 = vpop.f32.mrb[0].mxu0
        %v3552 = vpop.f32.mrb[0].mxu0
        %v3553 = vadd.f32 %v3264, %v3552
        %v3554 = vpop.f32.mrb[0].mxu0
        %3555 = vmatprep.mubr.bf16.mxu0 %v1193
        %3556 = vmatmul.mubr.bf16.gmra.mrb[0].mxu0 %v1192
        %v3557 = vpop.f32.mrb[0].mxu0
        %v3558 = vadd.f32 %v3269, %v3557
        %v3559 = vpop.f32.mrb[0].mxu0
        %v3560 = vpop.f32.mrb[0].mxu0
        %v3561 = vadd.f32 %v3272, %v3560
        %v3562 = vpop.f32.mrb[0].mxu0
        %3563 = vmatprep.mubr.bf16.mxu0 %v1197
        %3564 = vmatmul.mubr.bf16.gmra.mrb[0].mxu0 %v1196
        %v3565 = vpop.f32.mrb[0].mxu0
        %v3566 = vadd.f32 %v3277, %v3565
        %v3567 = vpop.f32.mrb[0].mxu0
        %v3568 = vpop.f32.mrb[0].mxu0
        %v3569 = vadd.f32 %v3280, %v3568
        %v3570 = vpop.f32.mrb[0].mxu0
        %3571 = vmatprep.mubr.bf16.mxu0 %v1201
        %3572 = vmatmul.mubr.bf16.gmra.mrb[0].mxu0 %v1200
        %v3573 = vpop.f32.mrb[0].mxu0
        %v3574 = vadd.f32 %v3285, %v3573
        %v3575 = vpop.f32.mrb[0].mxu0
        %v3576 = vpop.f32.mrb[0].mxu0
        %v3577 = vadd.f32 %v3288, %v3576
        %v3578 = vpop.f32.mrb[0].mxu0
        %3579 = vdwg.mxu0
        %v3580 = vpack.c.bf16 %v3329, %v3326
        %v3581 = vpack.c.bf16 %v3337, %v3334
        %v3582 = vpack.c.bf16 %v3345, %v3342
        %v3583 = vpack.c.bf16 %v3353, %v3350
        %v3584 = vpack.c.bf16 %v3361, %v3358
        %v3585 = vpack.c.bf16 %v3369, %v3366
        %v3586 = vpack.c.bf16 %v3377, %v3374
        %v3587 = vpack.c.bf16 %v3385, %v3382
        %v3588 = vpack.c.bf16 %v3393, %v3390
        %v3589 = vpack.c.bf16 %v3401, %v3398
        %v3590 = vpack.c.bf16 %v3409, %v3406
        %v3591 = vpack.c.bf16 %v3417, %v3414
        %v3592 = vpack.c.bf16 %v3425, %v3422
        %v3593 = vpack.c.bf16 %v3433, %v3430
        %v3594 = vpack.c.bf16 %v3441, %v3438
        %v3595 = vpack.c.bf16 %v3449, %v3446
        %v3596 = vpack.c.bf16 %v3457, %v3454
        %v3597 = vpack.c.bf16 %v3465, %v3462
        %v3598 = vpack.c.bf16 %v3473, %v3470
        %v3599 = vpack.c.bf16 %v3481, %v3478
        %v3600 = vpack.c.bf16 %v3489, %v3486
        %v3601 = vpack.c.bf16 %v3497, %v3494
        %v3602 = vpack.c.bf16 %v3505, %v3502
        %v3603 = vpack.c.bf16 %v3513, %v3510
        %v3604 = vpack.c.bf16 %v3521, %v3518
        %v3605 = vpack.c.bf16 %v3529, %v3526
        %v3606 = vpack.c.bf16 %v3537, %v3534
        %v3607 = vpack.c.bf16 %v3545, %v3542
        %v3608 = vpack.c.bf16 %v3553, %v3550
        %v3609 = vpack.c.bf16 %v3561, %v3558
        %v3610 = vpack.c.bf16 %v3569, %v3566
        %v3611 = vpack.c.bf16 %v3577, %v3574
        %v3612 = vld [vmem:[#allocation10] sm:$0xf]
        %v3613 = vld [vmem:[#allocation10 + $0x4] sm:$0xf]
        %v3614 = vld [vmem:[#allocation10 + $0x8] sm:$0xf]
        %v3615 = vld [vmem:[#allocation10 + $0xc] sm:$0xf]
        %v3616 = vld [vmem:[#allocation10 + $0x10] sm:$0xf]
        %v3617 = vld [vmem:[#allocation10 + $0x14] sm:$0xf]
        %v3618 = vld [vmem:[#allocation10 + $0x18] sm:$0xf]
        %v3619 = vld [vmem:[#allocation10 + $0x1c] sm:$0xf]
        %v3620 = vld [vmem:[#allocation10 + $0x20] sm:$0xf]
        %v3621 = vld [vmem:[#allocation10 + $0x24] sm:$0xf]
        %v3622 = vld [vmem:[#allocation10 + $0x28] sm:$0xf]
        %v3623 = vld [vmem:[#allocation10 + $0x2c] sm:$0xf]
        %v3624 = vld [vmem:[#allocation10 + $0x30] sm:$0xf]
        %v3625 = vld [vmem:[#allocation10 + $0x34] sm:$0xf]
        %v3626 = vld [vmem:[#allocation10 + $0x38] sm:$0xf]
        %v3627 = vld [vmem:[#allocation10 + $0x3c] sm:$0xf]
        %v3628 = vld [vmem:[#allocation11] sm:$0xf]
        %v3629 = vld [vmem:[#allocation11 + $0x4] sm:$0xf]
        %v3630 = vld [vmem:[#allocation11 + $0x8] sm:$0xf]
        %v3631 = vld [vmem:[#allocation11 + $0xc] sm:$0xf]
        %v3632 = vld [vmem:[#allocation11 + $0x10] sm:$0xf]
        %v3633 = vld [vmem:[#allocation11 + $0x14] sm:$0xf]
        %v3634 = vld [vmem:[#allocation11 + $0x18] sm:$0xf]
        %v3635 = vld [vmem:[#allocation11 + $0x1c] sm:$0xf]
        %v3636 = vld [vmem:[#allocation11 + $0x20] sm:$0xf]
        %v3637 = vld [vmem:[#allocation11 + $0x24] sm:$0xf]
        %v3638 = vld [vmem:[#allocation11 + $0x28] sm:$0xf]
        %v3639 = vld [vmem:[#allocation11 + $0x2c] sm:$0xf]
        %v3640 = vld [vmem:[#allocation11 + $0x30] sm:$0xf]
        %v3641 = vld [vmem:[#allocation11 + $0x34] sm:$0xf]
        %v3642 = vld [vmem:[#allocation11 + $0x38] sm:$0xf]
        %v3643 = vld [vmem:[#allocation11 + $0x3c] sm:$0xf]
        %v3660 = vunpack.c.l.b16 %v3628
        %v3661 = vunpack.c.l.b16 %v3629
        %v3662 = vunpack.c.l.b16 %v3630
        %v3663 = vunpack.c.l.b16 %v3631
        %v3664 = vunpack.c.l.b16 %v3632
        %v3665 = vunpack.c.l.b16 %v3633
        %v3666 = vunpack.c.l.b16 %v3634
        %v3667 = vunpack.c.l.b16 %v3635
        %v3668 = vunpack.c.l.b16 %v3636
        %v3669 = vunpack.c.l.b16 %v3637
        %v3670 = vunpack.c.l.b16 %v3638
        %v3671 = vunpack.c.l.b16 %v3639
        %v3672 = vunpack.c.l.b16 %v3640
        %v3673 = vunpack.c.l.b16 %v3641
        %v3674 = vunpack.c.l.b16 %v3642
        %v3675 = vunpack.c.l.b16 %v3643
        %v3676 = vpack.c.b16 %v3661, %v3660
        %v3677 = vpack.c.b16 %v3663, %v3662
        %v3678 = vpack.c.b16 %v3665, %v3664
        %v3679 = vpack.c.b16 %v3667, %v3666
        %v3680 = vpack.c.b16 %v3669, %v3668
        %v3681 = vpack.c.b16 %v3671, %v3670
        %v3682 = vpack.c.b16 %v3673, %v3672
        %v3683 = vpack.c.b16 %v3675, %v3674
        %3692 = vmatprep.subr.bf16.mxu0 0
        %3693 = vmatpush1.bf16.msra.mxu0 %v3676
        %3694 = vmatprep.subr.bf16.mxu0 0
        %3695 = vmatpush1.bf16.msra.mxu0 %v3677
        %3696 = vmatprep.subr.bf16.mxu0 0
        %3697 = vmatpush1.bf16.msra.mxu0 %v3678
        %3698 = vmatprep.subr.bf16.mxu0 0
        %3699 = vmatpush1.bf16.msra.mxu0 %v3679
        %3700 = vmatprep.subr.bf16.mxu0 0
        %3701 = vmatpush1.bf16.msra.mxu0 %v3680
        %3702 = vmatprep.subr.bf16.mxu0 0
        %3703 = vmatpush1.bf16.msra.mxu0 %v3681
        %3704 = vmatprep.subr.bf16.mxu0 0
        %3705 = vmatpush1.bf16.msra.mxu0 %v3682
        %3706 = vmatprep.subr.bf16.mxu0 0
        %3707 = vmatpush1.bf16.msra.mxu0 %v3683
        %3708 = vmatprep.subr.bf16.mxu0 0
        %3709 = vmatpush1.bf16.msra.mxu0 0
        %3710 = vmatprep.subr.bf16.mxu0 0
        %3711 = vmatpush1.bf16.msra.mxu0 0
        %3712 = vmatprep.subr.bf16.mxu0 0
        %3713 = vmatpush1.bf16.msra.mxu0 0
        %3714 = vmatprep.subr.bf16.mxu0 0
        %3715 = vmatpush1.bf16.msra.mxu0 0
        %3716 = vmatprep.subr.bf16.mxu0 0
        %3717 = vmatpush1.bf16.msra.mxu0 0
        %3718 = vmatprep.subr.bf16.mxu0 0
        %3719 = vmatpush1.bf16.msra.mxu0 0
        %3720 = vmatprep.subr.bf16.mxu0 0
        %3721 = vmatpush1.bf16.msra.mxu0 0
        %3722 = vmatprep.subr.bf16.mxu0 0
        %3723 = vmatpush1.bf16.msra.mxu0 0
        %3724 = vmatprep.mubr.bf16.mxu0 0
        %3725 = vmatmul.mubr.bf16.gmra.mrb[0].mxu0 %v3580
        %v3726 = vpop.f32.mrb[0].mxu0
        %v3727 = vadd.f32 0.0, %v3726
        %v3728 = vpop.f32.mrb[0].mxu0
        %v3729 = vpop.f32.mrb[0].mxu0
        %v3730 = vadd.f32 0.0, %v3729
        %v3731 = vpop.f32.mrb[0].mxu0
        %3732 = vmatprep.mubr.bf16.mxu0 0
        %3733 = vmatmul.mubr.bf16.gmra.mrb[0].mxu0 %v3581
        %v3734 = vpop.f32.mrb[0].mxu0
        %v3735 = vadd.f32 0.0, %v3734
        %v3736 = vpop.f32.mrb[0].mxu0
        %v3737 = vpop.f32.mrb[0].mxu0
        %v3738 = vadd.f32 0.0, %v3737
        %v3739 = vpop.f32.mrb[0].mxu0
        %3740 = vmatprep.mubr.bf16.mxu0 0
        %3741 = vmatmul.mubr.bf16.gmra.mrb[0].mxu0 %v3582
        %v3742 = vpop.f32.mrb[0].mxu0
        %v3743 = vadd.f32 0.0, %v3742
        %v3744 = vpop.f32.mrb[0].mxu0
        %v3745 = vpop.f32.mrb[0].mxu0
        %v3746 = vadd.f32 0.0, %v3745
        %v3747 = vpop.f32.mrb[0].mxu0
        %3748 = vmatprep.mubr.bf16.mxu0 0
        %3749 = vmatmul.mubr.bf16.gmra.mrb[0].mxu0 %v3583
        %v3750 = vpop.f32.mrb[0].mxu0
        %v3751 = vadd.f32 0.0, %v3750
        %v3752 = vpop.f32.mrb[0].mxu0
        %v3753 = vpop.f32.mrb[0].mxu0
        %v3754 = vadd.f32 0.0, %v3753
        %v3755 = vpop.f32.mrb[0].mxu0
        %3756 = vmatprep.mubr.bf16.mxu0 0
        %3757 = vmatmul.mubr.bf16.gmra.mrb[0].mxu0 %v3584
        %v3758 = vpop.f32.mrb[0].mxu0
        %v3759 = vadd.f32 0.0, %v3758
        %v3760 = vpop.f32.mrb[0].mxu0
        %v3761 = vpop.f32.mrb[0].mxu0
        %v3762 = vadd.f32 0.0, %v3761
        %v3763 = vpop.f32.mrb[0].mxu0
        %3764 = vmatprep.mubr.bf16.mxu0 0
        %3765 = vmatmul.mubr.bf16.gmra.mrb[0].mxu0 %v3585
        %v3766 = vpop.f32.mrb[0].mxu0
        %v3767 = vadd.f32 0.0, %v3766
        %v3768 = vpop.f32.mrb[0].mxu0
        %v3769 = vpop.f32.mrb[0].mxu0
        %v3770 = vadd.f32 0.0, %v3769
        %v3771 = vpop.f32.mrb[0].mxu0
        %3772 = vmatprep.mubr.bf16.mxu0 0
        %3773 = vmatmul.mubr.bf16.gmra.mrb[0].mxu0 %v3586
        %v3774 = vpop.f32.mrb[0].mxu0
        %v3775 = vadd.f32 0.0, %v3774
        %v3776 = vpop.f32.mrb[0].mxu0
        %v3777 = vpop.f32.mrb[0].mxu0
        %v3778 = vadd.f32 0.0, %v3777
        %v3779 = vpop.f32.mrb[0].mxu0
        %3780 = vmatprep.mubr.bf16.mxu0 0
        %3781 = vmatmul.mubr.bf16.gmra.mrb[0].mxu0 %v3587
        %v3782 = vpop.f32.mrb[0].mxu0
        %v3783 = vadd.f32 0.0, %v3782
        %v3784 = vpop.f32.mrb[0].mxu0
        %v3785 = vpop.f32.mrb[0].mxu0
        %v3786 = vadd.f32 0.0, %v3785
        %v3787 = vpop.f32.mrb[0].mxu0
        %3788 = vmatprep.mubr.bf16.mxu0 0
        %3789 = vmatmul.mubr.bf16.gmra.mrb[0].mxu0 %v3588
        %v3790 = vpop.f32.mrb[0].mxu0
        %v3791 = vadd.f32 0.0, %v3790
        %v3792 = vpop.f32.mrb[0].mxu0
        %v3793 = vpop.f32.mrb[0].mxu0
        %v3794 = vadd.f32 0.0, %v3793
        %v3795 = vpop.f32.mrb[0].mxu0
        %3796 = vmatprep.mubr.bf16.mxu0 0
        %3797 = vmatmul.mubr.bf16.gmra.mrb[0].mxu0 %v3589
        %v3798 = vpop.f32.mrb[0].mxu0
        %v3799 = vadd.f32 0.0, %v3798
        %v3800 = vpop.f32.mrb[0].mxu0
        %v3801 = vpop.f32.mrb[0].mxu0
        %v3802 = vadd.f32 0.0, %v3801
        %v3803 = vpop.f32.mrb[0].mxu0
        %3804 = vmatprep.mubr.bf16.mxu0 0
        %3805 = vmatmul.mubr.bf16.gmra.mrb[0].mxu0 %v3590
        %v3806 = vpop.f32.mrb[0].mxu0
        %v3807 = vadd.f32 0.0, %v3806
        %v3808 = vpop.f32.mrb[0].mxu0
        %v3809 = vpop.f32.mrb[0].mxu0
        %v3810 = vadd.f32 0.0, %v3809
        %v3811 = vpop.f32.mrb[0].mxu0
        %3812 = vmatprep.mubr.bf16.mxu0 0
        %3813 = vmatmul.mubr.bf16.gmra.mrb[0].mxu0 %v3591
        %v3814 = vpop.f32.mrb[0].mxu0
        %v3815 = vadd.f32 0.0, %v3814
        %v3816 = vpop.f32.mrb[0].mxu0
        %v3817 = vpop.f32.mrb[0].mxu0
        %v3818 = vadd.f32 0.0, %v3817
        %v3819 = vpop.f32.mrb[0].mxu0
        %3820 = vmatprep.mubr.bf16.mxu0 0
        %3821 = vmatmul.mubr.bf16.gmra.mrb[0].mxu0 %v3592
        %v3822 = vpop.f32.mrb[0].mxu0
        %v3823 = vadd.f32 0.0, %v3822
        %v3824 = vpop.f32.mrb[0].mxu0
        %v3825 = vpop.f32.mrb[0].mxu0
        %v3826 = vadd.f32 0.0, %v3825
        %v3827 = vpop.f32.mrb[0].mxu0
        %3828 = vmatprep.mubr.bf16.mxu0 0
        %3829 = vmatmul.mubr.bf16.gmra.mrb[0].mxu0 %v3593
        %v3830 = vpop.f32.mrb[0].mxu0
        %v3831 = vadd.f32 0.0, %v3830
        %v3832 = vpop.f32.mrb[0].mxu0
        %v3833 = vpop.f32.mrb[0].mxu0
        %v3834 = vadd.f32 0.0, %v3833
        %v3835 = vpop.f32.mrb[0].mxu0
        %3836 = vmatprep.mubr.bf16.mxu0 0
        %3837 = vmatmul.mubr.bf16.gmra.mrb[0].mxu0 %v3594
        %v3838 = vpop.f32.mrb[0].mxu0
        %v3839 = vadd.f32 0.0, %v3838
        %v3840 = vpop.f32.mrb[0].mxu0
        %v3841 = vpop.f32.mrb[0].mxu0
        %v3842 = vadd.f32 0.0, %v3841
        %v3843 = vpop.f32.mrb[0].mxu0
        %3844 = vmatprep.mubr.bf16.mxu0 0
        %3845 = vmatmul.mubr.bf16.gmra.mrb[0].mxu0 %v3595
        %v3846 = vpop.f32.mrb[0].mxu0
        %v3847 = vadd.f32 0.0, %v3846
        %v3848 = vpop.f32.mrb[0].mxu0
        %v3849 = vpop.f32.mrb[0].mxu0
        %v3850 = vadd.f32 0.0, %v3849
        %v3851 = vpop.f32.mrb[0].mxu0
        %3852 = vmatprep.mubr.bf16.mxu0 0
        %3853 = vmatmul.mubr.bf16.gmra.mrb[0].mxu0 %v3596
        %v3854 = vpop.f32.mrb[0].mxu0
        %v3855 = vadd.f32 0.0, %v3854
        %v3856 = vpop.f32.mrb[0].mxu0
        %v3857 = vpop.f32.mrb[0].mxu0
        %v3858 = vadd.f32 0.0, %v3857
        %v3859 = vpop.f32.mrb[0].mxu0
        %3860 = vmatprep.mubr.bf16.mxu0 0
        %3861 = vmatmul.mubr.bf16.gmra.mrb[0].mxu0 %v3597
        %v3862 = vpop.f32.mrb[0].mxu0
        %v3863 = vadd.f32 0.0, %v3862
        %v3864 = vpop.f32.mrb[0].mxu0
        %v3865 = vpop.f32.mrb[0].mxu0
        %v3866 = vadd.f32 0.0, %v3865
        %v3867 = vpop.f32.mrb[0].mxu0
        %3868 = vmatprep.mubr.bf16.mxu0 0
        %3869 = vmatmul.mubr.bf16.gmra.mrb[0].mxu0 %v3598
        %v3870 = vpop.f32.mrb[0].mxu0
        %v3871 = vadd.f32 0.0, %v3870
        %v3872 = vpop.f32.mrb[0].mxu0
        %v3873 = vpop.f32.mrb[0].mxu0
        %v3874 = vadd.f32 0.0, %v3873
        %v3875 = vpop.f32.mrb[0].mxu0
        %3876 = vmatprep.mubr.bf16.mxu0 0
        %3877 = vmatmul.mubr.bf16.gmra.mrb[0].mxu0 %v3599
        %v3878 = vpop.f32.mrb[0].mxu0
        %v3879 = vadd.f32 0.0, %v3878
        %v3880 = vpop.f32.mrb[0].mxu0
        %v3881 = vpop.f32.mrb[0].mxu0
        %v3882 = vadd.f32 0.0, %v3881
        %v3883 = vpop.f32.mrb[0].mxu0
        %3884 = vmatprep.mubr.bf16.mxu0 0
        %3885 = vmatmul.mubr.bf16.gmra.mrb[0].mxu0 %v3600
        %v3886 = vpop.f32.mrb[0].mxu0
        %v3887 = vadd.f32 0.0, %v3886
        %v3888 = vpop.f32.mrb[0].mxu0
        %v3889 = vpop.f32.mrb[0].mxu0
        %v3890 = vadd.f32 0.0, %v3889
        %v3891 = vpop.f32.mrb[0].mxu0
        %3892 = vmatprep.mubr.bf16.mxu0 0
        %3893 = vmatmul.mubr.bf16.gmra.mrb[0].mxu0 %v3601
        %v3894 = vpop.f32.mrb[0].mxu0
        %v3895 = vadd.f32 0.0, %v3894
        %v3896 = vpop.f32.mrb[0].mxu0
        %v3897 = vpop.f32.mrb[0].mxu0
        %v3898 = vadd.f32 0.0, %v3897
        %v3899 = vpop.f32.mrb[0].mxu0
        %3900 = vmatprep.mubr.bf16.mxu0 0
        %3901 = vmatmul.mubr.bf16.gmra.mrb[0].mxu0 %v3602
        %v3902 = vpop.f32.mrb[0].mxu0
        %v3903 = vadd.f32 0.0, %v3902
        %v3904 = vpop.f32.mrb[0].mxu0
        %v3905 = vpop.f32.mrb[0].mxu0
        %v3906 = vadd.f32 0.0, %v3905
        %v3907 = vpop.f32.mrb[0].mxu0
        %3908 = vmatprep.mubr.bf16.mxu0 0
        %3909 = vmatmul.mubr.bf16.gmra.mrb[0].mxu0 %v3603
        %v3910 = vpop.f32.mrb[0].mxu0
        %v3911 = vadd.f32 0.0, %v3910
        %v3912 = vpop.f32.mrb[0].mxu0
        %v3913 = vpop.f32.mrb[0].mxu0
        %v3914 = vadd.f32 0.0, %v3913
        %v3915 = vpop.f32.mrb[0].mxu0
        %3916 = vmatprep.mubr.bf16.mxu0 0
        %3917 = vmatmul.mubr.bf16.gmra.mrb[0].mxu0 %v3604
        %v3918 = vpop.f32.mrb[0].mxu0
        %v3919 = vadd.f32 0.0, %v3918
        %v3920 = vpop.f32.mrb[0].mxu0
        %v3921 = vpop.f32.mrb[0].mxu0
        %v3922 = vadd.f32 0.0, %v3921
        %v3923 = vpop.f32.mrb[0].mxu0
        %3924 = vmatprep.mubr.bf16.mxu0 0
        %3925 = vmatmul.mubr.bf16.gmra.mrb[0].mxu0 %v3605
        %v3926 = vpop.f32.mrb[0].mxu0
        %v3927 = vadd.f32 0.0, %v3926
        %v3928 = vpop.f32.mrb[0].mxu0
        %v3929 = vpop.f32.mrb[0].mxu0
        %v3930 = vadd.f32 0.0, %v3929
        %v3931 = vpop.f32.mrb[0].mxu0
        %3932 = vmatprep.mubr.bf16.mxu0 0
        %3933 = vmatmul.mubr.bf16.gmra.mrb[0].mxu0 %v3606
        %v3934 = vpop.f32.mrb[0].mxu0
        %v3935 = vadd.f32 0.0, %v3934
        %v3936 = vpop.f32.mrb[0].mxu0
        %v3937 = vpop.f32.mrb[0].mxu0
        %v3938 = vadd.f32 0.0, %v3937
        %v3939 = vpop.f32.mrb[0].mxu0
        %3940 = vmatprep.mubr.bf16.mxu0 0
        %3941 = vmatmul.mubr.bf16.gmra.mrb[0].mxu0 %v3607
        %v3942 = vpop.f32.mrb[0].mxu0
        %v3943 = vadd.f32 0.0, %v3942
        %v3944 = vpop.f32.mrb[0].mxu0
        %v3945 = vpop.f32.mrb[0].mxu0
        %v3946 = vadd.f32 0.0, %v3945
        %v3947 = vpop.f32.mrb[0].mxu0
        %3948 = vmatprep.mubr.bf16.mxu0 0
        %3949 = vmatmul.mubr.bf16.gmra.mrb[0].mxu0 %v3608
        %v3950 = vpop.f32.mrb[0].mxu0
        %v3951 = vadd.f32 0.0, %v3950
        %v3952 = vpop.f32.mrb[0].mxu0
        %v3953 = vpop.f32.mrb[0].mxu0
        %v3954 = vadd.f32 0.0, %v3953
        %v3955 = vpop.f32.mrb[0].mxu0
        %3956 = vmatprep.mubr.bf16.mxu0 0
        %3957 = vmatmul.mubr.bf16.gmra.mrb[0].mxu0 %v3609
        %v3958 = vpop.f32.mrb[0].mxu0
        %v3959 = vadd.f32 0.0, %v3958
        %v3960 = vpop.f32.mrb[0].mxu0
        %v3961 = vpop.f32.mrb[0].mxu0
        %v3962 = vadd.f32 0.0, %v3961
        %v3963 = vpop.f32.mrb[0].mxu0
        %3964 = vmatprep.mubr.bf16.mxu0 0
        %3965 = vmatmul.mubr.bf16.gmra.mrb[0].mxu0 %v3610
        %v3966 = vpop.f32.mrb[0].mxu0
        %v3967 = vadd.f32 0.0, %v3966
        %v3968 = vpop.f32.mrb[0].mxu0
        %v3969 = vpop.f32.mrb[0].mxu0
        %v3970 = vadd.f32 0.0, %v3969
        %v3971 = vpop.f32.mrb[0].mxu0
        %3972 = vmatprep.mubr.bf16.mxu0 0
        %3973 = vmatmul.mubr.bf16.gmra.mrb[0].mxu0 %v3611
        %v3974 = vpop.f32.mrb[0].mxu0
        %v3975 = vadd.f32 0.0, %v3974
        %v3976 = vpop.f32.mrb[0].mxu0
        %v3977 = vpop.f32.mrb[0].mxu0
        %v3978 = vadd.f32 0.0, %v3977
        %v3979 = vpop.f32.mrb[0].mxu0
        %3980 = vdwg.mxu0
        %v3997 = vunpack.c.l.b16 %v3612
        %v3998 = vunpack.c.l.b16 %v3613
        %v3999 = vunpack.c.l.b16 %v3614
        %v4000 = vunpack.c.l.b16 %v3615
        %v4001 = vunpack.c.l.b16 %v3616
        %v4002 = vunpack.c.l.b16 %v3617
        %v4003 = vunpack.c.l.b16 %v3618
        %v4004 = vunpack.c.l.b16 %v3619
        %v4005 = vunpack.c.l.b16 %v3620
        %v4006 = vunpack.c.l.b16 %v3621
        %v4007 = vunpack.c.l.b16 %v3622
        %v4008 = vunpack.c.l.b16 %v3623
        %v4009 = vunpack.c.l.b16 %v3624
        %v4010 = vunpack.c.l.b16 %v3625
        %v4011 = vunpack.c.l.b16 %v3626
        %v4012 = vunpack.c.l.b16 %v3627
        %v4013 = vpack.c.b16 %v3998, %v3997
        %v4014 = vpack.c.b16 %v4000, %v3999
        %v4015 = vpack.c.b16 %v4002, %v4001
        %v4016 = vpack.c.b16 %v4004, %v4003
        %v4017 = vpack.c.b16 %v4006, %v4005
        %v4018 = vpack.c.b16 %v4008, %v4007
        %v4019 = vpack.c.b16 %v4010, %v4009
        %v4020 = vpack.c.b16 %v4012, %v4011
        %4029 = vmatprep.subr.bf16.mxu0 0
        %4030 = vmatpush1.bf16.msra.mxu0 %v4013
        %4031 = vmatprep.subr.bf16.mxu0 0
        %4032 = vmatpush1.bf16.msra.mxu0 %v4014
        %4033 = vmatprep.subr.bf16.mxu0 0
        %4034 = vmatpush1.bf16.msra.mxu0 %v4015
        %4035 = vmatprep.subr.bf16.mxu0 0
        %4036 = vmatpush1.bf16.msra.mxu0 %v4016
        %4037 = vmatprep.subr.bf16.mxu0 0
        %4038 = vmatpush1.bf16.msra.mxu0 %v4017
        %4039 = vmatprep.subr.bf16.mxu0 0
        %4040 = vmatpush1.bf16.msra.mxu0 %v4018
        %4041 = vmatprep.subr.bf16.mxu0 0
        %4042 = vmatpush1.bf16.msra.mxu0 %v4019
        %4043 = vmatprep.subr.bf16.mxu0 0
        %4044 = vmatpush1.bf16.msra.mxu0 %v4020
        %4045 = vmatprep.subr.bf16.mxu0 0
        %4046 = vmatpush1.bf16.msra.mxu0 0
        %4047 = vmatprep.subr.bf16.mxu0 0
        %4048 = vmatpush1.bf16.msra.mxu0 0
        %4049 = vmatprep.subr.bf16.mxu0 0
        %4050 = vmatpush1.bf16.msra.mxu0 0
        %4051 = vmatprep.subr.bf16.mxu0 0
        %4052 = vmatpush1.bf16.msra.mxu0 0
        %4053 = vmatprep.subr.bf16.mxu0 0
        %4054 = vmatpush1.bf16.msra.mxu0 0
        %4055 = vmatprep.subr.bf16.mxu0 0
        %4056 = vmatpush1.bf16.msra.mxu0 0
        %4057 = vmatprep.subr.bf16.mxu0 0
        %4058 = vmatpush1.bf16.msra.mxu0 0
        %4059 = vmatprep.subr.bf16.mxu0 0
        %4060 = vmatpush1.bf16.msra.mxu0 0
        %4061 = vmatprep.mubr.bf16.mxu0 0
        %4062 = vmatmul.mubr.bf16.gmra.mrb[0].mxu0 %v2970
        %v4063 = vpop.f32.mrb[0].mxu0
        %v4064 = vadd.f32 %v3727, %v4063
        %v4065 = vpop.f32.mrb[0].mxu0
        %v4066 = vpop.f32.mrb[0].mxu0
        %v4067 = vadd.f32 %v3730, %v4066
        %v4068 = vpop.f32.mrb[0].mxu0
        %4069 = vmatprep.mubr.bf16.mxu0 0
        %4070 = vmatmul.mubr.bf16.gmra.mrb[0].mxu0 %v2971
        %v4071 = vpop.f32.mrb[0].mxu0
        %v4072 = vadd.f32 %v3735, %v4071
        %v4073 = vpop.f32.mrb[0].mxu0
        %v4074 = vpop.f32.mrb[0].mxu0
        %v4075 = vadd.f32 %v3738, %v4074
        %v4076 = vpop.f32.mrb[0].mxu0
        %4077 = vmatprep.mubr.bf16.mxu0 0
        %4078 = vmatmul.mubr.bf16.gmra.mrb[0].mxu0 %v2972
        %v4079 = vpop.f32.mrb[0].mxu0
        %v4080 = vadd.f32 %v3743, %v4079
        %v4081 = vpop.f32.mrb[0].mxu0
        %v4082 = vpop.f32.mrb[0].mxu0
        %v4083 = vadd.f32 %v3746, %v4082
        %v4084 = vpop.f32.mrb[0].mxu0
        %4085 = vmatprep.mubr.bf16.mxu0 0
        %4086 = vmatmul.mubr.bf16.gmra.mrb[0].mxu0 %v2973
        %v4087 = vpop.f32.mrb[0].mxu0
        %v4088 = vadd.f32 %v3751, %v4087
        %v4089 = vpop.f32.mrb[0].mxu0
        %v4090 = vpop.f32.mrb[0].mxu0
        %v4091 = vadd.f32 %v3754, %v4090
        %v4092 = vpop.f32.mrb[0].mxu0
        %4093 = vmatprep.mubr.bf16.mxu0 0
        %4094 = vmatmul.mubr.bf16.gmra.mrb[0].mxu0 %v2974
        %v4095 = vpop.f32.mrb[0].mxu0
        %v4096 = vadd.f32 %v3759, %v4095
        %v4097 = vpop.f32.mrb[0].mxu0
        %v4098 = vpop.f32.mrb[0].mxu0
        %v4099 = vadd.f32 %v3762, %v4098
        %v4100 = vpop.f32.mrb[0].mxu0
        %4101 = vmatprep.mubr.bf16.mxu0 0
        %4102 = vmatmul.mubr.bf16.gmra.mrb[0].mxu0 %v2975
        %v4103 = vpop.f32.mrb[0].mxu0
        %v4104 = vadd.f32 %v3767, %v4103
        %v4105 = vpop.f32.mrb[0].mxu0
        %v4106 = vpop.f32.mrb[0].mxu0
        %v4107 = vadd.f32 %v3770, %v4106
        %v4108 = vpop.f32.mrb[0].mxu0
        %4109 = vmatprep.mubr.bf16.mxu0 0
        %4110 = vmatmul.mubr.bf16.gmra.mrb[0].mxu0 %v2976
        %v4111 = vpop.f32.mrb[0].mxu0
        %v4112 = vadd.f32 %v3775, %v4111
        %v4113 = vpop.f32.mrb[0].mxu0
        %v4114 = vpop.f32.mrb[0].mxu0
        %v4115 = vadd.f32 %v3778, %v4114
        %v4116 = vpop.f32.mrb[0].mxu0
        %4117 = vmatprep.mubr.bf16.mxu0 0
        %4118 = vmatmul.mubr.bf16.gmra.mrb[0].mxu0 %v2977
        %v4119 = vpop.f32.mrb[0].mxu0
        %v4120 = vadd.f32 %v3783, %v4119
        %v4121 = vpop.f32.mrb[0].mxu0
        %v4122 = vpop.f32.mrb[0].mxu0
        %v4123 = vadd.f32 %v3786, %v4122
        %v4124 = vpop.f32.mrb[0].mxu0
        %4125 = vmatprep.mubr.bf16.mxu0 0
        %4126 = vmatmul.mubr.bf16.gmra.mrb[0].mxu0 %v2978
        %v4127 = vpop.f32.mrb[0].mxu0
        %v4128 = vadd.f32 %v3791, %v4127
        %v4129 = vpop.f32.mrb[0].mxu0
        %v4130 = vpop.f32.mrb[0].mxu0
        %v4131 = vadd.f32 %v3794, %v4130
        %v4132 = vpop.f32.mrb[0].mxu0
        %4133 = vmatprep.mubr.bf16.mxu0 0
        %4134 = vmatmul.mubr.bf16.gmra.mrb[0].mxu0 %v2979
        %v4135 = vpop.f32.mrb[0].mxu0
        %v4136 = vadd.f32 %v3799, %v4135
        %v4137 = vpop.f32.mrb[0].mxu0
        %v4138 = vpop.f32.mrb[0].mxu0
        %v4139 = vadd.f32 %v3802, %v4138
        %v4140 = vpop.f32.mrb[0].mxu0
        %4141 = vmatprep.mubr.bf16.mxu0 0
        %4142 = vmatmul.mubr.bf16.gmra.mrb[0].mxu0 %v2980
        %v4143 = vpop.f32.mrb[0].mxu0
        %v4144 = vadd.f32 %v3807, %v4143
        %v4145 = vpop.f32.mrb[0].mxu0
        %v4146 = vpop.f32.mrb[0].mxu0
        %v4147 = vadd.f32 %v3810, %v4146
        %v4148 = vpop.f32.mrb[0].mxu0
        %4149 = vmatprep.mubr.bf16.mxu0 0
        %4150 = vmatmul.mubr.bf16.gmra.mrb[0].mxu0 %v2981
        %v4151 = vpop.f32.mrb[0].mxu0
        %v4152 = vadd.f32 %v3815, %v4151
        %v4153 = vpop.f32.mrb[0].mxu0
        %v4154 = vpop.f32.mrb[0].mxu0
        %v4155 = vadd.f32 %v3818, %v4154
        %v4156 = vpop.f32.mrb[0].mxu0
        %4157 = vmatprep.mubr.bf16.mxu0 0
        %4158 = vmatmul.mubr.bf16.gmra.mrb[0].mxu0 %v2982
        %v4159 = vpop.f32.mrb[0].mxu0
        %v4160 = vadd.f32 %v3823, %v4159
        %v4161 = vpop.f32.mrb[0].mxu0
        %v4162 = vpop.f32.mrb[0].mxu0
        %v4163 = vadd.f32 %v3826, %v4162
        %v4164 = vpop.f32.mrb[0].mxu0
        %4165 = vmatprep.mubr.bf16.mxu0 0
        %4166 = vmatmul.mubr.bf16.gmra.mrb[0].mxu0 %v2983
        %v4167 = vpop.f32.mrb[0].mxu0
        %v4168 = vadd.f32 %v3831, %v4167
        %v4169 = vpop.f32.mrb[0].mxu0
        %v4170 = vpop.f32.mrb[0].mxu0
        %v4171 = vadd.f32 %v3834, %v4170
        %v4172 = vpop.f32.mrb[0].mxu0
        %4173 = vmatprep.mubr.bf16.mxu0 0
        %4174 = vmatmul.mubr.bf16.gmra.mrb[0].mxu0 %v2984
        %v4175 = vpop.f32.mrb[0].mxu0
        %v4176 = vadd.f32 %v3839, %v4175
        %v4177 = vpop.f32.mrb[0].mxu0
        %v4178 = vpop.f32.mrb[0].mxu0
        %v4179 = vadd.f32 %v3842, %v4178
        %v4180 = vpop.f32.mrb[0].mxu0
        %4181 = vmatprep.mubr.bf16.mxu0 0
        %4182 = vmatmul.mubr.bf16.gmra.mrb[0].mxu0 %v2985
        %v4183 = vpop.f32.mrb[0].mxu0
        %v4184 = vadd.f32 %v3847, %v4183
        %v4185 = vpop.f32.mrb[0].mxu0
        %v4186 = vpop.f32.mrb[0].mxu0
        %v4187 = vadd.f32 %v3850, %v4186
        %v4188 = vpop.f32.mrb[0].mxu0
        %4189 = vmatprep.mubr.bf16.mxu0 0
        %4190 = vmatmul.mubr.bf16.gmra.mrb[0].mxu0 %v2986
        %v4191 = vpop.f32.mrb[0].mxu0
        %v4192 = vadd.f32 %v3855, %v4191
        %v4193 = vpop.f32.mrb[0].mxu0
        %v4194 = vpop.f32.mrb[0].mxu0
        %v4195 = vadd.f32 %v3858, %v4194
        %v4196 = vpop.f32.mrb[0].mxu0
        %4197 = vmatprep.mubr.bf16.mxu0 0
        %4198 = vmatmul.mubr.bf16.gmra.mrb[0].mxu0 %v2987
        %v4199 = vpop.f32.mrb[0].mxu0
        %v4200 = vadd.f32 %v3863, %v4199
        %v4201 = vpop.f32.mrb[0].mxu0
        %v4202 = vpop.f32.mrb[0].mxu0
        %v4203 = vadd.f32 %v3866, %v4202
        %v4204 = vpop.f32.mrb[0].mxu0
        %4205 = vmatprep.mubr.bf16.mxu0 0
        %4206 = vmatmul.mubr.bf16.gmra.mrb[0].mxu0 %v2988
        %v4207 = vpop.f32.mrb[0].mxu0
        %v4208 = vadd.f32 %v3871, %v4207
        %v4209 = vpop.f32.mrb[0].mxu0
        %v4210 = vpop.f32.mrb[0].mxu0
        %v4211 = vadd.f32 %v3874, %v4210
        %v4212 = vpop.f32.mrb[0].mxu0
        %4213 = vmatprep.mubr.bf16.mxu0 0
        %4214 = vmatmul.mubr.bf16.gmra.mrb[0].mxu0 %v2989
        %v4215 = vpop.f32.mrb[0].mxu0
        %v4216 = vadd.f32 %v3879, %v4215
        %v4217 = vpop.f32.mrb[0].mxu0
        %v4218 = vpop.f32.mrb[0].mxu0
        %v4219 = vadd.f32 %v3882, %v4218
        %v4220 = vpop.f32.mrb[0].mxu0
        %4221 = vmatprep.mubr.bf16.mxu0 0
        %4222 = vmatmul.mubr.bf16.gmra.mrb[0].mxu0 %v2990
        %v4223 = vpop.f32.mrb[0].mxu0
        %v4224 = vadd.f32 %v3887, %v4223
        %v4225 = vpop.f32.mrb[0].mxu0
        %v4226 = vpop.f32.mrb[0].mxu0
        %v4227 = vadd.f32 %v3890, %v4226
        %v4228 = vpop.f32.mrb[0].mxu0
        %4229 = vmatprep.mubr.bf16.mxu0 0
        %4230 = vmatmul.mubr.bf16.gmra.mrb[0].mxu0 %v2991
        %v4231 = vpop.f32.mrb[0].mxu0
        %v4232 = vadd.f32 %v3895, %v4231
        %v4233 = vpop.f32.mrb[0].mxu0
        %v4234 = vpop.f32.mrb[0].mxu0
        %v4235 = vadd.f32 %v3898, %v4234
        %v4236 = vpop.f32.mrb[0].mxu0
        %4237 = vmatprep.mubr.bf16.mxu0 0
        %4238 = vmatmul.mubr.bf16.gmra.mrb[0].mxu0 %v2992
        %v4239 = vpop.f32.mrb[0].mxu0
        %v4240 = vadd.f32 %v3903, %v4239
        %v4241 = vpop.f32.mrb[0].mxu0
        %v4242 = vpop.f32.mrb[0].mxu0
        %v4243 = vadd.f32 %v3906, %v4242
        %v4244 = vpop.f32.mrb[0].mxu0
        %4245 = vmatprep.mubr.bf16.mxu0 0
        %4246 = vmatmul.mubr.bf16.gmra.mrb[0].mxu0 %v2993
        %v4247 = vpop.f32.mrb[0].mxu0
        %v4248 = vadd.f32 %v3911, %v4247
        %v4249 = vpop.f32.mrb[0].mxu0
        %v4250 = vpop.f32.mrb[0].mxu0
        %v4251 = vadd.f32 %v3914, %v4250
        %v4252 = vpop.f32.mrb[0].mxu0
        %4253 = vmatprep.mubr.bf16.mxu0 0
        %4254 = vmatmul.mubr.bf16.gmra.mrb[0].mxu0 %v2994
        %v4255 = vpop.f32.mrb[0].mxu0
        %v4256 = vadd.f32 %v3919, %v4255
        %v4257 = vpop.f32.mrb[0].mxu0
        %v4258 = vpop.f32.mrb[0].mxu0
        %v4259 = vadd.f32 %v3922, %v4258
        %v4260 = vpop.f32.mrb[0].mxu0
        %4261 = vmatprep.mubr.bf16.mxu0 0
        %4262 = vmatmul.mubr.bf16.gmra.mrb[0].mxu0 %v2995
        %v4263 = vpop.f32.mrb[0].mxu0
        %v4264 = vadd.f32 %v3927, %v4263
        %v4265 = vpop.f32.mrb[0].mxu0
        %v4266 = vpop.f32.mrb[0].mxu0
        %v4267 = vadd.f32 %v3930, %v4266
        %v4268 = vpop.f32.mrb[0].mxu0
        %4269 = vmatprep.mubr.bf16.mxu0 0
        %4270 = vmatmul.mubr.bf16.gmra.mrb[0].mxu0 %v2996
        %v4271 = vpop.f32.mrb[0].mxu0
        %v4272 = vadd.f32 %v3935, %v4271
        %v4273 = vpop.f32.mrb[0].mxu0
        %v4274 = vpop.f32.mrb[0].mxu0
        %v4275 = vadd.f32 %v3938, %v4274
        %v4276 = vpop.f32.mrb[0].mxu0
        %4277 = vmatprep.mubr.bf16.mxu0 0
        %4278 = vmatmul.mubr.bf16.gmra.mrb[0].mxu0 %v2997
        %v4279 = vpop.f32.mrb[0].mxu0
        %v4280 = vadd.f32 %v3943, %v4279
        %v4281 = vpop.f32.mrb[0].mxu0
        %v4282 = vpop.f32.mrb[0].mxu0
        %v4283 = vadd.f32 %v3946, %v4282
        %v4284 = vpop.f32.mrb[0].mxu0
        %4285 = vmatprep.mubr.bf16.mxu0 0
        %4286 = vmatmul.mubr.bf16.gmra.mrb[0].mxu0 %v2998
        %v4287 = vpop.f32.mrb[0].mxu0
        %v4288 = vadd.f32 %v3951, %v4287
        %v4289 = vpop.f32.mrb[0].mxu0
        %v4290 = vpop.f32.mrb[0].mxu0
        %v4291 = vadd.f32 %v3954, %v4290
        %v4292 = vpop.f32.mrb[0].mxu0
        %4293 = vmatprep.mubr.bf16.mxu0 0
        %4294 = vmatmul.mubr.bf16.gmra.mrb[0].mxu0 %v2999
        %v4295 = vpop.f32.mrb[0].mxu0
        %v4296 = vadd.f32 %v3959, %v4295
        %v4297 = vpop.f32.mrb[0].mxu0
        %v4298 = vpop.f32.mrb[0].mxu0
        %v4299 = vadd.f32 %v3962, %v4298
        %v4300 = vpop.f32.mrb[0].mxu0
        %4301 = vmatprep.mubr.bf16.mxu0 0
        %4302 = vmatmul.mubr.bf16.gmra.mrb[0].mxu0 %v3000
        %v4303 = vpop.f32.mrb[0].mxu0
        %v4304 = vadd.f32 %v3967, %v4303
        %v4305 = vpop.f32.mrb[0].mxu0
        %v4306 = vpop.f32.mrb[0].mxu0
        %v4307 = vadd.f32 %v3970, %v4306
        %v4308 = vpop.f32.mrb[0].mxu0
        %4309 = vmatprep.mubr.bf16.mxu0 0
        %4310 = vmatmul.mubr.bf16.gmra.mrb[0].mxu0 %v3001
        %v4311 = vpop.f32.mrb[0].mxu0
        %v4312 = vadd.f32 %v3975, %v4311
        %v4313 = vpop.f32.mrb[0].mxu0
        %v4314 = vpop.f32.mrb[0].mxu0
        %v4315 = vadd.f32 %v3978, %v4314
        %v4316 = vpop.f32.mrb[0].mxu0
        %4317 = vdwg.mxu0
        %v4318 = vlaneseq
        %v4319 = vshrl.u32 %v4318, 7
        %v4320 = vsub.s32 1, %v4319
        %v4321 = vrot.slane %v689, %v4320
        %v4322 = vadd.f32 %v4064, %v4321
        %v4323 = vadd.f32 %v4067, %v4321
        %v4324 = vadd.f32 %v4072, %v4321
        %v4325 = vadd.f32 %v4075, %v4321
        %v4326 = vadd.f32 %v4080, %v4321
        %v4327 = vadd.f32 %v4083, %v4321
        %v4328 = vadd.f32 %v4088, %v4321
        %v4329 = vadd.f32 %v4091, %v4321
        %v4330 = vadd.f32 %v4096, %v4321
        %v4331 = vadd.f32 %v4099, %v4321
        %v4332 = vadd.f32 %v4104, %v4321
        %v4333 = vadd.f32 %v4107, %v4321
        %v4334 = vadd.f32 %v4112, %v4321
        %v4335 = vadd.f32 %v4115, %v4321
        %v4336 = vadd.f32 %v4120, %v4321
        %v4337 = vadd.f32 %v4123, %v4321
        %v4338 = vadd.f32 %v4128, %v4321
        %v4339 = vadd.f32 %v4131, %v4321
        %v4340 = vadd.f32 %v4136, %v4321
        %v4341 = vadd.f32 %v4139, %v4321
        %v4342 = vadd.f32 %v4144, %v4321
        %v4343 = vadd.f32 %v4147, %v4321
        %v4344 = vadd.f32 %v4152, %v4321
        %v4345 = vadd.f32 %v4155, %v4321
        %v4346 = vadd.f32 %v4160, %v4321
        %v4347 = vadd.f32 %v4163, %v4321
        %v4348 = vadd.f32 %v4168, %v4321
        %v4349 = vadd.f32 %v4171, %v4321
        %v4350 = vadd.f32 %v4176, %v4321
        %v4351 = vadd.f32 %v4179, %v4321
        %v4352 = vadd.f32 %v4184, %v4321
        %v4353 = vadd.f32 %v4187, %v4321
        %v4354 = vadd.f32 %v4192, %v4321
        %v4355 = vadd.f32 %v4195, %v4321
        %v4356 = vadd.f32 %v4200, %v4321
        %v4357 = vadd.f32 %v4203, %v4321
        %v4358 = vadd.f32 %v4208, %v4321
        %v4359 = vadd.f32 %v4211, %v4321
        %v4360 = vadd.f32 %v4216, %v4321
        %v4361 = vadd.f32 %v4219, %v4321
        %v4362 = vadd.f32 %v4224, %v4321
        %v4363 = vadd.f32 %v4227, %v4321
        %v4364 = vadd.f32 %v4232, %v4321
        %v4365 = vadd.f32 %v4235, %v4321
        %v4366 = vadd.f32 %v4240, %v4321
        %v4367 = vadd.f32 %v4243, %v4321
        %v4368 = vadd.f32 %v4248, %v4321
        %v4369 = vadd.f32 %v4251, %v4321
        %v4370 = vadd.f32 %v4256, %v4321
        %v4371 = vadd.f32 %v4259, %v4321
        %v4372 = vadd.f32 %v4264, %v4321
        %v4373 = vadd.f32 %v4267, %v4321
        %v4374 = vadd.f32 %v4272, %v4321
        %v4375 = vadd.f32 %v4275, %v4321
        %v4376 = vadd.f32 %v4280, %v4321
        %v4377 = vadd.f32 %v4283, %v4321
        %v4378 = vadd.f32 %v4288, %v4321
        %v4379 = vadd.f32 %v4291, %v4321
        %v4380 = vadd.f32 %v4296, %v4321
        %v4381 = vadd.f32 %v4299, %v4321
        %v4382 = vadd.f32 %v4304, %v4321
        %v4383 = vadd.f32 %v4307, %v4321
        %v4384 = vadd.f32 %v4312, %v4321
        %v4385 = vadd.f32 %v4315, %v4321
        %v4386 = vadd.f32 %v2906, %v4322
        %v4387 = vadd.f32 %v2907, %v4323
        %v4388 = vadd.f32 %v2908, %v4324
        %v4389 = vadd.f32 %v2909, %v4325
        %v4390 = vadd.f32 %v2910, %v4326
        %v4391 = vadd.f32 %v2911, %v4327
        %v4392 = vadd.f32 %v2912, %v4328
        %v4393 = vadd.f32 %v2913, %v4329
        %v4394 = vadd.f32 %v2914, %v4330
        %v4395 = vadd.f32 %v2915, %v4331
        %v4396 = vadd.f32 %v2916, %v4332
        %v4397 = vadd.f32 %v2917, %v4333
        %v4398 = vadd.f32 %v2918, %v4334
        %v4399 = vadd.f32 %v2919, %v4335
        %v4400 = vadd.f32 %v2920, %v4336
        %v4401 = vadd.f32 %v2921, %v4337
        %v4402 = vadd.f32 %v2922, %v4338
        %v4403 = vadd.f32 %v2923, %v4339
        %v4404 = vadd.f32 %v2924, %v4340
        %v4405 = vadd.f32 %v2925, %v4341
        %v4406 = vadd.f32 %v2926, %v4342
        %v4407 = vadd.f32 %v2927, %v4343
        %v4408 = vadd.f32 %v2928, %v4344
        %v4409 = vadd.f32 %v2929, %v4345
        %v4410 = vadd.f32 %v2930, %v4346
        %v4411 = vadd.f32 %v2931, %v4347
        %v4412 = vadd.f32 %v2932, %v4348
        %v4413 = vadd.f32 %v2933, %v4349
        %v4414 = vadd.f32 %v2934, %v4350
        %v4415 = vadd.f32 %v2935, %v4351
        %v4416 = vadd.f32 %v2936, %v4352
        %v4417 = vadd.f32 %v2937, %v4353
        %v4418 = vadd.f32 %v2938, %v4354
        %v4419 = vadd.f32 %v2939, %v4355
        %v4420 = vadd.f32 %v2940, %v4356
        %v4421 = vadd.f32 %v2941, %v4357
        %v4422 = vadd.f32 %v2942, %v4358
        %v4423 = vadd.f32 %v2943, %v4359
        %v4424 = vadd.f32 %v2944, %v4360
        %v4425 = vadd.f32 %v2945, %v4361
        %v4426 = vadd.f32 %v2946, %v4362
        %v4427 = vadd.f32 %v2947, %v4363
        %v4428 = vadd.f32 %v2948, %v4364
        %v4429 = vadd.f32 %v2949, %v4365
        %v4430 = vadd.f32 %v2950, %v4366
        %v4431 = vadd.f32 %v2951, %v4367
        %v4432 = vadd.f32 %v2952, %v4368
        %v4433 = vadd.f32 %v2953, %v4369
        %v4434 = vadd.f32 %v2954, %v4370
        %v4435 = vadd.f32 %v2955, %v4371
        %v4436 = vadd.f32 %v2956, %v4372
        %v4437 = vadd.f32 %v2957, %v4373
        %v4438 = vadd.f32 %v2958, %v4374
        %v4439 = vadd.f32 %v2959, %v4375
        %v4440 = vadd.f32 %v2960, %v4376
        %v4441 = vadd.f32 %v2961, %v4377
        %v4442 = vadd.f32 %v2962, %v4378
        %v4443 = vadd.f32 %v2963, %v4379
        %v4444 = vadd.f32 %v2964, %v4380
        %v4445 = vadd.f32 %v2965, %v4381
        %v4446 = vadd.f32 %v2966, %v4382
        %v4447 = vadd.f32 %v2967, %v4383
        %v4448 = vadd.f32 %v2968, %v4384
        %v4449 = vadd.f32 %v2969, %v4385
        %v4450 = vmax.f32 %v4386, 0.0
        %v4451 = vmax.f32 %v4387, 0.0
        %v4452 = vmax.f32 %v4388, 0.0
        %v4453 = vmax.f32 %v4389, 0.0
        %v4454 = vmax.f32 %v4390, 0.0
        %v4455 = vmax.f32 %v4391, 0.0
        %v4456 = vmax.f32 %v4392, 0.0
        %v4457 = vmax.f32 %v4393, 0.0
        %v4458 = vmax.f32 %v4394, 0.0
        %v4459 = vmax.f32 %v4395, 0.0
        %v4460 = vmax.f32 %v4396, 0.0
        %v4461 = vmax.f32 %v4397, 0.0
        %v4462 = vmax.f32 %v4398, 0.0
        %v4463 = vmax.f32 %v4399, 0.0
        %v4464 = vmax.f32 %v4400, 0.0
        %v4465 = vmax.f32 %v4401, 0.0
        %v4466 = vmax.f32 %v4402, 0.0
        %v4467 = vmax.f32 %v4403, 0.0
        %v4468 = vmax.f32 %v4404, 0.0
        %v4469 = vmax.f32 %v4405, 0.0
        %v4470 = vmax.f32 %v4406, 0.0
        %v4471 = vmax.f32 %v4407, 0.0
        %v4472 = vmax.f32 %v4408, 0.0
        %v4473 = vmax.f32 %v4409, 0.0
        %v4474 = vmax.f32 %v4410, 0.0
        %v4475 = vmax.f32 %v4411, 0.0
        %v4476 = vmax.f32 %v4412, 0.0
        %v4477 = vmax.f32 %v4413, 0.0
        %v4478 = vmax.f32 %v4414, 0.0
        %v4479 = vmax.f32 %v4415, 0.0
        %v4480 = vmax.f32 %v4416, 0.0
        %v4481 = vmax.f32 %v4417, 0.0
        %v4482 = vmax.f32 %v4418, 0.0
        %v4483 = vmax.f32 %v4419, 0.0
        %v4484 = vmax.f32 %v4420, 0.0
        %v4485 = vmax.f32 %v4421, 0.0
        %v4486 = vmax.f32 %v4422, 0.0
        %v4487 = vmax.f32 %v4423, 0.0
        %v4488 = vmax.f32 %v4424, 0.0
        %v4489 = vmax.f32 %v4425, 0.0
        %v4490 = vmax.f32 %v4426, 0.0
        %v4491 = vmax.f32 %v4427, 0.0
        %v4492 = vmax.f32 %v4428, 0.0
        %v4493 = vmax.f32 %v4429, 0.0
        %v4494 = vmax.f32 %v4430, 0.0
        %v4495 = vmax.f32 %v4431, 0.0
        %v4496 = vmax.f32 %v4432, 0.0
        %v4497 = vmax.f32 %v4433, 0.0
        %v4498 = vmax.f32 %v4434, 0.0
        %v4499 = vmax.f32 %v4435, 0.0
        %v4500 = vmax.f32 %v4436, 0.0
        %v4501 = vmax.f32 %v4437, 0.0
        %v4502 = vmax.f32 %v4438, 0.0
        %v4503 = vmax.f32 %v4439, 0.0
        %v4504 = vmax.f32 %v4440, 0.0
        %v4505 = vmax.f32 %v4441, 0.0
        %v4506 = vmax.f32 %v4442, 0.0
        %v4507 = vmax.f32 %v4443, 0.0
        %v4508 = vmax.f32 %v4444, 0.0
        %v4509 = vmax.f32 %v4445, 0.0
        %v4510 = vmax.f32 %v4446, 0.0
        %v4511 = vmax.f32 %v4447, 0.0
        %v4512 = vmax.f32 %v4448, 0.0
        %v4513 = vmax.f32 %v4449, 0.0
        %v4514 = vpack.c.bf16 %v4451, %v4450
        %v4515 = vpack.c.bf16 %v4453, %v4452
        %v4516 = vpack.c.bf16 %v4455, %v4454
        %v4517 = vpack.c.bf16 %v4457, %v4456
        %v4518 = vpack.c.bf16 %v4459, %v4458
        %v4519 = vpack.c.bf16 %v4461, %v4460
        %v4520 = vpack.c.bf16 %v4463, %v4462
        %v4521 = vpack.c.bf16 %v4465, %v4464
        %v4522 = vpack.c.bf16 %v4467, %v4466
        %v4523 = vpack.c.bf16 %v4469, %v4468
        %v4524 = vpack.c.bf16 %v4471, %v4470
        %v4525 = vpack.c.bf16 %v4473, %v4472
        %v4526 = vpack.c.bf16 %v4475, %v4474
        %v4527 = vpack.c.bf16 %v4477, %v4476
        %v4528 = vpack.c.bf16 %v4479, %v4478
        %v4529 = vpack.c.bf16 %v4481, %v4480
        %v4530 = vpack.c.bf16 %v4483, %v4482
        %v4531 = vpack.c.bf16 %v4485, %v4484
        %v4532 = vpack.c.bf16 %v4487, %v4486
        %v4533 = vpack.c.bf16 %v4489, %v4488
        %v4534 = vpack.c.bf16 %v4491, %v4490
        %v4535 = vpack.c.bf16 %v4493, %v4492
        %v4536 = vpack.c.bf16 %v4495, %v4494
        %v4537 = vpack.c.bf16 %v4497, %v4496
        %v4538 = vpack.c.bf16 %v4499, %v4498
        %v4539 = vpack.c.bf16 %v4501, %v4500
        %v4540 = vpack.c.bf16 %v4503, %v4502
        %v4541 = vpack.c.bf16 %v4505, %v4504
        %v4542 = vpack.c.bf16 %v4507, %v4506
        %v4543 = vpack.c.bf16 %v4509, %v4508
        %v4544 = vpack.c.bf16 %v4511, %v4510
        %v4545 = vpack.c.bf16 %v4513, %v4512
        %4546 = vmatprep.subr.bf16.mxu0 0
        %4547 = vmatpush1.bf16.msra.mxu0 %v4514
        %4548 = vmatprep.subr.bf16.mxu0 0
        %4549 = vmatpush1.bf16.msra.mxu0 %v4515
        %4550 = vmatprep.subr.bf16.mxu0 0
        %4551 = vmatpush1.bf16.msra.mxu0 %v4516
        %4552 = vmatprep.subr.bf16.mxu0 0
        %4553 = vmatpush1.bf16.msra.mxu0 %v4517
        %4554 = vmatprep.subr.bf16.mxu0 0
        %4555 = vmatpush1.bf16.msra.mxu0 %v4518
        %4556 = vmatprep.subr.bf16.mxu0 0
        %4557 = vmatpush1.bf16.msra.mxu0 %v4519
        %4558 = vmatprep.subr.bf16.mxu0 0
        %4559 = vmatpush1.bf16.msra.mxu0 %v4520
        %4560 = vmatprep.subr.bf16.mxu0 0
        %4561 = vmatpush1.bf16.msra.mxu0 %v4521
        %4562 = vmatprep.subr.bf16.mxu0 0
        %4563 = vmatpush1.bf16.msra.mxu0 %v4522
        %4564 = vmatprep.subr.bf16.mxu0 0
        %4565 = vmatpush1.bf16.msra.mxu0 %v4523
        %4566 = vmatprep.subr.bf16.mxu0 0
        %4567 = vmatpush1.bf16.msra.mxu0 %v4524
        %4568 = vmatprep.subr.bf16.mxu0 0
        %4569 = vmatpush1.bf16.msra.mxu0 %v4525
        %4570 = vmatprep.subr.bf16.mxu0 0
        %4571 = vmatpush1.bf16.msra.mxu0 %v4526
        %4572 = vmatprep.subr.bf16.mxu0 0
        %4573 = vmatpush1.bf16.msra.mxu0 %v4527
        %4574 = vmatprep.subr.bf16.mxu0 0
        %4575 = vmatpush1.bf16.msra.mxu0 %v4528
        %4576 = vmatprep.subr.bf16.mxu0 0
        %4577 = vmatpush1.bf16.msra.mxu0 %v4529
        %4578 = vmatprep.mubr.bf16.mxu0 %v1075
        %4579 = vmatmul.mubr.bf16.gmra.mrb[0].mxu0 %v1074
        %v4580 = vpop.f32.mrb[0].mxu0
        %v4581 = vadd.f32 0.0, %v4580
        %v4582 = vpop.f32.mrb[0].mxu0
        %v4583 = vpop.f32.mrb[0].mxu0
        %v4584 = vadd.f32 0.0, %v4583
        %v4585 = vpop.f32.mrb[0].mxu0
        %4586 = vmatprep.mubr.bf16.mxu0 %v1079
        %4587 = vmatmul.mubr.bf16.gmra.mrb[0].mxu0 %v1078
        %v4588 = vpop.f32.mrb[0].mxu0
        %v4589 = vadd.f32 0.0, %v4588
        %v4590 = vpop.f32.mrb[0].mxu0
        %v4591 = vpop.f32.mrb[0].mxu0
        %v4592 = vadd.f32 0.0, %v4591
        %v4593 = vpop.f32.mrb[0].mxu0
        %4594 = vmatprep.mubr.bf16.mxu0 %v1083
        %4595 = vmatmul.mubr.bf16.gmra.mrb[0].mxu0 %v1082
        %v4596 = vpop.f32.mrb[0].mxu0
        %v4597 = vadd.f32 0.0, %v4596
        %v4598 = vpop.f32.mrb[0].mxu0
        %v4599 = vpop.f32.mrb[0].mxu0
        %v4600 = vadd.f32 0.0, %v4599
        %v4601 = vpop.f32.mrb[0].mxu0
        %4602 = vmatprep.mubr.bf16.mxu0 %v1087
        %4603 = vmatmul.mubr.bf16.gmra.mrb[0].mxu0 %v1086
        %v4604 = vpop.f32.mrb[0].mxu0
        %v4605 = vadd.f32 0.0, %v4604
        %v4606 = vpop.f32.mrb[0].mxu0
        %v4607 = vpop.f32.mrb[0].mxu0
        %v4608 = vadd.f32 0.0, %v4607
        %v4609 = vpop.f32.mrb[0].mxu0
        %4610 = vmatprep.mubr.bf16.mxu0 %v1091
        %4611 = vmatmul.mubr.bf16.gmra.mrb[0].mxu0 %v1090
        %v4612 = vpop.f32.mrb[0].mxu0
        %v4613 = vadd.f32 0.0, %v4612
        %v4614 = vpop.f32.mrb[0].mxu0
        %v4615 = vpop.f32.mrb[0].mxu0
        %v4616 = vadd.f32 0.0, %v4615
        %v4617 = vpop.f32.mrb[0].mxu0
        %4618 = vmatprep.mubr.bf16.mxu0 %v1095
        %4619 = vmatmul.mubr.bf16.gmra.mrb[0].mxu0 %v1094
        %v4620 = vpop.f32.mrb[0].mxu0
        %v4621 = vadd.f32 0.0, %v4620
        %v4622 = vpop.f32.mrb[0].mxu0
        %v4623 = vpop.f32.mrb[0].mxu0
        %v4624 = vadd.f32 0.0, %v4623
        %v4625 = vpop.f32.mrb[0].mxu0
        %4626 = vmatprep.mubr.bf16.mxu0 %v1099
        %4627 = vmatmul.mubr.bf16.gmra.mrb[0].mxu0 %v1098
        %v4628 = vpop.f32.mrb[0].mxu0
        %v4629 = vadd.f32 0.0, %v4628
        %v4630 = vpop.f32.mrb[0].mxu0
        %v4631 = vpop.f32.mrb[0].mxu0
        %v4632 = vadd.f32 0.0, %v4631
        %v4633 = vpop.f32.mrb[0].mxu0
        %4634 = vmatprep.mubr.bf16.mxu0 %v1103
        %4635 = vmatmul.mubr.bf16.gmra.mrb[0].mxu0 %v1102
        %v4636 = vpop.f32.mrb[0].mxu0
        %v4637 = vadd.f32 0.0, %v4636
        %v4638 = vpop.f32.mrb[0].mxu0
        %v4639 = vpop.f32.mrb[0].mxu0
        %v4640 = vadd.f32 0.0, %v4639
        %v4641 = vpop.f32.mrb[0].mxu0
        %4642 = vmatprep.mubr.bf16.mxu0 %v1107
        %4643 = vmatmul.mubr.bf16.gmra.mrb[0].mxu0 %v1106
        %v4644 = vpop.f32.mrb[0].mxu0
        %v4645 = vadd.f32 0.0, %v4644
        %v4646 = vpop.f32.mrb[0].mxu0
        %v4647 = vpop.f32.mrb[0].mxu0
        %v4648 = vadd.f32 0.0, %v4647
        %v4649 = vpop.f32.mrb[0].mxu0
        %4650 = vmatprep.mubr.bf16.mxu0 %v1111
        %4651 = vmatmul.mubr.bf16.gmra.mrb[0].mxu0 %v1110
        %v4652 = vpop.f32.mrb[0].mxu0
        %v4653 = vadd.f32 0.0, %v4652
        %v4654 = vpop.f32.mrb[0].mxu0
        %v4655 = vpop.f32.mrb[0].mxu0
        %v4656 = vadd.f32 0.0, %v4655
        %v4657 = vpop.f32.mrb[0].mxu0
        %4658 = vmatprep.mubr.bf16.mxu0 %v1115
        %4659 = vmatmul.mubr.bf16.gmra.mrb[0].mxu0 %v1114
        %v4660 = vpop.f32.mrb[0].mxu0
        %v4661 = vadd.f32 0.0, %v4660
        %v4662 = vpop.f32.mrb[0].mxu0
        %v4663 = vpop.f32.mrb[0].mxu0
        %v4664 = vadd.f32 0.0, %v4663
        %v4665 = vpop.f32.mrb[0].mxu0
        %4666 = vmatprep.mubr.bf16.mxu0 %v1119
        %4667 = vmatmul.mubr.bf16.gmra.mrb[0].mxu0 %v1118
        %v4668 = vpop.f32.mrb[0].mxu0
        %v4669 = vadd.f32 0.0, %v4668
        %v4670 = vpop.f32.mrb[0].mxu0
        %v4671 = vpop.f32.mrb[0].mxu0
        %v4672 = vadd.f32 0.0, %v4671
        %v4673 = vpop.f32.mrb[0].mxu0
        %4674 = vmatprep.mubr.bf16.mxu0 %v1123
        %4675 = vmatmul.mubr.bf16.gmra.mrb[0].mxu0 %v1122
        %v4676 = vpop.f32.mrb[0].mxu0
        %v4677 = vadd.f32 0.0, %v4676
        %v4678 = vpop.f32.mrb[0].mxu0
        %v4679 = vpop.f32.mrb[0].mxu0
        %v4680 = vadd.f32 0.0, %v4679
        %v4681 = vpop.f32.mrb[0].mxu0
        %4682 = vmatprep.mubr.bf16.mxu0 %v1127
        %4683 = vmatmul.mubr.bf16.gmra.mrb[0].mxu0 %v1126
        %v4684 = vpop.f32.mrb[0].mxu0
        %v4685 = vadd.f32 0.0, %v4684
        %v4686 = vpop.f32.mrb[0].mxu0
        %v4687 = vpop.f32.mrb[0].mxu0
        %v4688 = vadd.f32 0.0, %v4687
        %v4689 = vpop.f32.mrb[0].mxu0
        %4690 = vmatprep.mubr.bf16.mxu0 %v1131
        %4691 = vmatmul.mubr.bf16.gmra.mrb[0].mxu0 %v1130
        %v4692 = vpop.f32.mrb[0].mxu0
        %v4693 = vadd.f32 0.0, %v4692
        %v4694 = vpop.f32.mrb[0].mxu0
        %v4695 = vpop.f32.mrb[0].mxu0
        %v4696 = vadd.f32 0.0, %v4695
        %v4697 = vpop.f32.mrb[0].mxu0
        %4698 = vmatprep.mubr.bf16.mxu0 %v1135
        %4699 = vmatmul.mubr.bf16.gmra.mrb[0].mxu0 %v1134
        %v4700 = vpop.f32.mrb[0].mxu0
        %v4701 = vadd.f32 0.0, %v4700
        %v4702 = vpop.f32.mrb[0].mxu0
        %v4703 = vpop.f32.mrb[0].mxu0
        %v4704 = vadd.f32 0.0, %v4703
        %v4705 = vpop.f32.mrb[0].mxu0
        %4706 = vmatprep.mubr.bf16.mxu0 %v1139
        %4707 = vmatmul.mubr.bf16.gmra.mrb[0].mxu0 %v1138
        %v4708 = vpop.f32.mrb[0].mxu0
        %v4709 = vadd.f32 0.0, %v4708
        %v4710 = vpop.f32.mrb[0].mxu0
        %v4711 = vpop.f32.mrb[0].mxu0
        %v4712 = vadd.f32 0.0, %v4711
        %v4713 = vpop.f32.mrb[0].mxu0
        %4714 = vmatprep.mubr.bf16.mxu0 %v1143
        %4715 = vmatmul.mubr.bf16.gmra.mrb[0].mxu0 %v1142
        %v4716 = vpop.f32.mrb[0].mxu0
        %v4717 = vadd.f32 0.0, %v4716
        %v4718 = vpop.f32.mrb[0].mxu0
        %v4719 = vpop.f32.mrb[0].mxu0
        %v4720 = vadd.f32 0.0, %v4719
        %v4721 = vpop.f32.mrb[0].mxu0
        %4722 = vmatprep.mubr.bf16.mxu0 %v1147
        %4723 = vmatmul.mubr.bf16.gmra.mrb[0].mxu0 %v1146
        %v4724 = vpop.f32.mrb[0].mxu0
        %v4725 = vadd.f32 0.0, %v4724
        %v4726 = vpop.f32.mrb[0].mxu0
        %v4727 = vpop.f32.mrb[0].mxu0
        %v4728 = vadd.f32 0.0, %v4727
        %v4729 = vpop.f32.mrb[0].mxu0
        %4730 = vmatprep.mubr.bf16.mxu0 %v1151
        %4731 = vmatmul.mubr.bf16.gmra.mrb[0].mxu0 %v1150
        %v4732 = vpop.f32.mrb[0].mxu0
        %v4733 = vadd.f32 0.0, %v4732
        %v4734 = vpop.f32.mrb[0].mxu0
        %v4735 = vpop.f32.mrb[0].mxu0
        %v4736 = vadd.f32 0.0, %v4735
        %v4737 = vpop.f32.mrb[0].mxu0
        %4738 = vmatprep.mubr.bf16.mxu0 %v1155
        %4739 = vmatmul.mubr.bf16.gmra.mrb[0].mxu0 %v1154
        %v4740 = vpop.f32.mrb[0].mxu0
        %v4741 = vadd.f32 0.0, %v4740
        %v4742 = vpop.f32.mrb[0].mxu0
        %v4743 = vpop.f32.mrb[0].mxu0
        %v4744 = vadd.f32 0.0, %v4743
        %v4745 = vpop.f32.mrb[0].mxu0
        %4746 = vmatprep.mubr.bf16.mxu0 %v1159
        %4747 = vmatmul.mubr.bf16.gmra.mrb[0].mxu0 %v1158
        %v4748 = vpop.f32.mrb[0].mxu0
        %v4749 = vadd.f32 0.0, %v4748
        %v4750 = vpop.f32.mrb[0].mxu0
        %v4751 = vpop.f32.mrb[0].mxu0
        %v4752 = vadd.f32 0.0, %v4751
        %v4753 = vpop.f32.mrb[0].mxu0
        %4754 = vmatprep.mubr.bf16.mxu0 %v1163
        %4755 = vmatmul.mubr.bf16.gmra.mrb[0].mxu0 %v1162
        %v4756 = vpop.f32.mrb[0].mxu0
        %v4757 = vadd.f32 0.0, %v4756
        %v4758 = vpop.f32.mrb[0].mxu0
        %v4759 = vpop.f32.mrb[0].mxu0
        %v4760 = vadd.f32 0.0, %v4759
        %v4761 = vpop.f32.mrb[0].mxu0
        %4762 = vmatprep.mubr.bf16.mxu0 %v1167
        %4763 = vmatmul.mubr.bf16.gmra.mrb[0].mxu0 %v1166
        %v4764 = vpop.f32.mrb[0].mxu0
        %v4765 = vadd.f32 0.0, %v4764
        %v4766 = vpop.f32.mrb[0].mxu0
        %v4767 = vpop.f32.mrb[0].mxu0
        %v4768 = vadd.f32 0.0, %v4767
        %v4769 = vpop.f32.mrb[0].mxu0
        %4770 = vmatprep.mubr.bf16.mxu0 %v1171
        %4771 = vmatmul.mubr.bf16.gmra.mrb[0].mxu0 %v1170
        %v4772 = vpop.f32.mrb[0].mxu0
        %v4773 = vadd.f32 0.0, %v4772
        %v4774 = vpop.f32.mrb[0].mxu0
        %v4775 = vpop.f32.mrb[0].mxu0
        %v4776 = vadd.f32 0.0, %v4775
        %v4777 = vpop.f32.mrb[0].mxu0
        %4778 = vmatprep.mubr.bf16.mxu0 %v1175
        %4779 = vmatmul.mubr.bf16.gmra.mrb[0].mxu0 %v1174
        %v4780 = vpop.f32.mrb[0].mxu0
        %v4781 = vadd.f32 0.0, %v4780
        %v4782 = vpop.f32.mrb[0].mxu0
        %v4783 = vpop.f32.mrb[0].mxu0
        %v4784 = vadd.f32 0.0, %v4783
        %v4785 = vpop.f32.mrb[0].mxu0
        %4786 = vmatprep.mubr.bf16.mxu0 %v1179
        %4787 = vmatmul.mubr.bf16.gmra.mrb[0].mxu0 %v1178
        %v4788 = vpop.f32.mrb[0].mxu0
        %v4789 = vadd.f32 0.0, %v4788
        %v4790 = vpop.f32.mrb[0].mxu0
        %v4791 = vpop.f32.mrb[0].mxu0
        %v4792 = vadd.f32 0.0, %v4791
        %v4793 = vpop.f32.mrb[0].mxu0
        %4794 = vmatprep.mubr.bf16.mxu0 %v1183
        %4795 = vmatmul.mubr.bf16.gmra.mrb[0].mxu0 %v1182
        %v4796 = vpop.f32.mrb[0].mxu0
        %v4797 = vadd.f32 0.0, %v4796
        %v4798 = vpop.f32.mrb[0].mxu0
        %v4799 = vpop.f32.mrb[0].mxu0
        %v4800 = vadd.f32 0.0, %v4799
        %v4801 = vpop.f32.mrb[0].mxu0
        %4802 = vmatprep.mubr.bf16.mxu0 %v1187
        %4803 = vmatmul.mubr.bf16.gmra.mrb[0].mxu0 %v1186
        %v4804 = vpop.f32.mrb[0].mxu0
        %v4805 = vadd.f32 0.0, %v4804
        %v4806 = vpop.f32.mrb[0].mxu0
        %v4807 = vpop.f32.mrb[0].mxu0
        %v4808 = vadd.f32 0.0, %v4807
        %v4809 = vpop.f32.mrb[0].mxu0
        %4810 = vmatprep.mubr.bf16.mxu0 %v1191
        %4811 = vmatmul.mubr.bf16.gmra.mrb[0].mxu0 %v1190
        %v4812 = vpop.f32.mrb[0].mxu0
        %v4813 = vadd.f32 0.0, %v4812
        %v4814 = vpop.f32.mrb[0].mxu0
        %v4815 = vpop.f32.mrb[0].mxu0
        %v4816 = vadd.f32 0.0, %v4815
        %v4817 = vpop.f32.mrb[0].mxu0
        %4818 = vmatprep.mubr.bf16.mxu0 %v1195
        %4819 = vmatmul.mubr.bf16.gmra.mrb[0].mxu0 %v1194
        %v4820 = vpop.f32.mrb[0].mxu0
        %v4821 = vadd.f32 0.0, %v4820
        %v4822 = vpop.f32.mrb[0].mxu0
        %v4823 = vpop.f32.mrb[0].mxu0
        %v4824 = vadd.f32 0.0, %v4823
        %v4825 = vpop.f32.mrb[0].mxu0
        %4826 = vmatprep.mubr.bf16.mxu0 %v1199
        %4827 = vmatmul.mubr.bf16.gmra.mrb[0].mxu0 %v1198
        %v4828 = vpop.f32.mrb[0].mxu0
        %v4829 = vadd.f32 0.0, %v4828
        %v4830 = vpop.f32.mrb[0].mxu0
        %v4831 = vpop.f32.mrb[0].mxu0
        %v4832 = vadd.f32 0.0, %v4831
        %v4833 = vpop.f32.mrb[0].mxu0
        %4834 = vdwg.mxu0
        %4835 = vmatprep.subr.bf16.mxu0 0
        %4836 = vmatpush1.bf16.msra.mxu0 %v4530
        %4837 = vmatprep.subr.bf16.mxu0 0
        %4838 = vmatpush1.bf16.msra.mxu0 %v4531
        %4839 = vmatprep.subr.bf16.mxu0 0
        %4840 = vmatpush1.bf16.msra.mxu0 %v4532
        %4841 = vmatprep.subr.bf16.mxu0 0
        %4842 = vmatpush1.bf16.msra.mxu0 %v4533
        %4843 = vmatprep.subr.bf16.mxu0 0
        %4844 = vmatpush1.bf16.msra.mxu0 %v4534
        %4845 = vmatprep.subr.bf16.mxu0 0
        %4846 = vmatpush1.bf16.msra.mxu0 %v4535
        %4847 = vmatprep.subr.bf16.mxu0 0
        %4848 = vmatpush1.bf16.msra.mxu0 %v4536
        %4849 = vmatprep.subr.bf16.mxu0 0
        %4850 = vmatpush1.bf16.msra.mxu0 %v4537
        %4851 = vmatprep.subr.bf16.mxu0 0
        %4852 = vmatpush1.bf16.msra.mxu0 %v4538
        %4853 = vmatprep.subr.bf16.mxu0 0
        %4854 = vmatpush1.bf16.msra.mxu0 %v4539
        %4855 = vmatprep.subr.bf16.mxu0 0
        %4856 = vmatpush1.bf16.msra.mxu0 %v4540
        %4857 = vmatprep.subr.bf16.mxu0 0
        %4858 = vmatpush1.bf16.msra.mxu0 %v4541
        %4859 = vmatprep.subr.bf16.mxu0 0
        %4860 = vmatpush1.bf16.msra.mxu0 %v4542
        %4861 = vmatprep.subr.bf16.mxu0 0
        %4862 = vmatpush1.bf16.msra.mxu0 %v4543
        %4863 = vmatprep.subr.bf16.mxu0 0
        %4864 = vmatpush1.bf16.msra.mxu0 %v4544
        %4865 = vmatprep.subr.bf16.mxu0 0
        %4866 = vmatpush1.bf16.msra.mxu0 %v4545
        %4867 = vmatprep.mubr.bf16.mxu0 %v1077
        %4868 = vmatmul.mubr.bf16.gmra.mrb[0].mxu0 %v1076
        %v4869 = vpop.f32.mrb[0].mxu0
        %v4870 = vadd.f32 %v4581, %v4869
        %v4871 = vpop.f32.mrb[0].mxu0
        %v4872 = vpop.f32.mrb[0].mxu0
        %v4873 = vadd.f32 %v4584, %v4872
        %v4874 = vpop.f32.mrb[0].mxu0
        %4875 = vmatprep.mubr.bf16.mxu0 %v1081
        %4876 = vmatmul.mubr.bf16.gmra.mrb[0].mxu0 %v1080
        %v4877 = vpop.f32.mrb[0].mxu0
        %v4878 = vadd.f32 %v4589, %v4877
        %v4879 = vpop.f32.mrb[0].mxu0
        %v4880 = vpop.f32.mrb[0].mxu0
        %v4881 = vadd.f32 %v4592, %v4880
        %v4882 = vpop.f32.mrb[0].mxu0
        %4883 = vmatprep.mubr.bf16.mxu0 %v1085
        %4884 = vmatmul.mubr.bf16.gmra.mrb[0].mxu0 %v1084
        %v4885 = vpop.f32.mrb[0].mxu0
        %v4886 = vadd.f32 %v4597, %v4885
        %v4887 = vpop.f32.mrb[0].mxu0
        %v4888 = vpop.f32.mrb[0].mxu0
        %v4889 = vadd.f32 %v4600, %v4888
        %v4890 = vpop.f32.mrb[0].mxu0
        %4891 = vmatprep.mubr.bf16.mxu0 %v1089
        %4892 = vmatmul.mubr.bf16.gmra.mrb[0].mxu0 %v1088
        %v4893 = vpop.f32.mrb[0].mxu0
        %v4894 = vadd.f32 %v4605, %v4893
        %v4895 = vpop.f32.mrb[0].mxu0
        %v4896 = vpop.f32.mrb[0].mxu0
        %v4897 = vadd.f32 %v4608, %v4896
        %v4898 = vpop.f32.mrb[0].mxu0
        %4899 = vmatprep.mubr.bf16.mxu0 %v1093
        %4900 = vmatmul.mubr.bf16.gmra.mrb[0].mxu0 %v1092
        %v4901 = vpop.f32.mrb[0].mxu0
        %v4902 = vadd.f32 %v4613, %v4901
        %v4903 = vpop.f32.mrb[0].mxu0
        %v4904 = vpop.f32.mrb[0].mxu0
        %v4905 = vadd.f32 %v4616, %v4904
        %v4906 = vpop.f32.mrb[0].mxu0
        %4907 = vmatprep.mubr.bf16.mxu0 %v1097
        %4908 = vmatmul.mubr.bf16.gmra.mrb[0].mxu0 %v1096
        %v4909 = vpop.f32.mrb[0].mxu0
        %v4910 = vadd.f32 %v4621, %v4909
        %v4911 = vpop.f32.mrb[0].mxu0
        %v4912 = vpop.f32.mrb[0].mxu0
        %v4913 = vadd.f32 %v4624, %v4912
        %v4914 = vpop.f32.mrb[0].mxu0
        %4915 = vmatprep.mubr.bf16.mxu0 %v1101
        %4916 = vmatmul.mubr.bf16.gmra.mrb[0].mxu0 %v1100
        %v4917 = vpop.f32.mrb[0].mxu0
        %v4918 = vadd.f32 %v4629, %v4917
        %v4919 = vpop.f32.mrb[0].mxu0
        %v4920 = vpop.f32.mrb[0].mxu0
        %v4921 = vadd.f32 %v4632, %v4920
        %v4922 = vpop.f32.mrb[0].mxu0
        %4923 = vmatprep.mubr.bf16.mxu0 %v1105
        %4924 = vmatmul.mubr.bf16.gmra.mrb[0].mxu0 %v1104
        %v4925 = vpop.f32.mrb[0].mxu0
        %v4926 = vadd.f32 %v4637, %v4925
        %v4927 = vpop.f32.mrb[0].mxu0
        %v4928 = vpop.f32.mrb[0].mxu0
        %v4929 = vadd.f32 %v4640, %v4928
        %v4930 = vpop.f32.mrb[0].mxu0
        %4931 = vmatprep.mubr.bf16.mxu0 %v1109
        %4932 = vmatmul.mubr.bf16.gmra.mrb[0].mxu0 %v1108
        %v4933 = vpop.f32.mrb[0].mxu0
        %v4934 = vadd.f32 %v4645, %v4933
        %v4935 = vpop.f32.mrb[0].mxu0
        %v4936 = vpop.f32.mrb[0].mxu0
        %v4937 = vadd.f32 %v4648, %v4936
        %v4938 = vpop.f32.mrb[0].mxu0
        %4939 = vmatprep.mubr.bf16.mxu0 %v1113
        %4940 = vmatmul.mubr.bf16.gmra.mrb[0].mxu0 %v1112
        %v4941 = vpop.f32.mrb[0].mxu0
        %v4942 = vadd.f32 %v4653, %v4941
        %v4943 = vpop.f32.mrb[0].mxu0
        %v4944 = vpop.f32.mrb[0].mxu0
        %v4945 = vadd.f32 %v4656, %v4944
        %v4946 = vpop.f32.mrb[0].mxu0
        %4947 = vmatprep.mubr.bf16.mxu0 %v1117
        %4948 = vmatmul.mubr.bf16.gmra.mrb[0].mxu0 %v1116
        %v4949 = vpop.f32.mrb[0].mxu0
        %v4950 = vadd.f32 %v4661, %v4949
        %v4951 = vpop.f32.mrb[0].mxu0
        %v4952 = vpop.f32.mrb[0].mxu0
        %v4953 = vadd.f32 %v4664, %v4952
        %v4954 = vpop.f32.mrb[0].mxu0
        %4955 = vmatprep.mubr.bf16.mxu0 %v1121
        %4956 = vmatmul.mubr.bf16.gmra.mrb[0].mxu0 %v1120
        %v4957 = vpop.f32.mrb[0].mxu0
        %v4958 = vadd.f32 %v4669, %v4957
        %v4959 = vpop.f32.mrb[0].mxu0
        %v4960 = vpop.f32.mrb[0].mxu0
        %v4961 = vadd.f32 %v4672, %v4960
        %v4962 = vpop.f32.mrb[0].mxu0
        %4963 = vmatprep.mubr.bf16.mxu0 %v1125
        %4964 = vmatmul.mubr.bf16.gmra.mrb[0].mxu0 %v1124
        %v4965 = vpop.f32.mrb[0].mxu0
        %v4966 = vadd.f32 %v4677, %v4965
        %v4967 = vpop.f32.mrb[0].mxu0
        %v4968 = vpop.f32.mrb[0].mxu0
        %v4969 = vadd.f32 %v4680, %v4968
        %v4970 = vpop.f32.mrb[0].mxu0
        %4971 = vmatprep.mubr.bf16.mxu0 %v1129
        %4972 = vmatmul.mubr.bf16.gmra.mrb[0].mxu0 %v1128
        %v4973 = vpop.f32.mrb[0].mxu0
        %v4974 = vadd.f32 %v4685, %v4973
        %v4975 = vpop.f32.mrb[0].mxu0
        %v4976 = vpop.f32.mrb[0].mxu0
        %v4977 = vadd.f32 %v4688, %v4976
        %v4978 = vpop.f32.mrb[0].mxu0
        %4979 = vmatprep.mubr.bf16.mxu0 %v1133
        %4980 = vmatmul.mubr.bf16.gmra.mrb[0].mxu0 %v1132
        %v4981 = vpop.f32.mrb[0].mxu0
        %v4982 = vadd.f32 %v4693, %v4981
        %v4983 = vpop.f32.mrb[0].mxu0
        %v4984 = vpop.f32.mrb[0].mxu0
        %v4985 = vadd.f32 %v4696, %v4984
        %v4986 = vpop.f32.mrb[0].mxu0
        %4987 = vmatprep.mubr.bf16.mxu0 %v1137
        %4988 = vmatmul.mubr.bf16.gmra.mrb[0].mxu0 %v1136
        %v4989 = vpop.f32.mrb[0].mxu0
        %v4990 = vadd.f32 %v4701, %v4989
        %v4991 = vpop.f32.mrb[0].mxu0
        %v4992 = vpop.f32.mrb[0].mxu0
        %v4993 = vadd.f32 %v4704, %v4992
        %v4994 = vpop.f32.mrb[0].mxu0
        %4995 = vmatprep.mubr.bf16.mxu0 %v1141
        %4996 = vmatmul.mubr.bf16.gmra.mrb[0].mxu0 %v1140
        %v4997 = vpop.f32.mrb[0].mxu0
        %v4998 = vadd.f32 %v4709, %v4997
        %v4999 = vpop.f32.mrb[0].mxu0
        %v5000 = vpop.f32.mrb[0].mxu0
        %v5001 = vadd.f32 %v4712, %v5000
        %v5002 = vpop.f32.mrb[0].mxu0
        %5003 = vmatprep.mubr.bf16.mxu0 %v1145
        %5004 = vmatmul.mubr.bf16.gmra.mrb[0].mxu0 %v1144
        %v5005 = vpop.f32.mrb[0].mxu0
        %v5006 = vadd.f32 %v4717, %v5005
        %v5007 = vpop.f32.mrb[0].mxu0
        %v5008 = vpop.f32.mrb[0].mxu0
        %v5009 = vadd.f32 %v4720, %v5008
        %v5010 = vpop.f32.mrb[0].mxu0
        %5011 = vmatprep.mubr.bf16.mxu0 %v1149
        %5012 = vmatmul.mubr.bf16.gmra.mrb[0].mxu0 %v1148
        %v5013 = vpop.f32.mrb[0].mxu0
        %v5014 = vadd.f32 %v4725, %v5013
        %v5015 = vpop.f32.mrb[0].mxu0
        %v5016 = vpop.f32.mrb[0].mxu0
        %v5017 = vadd.f32 %v4728, %v5016
        %v5018 = vpop.f32.mrb[0].mxu0
        %5019 = vmatprep.mubr.bf16.mxu0 %v1153
        %5020 = vmatmul.mubr.bf16.gmra.mrb[0].mxu0 %v1152
        %v5021 = vpop.f32.mrb[0].mxu0
        %v5022 = vadd.f32 %v4733, %v5021
        %v5023 = vpop.f32.mrb[0].mxu0
        %v5024 = vpop.f32.mrb[0].mxu0
        %v5025 = vadd.f32 %v4736, %v5024
        %v5026 = vpop.f32.mrb[0].mxu0
        %5027 = vmatprep.mubr.bf16.mxu0 %v1157
        %5028 = vmatmul.mubr.bf16.gmra.mrb[0].mxu0 %v1156
        %v5029 = vpop.f32.mrb[0].mxu0
        %v5030 = vadd.f32 %v4741, %v5029
        %v5031 = vpop.f32.mrb[0].mxu0
        %v5032 = vpop.f32.mrb[0].mxu0
        %v5033 = vadd.f32 %v4744, %v5032
        %v5034 = vpop.f32.mrb[0].mxu0
        %5035 = vmatprep.mubr.bf16.mxu0 %v1161
        %5036 = vmatmul.mubr.bf16.gmra.mrb[0].mxu0 %v1160
        %v5037 = vpop.f32.mrb[0].mxu0
        %v5038 = vadd.f32 %v4749, %v5037
        %v5039 = vpop.f32.mrb[0].mxu0
        %v5040 = vpop.f32.mrb[0].mxu0
        %v5041 = vadd.f32 %v4752, %v5040
        %v5042 = vpop.f32.mrb[0].mxu0
        %5043 = vmatprep.mubr.bf16.mxu0 %v1165
        %5044 = vmatmul.mubr.bf16.gmra.mrb[0].mxu0 %v1164
        %v5045 = vpop.f32.mrb[0].mxu0
        %v5046 = vadd.f32 %v4757, %v5045
        %v5047 = vpop.f32.mrb[0].mxu0
        %v5048 = vpop.f32.mrb[0].mxu0
        %v5049 = vadd.f32 %v4760, %v5048
        %v5050 = vpop.f32.mrb[0].mxu0
        %5051 = vmatprep.mubr.bf16.mxu0 %v1169
        %5052 = vmatmul.mubr.bf16.gmra.mrb[0].mxu0 %v1168
        %v5053 = vpop.f32.mrb[0].mxu0
        %v5054 = vadd.f32 %v4765, %v5053
        %v5055 = vpop.f32.mrb[0].mxu0
        %v5056 = vpop.f32.mrb[0].mxu0
        %v5057 = vadd.f32 %v4768, %v5056
        %v5058 = vpop.f32.mrb[0].mxu0
        %5059 = vmatprep.mubr.bf16.mxu0 %v1173
        %5060 = vmatmul.mubr.bf16.gmra.mrb[0].mxu0 %v1172
        %v5061 = vpop.f32.mrb[0].mxu0
        %v5062 = vadd.f32 %v4773, %v5061
        %v5063 = vpop.f32.mrb[0].mxu0
        %v5064 = vpop.f32.mrb[0].mxu0
        %v5065 = vadd.f32 %v4776, %v5064
        %v5066 = vpop.f32.mrb[0].mxu0
        %5067 = vmatprep.mubr.bf16.mxu0 %v1177
        %5068 = vmatmul.mubr.bf16.gmra.mrb[0].mxu0 %v1176
        %v5069 = vpop.f32.mrb[0].mxu0
        %v5070 = vadd.f32 %v4781, %v5069
        %v5071 = vpop.f32.mrb[0].mxu0
        %v5072 = vpop.f32.mrb[0].mxu0
        %v5073 = vadd.f32 %v4784, %v5072
        %v5074 = vpop.f32.mrb[0].mxu0
        %5075 = vmatprep.mubr.bf16.mxu0 %v1181
        %5076 = vmatmul.mubr.bf16.gmra.mrb[0].mxu0 %v1180
        %v5077 = vpop.f32.mrb[0].mxu0
        %v5078 = vadd.f32 %v4789, %v5077
        %v5079 = vpop.f32.mrb[0].mxu0
        %v5080 = vpop.f32.mrb[0].mxu0
        %v5081 = vadd.f32 %v4792, %v5080
        %v5082 = vpop.f32.mrb[0].mxu0
        %5083 = vmatprep.mubr.bf16.mxu0 %v1185
        %5084 = vmatmul.mubr.bf16.gmra.mrb[0].mxu0 %v1184
        %v5085 = vpop.f32.mrb[0].mxu0
        %v5086 = vadd.f32 %v4797, %v5085
        %v5087 = vpop.f32.mrb[0].mxu0
        %v5088 = vpop.f32.mrb[0].mxu0
        %v5089 = vadd.f32 %v4800, %v5088
        %v5090 = vpop.f32.mrb[0].mxu0
        %5091 = vmatprep.mubr.bf16.mxu0 %v1189
        %5092 = vmatmul.mubr.bf16.gmra.mrb[0].mxu0 %v1188
        %v5093 = vpop.f32.mrb[0].mxu0
        %v5094 = vadd.f32 %v4805, %v5093
        %v5095 = vpop.f32.mrb[0].mxu0
        %v5096 = vpop.f32.mrb[0].mxu0
        %v5097 = vadd.f32 %v4808, %v5096
        %v5098 = vpop.f32.mrb[0].mxu0
        %5099 = vmatprep.mubr.bf16.mxu0 %v1193
        %5100 = vmatmul.mubr.bf16.gmra.mrb[0].mxu0 %v1192
        %v5101 = vpop.f32.mrb[0].mxu0
        %v5102 = vadd.f32 %v4813, %v5101
        %v5103 = vpop.f32.mrb[0].mxu0
        %v5104 = vpop.f32.mrb[0].mxu0
        %v5105 = vadd.f32 %v4816, %v5104
        %v5106 = vpop.f32.mrb[0].mxu0
        %5107 = vmatprep.mubr.bf16.mxu0 %v1197
        %5108 = vmatmul.mubr.bf16.gmra.mrb[0].mxu0 %v1196
        %v5109 = vpop.f32.mrb[0].mxu0
        %v5110 = vadd.f32 %v4821, %v5109
        %v5111 = vpop.f32.mrb[0].mxu0
        %v5112 = vpop.f32.mrb[0].mxu0
        %v5113 = vadd.f32 %v4824, %v5112
        %v5114 = vpop.f32.mrb[0].mxu0
        %5115 = vmatprep.mubr.bf16.mxu0 %v1201
        %5116 = vmatmul.mubr.bf16.gmra.mrb[0].mxu0 %v1200
        %v5117 = vpop.f32.mrb[0].mxu0
        %v5118 = vadd.f32 %v4829, %v5117
        %v5119 = vpop.f32.mrb[0].mxu0
        %v5120 = vpop.f32.mrb[0].mxu0
        %v5121 = vadd.f32 %v4832, %v5120
        %v5122 = vpop.f32.mrb[0].mxu0
        %5123 = vdwg.mxu0
        %v5124 = vpack.c.bf16 %v4873, %v4870
        %v5125 = vpack.c.bf16 %v4881, %v4878
        %v5126 = vpack.c.bf16 %v4889, %v4886
        %v5127 = vpack.c.bf16 %v4897, %v4894
        %v5128 = vpack.c.bf16 %v4905, %v4902
        %v5129 = vpack.c.bf16 %v4913, %v4910
        %v5130 = vpack.c.bf16 %v4921, %v4918
        %v5131 = vpack.c.bf16 %v4929, %v4926
        %v5132 = vpack.c.bf16 %v4937, %v4934
        %v5133 = vpack.c.bf16 %v4945, %v4942
        %v5134 = vpack.c.bf16 %v4953, %v4950
        %v5135 = vpack.c.bf16 %v4961, %v4958
        %v5136 = vpack.c.bf16 %v4969, %v4966
        %v5137 = vpack.c.bf16 %v4977, %v4974
        %v5138 = vpack.c.bf16 %v4985, %v4982
        %v5139 = vpack.c.bf16 %v4993, %v4990
        %v5140 = vpack.c.bf16 %v5001, %v4998
        %v5141 = vpack.c.bf16 %v5009, %v5006
        %v5142 = vpack.c.bf16 %v5017, %v5014
        %v5143 = vpack.c.bf16 %v5025, %v5022
        %v5144 = vpack.c.bf16 %v5033, %v5030
        %v5145 = vpack.c.bf16 %v5041, %v5038
        %v5146 = vpack.c.bf16 %v5049, %v5046
        %v5147 = vpack.c.bf16 %v5057, %v5054
        %v5148 = vpack.c.bf16 %v5065, %v5062
        %v5149 = vpack.c.bf16 %v5073, %v5070
        %v5150 = vpack.c.bf16 %v5081, %v5078
        %v5151 = vpack.c.bf16 %v5089, %v5086
        %v5152 = vpack.c.bf16 %v5097, %v5094
        %v5153 = vpack.c.bf16 %v5105, %v5102
        %v5154 = vpack.c.bf16 %v5113, %v5110
        %v5155 = vpack.c.bf16 %v5121, %v5118
        %v5156 = vld [vmem:[#allocation13] sm:$0xf]
        %v5157 = vld [vmem:[#allocation13 + $0x4] sm:$0xf]
        %v5158 = vld [vmem:[#allocation13 + $0x8] sm:$0xf]
        %v5159 = vld [vmem:[#allocation13 + $0xc] sm:$0xf]
        %v5160 = vld [vmem:[#allocation13 + $0x10] sm:$0xf]
        %v5161 = vld [vmem:[#allocation13 + $0x14] sm:$0xf]
        %v5162 = vld [vmem:[#allocation13 + $0x18] sm:$0xf]
        %v5163 = vld [vmem:[#allocation13 + $0x1c] sm:$0xf]
        %v5164 = vld [vmem:[#allocation13 + $0x20] sm:$0xf]
        %v5165 = vld [vmem:[#allocation13 + $0x24] sm:$0xf]
        %v5166 = vld [vmem:[#allocation13 + $0x28] sm:$0xf]
        %v5167 = vld [vmem:[#allocation13 + $0x2c] sm:$0xf]
        %v5168 = vld [vmem:[#allocation13 + $0x30] sm:$0xf]
        %v5169 = vld [vmem:[#allocation13 + $0x34] sm:$0xf]
        %v5170 = vld [vmem:[#allocation13 + $0x38] sm:$0xf]
        %v5171 = vld [vmem:[#allocation13 + $0x3c] sm:$0xf]
        %v5172 = vld [vmem:[#allocation14] sm:$0xf]
        %v5173 = vld [vmem:[#allocation14 + $0x4] sm:$0xf]
        %v5174 = vld [vmem:[#allocation14 + $0x8] sm:$0xf]
        %v5175 = vld [vmem:[#allocation14 + $0xc] sm:$0xf]
        %v5176 = vld [vmem:[#allocation14 + $0x10] sm:$0xf]
        %v5177 = vld [vmem:[#allocation14 + $0x14] sm:$0xf]
        %v5178 = vld [vmem:[#allocation14 + $0x18] sm:$0xf]
        %v5179 = vld [vmem:[#allocation14 + $0x1c] sm:$0xf]
        %v5180 = vld [vmem:[#allocation14 + $0x20] sm:$0xf]
        %v5181 = vld [vmem:[#allocation14 + $0x24] sm:$0xf]
        %v5182 = vld [vmem:[#allocation14 + $0x28] sm:$0xf]
        %v5183 = vld [vmem:[#allocation14 + $0x2c] sm:$0xf]
        %v5184 = vld [vmem:[#allocation14 + $0x30] sm:$0xf]
        %v5185 = vld [vmem:[#allocation14 + $0x34] sm:$0xf]
        %v5186 = vld [vmem:[#allocation14 + $0x38] sm:$0xf]
        %v5187 = vld [vmem:[#allocation14 + $0x3c] sm:$0xf]
        %v5204 = vunpack.c.l.b16 %v5172
        %v5205 = vunpack.c.l.b16 %v5173
        %v5206 = vunpack.c.l.b16 %v5174
        %v5207 = vunpack.c.l.b16 %v5175
        %v5208 = vunpack.c.l.b16 %v5176
        %v5209 = vunpack.c.l.b16 %v5177
        %v5210 = vunpack.c.l.b16 %v5178
        %v5211 = vunpack.c.l.b16 %v5179
        %v5212 = vunpack.c.l.b16 %v5180
        %v5213 = vunpack.c.l.b16 %v5181
        %v5214 = vunpack.c.l.b16 %v5182
        %v5215 = vunpack.c.l.b16 %v5183
        %v5216 = vunpack.c.l.b16 %v5184
        %v5217 = vunpack.c.l.b16 %v5185
        %v5218 = vunpack.c.l.b16 %v5186
        %v5219 = vunpack.c.l.b16 %v5187
        %v5220 = vpack.c.b16 %v5205, %v5204
        %v5221 = vpack.c.b16 %v5207, %v5206
        %v5222 = vpack.c.b16 %v5209, %v5208
        %v5223 = vpack.c.b16 %v5211, %v5210
        %v5224 = vpack.c.b16 %v5213, %v5212
        %v5225 = vpack.c.b16 %v5215, %v5214
        %v5226 = vpack.c.b16 %v5217, %v5216
        %v5227 = vpack.c.b16 %v5219, %v5218
        %5236 = vmatprep.subr.bf16.mxu0 0
        %5237 = vmatpush1.bf16.msra.mxu0 %v5220
        %5238 = vmatprep.subr.bf16.mxu0 0
        %5239 = vmatpush1.bf16.msra.mxu0 %v5221
        %5240 = vmatprep.subr.bf16.mxu0 0
        %5241 = vmatpush1.bf16.msra.mxu0 %v5222
        %5242 = vmatprep.subr.bf16.mxu0 0
        %5243 = vmatpush1.bf16.msra.mxu0 %v5223
        %5244 = vmatprep.subr.bf16.mxu0 0
        %5245 = vmatpush1.bf16.msra.mxu0 %v5224
        %5246 = vmatprep.subr.bf16.mxu0 0
        %5247 = vmatpush1.bf16.msra.mxu0 %v5225
        %5248 = vmatprep.subr.bf16.mxu0 0
        %5249 = vmatpush1.bf16.msra.mxu0 %v5226
        %5250 = vmatprep.subr.bf16.mxu0 0
        %5251 = vmatpush1.bf16.msra.mxu0 %v5227
        %5252 = vmatprep.subr.bf16.mxu0 0
        %5253 = vmatpush1.bf16.msra.mxu0 0
        %5254 = vmatprep.subr.bf16.mxu0 0
        %5255 = vmatpush1.bf16.msra.mxu0 0
        %5256 = vmatprep.subr.bf16.mxu0 0
        %5257 = vmatpush1.bf16.msra.mxu0 0
        %5258 = vmatprep.subr.bf16.mxu0 0
        %5259 = vmatpush1.bf16.msra.mxu0 0
        %5260 = vmatprep.subr.bf16.mxu0 0
        %5261 = vmatpush1.bf16.msra.mxu0 0
        %5262 = vmatprep.subr.bf16.mxu0 0
        %5263 = vmatpush1.bf16.msra.mxu0 0
        %5264 = vmatprep.subr.bf16.mxu0 0
        %5265 = vmatpush1.bf16.msra.mxu0 0
        %5266 = vmatprep.subr.bf16.mxu0 0
        %5267 = vmatpush1.bf16.msra.mxu0 0
        %5268 = vmatprep.mubr.bf16.mxu0 0
        %5269 = vmatmul.mubr.bf16.gmra.mrb[0].mxu0 %v5124
        %v5270 = vpop.f32.mrb[0].mxu0
        %v5271 = vadd.f32 0.0, %v5270
        %v5272 = vpop.f32.mrb[0].mxu0
        %v5273 = vpop.f32.mrb[0].mxu0
        %v5274 = vadd.f32 0.0, %v5273
        %v5275 = vpop.f32.mrb[0].mxu0
        %5276 = vmatprep.mubr.bf16.mxu0 0
        %5277 = vmatmul.mubr.bf16.gmra.mrb[0].mxu0 %v5125
        %v5278 = vpop.f32.mrb[0].mxu0
        %v5279 = vadd.f32 0.0, %v5278
        %v5280 = vpop.f32.mrb[0].mxu0
        %v5281 = vpop.f32.mrb[0].mxu0
        %v5282 = vadd.f32 0.0, %v5281
        %v5283 = vpop.f32.mrb[0].mxu0
        %5284 = vmatprep.mubr.bf16.mxu0 0
        %5285 = vmatmul.mubr.bf16.gmra.mrb[0].mxu0 %v5126
        %v5286 = vpop.f32.mrb[0].mxu0
        %v5287 = vadd.f32 0.0, %v5286
        %v5288 = vpop.f32.mrb[0].mxu0
        %v5289 = vpop.f32.mrb[0].mxu0
        %v5290 = vadd.f32 0.0, %v5289
        %v5291 = vpop.f32.mrb[0].mxu0
        %5292 = vmatprep.mubr.bf16.mxu0 0
        %5293 = vmatmul.mubr.bf16.gmra.mrb[0].mxu0 %v5127
        %v5294 = vpop.f32.mrb[0].mxu0
        %v5295 = vadd.f32 0.0, %v5294
        %v5296 = vpop.f32.mrb[0].mxu0
        %v5297 = vpop.f32.mrb[0].mxu0
        %v5298 = vadd.f32 0.0, %v5297
        %v5299 = vpop.f32.mrb[0].mxu0
        %5300 = vmatprep.mubr.bf16.mxu0 0
        %5301 = vmatmul.mubr.bf16.gmra.mrb[0].mxu0 %v5128
        %v5302 = vpop.f32.mrb[0].mxu0
        %v5303 = vadd.f32 0.0, %v5302
        %v5304 = vpop.f32.mrb[0].mxu0
        %v5305 = vpop.f32.mrb[0].mxu0
        %v5306 = vadd.f32 0.0, %v5305
        %v5307 = vpop.f32.mrb[0].mxu0
        %5308 = vmatprep.mubr.bf16.mxu0 0
        %5309 = vmatmul.mubr.bf16.gmra.mrb[0].mxu0 %v5129
        %v5310 = vpop.f32.mrb[0].mxu0
        %v5311 = vadd.f32 0.0, %v5310
        %v5312 = vpop.f32.mrb[0].mxu0
        %v5313 = vpop.f32.mrb[0].mxu0
        %v5314 = vadd.f32 0.0, %v5313
        %v5315 = vpop.f32.mrb[0].mxu0
        %5316 = vmatprep.mubr.bf16.mxu0 0
        %5317 = vmatmul.mubr.bf16.gmra.mrb[0].mxu0 %v5130
        %v5318 = vpop.f32.mrb[0].mxu0
        %v5319 = vadd.f32 0.0, %v5318
        %v5320 = vpop.f32.mrb[0].mxu0
        %v5321 = vpop.f32.mrb[0].mxu0
        %v5322 = vadd.f32 0.0, %v5321
        %v5323 = vpop.f32.mrb[0].mxu0
        %5324 = vmatprep.mubr.bf16.mxu0 0
        %5325 = vmatmul.mubr.bf16.gmra.mrb[0].mxu0 %v5131
        %v5326 = vpop.f32.mrb[0].mxu0
        %v5327 = vadd.f32 0.0, %v5326
        %v5328 = vpop.f32.mrb[0].mxu0
        %v5329 = vpop.f32.mrb[0].mxu0
        %v5330 = vadd.f32 0.0, %v5329
        %v5331 = vpop.f32.mrb[0].mxu0
        %5332 = vmatprep.mubr.bf16.mxu0 0
        %5333 = vmatmul.mubr.bf16.gmra.mrb[0].mxu0 %v5132
        %v5334 = vpop.f32.mrb[0].mxu0
        %v5335 = vadd.f32 0.0, %v5334
        %v5336 = vpop.f32.mrb[0].mxu0
        %v5337 = vpop.f32.mrb[0].mxu0
        %v5338 = vadd.f32 0.0, %v5337
        %v5339 = vpop.f32.mrb[0].mxu0
        %5340 = vmatprep.mubr.bf16.mxu0 0
        %5341 = vmatmul.mubr.bf16.gmra.mrb[0].mxu0 %v5133
        %v5342 = vpop.f32.mrb[0].mxu0
        %v5343 = vadd.f32 0.0, %v5342
        %v5344 = vpop.f32.mrb[0].mxu0
        %v5345 = vpop.f32.mrb[0].mxu0
        %v5346 = vadd.f32 0.0, %v5345
        %v5347 = vpop.f32.mrb[0].mxu0
        %5348 = vmatprep.mubr.bf16.mxu0 0
        %5349 = vmatmul.mubr.bf16.gmra.mrb[0].mxu0 %v5134
        %v5350 = vpop.f32.mrb[0].mxu0
        %v5351 = vadd.f32 0.0, %v5350
        %v5352 = vpop.f32.mrb[0].mxu0
        %v5353 = vpop.f32.mrb[0].mxu0
        %v5354 = vadd.f32 0.0, %v5353
        %v5355 = vpop.f32.mrb[0].mxu0
        %5356 = vmatprep.mubr.bf16.mxu0 0
        %5357 = vmatmul.mubr.bf16.gmra.mrb[0].mxu0 %v5135
        %v5358 = vpop.f32.mrb[0].mxu0
        %v5359 = vadd.f32 0.0, %v5358
        %v5360 = vpop.f32.mrb[0].mxu0
        %v5361 = vpop.f32.mrb[0].mxu0
        %v5362 = vadd.f32 0.0, %v5361
        %v5363 = vpop.f32.mrb[0].mxu0
        %5364 = vmatprep.mubr.bf16.mxu0 0
        %5365 = vmatmul.mubr.bf16.gmra.mrb[0].mxu0 %v5136
        %v5366 = vpop.f32.mrb[0].mxu0
        %v5367 = vadd.f32 0.0, %v5366
        %v5368 = vpop.f32.mrb[0].mxu0
        %v5369 = vpop.f32.mrb[0].mxu0
        %v5370 = vadd.f32 0.0, %v5369
        %v5371 = vpop.f32.mrb[0].mxu0
        %5372 = vmatprep.mubr.bf16.mxu0 0
        %5373 = vmatmul.mubr.bf16.gmra.mrb[0].mxu0 %v5137
        %v5374 = vpop.f32.mrb[0].mxu0
        %v5375 = vadd.f32 0.0, %v5374
        %v5376 = vpop.f32.mrb[0].mxu0
        %v5377 = vpop.f32.mrb[0].mxu0
        %v5378 = vadd.f32 0.0, %v5377
        %v5379 = vpop.f32.mrb[0].mxu0
        %5380 = vmatprep.mubr.bf16.mxu0 0
        %5381 = vmatmul.mubr.bf16.gmra.mrb[0].mxu0 %v5138
        %v5382 = vpop.f32.mrb[0].mxu0
        %v5383 = vadd.f32 0.0, %v5382
        %v5384 = vpop.f32.mrb[0].mxu0
        %v5385 = vpop.f32.mrb[0].mxu0
        %v5386 = vadd.f32 0.0, %v5385
        %v5387 = vpop.f32.mrb[0].mxu0
        %5388 = vmatprep.mubr.bf16.mxu0 0
        %5389 = vmatmul.mubr.bf16.gmra.mrb[0].mxu0 %v5139
        %v5390 = vpop.f32.mrb[0].mxu0
        %v5391 = vadd.f32 0.0, %v5390
        %v5392 = vpop.f32.mrb[0].mxu0
        %v5393 = vpop.f32.mrb[0].mxu0
        %v5394 = vadd.f32 0.0, %v5393
        %v5395 = vpop.f32.mrb[0].mxu0
        %5396 = vmatprep.mubr.bf16.mxu0 0
        %5397 = vmatmul.mubr.bf16.gmra.mrb[0].mxu0 %v5140
        %v5398 = vpop.f32.mrb[0].mxu0
        %v5399 = vadd.f32 0.0, %v5398
        %v5400 = vpop.f32.mrb[0].mxu0
        %v5401 = vpop.f32.mrb[0].mxu0
        %v5402 = vadd.f32 0.0, %v5401
        %v5403 = vpop.f32.mrb[0].mxu0
        %5404 = vmatprep.mubr.bf16.mxu0 0
        %5405 = vmatmul.mubr.bf16.gmra.mrb[0].mxu0 %v5141
        %v5406 = vpop.f32.mrb[0].mxu0
        %v5407 = vadd.f32 0.0, %v5406
        %v5408 = vpop.f32.mrb[0].mxu0
        %v5409 = vpop.f32.mrb[0].mxu0
        %v5410 = vadd.f32 0.0, %v5409
        %v5411 = vpop.f32.mrb[0].mxu0
        %5412 = vmatprep.mubr.bf16.mxu0 0
        %5413 = vmatmul.mubr.bf16.gmra.mrb[0].mxu0 %v5142
        %v5414 = vpop.f32.mrb[0].mxu0
        %v5415 = vadd.f32 0.0, %v5414
        %v5416 = vpop.f32.mrb[0].mxu0
        %v5417 = vpop.f32.mrb[0].mxu0
        %v5418 = vadd.f32 0.0, %v5417
        %v5419 = vpop.f32.mrb[0].mxu0
        %5420 = vmatprep.mubr.bf16.mxu0 0
        %5421 = vmatmul.mubr.bf16.gmra.mrb[0].mxu0 %v5143
        %v5422 = vpop.f32.mrb[0].mxu0
        %v5423 = vadd.f32 0.0, %v5422
        %v5424 = vpop.f32.mrb[0].mxu0
        %v5425 = vpop.f32.mrb[0].mxu0
        %v5426 = vadd.f32 0.0, %v5425
        %v5427 = vpop.f32.mrb[0].mxu0
        %5428 = vmatprep.mubr.bf16.mxu0 0
        %5429 = vmatmul.mubr.bf16.gmra.mrb[0].mxu0 %v5144
        %v5430 = vpop.f32.mrb[0].mxu0
        %v5431 = vadd.f32 0.0, %v5430
        %v5432 = vpop.f32.mrb[0].mxu0
        %v5433 = vpop.f32.mrb[0].mxu0
        %v5434 = vadd.f32 0.0, %v5433
        %v5435 = vpop.f32.mrb[0].mxu0
        %5436 = vmatprep.mubr.bf16.mxu0 0
        %5437 = vmatmul.mubr.bf16.gmra.mrb[0].mxu0 %v5145
        %v5438 = vpop.f32.mrb[0].mxu0
        %v5439 = vadd.f32 0.0, %v5438
        %v5440 = vpop.f32.mrb[0].mxu0
        %v5441 = vpop.f32.mrb[0].mxu0
        %v5442 = vadd.f32 0.0, %v5441
        %v5443 = vpop.f32.mrb[0].mxu0
        %5444 = vmatprep.mubr.bf16.mxu0 0
        %5445 = vmatmul.mubr.bf16.gmra.mrb[0].mxu0 %v5146
        %v5446 = vpop.f32.mrb[0].mxu0
        %v5447 = vadd.f32 0.0, %v5446
        %v5448 = vpop.f32.mrb[0].mxu0
        %v5449 = vpop.f32.mrb[0].mxu0
        %v5450 = vadd.f32 0.0, %v5449
        %v5451 = vpop.f32.mrb[0].mxu0
        %5452 = vmatprep.mubr.bf16.mxu0 0
        %5453 = vmatmul.mubr.bf16.gmra.mrb[0].mxu0 %v5147
        %v5454 = vpop.f32.mrb[0].mxu0
        %v5455 = vadd.f32 0.0, %v5454
        %v5456 = vpop.f32.mrb[0].mxu0
        %v5457 = vpop.f32.mrb[0].mxu0
        %v5458 = vadd.f32 0.0, %v5457
        %v5459 = vpop.f32.mrb[0].mxu0
        %5460 = vmatprep.mubr.bf16.mxu0 0
        %5461 = vmatmul.mubr.bf16.gmra.mrb[0].mxu0 %v5148
        %v5462 = vpop.f32.mrb[0].mxu0
        %v5463 = vadd.f32 0.0, %v5462
        %v5464 = vpop.f32.mrb[0].mxu0
        %v5465 = vpop.f32.mrb[0].mxu0
        %v5466 = vadd.f32 0.0, %v5465
        %v5467 = vpop.f32.mrb[0].mxu0
        %5468 = vmatprep.mubr.bf16.mxu0 0
        %5469 = vmatmul.mubr.bf16.gmra.mrb[0].mxu0 %v5149
        %v5470 = vpop.f32.mrb[0].mxu0
        %v5471 = vadd.f32 0.0, %v5470
        %v5472 = vpop.f32.mrb[0].mxu0
        %v5473 = vpop.f32.mrb[0].mxu0
        %v5474 = vadd.f32 0.0, %v5473
        %v5475 = vpop.f32.mrb[0].mxu0
        %5476 = vmatprep.mubr.bf16.mxu0 0
        %5477 = vmatmul.mubr.bf16.gmra.mrb[0].mxu0 %v5150
        %v5478 = vpop.f32.mrb[0].mxu0
        %v5479 = vadd.f32 0.0, %v5478
        %v5480 = vpop.f32.mrb[0].mxu0
        %v5481 = vpop.f32.mrb[0].mxu0
        %v5482 = vadd.f32 0.0, %v5481
        %v5483 = vpop.f32.mrb[0].mxu0
        %5484 = vmatprep.mubr.bf16.mxu0 0
        %5485 = vmatmul.mubr.bf16.gmra.mrb[0].mxu0 %v5151
        %v5486 = vpop.f32.mrb[0].mxu0
        %v5487 = vadd.f32 0.0, %v5486
        %v5488 = vpop.f32.mrb[0].mxu0
        %v5489 = vpop.f32.mrb[0].mxu0
        %v5490 = vadd.f32 0.0, %v5489
        %v5491 = vpop.f32.mrb[0].mxu0
        %5492 = vmatprep.mubr.bf16.mxu0 0
        %5493 = vmatmul.mubr.bf16.gmra.mrb[0].mxu0 %v5152
        %v5494 = vpop.f32.mrb[0].mxu0
        %v5495 = vadd.f32 0.0, %v5494
        %v5496 = vpop.f32.mrb[0].mxu0
        %v5497 = vpop.f32.mrb[0].mxu0
        %v5498 = vadd.f32 0.0, %v5497
        %v5499 = vpop.f32.mrb[0].mxu0
        %5500 = vmatprep.mubr.bf16.mxu0 0
        %5501 = vmatmul.mubr.bf16.gmra.mrb[0].mxu0 %v5153
        %v5502 = vpop.f32.mrb[0].mxu0
        %v5503 = vadd.f32 0.0, %v5502
        %v5504 = vpop.f32.mrb[0].mxu0
        %v5505 = vpop.f32.mrb[0].mxu0
        %v5506 = vadd.f32 0.0, %v5505
        %v5507 = vpop.f32.mrb[0].mxu0
        %5508 = vmatprep.mubr.bf16.mxu0 0
        %5509 = vmatmul.mubr.bf16.gmra.mrb[0].mxu0 %v5154
        %v5510 = vpop.f32.mrb[0].mxu0
        %v5511 = vadd.f32 0.0, %v5510
        %v5512 = vpop.f32.mrb[0].mxu0
        %v5513 = vpop.f32.mrb[0].mxu0
        %v5514 = vadd.f32 0.0, %v5513
        %v5515 = vpop.f32.mrb[0].mxu0
        %5516 = vmatprep.mubr.bf16.mxu0 0
        %5517 = vmatmul.mubr.bf16.gmra.mrb[0].mxu0 %v5155
        %v5518 = vpop.f32.mrb[0].mxu0
        %v5519 = vadd.f32 0.0, %v5518
        %v5520 = vpop.f32.mrb[0].mxu0
        %v5521 = vpop.f32.mrb[0].mxu0
        %v5522 = vadd.f32 0.0, %v5521
        %v5523 = vpop.f32.mrb[0].mxu0
        %5524 = vdwg.mxu0
        %v5541 = vunpack.c.l.b16 %v5156
        %v5542 = vunpack.c.l.b16 %v5157
        %v5543 = vunpack.c.l.b16 %v5158
        %v5544 = vunpack.c.l.b16 %v5159
        %v5545 = vunpack.c.l.b16 %v5160
        %v5546 = vunpack.c.l.b16 %v5161
        %v5547 = vunpack.c.l.b16 %v5162
        %v5548 = vunpack.c.l.b16 %v5163
        %v5549 = vunpack.c.l.b16 %v5164
        %v5550 = vunpack.c.l.b16 %v5165
        %v5551 = vunpack.c.l.b16 %v5166
        %v5552 = vunpack.c.l.b16 %v5167
        %v5553 = vunpack.c.l.b16 %v5168
        %v5554 = vunpack.c.l.b16 %v5169
        %v5555 = vunpack.c.l.b16 %v5170
        %v5556 = vunpack.c.l.b16 %v5171
        %v5557 = vpack.c.b16 %v5542, %v5541
        %v5558 = vpack.c.b16 %v5544, %v5543
        %v5559 = vpack.c.b16 %v5546, %v5545
        %v5560 = vpack.c.b16 %v5548, %v5547
        %v5561 = vpack.c.b16 %v5550, %v5549
        %v5562 = vpack.c.b16 %v5552, %v5551
        %v5563 = vpack.c.b16 %v5554, %v5553
        %v5564 = vpack.c.b16 %v5556, %v5555
        %5573 = vmatprep.subr.bf16.mxu0 0
        %5574 = vmatpush1.bf16.msra.mxu0 %v5557
        %5575 = vmatprep.subr.bf16.mxu0 0
        %5576 = vmatpush1.bf16.msra.mxu0 %v5558
        %5577 = vmatprep.subr.bf16.mxu0 0
        %5578 = vmatpush1.bf16.msra.mxu0 %v5559
        %5579 = vmatprep.subr.bf16.mxu0 0
        %5580 = vmatpush1.bf16.msra.mxu0 %v5560
        %5581 = vmatprep.subr.bf16.mxu0 0
        %5582 = vmatpush1.bf16.msra.mxu0 %v5561
        %5583 = vmatprep.subr.bf16.mxu0 0
        %5584 = vmatpush1.bf16.msra.mxu0 %v5562
        %5585 = vmatprep.subr.bf16.mxu0 0
        %5586 = vmatpush1.bf16.msra.mxu0 %v5563
        %5587 = vmatprep.subr.bf16.mxu0 0
        %5588 = vmatpush1.bf16.msra.mxu0 %v5564
        %5589 = vmatprep.subr.bf16.mxu0 0
        %5590 = vmatpush1.bf16.msra.mxu0 0
        %5591 = vmatprep.subr.bf16.mxu0 0
        %5592 = vmatpush1.bf16.msra.mxu0 0
        %5593 = vmatprep.subr.bf16.mxu0 0
        %5594 = vmatpush1.bf16.msra.mxu0 0
        %5595 = vmatprep.subr.bf16.mxu0 0
        %5596 = vmatpush1.bf16.msra.mxu0 0
        %5597 = vmatprep.subr.bf16.mxu0 0
        %5598 = vmatpush1.bf16.msra.mxu0 0
        %5599 = vmatprep.subr.bf16.mxu0 0
        %5600 = vmatpush1.bf16.msra.mxu0 0
        %5601 = vmatprep.subr.bf16.mxu0 0
        %5602 = vmatpush1.bf16.msra.mxu0 0
        %5603 = vmatprep.subr.bf16.mxu0 0
        %5604 = vmatpush1.bf16.msra.mxu0 0
        %5605 = vmatprep.mubr.bf16.mxu0 0
        %5606 = vmatmul.mubr.bf16.gmra.mrb[0].mxu0 %v4514
        %v5607 = vpop.f32.mrb[0].mxu0
        %v5608 = vadd.f32 %v5271, %v5607
        %v5609 = vpop.f32.mrb[0].mxu0
        %v5610 = vpop.f32.mrb[0].mxu0
        %v5611 = vadd.f32 %v5274, %v5610
        %v5612 = vpop.f32.mrb[0].mxu0
        %5613 = vmatprep.mubr.bf16.mxu0 0
        %5614 = vmatmul.mubr.bf16.gmra.mrb[0].mxu0 %v4515
        %v5615 = vpop.f32.mrb[0].mxu0
        %v5616 = vadd.f32 %v5279, %v5615
        %v5617 = vpop.f32.mrb[0].mxu0
        %v5618 = vpop.f32.mrb[0].mxu0
        %v5619 = vadd.f32 %v5282, %v5618
        %v5620 = vpop.f32.mrb[0].mxu0
        %5621 = vmatprep.mubr.bf16.mxu0 0
        %5622 = vmatmul.mubr.bf16.gmra.mrb[0].mxu0 %v4516
        %v5623 = vpop.f32.mrb[0].mxu0
        %v5624 = vadd.f32 %v5287, %v5623
        %v5625 = vpop.f32.mrb[0].mxu0
        %v5626 = vpop.f32.mrb[0].mxu0
        %v5627 = vadd.f32 %v5290, %v5626
        %v5628 = vpop.f32.mrb[0].mxu0
        %5629 = vmatprep.mubr.bf16.mxu0 0
        %5630 = vmatmul.mubr.bf16.gmra.mrb[0].mxu0 %v4517
        %v5631 = vpop.f32.mrb[0].mxu0
        %v5632 = vadd.f32 %v5295, %v5631
        %v5633 = vpop.f32.mrb[0].mxu0
        %v5634 = vpop.f32.mrb[0].mxu0
        %v5635 = vadd.f32 %v5298, %v5634
        %v5636 = vpop.f32.mrb[0].mxu0
        %5637 = vmatprep.mubr.bf16.mxu0 0
        %5638 = vmatmul.mubr.bf16.gmra.mrb[0].mxu0 %v4518
        %v5639 = vpop.f32.mrb[0].mxu0
        %v5640 = vadd.f32 %v5303, %v5639
        %v5641 = vpop.f32.mrb[0].mxu0
        %v5642 = vpop.f32.mrb[0].mxu0
        %v5643 = vadd.f32 %v5306, %v5642
        %v5644 = vpop.f32.mrb[0].mxu0
        %5645 = vmatprep.mubr.bf16.mxu0 0
        %5646 = vmatmul.mubr.bf16.gmra.mrb[0].mxu0 %v4519
        %v5647 = vpop.f32.mrb[0].mxu0
        %v5648 = vadd.f32 %v5311, %v5647
        %v5649 = vpop.f32.mrb[0].mxu0
        %v5650 = vpop.f32.mrb[0].mxu0
        %v5651 = vadd.f32 %v5314, %v5650
        %v5652 = vpop.f32.mrb[0].mxu0
        %5653 = vmatprep.mubr.bf16.mxu0 0
        %5654 = vmatmul.mubr.bf16.gmra.mrb[0].mxu0 %v4520
        %v5655 = vpop.f32.mrb[0].mxu0
        %v5656 = vadd.f32 %v5319, %v5655
        %v5657 = vpop.f32.mrb[0].mxu0
        %v5658 = vpop.f32.mrb[0].mxu0
        %v5659 = vadd.f32 %v5322, %v5658
        %v5660 = vpop.f32.mrb[0].mxu0
        %5661 = vmatprep.mubr.bf16.mxu0 0
        %5662 = vmatmul.mubr.bf16.gmra.mrb[0].mxu0 %v4521
        %v5663 = vpop.f32.mrb[0].mxu0
        %v5664 = vadd.f32 %v5327, %v5663
        %v5665 = vpop.f32.mrb[0].mxu0
        %v5666 = vpop.f32.mrb[0].mxu0
        %v5667 = vadd.f32 %v5330, %v5666
        %v5668 = vpop.f32.mrb[0].mxu0
        %5669 = vmatprep.mubr.bf16.mxu0 0
        %5670 = vmatmul.mubr.bf16.gmra.mrb[0].mxu0 %v4522
        %v5671 = vpop.f32.mrb[0].mxu0
        %v5672 = vadd.f32 %v5335, %v5671
        %v5673 = vpop.f32.mrb[0].mxu0
        %v5674 = vpop.f32.mrb[0].mxu0
        %v5675 = vadd.f32 %v5338, %v5674
        %v5676 = vpop.f32.mrb[0].mxu0
        %5677 = vmatprep.mubr.bf16.mxu0 0
        %5678 = vmatmul.mubr.bf16.gmra.mrb[0].mxu0 %v4523
        %v5679 = vpop.f32.mrb[0].mxu0
        %v5680 = vadd.f32 %v5343, %v5679
        %v5681 = vpop.f32.mrb[0].mxu0
        %v5682 = vpop.f32.mrb[0].mxu0
        %v5683 = vadd.f32 %v5346, %v5682
        %v5684 = vpop.f32.mrb[0].mxu0
        %5685 = vmatprep.mubr.bf16.mxu0 0
        %5686 = vmatmul.mubr.bf16.gmra.mrb[0].mxu0 %v4524
        %v5687 = vpop.f32.mrb[0].mxu0
        %v5688 = vadd.f32 %v5351, %v5687
        %v5689 = vpop.f32.mrb[0].mxu0
        %v5690 = vpop.f32.mrb[0].mxu0
        %v5691 = vadd.f32 %v5354, %v5690
        %v5692 = vpop.f32.mrb[0].mxu0
        %5693 = vmatprep.mubr.bf16.mxu0 0
        %5694 = vmatmul.mubr.bf16.gmra.mrb[0].mxu0 %v4525
        %v5695 = vpop.f32.mrb[0].mxu0
        %v5696 = vadd.f32 %v5359, %v5695
        %v5697 = vpop.f32.mrb[0].mxu0
        %v5698 = vpop.f32.mrb[0].mxu0
        %v5699 = vadd.f32 %v5362, %v5698
        %v5700 = vpop.f32.mrb[0].mxu0
        %5701 = vmatprep.mubr.bf16.mxu0 0
        %5702 = vmatmul.mubr.bf16.gmra.mrb[0].mxu0 %v4526
        %v5703 = vpop.f32.mrb[0].mxu0
        %v5704 = vadd.f32 %v5367, %v5703
        %v5705 = vpop.f32.mrb[0].mxu0
        %v5706 = vpop.f32.mrb[0].mxu0
        %v5707 = vadd.f32 %v5370, %v5706
        %v5708 = vpop.f32.mrb[0].mxu0
        %5709 = vmatprep.mubr.bf16.mxu0 0
        %5710 = vmatmul.mubr.bf16.gmra.mrb[0].mxu0 %v4527
        %v5711 = vpop.f32.mrb[0].mxu0
        %v5712 = vadd.f32 %v5375, %v5711
        %v5713 = vpop.f32.mrb[0].mxu0
        %v5714 = vpop.f32.mrb[0].mxu0
        %v5715 = vadd.f32 %v5378, %v5714
        %v5716 = vpop.f32.mrb[0].mxu0
        %5717 = vmatprep.mubr.bf16.mxu0 0
        %5718 = vmatmul.mubr.bf16.gmra.mrb[0].mxu0 %v4528
        %v5719 = vpop.f32.mrb[0].mxu0
        %v5720 = vadd.f32 %v5383, %v5719
        %v5721 = vpop.f32.mrb[0].mxu0
        %v5722 = vpop.f32.mrb[0].mxu0
        %v5723 = vadd.f32 %v5386, %v5722
        %v5724 = vpop.f32.mrb[0].mxu0
        %5725 = vmatprep.mubr.bf16.mxu0 0
        %5726 = vmatmul.mubr.bf16.gmra.mrb[0].mxu0 %v4529
        %v5727 = vpop.f32.mrb[0].mxu0
        %v5728 = vadd.f32 %v5391, %v5727
        %v5729 = vpop.f32.mrb[0].mxu0
        %v5730 = vpop.f32.mrb[0].mxu0
        %v5731 = vadd.f32 %v5394, %v5730
        %v5732 = vpop.f32.mrb[0].mxu0
        %5733 = vmatprep.mubr.bf16.mxu0 0
        %5734 = vmatmul.mubr.bf16.gmra.mrb[0].mxu0 %v4530
        %v5735 = vpop.f32.mrb[0].mxu0
        %v5736 = vadd.f32 %v5399, %v5735
        %v5737 = vpop.f32.mrb[0].mxu0
        %v5738 = vpop.f32.mrb[0].mxu0
        %v5739 = vadd.f32 %v5402, %v5738
        %v5740 = vpop.f32.mrb[0].mxu0
        %5741 = vmatprep.mubr.bf16.mxu0 0
        %5742 = vmatmul.mubr.bf16.gmra.mrb[0].mxu0 %v4531
        %v5743 = vpop.f32.mrb[0].mxu0
        %v5744 = vadd.f32 %v5407, %v5743
        %v5745 = vpop.f32.mrb[0].mxu0
        %v5746 = vpop.f32.mrb[0].mxu0
        %v5747 = vadd.f32 %v5410, %v5746
        %v5748 = vpop.f32.mrb[0].mxu0
        %5749 = vmatprep.mubr.bf16.mxu0 0
        %5750 = vmatmul.mubr.bf16.gmra.mrb[0].mxu0 %v4532
        %v5751 = vpop.f32.mrb[0].mxu0
        %v5752 = vadd.f32 %v5415, %v5751
        %v5753 = vpop.f32.mrb[0].mxu0
        %v5754 = vpop.f32.mrb[0].mxu0
        %v5755 = vadd.f32 %v5418, %v5754
        %v5756 = vpop.f32.mrb[0].mxu0
        %5757 = vmatprep.mubr.bf16.mxu0 0
        %5758 = vmatmul.mubr.bf16.gmra.mrb[0].mxu0 %v4533
        %v5759 = vpop.f32.mrb[0].mxu0
        %v5760 = vadd.f32 %v5423, %v5759
        %v5761 = vpop.f32.mrb[0].mxu0
        %v5762 = vpop.f32.mrb[0].mxu0
        %v5763 = vadd.f32 %v5426, %v5762
        %v5764 = vpop.f32.mrb[0].mxu0
        %5765 = vmatprep.mubr.bf16.mxu0 0
        %5766 = vmatmul.mubr.bf16.gmra.mrb[0].mxu0 %v4534
        %v5767 = vpop.f32.mrb[0].mxu0
        %v5768 = vadd.f32 %v5431, %v5767
        %v5769 = vpop.f32.mrb[0].mxu0
        %v5770 = vpop.f32.mrb[0].mxu0
        %v5771 = vadd.f32 %v5434, %v5770
        %v5772 = vpop.f32.mrb[0].mxu0
        %5773 = vmatprep.mubr.bf16.mxu0 0
        %5774 = vmatmul.mubr.bf16.gmra.mrb[0].mxu0 %v4535
        %v5775 = vpop.f32.mrb[0].mxu0
        %v5776 = vadd.f32 %v5439, %v5775
        %v5777 = vpop.f32.mrb[0].mxu0
        %v5778 = vpop.f32.mrb[0].mxu0
        %v5779 = vadd.f32 %v5442, %v5778
        %v5780 = vpop.f32.mrb[0].mxu0
        %5781 = vmatprep.mubr.bf16.mxu0 0
        %5782 = vmatmul.mubr.bf16.gmra.mrb[0].mxu0 %v4536
        %v5783 = vpop.f32.mrb[0].mxu0
        %v5784 = vadd.f32 %v5447, %v5783
        %v5785 = vpop.f32.mrb[0].mxu0
        %v5786 = vpop.f32.mrb[0].mxu0
        %v5787 = vadd.f32 %v5450, %v5786
        %v5788 = vpop.f32.mrb[0].mxu0
        %5789 = vmatprep.mubr.bf16.mxu0 0
        %5790 = vmatmul.mubr.bf16.gmra.mrb[0].mxu0 %v4537
        %v5791 = vpop.f32.mrb[0].mxu0
        %v5792 = vadd.f32 %v5455, %v5791
        %v5793 = vpop.f32.mrb[0].mxu0
        %v5794 = vpop.f32.mrb[0].mxu0
        %v5795 = vadd.f32 %v5458, %v5794
        %v5796 = vpop.f32.mrb[0].mxu0
        %5797 = vmatprep.mubr.bf16.mxu0 0
        %5798 = vmatmul.mubr.bf16.gmra.mrb[0].mxu0 %v4538
        %v5799 = vpop.f32.mrb[0].mxu0
        %v5800 = vadd.f32 %v5463, %v5799
        %v5801 = vpop.f32.mrb[0].mxu0
        %v5802 = vpop.f32.mrb[0].mxu0
        %v5803 = vadd.f32 %v5466, %v5802
        %v5804 = vpop.f32.mrb[0].mxu0
        %5805 = vmatprep.mubr.bf16.mxu0 0
        %5806 = vmatmul.mubr.bf16.gmra.mrb[0].mxu0 %v4539
        %v5807 = vpop.f32.mrb[0].mxu0
        %v5808 = vadd.f32 %v5471, %v5807
        %v5809 = vpop.f32.mrb[0].mxu0
        %v5810 = vpop.f32.mrb[0].mxu0
        %v5811 = vadd.f32 %v5474, %v5810
        %v5812 = vpop.f32.mrb[0].mxu0
        %5813 = vmatprep.mubr.bf16.mxu0 0
        %5814 = vmatmul.mubr.bf16.gmra.mrb[0].mxu0 %v4540
        %v5815 = vpop.f32.mrb[0].mxu0
        %v5816 = vadd.f32 %v5479, %v5815
        %v5817 = vpop.f32.mrb[0].mxu0
        %v5818 = vpop.f32.mrb[0].mxu0
        %v5819 = vadd.f32 %v5482, %v5818
        %v5820 = vpop.f32.mrb[0].mxu0
        %5821 = vmatprep.mubr.bf16.mxu0 0
        %5822 = vmatmul.mubr.bf16.gmra.mrb[0].mxu0 %v4541
        %v5823 = vpop.f32.mrb[0].mxu0
        %v5824 = vadd.f32 %v5487, %v5823
        %v5825 = vpop.f32.mrb[0].mxu0
        %v5826 = vpop.f32.mrb[0].mxu0
        %v5827 = vadd.f32 %v5490, %v5826
        %v5828 = vpop.f32.mrb[0].mxu0
        %5829 = vmatprep.mubr.bf16.mxu0 0
        %5830 = vmatmul.mubr.bf16.gmra.mrb[0].mxu0 %v4542
        %v5831 = vpop.f32.mrb[0].mxu0
        %v5832 = vadd.f32 %v5495, %v5831
        %v5833 = vpop.f32.mrb[0].mxu0
        %v5834 = vpop.f32.mrb[0].mxu0
        %v5835 = vadd.f32 %v5498, %v5834
        %v5836 = vpop.f32.mrb[0].mxu0
        %5837 = vmatprep.mubr.bf16.mxu0 0
        %5838 = vmatmul.mubr.bf16.gmra.mrb[0].mxu0 %v4543
        %v5839 = vpop.f32.mrb[0].mxu0
        %v5840 = vadd.f32 %v5503, %v5839
        %v5841 = vpop.f32.mrb[0].mxu0
        %v5842 = vpop.f32.mrb[0].mxu0
        %v5843 = vadd.f32 %v5506, %v5842
        %v5844 = vpop.f32.mrb[0].mxu0
        %5845 = vmatprep.mubr.bf16.mxu0 0
        %5846 = vmatmul.mubr.bf16.gmra.mrb[0].mxu0 %v4544
        %v5847 = vpop.f32.mrb[0].mxu0
        %v5848 = vadd.f32 %v5511, %v5847
        %v5849 = vpop.f32.mrb[0].mxu0
        %v5850 = vpop.f32.mrb[0].mxu0
        %v5851 = vadd.f32 %v5514, %v5850
        %v5852 = vpop.f32.mrb[0].mxu0
        %5853 = vmatprep.mubr.bf16.mxu0 0
        %5854 = vmatmul.mubr.bf16.gmra.mrb[0].mxu0 %v4545
        %v5855 = vpop.f32.mrb[0].mxu0
        %v5856 = vadd.f32 %v5519, %v5855
        %v5857 = vpop.f32.mrb[0].mxu0
        %v5858 = vpop.f32.mrb[0].mxu0
        %v5859 = vadd.f32 %v5522, %v5858
        %v5860 = vpop.f32.mrb[0].mxu0
        %5861 = vdwg.mxu0
        %v5862 = vlaneseq
        %v5863 = vshrl.u32 %v5862, 7
        %v5864 = vsub.s32 2, %v5863
        %v5865 = vrot.slane %v689, %v5864
        %v5866 = vadd.f32 %v5608, %v5865
        %v5867 = vadd.f32 %v5611, %v5865
        %v5868 = vadd.f32 %v5616, %v5865
        %v5869 = vadd.f32 %v5619, %v5865
        %v5870 = vadd.f32 %v5624, %v5865
        %v5871 = vadd.f32 %v5627, %v5865
        %v5872 = vadd.f32 %v5632, %v5865
        %v5873 = vadd.f32 %v5635, %v5865
        %v5874 = vadd.f32 %v5640, %v5865
        %v5875 = vadd.f32 %v5643, %v5865
        %v5876 = vadd.f32 %v5648, %v5865
        %v5877 = vadd.f32 %v5651, %v5865
        %v5878 = vadd.f32 %v5656, %v5865
        %v5879 = vadd.f32 %v5659, %v5865
        %v5880 = vadd.f32 %v5664, %v5865
        %v5881 = vadd.f32 %v5667, %v5865
        %v5882 = vadd.f32 %v5672, %v5865
        %v5883 = vadd.f32 %v5675, %v5865
        %v5884 = vadd.f32 %v5680, %v5865
        %v5885 = vadd.f32 %v5683, %v5865
        %v5886 = vadd.f32 %v5688, %v5865
        %v5887 = vadd.f32 %v5691, %v5865
        %v5888 = vadd.f32 %v5696, %v5865
        %v5889 = vadd.f32 %v5699, %v5865
        %v5890 = vadd.f32 %v5704, %v5865
        %v5891 = vadd.f32 %v5707, %v5865
        %v5892 = vadd.f32 %v5712, %v5865
        %v5893 = vadd.f32 %v5715, %v5865
        %v5894 = vadd.f32 %v5720, %v5865
        %v5895 = vadd.f32 %v5723, %v5865
        %v5896 = vadd.f32 %v5728, %v5865
        %v5897 = vadd.f32 %v5731, %v5865
        %v5898 = vadd.f32 %v5736, %v5865
        %v5899 = vadd.f32 %v5739, %v5865
        %v5900 = vadd.f32 %v5744, %v5865
        %v5901 = vadd.f32 %v5747, %v5865
        %v5902 = vadd.f32 %v5752, %v5865
        %v5903 = vadd.f32 %v5755, %v5865
        %v5904 = vadd.f32 %v5760, %v5865
        %v5905 = vadd.f32 %v5763, %v5865
        %v5906 = vadd.f32 %v5768, %v5865
        %v5907 = vadd.f32 %v5771, %v5865
        %v5908 = vadd.f32 %v5776, %v5865
        %v5909 = vadd.f32 %v5779, %v5865
        %v5910 = vadd.f32 %v5784, %v5865
        %v5911 = vadd.f32 %v5787, %v5865
        %v5912 = vadd.f32 %v5792, %v5865
        %v5913 = vadd.f32 %v5795, %v5865
        %v5914 = vadd.f32 %v5800, %v5865
        %v5915 = vadd.f32 %v5803, %v5865
        %v5916 = vadd.f32 %v5808, %v5865
        %v5917 = vadd.f32 %v5811, %v5865
        %v5918 = vadd.f32 %v5816, %v5865
        %v5919 = vadd.f32 %v5819, %v5865
        %v5920 = vadd.f32 %v5824, %v5865
        %v5921 = vadd.f32 %v5827, %v5865
        %v5922 = vadd.f32 %v5832, %v5865
        %v5923 = vadd.f32 %v5835, %v5865
        %v5924 = vadd.f32 %v5840, %v5865
        %v5925 = vadd.f32 %v5843, %v5865
        %v5926 = vadd.f32 %v5848, %v5865
        %v5927 = vadd.f32 %v5851, %v5865
        %v5928 = vadd.f32 %v5856, %v5865
        %v5929 = vadd.f32 %v5859, %v5865
        %v5930 = vadd.f32 %v4450, %v5866
        %v5931 = vadd.f32 %v4451, %v5867
        %v5932 = vadd.f32 %v4452, %v5868
        %v5933 = vadd.f32 %v4453, %v5869
        %v5934 = vadd.f32 %v4454, %v5870
        %v5935 = vadd.f32 %v4455, %v5871
        %v5936 = vadd.f32 %v4456, %v5872
        %v5937 = vadd.f32 %v4457, %v5873
        %v5938 = vadd.f32 %v4458, %v5874
        %v5939 = vadd.f32 %v4459, %v5875
        %v5940 = vadd.f32 %v4460, %v5876
        %v5941 = vadd.f32 %v4461, %v5877
        %v5942 = vadd.f32 %v4462, %v5878
        %v5943 = vadd.f32 %v4463, %v5879
        %v5944 = vadd.f32 %v4464, %v5880
        %v5945 = vadd.f32 %v4465, %v5881
        %v5946 = vadd.f32 %v4466, %v5882
        %v5947 = vadd.f32 %v4467, %v5883
        %v5948 = vadd.f32 %v4468, %v5884
        %v5949 = vadd.f32 %v4469, %v5885
        %v5950 = vadd.f32 %v4470, %v5886
        %v5951 = vadd.f32 %v4471, %v5887
        %v5952 = vadd.f32 %v4472, %v5888
        %v5953 = vadd.f32 %v4473, %v5889
        %v5954 = vadd.f32 %v4474, %v5890
        %v5955 = vadd.f32 %v4475, %v5891
        %v5956 = vadd.f32 %v4476, %v5892
        %v5957 = vadd.f32 %v4477, %v5893
        %v5958 = vadd.f32 %v4478, %v5894
        %v5959 = vadd.f32 %v4479, %v5895
        %v5960 = vadd.f32 %v4480, %v5896
        %v5961 = vadd.f32 %v4481, %v5897
        %v5962 = vadd.f32 %v4482, %v5898
        %v5963 = vadd.f32 %v4483, %v5899
        %v5964 = vadd.f32 %v4484, %v5900
        %v5965 = vadd.f32 %v4485, %v5901
        %v5966 = vadd.f32 %v4486, %v5902
        %v5967 = vadd.f32 %v4487, %v5903
        %v5968 = vadd.f32 %v4488, %v5904
        %v5969 = vadd.f32 %v4489, %v5905
        %v5970 = vadd.f32 %v4490, %v5906
        %v5971 = vadd.f32 %v4491, %v5907
        %v5972 = vadd.f32 %v4492, %v5908
        %v5973 = vadd.f32 %v4493, %v5909
        %v5974 = vadd.f32 %v4494, %v5910
        %v5975 = vadd.f32 %v4495, %v5911
        %v5976 = vadd.f32 %v4496, %v5912
        %v5977 = vadd.f32 %v4497, %v5913
        %v5978 = vadd.f32 %v4498, %v5914
        %v5979 = vadd.f32 %v4499, %v5915
        %v5980 = vadd.f32 %v4500, %v5916
        %v5981 = vadd.f32 %v4501, %v5917
        %v5982 = vadd.f32 %v4502, %v5918
        %v5983 = vadd.f32 %v4503, %v5919
        %v5984 = vadd.f32 %v4504, %v5920
        %v5985 = vadd.f32 %v4505, %v5921
        %v5986 = vadd.f32 %v4506, %v5922
        %v5987 = vadd.f32 %v4507, %v5923
        %v5988 = vadd.f32 %v4508, %v5924
        %v5989 = vadd.f32 %v4509, %v5925
        %v5990 = vadd.f32 %v4510, %v5926
        %v5991 = vadd.f32 %v4511, %v5927
        %v5992 = vadd.f32 %v4512, %v5928
        %v5993 = vadd.f32 %v4513, %v5929
        %v5994 = vmax.f32 %v5930, 0.0
        %v5995 = vmax.f32 %v5931, 0.0
        %v5996 = vmax.f32 %v5932, 0.0
        %v5997 = vmax.f32 %v5933, 0.0
        %v5998 = vmax.f32 %v5934, 0.0
        %v5999 = vmax.f32 %v5935, 0.0
        %v6000 = vmax.f32 %v5936, 0.0
        %v6001 = vmax.f32 %v5937, 0.0
        %v6002 = vmax.f32 %v5938, 0.0
        %v6003 = vmax.f32 %v5939, 0.0
        %v6004 = vmax.f32 %v5940, 0.0
        %v6005 = vmax.f32 %v5941, 0.0
        %v6006 = vmax.f32 %v5942, 0.0
        %v6007 = vmax.f32 %v5943, 0.0
        %v6008 = vmax.f32 %v5944, 0.0
        %v6009 = vmax.f32 %v5945, 0.0
        %v6010 = vmax.f32 %v5946, 0.0
        %v6011 = vmax.f32 %v5947, 0.0
        %v6012 = vmax.f32 %v5948, 0.0
        %v6013 = vmax.f32 %v5949, 0.0
        %v6014 = vmax.f32 %v5950, 0.0
        %v6015 = vmax.f32 %v5951, 0.0
        %v6016 = vmax.f32 %v5952, 0.0
        %v6017 = vmax.f32 %v5953, 0.0
        %v6018 = vmax.f32 %v5954, 0.0
        %v6019 = vmax.f32 %v5955, 0.0
        %v6020 = vmax.f32 %v5956, 0.0
        %v6021 = vmax.f32 %v5957, 0.0
        %v6022 = vmax.f32 %v5958, 0.0
        %v6023 = vmax.f32 %v5959, 0.0
        %v6024 = vmax.f32 %v5960, 0.0
        %v6025 = vmax.f32 %v5961, 0.0
        %v6026 = vmax.f32 %v5962, 0.0
        %v6027 = vmax.f32 %v5963, 0.0
        %v6028 = vmax.f32 %v5964, 0.0
        %v6029 = vmax.f32 %v5965, 0.0
        %v6030 = vmax.f32 %v5966, 0.0
        %v6031 = vmax.f32 %v5967, 0.0
        %v6032 = vmax.f32 %v5968, 0.0
        %v6033 = vmax.f32 %v5969, 0.0
        %v6034 = vmax.f32 %v5970, 0.0
        %v6035 = vmax.f32 %v5971, 0.0
        %v6036 = vmax.f32 %v5972, 0.0
        %v6037 = vmax.f32 %v5973, 0.0
        %v6038 = vmax.f32 %v5974, 0.0
        %v6039 = vmax.f32 %v5975, 0.0
        %v6040 = vmax.f32 %v5976, 0.0
        %v6041 = vmax.f32 %v5977, 0.0
        %v6042 = vmax.f32 %v5978, 0.0
        %v6043 = vmax.f32 %v5979, 0.0
        %v6044 = vmax.f32 %v5980, 0.0
        %v6045 = vmax.f32 %v5981, 0.0
        %v6046 = vmax.f32 %v5982, 0.0
        %v6047 = vmax.f32 %v5983, 0.0
        %v6048 = vmax.f32 %v5984, 0.0
        %v6049 = vmax.f32 %v5985, 0.0
        %v6050 = vmax.f32 %v5986, 0.0
        %v6051 = vmax.f32 %v5987, 0.0
        %v6052 = vmax.f32 %v5988, 0.0
        %v6053 = vmax.f32 %v5989, 0.0
        %v6054 = vmax.f32 %v5990, 0.0
        %v6055 = vmax.f32 %v5991, 0.0
        %v6056 = vmax.f32 %v5992, 0.0
        %v6057 = vmax.f32 %v5993, 0.0
        %v6058 = vpack.c.bf16 %v5995, %v5994
        %v6059 = vpack.c.bf16 %v5997, %v5996
        %v6060 = vpack.c.bf16 %v5999, %v5998
        %v6061 = vpack.c.bf16 %v6001, %v6000
        %v6062 = vpack.c.bf16 %v6003, %v6002
        %v6063 = vpack.c.bf16 %v6005, %v6004
        %v6064 = vpack.c.bf16 %v6007, %v6006
        %v6065 = vpack.c.bf16 %v6009, %v6008
        %v6066 = vpack.c.bf16 %v6011, %v6010
        %v6067 = vpack.c.bf16 %v6013, %v6012
        %v6068 = vpack.c.bf16 %v6015, %v6014
        %v6069 = vpack.c.bf16 %v6017, %v6016
        %v6070 = vpack.c.bf16 %v6019, %v6018
        %v6071 = vpack.c.bf16 %v6021, %v6020
        %v6072 = vpack.c.bf16 %v6023, %v6022
        %v6073 = vpack.c.bf16 %v6025, %v6024
        %v6074 = vpack.c.bf16 %v6027, %v6026
        %v6075 = vpack.c.bf16 %v6029, %v6028
        %v6076 = vpack.c.bf16 %v6031, %v6030
        %v6077 = vpack.c.bf16 %v6033, %v6032
        %v6078 = vpack.c.bf16 %v6035, %v6034
        %v6079 = vpack.c.bf16 %v6037, %v6036
        %v6080 = vpack.c.bf16 %v6039, %v6038
        %v6081 = vpack.c.bf16 %v6041, %v6040
        %v6082 = vpack.c.bf16 %v6043, %v6042
        %v6083 = vpack.c.bf16 %v6045, %v6044
        %v6084 = vpack.c.bf16 %v6047, %v6046
        %v6085 = vpack.c.bf16 %v6049, %v6048
        %v6086 = vpack.c.bf16 %v6051, %v6050
        %v6087 = vpack.c.bf16 %v6053, %v6052
        %v6088 = vpack.c.bf16 %v6055, %v6054
        %v6089 = vpack.c.bf16 %v6057, %v6056
        %v6090 = vld [vmem:[#allocation16] sm:$0xf]
        %v6091 = vld [vmem:[#allocation16 + $0x4] sm:$0xf]
        %v6092 = vld [vmem:[#allocation16 + $0x8] sm:$0xf]
        %v6093 = vld [vmem:[#allocation16 + $0xc] sm:$0xf]
        %v6094 = vld [vmem:[#allocation16 + $0x10] sm:$0xf]
        %v6095 = vld [vmem:[#allocation16 + $0x14] sm:$0xf]
        %v6096 = vld [vmem:[#allocation16 + $0x18] sm:$0xf]
        %v6097 = vld [vmem:[#allocation16 + $0x1c] sm:$0xf]
        %v6098 = vld [vmem:[#allocation16 + $0x20] sm:$0xf]
        %v6099 = vld [vmem:[#allocation16 + $0x24] sm:$0xf]
        %v6100 = vld [vmem:[#allocation16 + $0x28] sm:$0xf]
        %v6101 = vld [vmem:[#allocation16 + $0x2c] sm:$0xf]
        %v6102 = vld [vmem:[#allocation16 + $0x30] sm:$0xf]
        %v6103 = vld [vmem:[#allocation16 + $0x34] sm:$0xf]
        %v6104 = vld [vmem:[#allocation16 + $0x38] sm:$0xf]
        %v6105 = vld [vmem:[#allocation16 + $0x3c] sm:$0xf]
        %v6106 = vlaneseq
        %v6107 = vshrl.u32 %v6106, 7
        %v6108 = vsub.s32 3, %v6107
        %v6109 = vrot.slane %v689, %v6108
        %v6126 = vunpack.c.l.b16 %v6090
        %v6127 = vunpack.c.l.b16 %v6091
        %v6128 = vunpack.c.l.b16 %v6092
        %v6129 = vunpack.c.l.b16 %v6093
        %v6130 = vunpack.c.l.b16 %v6094
        %v6131 = vunpack.c.l.b16 %v6095
        %v6132 = vunpack.c.l.b16 %v6096
        %v6133 = vunpack.c.l.b16 %v6097
        %v6134 = vunpack.c.l.b16 %v6098
        %v6135 = vunpack.c.l.b16 %v6099
        %v6136 = vunpack.c.l.b16 %v6100
        %v6137 = vunpack.c.l.b16 %v6101
        %v6138 = vunpack.c.l.b16 %v6102
        %v6139 = vunpack.c.l.b16 %v6103
        %v6140 = vunpack.c.l.b16 %v6104
        %v6141 = vunpack.c.l.b16 %v6105
        %v6142 = vpack.c.b16 %v6127, %v6126
        %v6143 = vpack.c.b16 %v6129, %v6128
        %v6144 = vpack.c.b16 %v6131, %v6130
        %v6145 = vpack.c.b16 %v6133, %v6132
        %v6146 = vpack.c.b16 %v6135, %v6134
        %v6147 = vpack.c.b16 %v6137, %v6136
        %v6148 = vpack.c.b16 %v6139, %v6138
        %v6149 = vpack.c.b16 %v6141, %v6140
        %6158 = vmatprep.subr.bf16.mxu0 0
        %6159 = vmatpush1.bf16.msra.mxu0 %v6142
        %6160 = vmatprep.subr.bf16.mxu0 0
        %6161 = vmatpush1.bf16.msra.mxu0 %v6143
        %6162 = vmatprep.subr.bf16.mxu0 0
        %6163 = vmatpush1.bf16.msra.mxu0 %v6144
        %6164 = vmatprep.subr.bf16.mxu0 0
        %6165 = vmatpush1.bf16.msra.mxu0 %v6145
        %6166 = vmatprep.subr.bf16.mxu0 0
        %6167 = vmatpush1.bf16.msra.mxu0 %v6146
        %6168 = vmatprep.subr.bf16.mxu0 0
        %6169 = vmatpush1.bf16.msra.mxu0 %v6147
        %6170 = vmatprep.subr.bf16.mxu0 0
        %6171 = vmatpush1.bf16.msra.mxu0 %v6148
        %6172 = vmatprep.subr.bf16.mxu0 0
        %6173 = vmatpush1.bf16.msra.mxu0 %v6149
        %6174 = vmatprep.subr.bf16.mxu0 0
        %6175 = vmatpush1.bf16.msra.mxu0 0
        %6176 = vmatprep.subr.bf16.mxu0 0
        %6177 = vmatpush1.bf16.msra.mxu0 0
        %6178 = vmatprep.subr.bf16.mxu0 0
        %6179 = vmatpush1.bf16.msra.mxu0 0
        %6180 = vmatprep.subr.bf16.mxu0 0
        %6181 = vmatpush1.bf16.msra.mxu0 0
        %6182 = vmatprep.subr.bf16.mxu0 0
        %6183 = vmatpush1.bf16.msra.mxu0 0
        %6184 = vmatprep.subr.bf16.mxu0 0
        %6185 = vmatpush1.bf16.msra.mxu0 0
        %6186 = vmatprep.subr.bf16.mxu0 0
        %6187 = vmatpush1.bf16.msra.mxu0 0
        %6188 = vmatprep.subr.bf16.mxu0 0
        %6189 = vmatpush1.bf16.msra.mxu0 0
        %6190 = vmatprep.mubr.bf16.mxu0 0
        %6191 = vmatmul.mubr.bf16.gmra.mrb[0].mxu0 %v6058
        %v6192 = vpop.f32.mrb[0].mxu0
        %v6193 = vadd.f32 %v6109, %v6192
        %v6194 = vpop.f32.mrb[0].mxu0
        %v6195 = vpop.f32.mrb[0].mxu0
        %v6196 = vadd.f32 %v6109, %v6195
        %v6197 = vpop.f32.mrb[0].mxu0
        %6198 = vmatprep.mubr.bf16.mxu0 0
        %6199 = vmatmul.mubr.bf16.gmra.mrb[0].mxu0 %v6059
        %v6200 = vpop.f32.mrb[0].mxu0
        %v6201 = vadd.f32 %v6109, %v6200
        %v6202 = vpop.f32.mrb[0].mxu0
        %v6203 = vpop.f32.mrb[0].mxu0
        %v6204 = vadd.f32 %v6109, %v6203
        %v6205 = vpop.f32.mrb[0].mxu0
        %6206 = vmatprep.mubr.bf16.mxu0 0
        %6207 = vmatmul.mubr.bf16.gmra.mrb[0].mxu0 %v6060
        %v6208 = vpop.f32.mrb[0].mxu0
        %v6209 = vadd.f32 %v6109, %v6208
        %v6210 = vpop.f32.mrb[0].mxu0
        %v6211 = vpop.f32.mrb[0].mxu0
        %v6212 = vadd.f32 %v6109, %v6211
        %v6213 = vpop.f32.mrb[0].mxu0
        %6214 = vmatprep.mubr.bf16.mxu0 0
        %6215 = vmatmul.mubr.bf16.gmra.mrb[0].mxu0 %v6061
        %v6216 = vpop.f32.mrb[0].mxu0
        %v6217 = vadd.f32 %v6109, %v6216
        %v6218 = vpop.f32.mrb[0].mxu0
        %v6219 = vpop.f32.mrb[0].mxu0
        %v6220 = vadd.f32 %v6109, %v6219
        %v6221 = vpop.f32.mrb[0].mxu0
        %6222 = vmatprep.mubr.bf16.mxu0 0
        %6223 = vmatmul.mubr.bf16.gmra.mrb[0].mxu0 %v6062
        %v6224 = vpop.f32.mrb[0].mxu0
        %v6225 = vadd.f32 %v6109, %v6224
        %v6226 = vpop.f32.mrb[0].mxu0
        %v6227 = vpop.f32.mrb[0].mxu0
        %v6228 = vadd.f32 %v6109, %v6227
        %v6229 = vpop.f32.mrb[0].mxu0
        %6230 = vmatprep.mubr.bf16.mxu0 0
        %6231 = vmatmul.mubr.bf16.gmra.mrb[0].mxu0 %v6063
        %v6232 = vpop.f32.mrb[0].mxu0
        %v6233 = vadd.f32 %v6109, %v6232
        %v6234 = vpop.f32.mrb[0].mxu0
        %v6235 = vpop.f32.mrb[0].mxu0
        %v6236 = vadd.f32 %v6109, %v6235
        %v6237 = vpop.f32.mrb[0].mxu0
        %6238 = vmatprep.mubr.bf16.mxu0 0
        %6239 = vmatmul.mubr.bf16.gmra.mrb[0].mxu0 %v6064
        %v6240 = vpop.f32.mrb[0].mxu0
        %v6241 = vadd.f32 %v6109, %v6240
        %v6242 = vpop.f32.mrb[0].mxu0
        %v6243 = vpop.f32.mrb[0].mxu0
        %v6244 = vadd.f32 %v6109, %v6243
        %v6245 = vpop.f32.mrb[0].mxu0
        %6246 = vmatprep.mubr.bf16.mxu0 0
        %6247 = vmatmul.mubr.bf16.gmra.mrb[0].mxu0 %v6065
        %v6248 = vpop.f32.mrb[0].mxu0
        %v6249 = vadd.f32 %v6109, %v6248
        %v6250 = vpop.f32.mrb[0].mxu0
        %v6251 = vpop.f32.mrb[0].mxu0
        %v6252 = vadd.f32 %v6109, %v6251
        %v6253 = vpop.f32.mrb[0].mxu0
        %6254 = vmatprep.mubr.bf16.mxu0 0
        %6255 = vmatmul.mubr.bf16.gmra.mrb[0].mxu0 %v6066
        %v6256 = vpop.f32.mrb[0].mxu0
        %v6257 = vadd.f32 %v6109, %v6256
        %v6258 = vpop.f32.mrb[0].mxu0
        %v6259 = vpop.f32.mrb[0].mxu0
        %v6260 = vadd.f32 %v6109, %v6259
        %v6261 = vpop.f32.mrb[0].mxu0
        %6262 = vmatprep.mubr.bf16.mxu0 0
        %6263 = vmatmul.mubr.bf16.gmra.mrb[0].mxu0 %v6067
        %v6264 = vpop.f32.mrb[0].mxu0
        %v6265 = vadd.f32 %v6109, %v6264
        %v6266 = vpop.f32.mrb[0].mxu0
        %v6267 = vpop.f32.mrb[0].mxu0
        %v6268 = vadd.f32 %v6109, %v6267
        %v6269 = vpop.f32.mrb[0].mxu0
        %6270 = vmatprep.mubr.bf16.mxu0 0
        %6271 = vmatmul.mubr.bf16.gmra.mrb[0].mxu0 %v6068
        %v6272 = vpop.f32.mrb[0].mxu0
        %v6273 = vadd.f32 %v6109, %v6272
        %v6274 = vpop.f32.mrb[0].mxu0
        %v6275 = vpop.f32.mrb[0].mxu0
        %v6276 = vadd.f32 %v6109, %v6275
        %v6277 = vpop.f32.mrb[0].mxu0
        %6278 = vmatprep.mubr.bf16.mxu0 0
        %6279 = vmatmul.mubr.bf16.gmra.mrb[0].mxu0 %v6069
        %v6280 = vpop.f32.mrb[0].mxu0
        %v6281 = vadd.f32 %v6109, %v6280
        %v6282 = vpop.f32.mrb[0].mxu0
        %v6283 = vpop.f32.mrb[0].mxu0
        %v6284 = vadd.f32 %v6109, %v6283
        %v6285 = vpop.f32.mrb[0].mxu0
        %6286 = vmatprep.mubr.bf16.mxu0 0
        %6287 = vmatmul.mubr.bf16.gmra.mrb[0].mxu0 %v6070
        %v6288 = vpop.f32.mrb[0].mxu0
        %v6289 = vadd.f32 %v6109, %v6288
        %v6290 = vpop.f32.mrb[0].mxu0
        %v6291 = vpop.f32.mrb[0].mxu0
        %v6292 = vadd.f32 %v6109, %v6291
        %v6293 = vpop.f32.mrb[0].mxu0
        %6294 = vmatprep.mubr.bf16.mxu0 0
        %6295 = vmatmul.mubr.bf16.gmra.mrb[0].mxu0 %v6071
        %v6296 = vpop.f32.mrb[0].mxu0
        %v6297 = vadd.f32 %v6109, %v6296
        %v6298 = vpop.f32.mrb[0].mxu0
        %v6299 = vpop.f32.mrb[0].mxu0
        %v6300 = vadd.f32 %v6109, %v6299
        %v6301 = vpop.f32.mrb[0].mxu0
        %6302 = vmatprep.mubr.bf16.mxu0 0
        %6303 = vmatmul.mubr.bf16.gmra.mrb[0].mxu0 %v6072
        %v6304 = vpop.f32.mrb[0].mxu0
        %v6305 = vadd.f32 %v6109, %v6304
        %v6306 = vpop.f32.mrb[0].mxu0
        %v6307 = vpop.f32.mrb[0].mxu0
        %v6308 = vadd.f32 %v6109, %v6307
        %v6309 = vpop.f32.mrb[0].mxu0
        %6310 = vmatprep.mubr.bf16.mxu0 0
        %6311 = vmatmul.mubr.bf16.gmra.mrb[0].mxu0 %v6073
        %v6312 = vpop.f32.mrb[0].mxu0
        %v6313 = vadd.f32 %v6109, %v6312
        %v6314 = vpop.f32.mrb[0].mxu0
        %v6315 = vpop.f32.mrb[0].mxu0
        %v6316 = vadd.f32 %v6109, %v6315
        %v6317 = vpop.f32.mrb[0].mxu0
        %6318 = vmatprep.mubr.bf16.mxu0 0
        %6319 = vmatmul.mubr.bf16.gmra.mrb[0].mxu0 %v6074
        %v6320 = vpop.f32.mrb[0].mxu0
        %v6321 = vadd.f32 %v6109, %v6320
        %v6322 = vpop.f32.mrb[0].mxu0
        %v6323 = vpop.f32.mrb[0].mxu0
        %v6324 = vadd.f32 %v6109, %v6323
        %v6325 = vpop.f32.mrb[0].mxu0
        %6326 = vmatprep.mubr.bf16.mxu0 0
        %6327 = vmatmul.mubr.bf16.gmra.mrb[0].mxu0 %v6075
        %v6328 = vpop.f32.mrb[0].mxu0
        %v6329 = vadd.f32 %v6109, %v6328
        %v6330 = vpop.f32.mrb[0].mxu0
        %v6331 = vpop.f32.mrb[0].mxu0
        %v6332 = vadd.f32 %v6109, %v6331
        %v6333 = vpop.f32.mrb[0].mxu0
        %6334 = vmatprep.mubr.bf16.mxu0 0
        %6335 = vmatmul.mubr.bf16.gmra.mrb[0].mxu0 %v6076
        %v6336 = vpop.f32.mrb[0].mxu0
        %v6337 = vadd.f32 %v6109, %v6336
        %v6338 = vpop.f32.mrb[0].mxu0
        %v6339 = vpop.f32.mrb[0].mxu0
        %v6340 = vadd.f32 %v6109, %v6339
        %v6341 = vpop.f32.mrb[0].mxu0
        %6342 = vmatprep.mubr.bf16.mxu0 0
        %6343 = vmatmul.mubr.bf16.gmra.mrb[0].mxu0 %v6077
        %v6344 = vpop.f32.mrb[0].mxu0
        %v6345 = vadd.f32 %v6109, %v6344
        %v6346 = vpop.f32.mrb[0].mxu0
        %v6347 = vpop.f32.mrb[0].mxu0
        %v6348 = vadd.f32 %v6109, %v6347
        %v6349 = vpop.f32.mrb[0].mxu0
        %6350 = vmatprep.mubr.bf16.mxu0 0
        %6351 = vmatmul.mubr.bf16.gmra.mrb[0].mxu0 %v6078
        %v6352 = vpop.f32.mrb[0].mxu0
        %v6353 = vadd.f32 %v6109, %v6352
        %v6354 = vpop.f32.mrb[0].mxu0
        %v6355 = vpop.f32.mrb[0].mxu0
        %v6356 = vadd.f32 %v6109, %v6355
        %v6357 = vpop.f32.mrb[0].mxu0
        %6358 = vmatprep.mubr.bf16.mxu0 0
        %6359 = vmatmul.mubr.bf16.gmra.mrb[0].mxu0 %v6079
        %v6360 = vpop.f32.mrb[0].mxu0
        %v6361 = vadd.f32 %v6109, %v6360
        %v6362 = vpop.f32.mrb[0].mxu0
        %v6363 = vpop.f32.mrb[0].mxu0
        %v6364 = vadd.f32 %v6109, %v6363
        %v6365 = vpop.f32.mrb[0].mxu0
        %6366 = vmatprep.mubr.bf16.mxu0 0
        %6367 = vmatmul.mubr.bf16.gmra.mrb[0].mxu0 %v6080
        %v6368 = vpop.f32.mrb[0].mxu0
        %v6369 = vadd.f32 %v6109, %v6368
        %v6370 = vpop.f32.mrb[0].mxu0
        %v6371 = vpop.f32.mrb[0].mxu0
        %v6372 = vadd.f32 %v6109, %v6371
        %v6373 = vpop.f32.mrb[0].mxu0
        %6374 = vmatprep.mubr.bf16.mxu0 0
        %6375 = vmatmul.mubr.bf16.gmra.mrb[0].mxu0 %v6081
        %v6376 = vpop.f32.mrb[0].mxu0
        %v6377 = vadd.f32 %v6109, %v6376
        %v6378 = vpop.f32.mrb[0].mxu0
        %v6379 = vpop.f32.mrb[0].mxu0
        %v6380 = vadd.f32 %v6109, %v6379
        %v6381 = vpop.f32.mrb[0].mxu0
        %6382 = vmatprep.mubr.bf16.mxu0 0
        %6383 = vmatmul.mubr.bf16.gmra.mrb[0].mxu0 %v6082
        %v6384 = vpop.f32.mrb[0].mxu0
        %v6385 = vadd.f32 %v6109, %v6384
        %v6386 = vpop.f32.mrb[0].mxu0
        %v6387 = vpop.f32.mrb[0].mxu0
        %v6388 = vadd.f32 %v6109, %v6387
        %v6389 = vpop.f32.mrb[0].mxu0
        %6390 = vmatprep.mubr.bf16.mxu0 0
        %6391 = vmatmul.mubr.bf16.gmra.mrb[0].mxu0 %v6083
        %v6392 = vpop.f32.mrb[0].mxu0
        %v6393 = vadd.f32 %v6109, %v6392
        %v6394 = vpop.f32.mrb[0].mxu0
        %v6395 = vpop.f32.mrb[0].mxu0
        %v6396 = vadd.f32 %v6109, %v6395
        %v6397 = vpop.f32.mrb[0].mxu0
        %6398 = vmatprep.mubr.bf16.mxu0 0
        %6399 = vmatmul.mubr.bf16.gmra.mrb[0].mxu0 %v6084
        %v6400 = vpop.f32.mrb[0].mxu0
        %v6401 = vadd.f32 %v6109, %v6400
        %v6402 = vpop.f32.mrb[0].mxu0
        %v6403 = vpop.f32.mrb[0].mxu0
        %v6404 = vadd.f32 %v6109, %v6403
        %v6405 = vpop.f32.mrb[0].mxu0
        %6406 = vmatprep.mubr.bf16.mxu0 0
        %6407 = vmatmul.mubr.bf16.gmra.mrb[0].mxu0 %v6085
        %v6408 = vpop.f32.mrb[0].mxu0
        %v6409 = vadd.f32 %v6109, %v6408
        %v6410 = vpop.f32.mrb[0].mxu0
        %v6411 = vpop.f32.mrb[0].mxu0
        %v6412 = vadd.f32 %v6109, %v6411
        %v6413 = vpop.f32.mrb[0].mxu0
        %6414 = vmatprep.mubr.bf16.mxu0 0
        %6415 = vmatmul.mubr.bf16.gmra.mrb[0].mxu0 %v6086
        %v6416 = vpop.f32.mrb[0].mxu0
        %v6417 = vadd.f32 %v6109, %v6416
        %v6418 = vpop.f32.mrb[0].mxu0
        %v6419 = vpop.f32.mrb[0].mxu0
        %v6420 = vadd.f32 %v6109, %v6419
        %v6421 = vpop.f32.mrb[0].mxu0
        %6422 = vmatprep.mubr.bf16.mxu0 0
        %6423 = vmatmul.mubr.bf16.gmra.mrb[0].mxu0 %v6087
        %v6424 = vpop.f32.mrb[0].mxu0
        %v6425 = vadd.f32 %v6109, %v6424
        %v6426 = vpop.f32.mrb[0].mxu0
        %v6427 = vpop.f32.mrb[0].mxu0
        %v6428 = vadd.f32 %v6109, %v6427
        %v6429 = vpop.f32.mrb[0].mxu0
        %6430 = vmatprep.mubr.bf16.mxu0 0
        %6431 = vmatmul.mubr.bf16.gmra.mrb[0].mxu0 %v6088
        %v6432 = vpop.f32.mrb[0].mxu0
        %v6433 = vadd.f32 %v6109, %v6432
        %v6434 = vpop.f32.mrb[0].mxu0
        %v6435 = vpop.f32.mrb[0].mxu0
        %v6436 = vadd.f32 %v6109, %v6435
        %v6437 = vpop.f32.mrb[0].mxu0
        %6438 = vmatprep.mubr.bf16.mxu0 0
        %6439 = vmatmul.mubr.bf16.gmra.mrb[0].mxu0 %v6089
        %v6440 = vpop.f32.mrb[0].mxu0
        %v6441 = vadd.f32 %v6109, %v6440
        %v6442 = vpop.f32.mrb[0].mxu0
        %v6443 = vpop.f32.mrb[0].mxu0
        %v6444 = vadd.f32 %v6109, %v6443
        %v6445 = vpop.f32.mrb[0].mxu0
        %6446 = vdwg.mxu0
        %6447 = vst [vmem:[%s493] sm:$0xff] %v6193
        %6448 = vst [vmem:[%s493 + $0x8] sm:$0xff] %v6196
        %6449 = vst [vmem:[%s493 + $0x10] sm:$0xff] %v6201
        %6450 = vst [vmem:[%s493 + $0x18] sm:$0xff] %v6204
        %6451 = vst [vmem:[%s493 + $0x20] sm:$0xff] %v6209
        %6452 = vst [vmem:[%s493 + $0x28] sm:$0xff] %v6212
        %6453 = vst [vmem:[%s493 + $0x30] sm:$0xff] %v6217
        %6454 = vst [vmem:[%s493 + $0x38] sm:$0xff] %v6220
        %6455 = vst [vmem:[%s493 + $0x40] sm:$0xff] %v6225
        %6456 = vst [vmem:[%s493 + $0x48] sm:$0xff] %v6228
        %6457 = vst [vmem:[%s493 + $0x50] sm:$0xff] %v6233
        %6458 = vst [vmem:[%s493 + $0x58] sm:$0xff] %v6236
        %6459 = vst [vmem:[%s493 + $0x60] sm:$0xff] %v6241
        %6460 = vst [vmem:[%s493 + $0x68] sm:$0xff] %v6244
        %6461 = vst [vmem:[%s493 + $0x70] sm:$0xff] %v6249
        %6462 = vst [vmem:[%s493 + $0x78] sm:$0xff] %v6252
        %6463 = vst [vmem:[%s493 + $0x80] sm:$0xff] %v6257
        %6464 = vst [vmem:[%s493 + $0x88] sm:$0xff] %v6260
        %6465 = vst [vmem:[%s493 + $0x90] sm:$0xff] %v6265
        %6466 = vst [vmem:[%s493 + $0x98] sm:$0xff] %v6268
        %6467 = vst [vmem:[%s493 + $0xa0] sm:$0xff] %v6273
        %6468 = vst [vmem:[%s493 + $0xa8] sm:$0xff] %v6276
        %6469 = vst [vmem:[%s493 + $0xb0] sm:$0xff] %v6281
        %6470 = vst [vmem:[%s493 + $0xb8] sm:$0xff] %v6284
        %6471 = vst [vmem:[%s493 + $0xc0] sm:$0xff] %v6289
        %6472 = vst [vmem:[%s493 + $0xc8] sm:$0xff] %v6292
        %6473 = vst [vmem:[%s493 + $0xd0] sm:$0xff] %v6297
        %6474 = vst [vmem:[%s493 + $0xd8] sm:$0xff] %v6300
        %6475 = vst [vmem:[%s493 + $0xe0] sm:$0xff] %v6305
        %6476 = vst [vmem:[%s493 + $0xe8] sm:$0xff] %v6308
        %6477 = vst [vmem:[%s493 + $0xf0] sm:$0xff] %v6313
        %6478 = vst [vmem:[%s493 + $0xf8] sm:$0xff] %v6316
        %6479 = vst [vmem:[%s493 + $0x100] sm:$0xff] %v6321
        %6480 = vst [vmem:[%s493 + $0x108] sm:$0xff] %v6324
        %6481 = vst [vmem:[%s493 + $0x110] sm:$0xff] %v6329
        %6482 = vst [vmem:[%s493 + $0x118] sm:$0xff] %v6332
        %6483 = vst [vmem:[%s493 + $0x120] sm:$0xff] %v6337
        %6484 = vst [vmem:[%s493 + $0x128] sm:$0xff] %v6340
        %6485 = vst [vmem:[%s493 + $0x130] sm:$0xff] %v6345
        %6486 = vst [vmem:[%s493 + $0x138] sm:$0xff] %v6348
        %6487 = vst [vmem:[%s493 + $0x140] sm:$0xff] %v6353
        %6488 = vst [vmem:[%s493 + $0x148] sm:$0xff] %v6356
        %6489 = vst [vmem:[%s493 + $0x150] sm:$0xff] %v6361
        %6490 = vst [vmem:[%s493 + $0x158] sm:$0xff] %v6364
        %6491 = vst [vmem:[%s493 + $0x160] sm:$0xff] %v6369
        %6492 = vst [vmem:[%s493 + $0x168] sm:$0xff] %v6372
        %6493 = vst [vmem:[%s493 + $0x170] sm:$0xff] %v6377
        %6494 = vst [vmem:[%s493 + $0x178] sm:$0xff] %v6380
        %6495 = vst [vmem:[%s493 + $0x180] sm:$0xff] %v6385
        %6496 = vst [vmem:[%s493 + $0x188] sm:$0xff] %v6388
        %6497 = vst [vmem:[%s493 + $0x190] sm:$0xff] %v6393
        %6498 = vst [vmem:[%s493 + $0x198] sm:$0xff] %v6396
        %6499 = vst [vmem:[%s493 + $0x1a0] sm:$0xff] %v6401
        %6500 = vst [vmem:[%s493 + $0x1a8] sm:$0xff] %v6404
        %6501 = vst [vmem:[%s493 + $0x1b0] sm:$0xff] %v6409
        %6502 = vst [vmem:[%s493 + $0x1b8] sm:$0xff] %v6412
        %6503 = vst [vmem:[%s493 + $0x1c0] sm:$0xff] %v6417
        %6504 = vst [vmem:[%s493 + $0x1c8] sm:$0xff] %v6420
        %6505 = vst [vmem:[%s493 + $0x1d0] sm:$0xff] %v6425
        %6506 = vst [vmem:[%s493 + $0x1d8] sm:$0xff] %v6428
        %6507 = vst [vmem:[%s493 + $0x1e0] sm:$0xff] %v6433
        %6508 = vst [vmem:[%s493 + $0x1e8] sm:$0xff] %v6436
        %6509 = vst [vmem:[%s493 + $0x1f0] sm:$0xff] %v6441
        %6510 = vst [vmem:[%s493 + $0x1f8] sm:$0xff] %v6444
        %s6511 = sand.u32 %s254, 1
        %s6512 = scalar_lea.sflag [#allocation4], %s6511
        %s6513 = sand.u32 %s254, 1
        %s6514 = smul.addr %s6513, 512
        %s6515 = scalar_lea.vmem [#allocation17], %s6514
        // Predicated region
        $region97: #{tpu_custom_call.1} parent=59 // pred_check
          %p6516 = pneg %p264
        $region98: #{tpu_custom_call.1} parent=59 // pred_check_branch
          %6518 = sbr.rel (%p6516) target = $region100
        $region99: #{tpu_custom_call.1} parent=59 // pred_region
          %s6519 = smul.u32 64, %s31
          %s6521 = ssub.s32 8192, 8192
          %6522 = vsyncadd %s6512, %s6521
          %s6523 = smul.addr %s6519, 128
          %s6524 = scalar_lea.hbm %s10, %s6523
          %s6525 = sshll.u32 %s6515, 4
          %s6526 = int_to_ptr.vmem [resolvable:$true] %s6525
          %6531 = dma.vmem_to_hbm [thread:$0]  %s6526, 8192, %s6524, %s6512, 128, 128, 8
        $region100: #{tpu_custom_call.1} parent=59 // pred_fallthru
          _
      $region60: #{tpu_custom_call.1} parent=5 // pred_fallthru
        _
      %p6532 = scmp.le.s32.totalorder 2, %s26
      // Predicated region
      $region101: #{tpu_custom_call.1} parent=5 // pred_check
        %p6533 = pneg %p6532
      $region102: #{tpu_custom_call.1} parent=5 // pred_check_branch
        %6535 = sbr.rel (%p6533) target = $region104
      $region103: #{tpu_custom_call.1} parent=5 // pred_region
        %s6536 = ssub.s32 %s26, 2
        // Predicated region
        $region105: #{tpu_custom_call.1} parent=103 // pred_check
          %p6537 = pneg %p270
        $region106: #{tpu_custom_call.1} parent=103 // pred_check_branch
          %6539 = sbr.rel (%p6537) target = $region108
        $region107: #{tpu_custom_call.1} parent=103 // pred_region
          %s6540 = sand.u32 %s255, 1
          %s6541 = scalar_lea.sflag [#allocation4], %s6540
          %s6542 = sand.u32 %s255, 1
          %s6543 = smul.addr %s6542, 512
          %s6544 = scalar_lea.vmem [#allocation17], %s6543
          %6545 = dma.done %s6541, 8192
        $region108: #{tpu_custom_call.1} parent=103 // pred_fallthru
          _
      $region104: #{tpu_custom_call.1} parent=5 // pred_fallthru
        _
    $region6: #{tpu_custom_call.1} parent=1 // loop_footer
      %s30 = sadd.s32 1, %s26
    $region7: #{tpu_custom_call.1} parent=1 // loop_footer_branch
      %25 = sbr.rel target = $region3
    $region8: #{tpu_custom_call.1} parent=1 // loop_exit
      _
    %6546 = vsyncpa [#allocation3], 1
    %s6547 = scalar_lea.sflag [#allocation3], 1
    %6548 = vsyncpa %s6547, 1
    %6549 = vsyncpa [#allocation6], 1
    %6550 = vsyncpa [#allocation9], 1
    %6551 = vsyncpa [#allocation12], 1
    %6552 = vsyncpa [#allocation15], 1
    %6553 = vsyncpa [#allocation4], 1
    %s6554 = scalar_lea.sflag [#allocation4], 1
    %6555 = vsyncpa %s6554, 1

</llo_original>
